<compile_context>
chip_gen: v7x
topology: tpu7x:2x2x1
jax: 0.10.0
libtpu: 0.0.40
codegen_flags: <defaults>
</compile_context>

<pallas_src>
import functools

import jax
import jax.numpy as jnp
from jax.experimental import pallas as pl
from jax.experimental.pallas import tpu as pltpu


# ----------------------------------------------------------------------------
# Pallas kernel 1: single-K-step fused   out = [relu]( (x @ w) * scale + bias )
# Grid tiles only M ("parallel"); no accumulator scratch needed.
# ----------------------------------------------------------------------------
def _mm_scale_bias_kernel(x_ref, w_ref, scale_ref, bias_ref, o_ref, *, apply_relu):
    y = jnp.dot(x_ref[...], w_ref[...], preferred_element_type=jnp.float32)
    y = y * scale_ref[...] + bias_ref[...]
    if apply_relu:
        y = jnp.maximum(y, 0.0)
    o_ref[...] = y.astype(o_ref.dtype)


def fused_matmul_scale_bias(x, w, scale, bias, *, apply_relu, tm, out_dtype):
    """out = [relu]((x @ w) * scale + bias); x:(M,K), w:(K,N), scale/bias:(1,N)."""
    M, K = x.shape
    K2, N = w.shape
    assert K == K2, (K, K2)
    assert M % tm == 0, (M, tm)
    grid = (M // tm,)

    return pl.pallas_call(
        functools.partial(_mm_scale_bias_kernel, apply_relu=apply_relu),
        out_shape=jax.ShapeDtypeStruct((M, N), out_dtype),
        grid_spec=pltpu.PrefetchScalarGridSpec(
            num_scalar_prefetch=0,
            grid=grid,
            in_specs=[
                pl.BlockSpec((tm, K), lambda i: (i, 0)),
                pl.BlockSpec((K, N), lambda i: (0, 0)),
                pl.BlockSpec((1, N), lambda i: (0, 0)),
                pl.BlockSpec((1, N), lambda i: (0, 0)),
            ],
            out_specs=pl.BlockSpec((tm, N), lambda i: (i, 0)),
        ),
        compiler_params=pltpu.CompilerParams(
            dimension_semantics=("parallel",)),
    )(x, w, scale, bias)


# ----------------------------------------------------------------------------
# Pallas kernel 2: fused  FC1 (+bias, ReLU)  ->  FC2 (+bias)
# K reduction of FC1 streamed over the grid; FC2 done in the epilogue so the
# (B,256) hidden stays in VMEM.
# ----------------------------------------------------------------------------
def _fc_head_kernel(x_ref, w1_ref, b1_ref, w2_ref, b2_ref, o_ref, acc_ref):
    k = pl.program_id(0)

    @pl.when(k == 0)
    def _():
        acc_ref[...] = jnp.zeros_like(acc_ref)

    acc_ref[...] += jnp.dot(x_ref[...], w1_ref[...],
                            preferred_element_type=jnp.float32)

    @pl.when(k == pl.num_programs(0) - 1)
    def _():
        h = jnp.maximum(acc_ref[...] + b1_ref[...], 0.0)          # (B, H) f32
        out = jnp.dot(h, w2_ref[...], preferred_element_type=jnp.float32)
        o_ref[...] = (out + b2_ref[...]).astype(o_ref.dtype)


def fused_fc_head(x, w1, b1, w2, b2, *, tk):
    """out = relu(x @ w1 + b1) @ w2 + b2 ; x:(B,K), w1:(K,H), w2:(H,N)."""
    B, K = x.shape
    K2, H = w1.shape
    H2, N = w2.shape
    assert K == K2 and H == H2, (K, K2, H, H2)
    assert K % tk == 0, (K, tk)   # fail loudly instead of silently changing tk
    grid = (K // tk,)

    return pl.pallas_call(
        _fc_head_kernel,
        out_shape=jax.ShapeDtypeStruct((B, N), jnp.float32),
        grid_spec=pltpu.PrefetchScalarGridSpec(
            num_scalar_prefetch=0,
            grid=grid,
            in_specs=[
                pl.BlockSpec((B, tk), lambda k: (0, k)),
                pl.BlockSpec((tk, H), lambda k: (k, 0)),
                pl.BlockSpec((1, H), lambda k: (0, 0)),
                pl.BlockSpec((H, N), lambda k: (0, 0)),
                pl.BlockSpec((1, N), lambda k: (0, 0)),
            ],
            out_specs=pl.BlockSpec((B, N), lambda k: (0, 0)),
            scratch_shapes=[pltpu.VMEM((B, H), jnp.float32)],
        ),
        compiler_params=pltpu.CompilerParams(
            dimension_semantics=("arbitrary",)),
    )(x, w1, b1, w2, b2)


# ----------------------------------------------------------------------------
# Glue: im2col for k=4, s=2, p=1 conv on NHWC inputs (strided slicing only).
# Patch K-axis ordering is (kh, kw, cin), matching the weight reshape below.
# ----------------------------------------------------------------------------
def _extract_patches(x_nhwc, k=4, s=2, p=1):
    B, H, W, C = x_nhwc.shape
    xp = jnp.pad(x_nhwc, ((0, 0), (p, p), (p, p), (0, 0)))
    Ho = (H + 2 * p - k) // s + 1
    Wo = (W + 2 * p - k) // s + 1
    cols = []
    for kh in range(k):
        for kw in range(k):
            cols.append(xp[:, kh:kh + s * Ho:s, kw:kw + s * Wo:s, :])
    patches = jnp.concatenate(cols, axis=-1)          # (B, Ho, Wo, k*k*C)
    return patches.reshape(B * Ho * Wo, k * k * C), (B, Ho, Wo)


def _conv_weight_to_matmul(w_pt):
    """PyTorch conv weight (Cout, Cin, KH, KW) -> matmul weight (KH*KW*Cin, Cout)."""
    Cout, Cin, KH, KW = w_pt.shape
    return jnp.transpose(w_pt, (2, 3, 1, 0)).reshape(KH * KW * Cin, Cout)


def _fold_bn(conv_bias, gamma, beta, running_mean, running_var, eps=1e-5):
    scale = gamma / jnp.sqrt(running_var + eps)
    bias = beta + (conv_bias - running_mean) * scale
    return scale, bias


def _pick_tm(M, n_split=2):
    """M tile: split for megacore parallelism when it stays (8,)-aligned."""
    if M % n_split == 0 and (M // n_split) % 8 == 0 and M // n_split > 0:
        return M // n_split
    return M


# ----------------------------------------------------------------------------
# Parameter construction (deterministic, synthetic; PyTorch conventions)
# ----------------------------------------------------------------------------
def init_params(state_channels, latent_dim, key):
    ks = jax.random.split(key, 16)
    p = {}

    def conv(kw, kb, cout, cin):
        return (0.05 * jax.random.normal(kw, (cout, cin, 4, 4), jnp.float32),
                0.05 * jax.random.normal(kb, (cout,), jnp.float32))

    def bn(k, c):
        k1, k2, k3, k4 = jax.random.split(k, 4)
        return (1.0 + 0.1 * jax.random.normal(k1, (c,), jnp.float32),   # gamma
                0.1 * jax.random.normal(k2, (c,), jnp.float32),         # beta
                0.1 * jax.random.normal(k3, (c,), jnp.float32),         # mean
                jax.random.uniform(k4, (c,), jnp.float32, 0.5, 1.5))    # var

    p["conv1_w"], p["conv1_b"] = conv(ks[0], ks[1], 32, state_channels)
    p["bn1"] = bn(ks[2], 32)
    p["conv2_w"], p["conv2_b"] = conv(ks[3], ks[4], 64, 32)
    p["bn2"] = bn(ks[5], 64)
    p["conv3_w"], p["conv3_b"] = conv(ks[6], ks[7], 128, 64)
    p["bn3"] = bn(ks[8], 128)
    # Linear weights kept in PyTorch (out, in) convention here.
    p["fc1_w"] = 0.02 * jax.random.normal(ks[9], (256, 128 * 10 * 10), jnp.float32)
    p["fc1_b"] = 0.02 * jax.random.normal(ks[10], (256,), jnp.float32)
    p["fc2_w"] = 0.05 * jax.random.normal(ks[11], (2 * latent_dim, 256), jnp.float32)
    p["fc2_b"] = 0.05 * jax.random.normal(ks[12], (2 * latent_dim,), jnp.float32)
    return p


def prepare_params(params):
    """One-time weight layout / BN folding so the forward has zero transposes."""
    prep = {}
    for i in (1, 2, 3):
        w = _conv_weight_to_matmul(params[f"conv{i}_w"])              # (K, Cout)
        s, b = _fold_bn(params[f"conv{i}_b"], *params[f"bn{i}"])
        prep[f"w{i}"] = w.astype(jnp.bfloat16)
        prep[f"s{i}"] = s.reshape(1, -1).astype(jnp.float32)
        prep[f"b{i}"] = b.reshape(1, -1).astype(jnp.float32)

    # fc1_w is (256, 12800) with input index = c*100 + h*10 + w  (NCHW flatten).
    # Permute rows to NHWC flatten order j = (h*10 + w)*128 + c so the conv3
    # output can be fed directly without any activation transpose.
    fc1 = params["fc1_w"].reshape(256, 128, 10, 10)    # (out, c, h, w)
    fc1 = jnp.transpose(fc1, (2, 3, 1, 0))             # (h, w, c, out)
    prep["fc1_w"] = fc1.reshape(128 * 10 * 10, 256).astype(jnp.bfloat16)
    prep["fc1_b"] = params["fc1_b"].reshape(1, 256).astype(jnp.float32)
    prep["fc2_w"] = params["fc2_w"].T.astype(jnp.float32)              # (256, 2L)
    prep["fc2_b"] = params["fc2_b"].reshape(1, -1).astype(jnp.float32)
    return prep


# ----------------------------------------------------------------------------
# StateEncoder forward
# ----------------------------------------------------------------------------
def state_encoder_forward(state_nchw, prep, latent_dim):
    B = state_nchw.shape[0]
    x = jnp.transpose(state_nchw, (0, 2, 3, 1)).astype(jnp.bfloat16)   # NHWC bf16

    # --- Conv1..Conv3 (+folded BN + ReLU); Dropout = identity (eval) ---
    for i in (1, 2, 3):
        patches, (_, Ho, Wo) = _extract_patches(x)
        y = fused_matmul_scale_bias(
            patches, prep[f"w{i}"], prep[f"s{i}"], prep[f"b{i}"],
            apply_relu=True, tm=_pick_tm(patches.shape[0]),
            out_dtype=jnp.bfloat16)
        cout = prep[f"w{i}"].shape[1]
        x = y.reshape(B, Ho, Wo, cout)

    # --- Flatten in NHWC order; the NCHW-flatten permutation is folded into
    #     prep["fc1_w"], so no transpose is needed here. ---
    x = x.reshape(B, -1)                               # (B, 12800) bf16

    # --- Linear(12800,256)+ReLU fused with Linear(256,2*latent_dim) ---
    out = fused_fc_head(x, prep["fc1_w"], prep["fc1_b"],
                        prep["fc2_w"], prep["fc2_b"], tk=6400)

    mean = out[:, :latent_dim]
    log_var = out[:, latent_dim:]
    return mean, log_var


if __name__ == "__main__":
    B = 2
    state_channels = 4
    latent_dim = 8
    dropout_rate = 0.1  # unused (eval-mode identity)

    key = jax.random.PRNGKey(0)
    k_in, k_par = jax.random.split(key)
    # Input spatial size must be 80x80 so that 3 stride-2 convs give 10x10
    # (the Linear(128*10*10, 256) fixes this).
    state = jax.random.normal(k_in, (B, state_channels, 80, 80), jnp.float32)
    params = init_params(state_channels, latent_dim, k_par)
    prep = prepare_params(params)   # one-time layout work, outside the forward

    fwd = jax.jit(functools.partial(state_encoder_forward, latent_dim=latent_dim))
    mean, log_var = fwd(state, prep)
    mean = jax.block_until_ready(mean)
    log_var = jax.block_until_ready(log_var)

    assert mean.shape == (B, latent_dim) and log_var.shape == (B, latent_dim)
    assert jnp.all(jnp.isfinite(mean)) and jnp.all(jnp.isfinite(log_var))
    print("KERNEL_OK")
</pallas_src>

<mosaic_0001>
module attributes {stable_mosaic.version = 11 : i64} {
  func.func @_mm_scale_bias_kernel(%arg0: i32, %arg1: memref<1600x64xbf16, #tpu.memory_space<vmem>>, %arg2: memref<64x32xbf16, #tpu.memory_space<vmem>>, %arg3: memref<1x32xf32, #tpu.memory_space<vmem>>, %arg4: memref<1x32xf32, #tpu.memory_space<vmem>>, %arg5: memref<1600x32xbf16, #tpu.memory_space<vmem>>) attributes {dimension_semantics = [#tpu.dimension_semantics<parallel>], iteration_bounds = array<i64: 2>, scalar_prefetch = 0 : i64, scratch_operands = 0 : i64, tpu.core_type = #tpu.core_type<tc>, window_params = [{transform_indices = @transform_0, window_bounds = array<i64: 1600, 64>}, {pipeline_mode = #tpu.pipeline_mode<synchronous>, transform_indices = @transform_1, window_bounds = array<i64: 64, 32>}, {pipeline_mode = #tpu.pipeline_mode<synchronous>, transform_indices = @transform_2, window_bounds = array<i64: 1, 32>}, {pipeline_mode = #tpu.pipeline_mode<synchronous>, transform_indices = @transform_3, window_bounds = array<i64: 1, 32>}, {transform_indices = @transform_4, window_bounds = array<i64: 1600, 32>}]} {
    %c0 = arith.constant 0 : index
    %c0_0 = arith.constant 0 : index
    %0 = vector.load %arg1[%c0, %c0_0] : memref<1600x64xbf16, #tpu.memory_space<vmem>>, vector<1600x64xbf16>
    %c0_1 = arith.constant 0 : index
    %c0_2 = arith.constant 0 : index
    %1 = vector.load %arg2[%c0_1, %c0_2] : memref<64x32xbf16, #tpu.memory_space<vmem>>, vector<64x32xbf16>
    %cst = arith.constant dense<0.000000e+00> : vector<1600x32xf32>
    %2 = tpu.matmul %0, %1, %cst {dimension_numbers = #tpu.dot_dimension_numbers<[1], [0], [0], [1], [0, 0, 1, 1], [], []>} : vector<1600x64xbf16>, vector<64x32xbf16>, vector<1600x32xf32> -> vector<1600x32xf32>
    %c0_3 = arith.constant 0 : index
    %c0_4 = arith.constant 0 : index
    %3 = vector.load %arg3[%c0_3, %c0_4] : memref<1x32xf32, #tpu.memory_space<vmem>>, vector<1x32xf32>
    %4 = vector.broadcast %3 : vector<1x32xf32> to vector<1600x32xf32>
    %5 = arith.mulf %2, %4 : vector<1600x32xf32>
    %c0_5 = arith.constant 0 : index
    %c0_6 = arith.constant 0 : index
    %6 = vector.load %arg4[%c0_5, %c0_6] : memref<1x32xf32, #tpu.memory_space<vmem>>, vector<1x32xf32>
    %7 = vector.broadcast %6 : vector<1x32xf32> to vector<1600x32xf32>
    %8 = arith.addf %5, %7 : vector<1600x32xf32>
    %cst_7 = arith.constant 0.000000e+00 : f32
    %9 = vector.broadcast %cst_7 : f32 to vector<1600x32xf32>
    %10 = arith.maximumf %8, %9 : vector<1600x32xf32>
    %11 = arith.truncf %10 : vector<1600x32xf32> to vector<1600x32xbf16>
    %c0_8 = arith.constant 0 : index
    %c0_9 = arith.constant 0 : index
    %12 = vector.load %arg5[%c0_8, %c0_9] : memref<1600x32xbf16, #tpu.memory_space<vmem>>, vector<1600x32xbf16>
    tpu.vector_store %arg5[%c0_8, %c0_9], %11 {strides = array<i32>} : memref<1600x32xbf16, #tpu.memory_space<vmem>>, vector<1600x32xbf16>,
    return
  }
  func.func @transform_0(%arg0: i32) -> (i32, i32) {
    %c0_i32 = arith.constant 0 : i32
    %c0_i32_0 = arith.constant 0 : i32
    return %arg0, %c0_i32 : i32, i32
  }
  func.func @transform_1(%arg0: i32) -> (i32, i32) {
    %c0_i32 = arith.constant 0 : i32
    %c0_i32_0 = arith.constant 0 : i32
    %c0_i32_1 = arith.constant 0 : i32
    return %c0_i32, %c0_i32_0 : i32, i32
  }
  func.func @transform_2(%arg0: i32) -> (i32, i32) {
    %c0_i32 = arith.constant 0 : i32
    %c0_i32_0 = arith.constant 0 : i32
    %c0_i32_1 = arith.constant 0 : i32
    return %c0_i32, %c0_i32_0 : i32, i32
  }
  func.func @transform_3(%arg0: i32) -> (i32, i32) {
    %c0_i32 = arith.constant 0 : i32
    %c0_i32_0 = arith.constant 0 : i32
    %c0_i32_1 = arith.constant 0 : i32
    return %c0_i32, %c0_i32_0 : i32, i32
  }
  func.func @transform_4(%arg0: i32) -> (i32, i32) {
    %c0_i32 = arith.constant 0 : i32
    %c0_i32_0 = arith.constant 0 : i32
    return %arg0, %c0_i32 : i32, i32
  }
}

module attributes {stable_mosaic.version = 11 : i64} {
  func.func @_mm_scale_bias_kernel(%arg0: i32, %arg1: memref<400x512xbf16, #tpu.memory_space<vmem>>, %arg2: memref<512x64xbf16, #tpu.memory_space<vmem>>, %arg3: memref<1x64xf32, #tpu.memory_space<vmem>>, %arg4: memref<1x64xf32, #tpu.memory_space<vmem>>, %arg5: memref<400x64xbf16, #tpu.memory_space<vmem>>) attributes {dimension_semantics = [#tpu.dimension_semantics<parallel>], iteration_bounds = array<i64: 2>, scalar_prefetch = 0 : i64, scratch_operands = 0 : i64, tpu.core_type = #tpu.core_type<tc>, window_params = [{transform_indices = @transform_0, window_bounds = array<i64: 400, 512>}, {pipeline_mode = #tpu.pipeline_mode<synchronous>, transform_indices = @transform_1, window_bounds = array<i64: 512, 64>}, {pipeline_mode = #tpu.pipeline_mode<synchronous>, transform_indices = @transform_2, window_bounds = array<i64: 1, 64>}, {pipeline_mode = #tpu.pipeline_mode<synchronous>, transform_indices = @transform_3, window_bounds = array<i64: 1, 64>}, {transform_indices = @transform_4, window_bounds = array<i64: 400, 64>}]} {
    %c0 = arith.constant 0 : index
    %c0_0 = arith.constant 0 : index
    %0 = vector.load %arg1[%c0, %c0_0] : memref<400x512xbf16, #tpu.memory_space<vmem>>, vector<400x512xbf16>
    %c0_1 = arith.constant 0 : index
    %c0_2 = arith.constant 0 : index
    %1 = vector.load %arg2[%c0_1, %c0_2] : memref<512x64xbf16, #tpu.memory_space<vmem>>, vector<512x64xbf16>
    %cst = arith.constant dense<0.000000e+00> : vector<400x64xf32>
    %2 = tpu.matmul %0, %1, %cst {dimension_numbers = #tpu.dot_dimension_numbers<[1], [0], [0], [1], [0, 0, 1, 1], [], []>} : vector<400x512xbf16>, vector<512x64xbf16>, vector<400x64xf32> -> vector<400x64xf32>
    %c0_3 = arith.constant 0 : index
    %c0_4 = arith.constant 0 : index
    %3 = vector.load %arg3[%c0_3, %c0_4] : memref<1x64xf32, #tpu.memory_space<vmem>>, vector<1x64xf32>
    %4 = vector.broadcast %3 : vector<1x64xf32> to vector<400x64xf32>
    %5 = arith.mulf %2, %4 : vector<400x64xf32>
    %c0_5 = arith.constant 0 : index
    %c0_6 = arith.constant 0 : index
    %6 = vector.load %arg4[%c0_5, %c0_6] : memref<1x64xf32, #tpu.memory_space<vmem>>, vector<1x64xf32>
    %7 = vector.broadcast %6 : vector<1x64xf32> to vector<400x64xf32>
    %8 = arith.addf %5, %7 : vector<400x64xf32>
    %cst_7 = arith.constant 0.000000e+00 : f32
    %9 = vector.broadcast %cst_7 : f32 to vector<400x64xf32>
    %10 = arith.maximumf %8, %9 : vector<400x64xf32>
    %11 = arith.truncf %10 : vector<400x64xf32> to vector<400x64xbf16>
    %c0_8 = arith.constant 0 : index
    %c0_9 = arith.constant 0 : index
    %12 = vector.load %arg5[%c0_8, %c0_9] : memref<400x64xbf16, #tpu.memory_space<vmem>>, vector<400x64xbf16>
    tpu.vector_store %arg5[%c0_8, %c0_9], %11 {strides = array<i32>} : memref<400x64xbf16, #tpu.memory_space<vmem>>, vector<400x64xbf16>,
    return
  }
  func.func @transform_0(%arg0: i32) -> (i32, i32) {
    %c0_i32 = arith.constant 0 : i32
    %c0_i32_0 = arith.constant 0 : i32
    return %arg0, %c0_i32 : i32, i32
  }
  func.func @transform_1(%arg0: i32) -> (i32, i32) {
    %c0_i32 = arith.constant 0 : i32
    %c0_i32_0 = arith.constant 0 : i32
    %c0_i32_1 = arith.constant 0 : i32
    return %c0_i32, %c0_i32_0 : i32, i32
  }
  func.func @transform_2(%arg0: i32) -> (i32, i32) {
    %c0_i32 = arith.constant 0 : i32
    %c0_i32_0 = arith.constant 0 : i32
    %c0_i32_1 = arith.constant 0 : i32
    return %c0_i32, %c0_i32_0 : i32, i32
  }
  func.func @transform_3(%arg0: i32) -> (i32, i32) {
    %c0_i32 = arith.constant 0 : i32
    %c0_i32_0 = arith.constant 0 : i32
    %c0_i32_1 = arith.constant 0 : i32
    return %c0_i32, %c0_i32_0 : i32, i32
  }
  func.func @transform_4(%arg0: i32) -> (i32, i32) {
    %c0_i32 = arith.constant 0 : i32
    %c0_i32_0 = arith.constant 0 : i32
    return %arg0, %c0_i32 : i32, i32
  }
}

module attributes {stable_mosaic.version = 11 : i64} {
  func.func @_mm_scale_bias_kernel(%arg0: i32, %arg1: memref<200x1024xbf16, #tpu.memory_space<vmem>>, %arg2: memref<1024x128xbf16, #tpu.memory_space<vmem>>, %arg3: memref<1x128xf32, #tpu.memory_space<vmem>>, %arg4: memref<1x128xf32, #tpu.memory_space<vmem>>, %arg5: memref<200x128xbf16, #tpu.memory_space<vmem>>) attributes {dimension_semantics = [#tpu.dimension_semantics<parallel>], iteration_bounds = array<i64: 1>, scalar_prefetch = 0 : i64, scratch_operands = 0 : i64, tpu.core_type = #tpu.core_type<tc>, window_params = [{transform_indices = @transform_0, window_bounds = array<i64: 200, 1024>}, {pipeline_mode = #tpu.pipeline_mode<synchronous>, transform_indices = @transform_1, window_bounds = array<i64: 1024, 128>}, {pipeline_mode = #tpu.pipeline_mode<synchronous>, transform_indices = @transform_2, window_bounds = array<i64: 1, 128>}, {pipeline_mode = #tpu.pipeline_mode<synchronous>, transform_indices = @transform_3, window_bounds = array<i64: 1, 128>}, {transform_indices = @transform_4, window_bounds = array<i64: 200, 128>}]} {
    %c0 = arith.constant 0 : index
    %c0_0 = arith.constant 0 : index
    %0 = vector.load %arg1[%c0, %c0_0] : memref<200x1024xbf16, #tpu.memory_space<vmem>>, vector<200x1024xbf16>
    %c0_1 = arith.constant 0 : index
    %c0_2 = arith.constant 0 : index
    %1 = vector.load %arg2[%c0_1, %c0_2] : memref<1024x128xbf16, #tpu.memory_space<vmem>>, vector<1024x128xbf16>
    %cst = arith.constant dense<0.000000e+00> : vector<200x128xf32>
    %2 = tpu.matmul %0, %1, %cst {dimension_numbers = #tpu.dot_dimension_numbers<[1], [0], [0], [1], [0, 0, 1, 1], [], []>} : vector<200x1024xbf16>, vector<1024x128xbf16>, vector<200x128xf32> -> vector<200x128xf32>
    %c0_3 = arith.constant 0 : index
    %c0_4 = arith.constant 0 : index
    %3 = vector.load %arg3[%c0_3, %c0_4] : memref<1x128xf32, #tpu.memory_space<vmem>>, vector<1x128xf32>
    %4 = vector.broadcast %3 : vector<1x128xf32> to vector<200x128xf32>
    %5 = arith.mulf %2, %4 : vector<200x128xf32>
    %c0_5 = arith.constant 0 : index
    %c0_6 = arith.constant 0 : index
    %6 = vector.load %arg4[%c0_5, %c0_6] : memref<1x128xf32, #tpu.memory_space<vmem>>, vector<1x128xf32>
    %7 = vector.broadcast %6 : vector<1x128xf32> to vector<200x128xf32>
    %8 = arith.addf %5, %7 : vector<200x128xf32>
    %cst_7 = arith.constant 0.000000e+00 : f32
    %9 = vector.broadcast %cst_7 : f32 to vector<200x128xf32>
    %10 = arith.maximumf %8, %9 : vector<200x128xf32>
    %11 = arith.truncf %10 : vector<200x128xf32> to vector<200x128xbf16>
    %c0_8 = arith.constant 0 : index
    %c0_9 = arith.constant 0 : index
    %12 = vector.load %arg5[%c0_8, %c0_9] : memref<200x128xbf16, #tpu.memory_space<vmem>>, vector<200x128xbf16>
    tpu.vector_store %arg5[%c0_8, %c0_9], %11 {strides = array<i32>} : memref<200x128xbf16, #tpu.memory_space<vmem>>, vector<200x128xbf16>,
    return
  }
  func.func @transform_0(%arg0: i32) -> (i32, i32) {
    %c0_i32 = arith.constant 0 : i32
    %c0_i32_0 = arith.constant 0 : i32
    return %arg0, %c0_i32 : i32, i32
  }
  func.func @transform_1(%arg0: i32) -> (i32, i32) {
    %c0_i32 = arith.constant 0 : i32
    %c0_i32_0 = arith.constant 0 : i32
    %c0_i32_1 = arith.constant 0 : i32
    return %c0_i32, %c0_i32_0 : i32, i32
  }
  func.func @transform_2(%arg0: i32) -> (i32, i32) {
    %c0_i32 = arith.constant 0 : i32
    %c0_i32_0 = arith.constant 0 : i32
    %c0_i32_1 = arith.constant 0 : i32
    return %c0_i32, %c0_i32_0 : i32, i32
  }
  func.func @transform_3(%arg0: i32) -> (i32, i32) {
    %c0_i32 = arith.constant 0 : i32
    %c0_i32_0 = arith.constant 0 : i32
    %c0_i32_1 = arith.constant 0 : i32
    return %c0_i32, %c0_i32_0 : i32, i32
  }
  func.func @transform_4(%arg0: i32) -> (i32, i32) {
    %c0_i32 = arith.constant 0 : i32
    %c0_i32_0 = arith.constant 0 : i32
    return %arg0, %c0_i32 : i32, i32
  }
}

module attributes {stable_mosaic.version = 11 : i64} {
  func.func @_fc_head_kernel(%arg0: i32, %arg1: memref<2x6400xbf16, #tpu.memory_space<vmem>>, %arg2: memref<6400x256xbf16, #tpu.memory_space<vmem>>, %arg3: memref<1x256xf32, #tpu.memory_space<vmem>>, %arg4: memref<256x16xf32, #tpu.memory_space<vmem>>, %arg5: memref<1x16xf32, #tpu.memory_space<vmem>>, %arg6: memref<2x16xf32, #tpu.memory_space<vmem>>, %arg7: memref<2x256xf32, #tpu.memory_space<vmem>>) attributes {dimension_semantics = [#tpu.dimension_semantics<arbitrary>], iteration_bounds = array<i64: 2>, scalar_prefetch = 0 : i64, scratch_operands = 1 : i64, tpu.core_type = #tpu.core_type<tc>, window_params = [{transform_indices = @transform_0, window_bounds = array<i64: 2, 6400>}, {transform_indices = @transform_1, window_bounds = array<i64: 6400, 256>}, {pipeline_mode = #tpu.pipeline_mode<synchronous>, transform_indices = @transform_2, window_bounds = array<i64: 1, 256>}, {pipeline_mode = #tpu.pipeline_mode<synchronous>, transform_indices = @transform_3, window_bounds = array<i64: 256, 16>}, {pipeline_mode = #tpu.pipeline_mode<synchronous>, transform_indices = @transform_4, window_bounds = array<i64: 1, 16>}, {pipeline_mode = #tpu.pipeline_mode<synchronous>, transform_indices = @transform_5, window_bounds = array<i64: 2, 16>}]} {
    %c0_i32 = arith.constant 0 : i32
    %0 = arith.cmpi eq, %arg0, %c0_i32 : i32
    %1 = arith.extui %0 : i1 to i32
    %c0_i32_0 = arith.constant 0 : i32
    %2 = arith.cmpi ne, %1, %c0_i32_0 : i32
    scf.if %2 {
      %cst_9 = arith.constant 0.000000e+00 : f32
      %12 = vector.broadcast %cst_9 : f32 to vector<2x256xf32>
      %c0_10 = arith.constant 0 : index
      %c0_11 = arith.constant 0 : index
      %13 = vector.load %arg7[%c0_10, %c0_11] : memref<2x256xf32, #tpu.memory_space<vmem>>, vector<2x256xf32>
      tpu.vector_store %arg7[%c0_10, %c0_11], %12 {strides = array<i32>} : memref<2x256xf32, #tpu.memory_space<vmem>>, vector<2x256xf32>,
    } else {
    }
    %c0 = arith.constant 0 : index
    %c0_1 = arith.constant 0 : index
    %3 = vector.load %arg7[%c0, %c0_1] : memref<2x256xf32, #tpu.memory_space<vmem>>, vector<2x256xf32>
    %c0_2 = arith.constant 0 : index
    %c0_3 = arith.constant 0 : index
    %4 = vector.load %arg1[%c0_2, %c0_3] : memref<2x6400xbf16, #tpu.memory_space<vmem>>, vector<2x6400xbf16>
    %c0_4 = arith.constant 0 : index
    %c0_5 = arith.constant 0 : index
    %5 = vector.load %arg2[%c0_4, %c0_5] : memref<6400x256xbf16, #tpu.memory_space<vmem>>, vector<6400x256xbf16>
    %cst = arith.constant dense<0.000000e+00> : vector<2x256xf32>
    %6 = tpu.matmul %4, %5, %cst {dimension_numbers = #tpu.dot_dimension_numbers<[1], [0], [0], [1], [0, 0, 1, 1], [], []>} : vector<2x6400xbf16>, vector<6400x256xbf16>, vector<2x256xf32> -> vector<2x256xf32>
    %7 = arith.addf %3, %6 : vector<2x256xf32>
    %c0_6 = arith.constant 0 : index
    %c0_7 = arith.constant 0 : index
    %8 = vector.load %arg7[%c0_6, %c0_7] : memref<2x256xf32, #tpu.memory_space<vmem>>, vector<2x256xf32>
    tpu.vector_store %arg7[%c0_6, %c0_7], %7 {strides = array<i32>} : memref<2x256xf32, #tpu.memory_space<vmem>>, vector<2x256xf32>,
    %c1_i32 = arith.constant 1 : i32
    %9 = arith.cmpi eq, %arg0, %c1_i32 : i32
    %10 = arith.extui %9 : i1 to i32
    %c0_i32_8 = arith.constant 0 : i32
    %11 = arith.cmpi ne, %10, %c0_i32_8 : i32
    scf.if %11 {
      %c0_9 = arith.constant 0 : index
      %c0_10 = arith.constant 0 : index
      %12 = vector.load %arg7[%c0_9, %c0_10] : memref<2x256xf32, #tpu.memory_space<vmem>>, vector<2x256xf32>
      %c0_11 = arith.constant 0 : index
      %c0_12 = arith.constant 0 : index
      %13 = vector.load %arg3[%c0_11, %c0_12] : memref<1x256xf32, #tpu.memory_space<vmem>>, vector<1x256xf32>
      %14 = vector.broadcast %13 : vector<1x256xf32> to vector<2x256xf32>
      %15 = arith.addf %12, %14 : vector<2x256xf32>
      %cst_13 = arith.constant 0.000000e+00 : f32
      %16 = vector.broadcast %cst_13 : f32 to vector<2x256xf32>
      %17 = arith.maximumf %15, %16 : vector<2x256xf32>
      %c0_14 = arith.constant 0 : index
      %c0_15 = arith.constant 0 : index
      %18 = vector.load %arg4[%c0_14, %c0_15] : memref<256x16xf32, #tpu.memory_space<vmem>>, vector<256x16xf32>
      %cst_16 = arith.constant dense<0.000000e+00> : vector<2x16xf32>
      %19 = tpu.matmul %17, %18, %cst_16 {dimension_numbers = #tpu.dot_dimension_numbers<[1], [0], [0], [1], [0, 0, 1, 1], [], []>} : vector<2x256xf32>, vector<256x16xf32>, vector<2x16xf32> -> vector<2x16xf32>
      %c0_17 = arith.constant 0 : index
      %c0_18 = arith.constant 0 : index
      %20 = vector.load %arg5[%c0_17, %c0_18] : memref<1x16xf32, #tpu.memory_space<vmem>>, vector<1x16xf32>
      %21 = vector.broadcast %20 : vector<1x16xf32> to vector<2x16xf32>
      %22 = arith.addf %19, %21 : vector<2x16xf32>
      %c0_19 = arith.constant 0 : index
      %c0_20 = arith.constant 0 : index
      %23 = vector.load %arg6[%c0_19, %c0_20] : memref<2x16xf32, #tpu.memory_space<vmem>>, vector<2x16xf32>
      tpu.vector_store %arg6[%c0_19, %c0_20], %22 {strides = array<i32>} : memref<2x16xf32, #tpu.memory_space<vmem>>, vector<2x16xf32>,
    } else {
    }
    return
  }
  func.func @transform_0(%arg0: i32) -> (i32, i32) {
    %c0_i32 = arith.constant 0 : i32
    %c0_i32_0 = arith.constant 0 : i32
    return %c0_i32, %arg0 : i32, i32
  }
  func.func @transform_1(%arg0: i32) -> (i32, i32) {
    %c0_i32 = arith.constant 0 : i32
    %c0_i32_0 = arith.constant 0 : i32
    return %arg0, %c0_i32 : i32, i32
  }
  func.func @transform_2(%arg0: i32) -> (i32, i32) {
    %c0_i32 = arith.constant 0 : i32
    %c0_i32_0 = arith.constant 0 : i32
    %c0_i32_1 = arith.constant 0 : i32
    return %c0_i32, %c0_i32_0 : i32, i32
  }
  func.func @transform_3(%arg0: i32) -> (i32, i32) {
    %c0_i32 = arith.constant 0 : i32
    %c0_i32_0 = arith.constant 0 : i32
    %c0_i32_1 = arith.constant 0 : i32
    return %c0_i32, %c0_i32_0 : i32, i32
  }
  func.func @transform_4(%arg0: i32) -> (i32, i32) {
    %c0_i32 = arith.constant 0 : i32
    %c0_i32_0 = arith.constant 0 : i32
    %c0_i32_1 = arith.constant 0 : i32
    return %c0_i32, %c0_i32_0 : i32, i32
  }
  func.func @transform_5(%arg0: i32) -> (i32, i32) {
    %c0_i32 = arith.constant 0 : i32
    %c0_i32_0 = arith.constant 0 : i32
    %c0_i32_1 = arith.constant 0 : i32
    return %c0_i32, %c0_i32_0 : i32, i32
  }
}

</mosaic_0001>

<llo_original>
// kernel: state_encoder_forward.4
$region0: #{state_encoder_forward.4}
  #allocation0 [shape = 'u32[]', space=smem, size = 0x4, offset = 0x4, fixed_abs, tag = 'smem constant byte address 0x4 - core index']
  #allocation1 [shape = 'u32[144,128]{1,0:T(1,128)}', space=vmem, size = 0x12000, scoped, tag = 'internal scratch']
  %s0 = inlined_call_operand.vmem [shape: bf16[3200,64], index: 0, kind: input, shape index: {}]
  %s1 = inlined_call_operand.vmem [shape: bf16[64,32], index: 1, kind: input, shape index: {}]
  %s2 = inlined_call_operand.vmem [shape: f32[1,32], index: 2, kind: input, shape index: {}]
  %s3 = inlined_call_operand.vmem [shape: f32[1,32], index: 3, kind: input, shape index: {}]
  %s4 = inlined_call_operand.vmem [shape: bf16[3200,32], index: 4, kind: output, shape index: {}]
  %s5 = sld [smem:[#allocation0]]
  $region49: #{state_encoder_forward.4} parent=0
    _
  %s7 = ssub.s32 1, %s5
  %s8 = scalar_select 0, %s7, %s5
  loop: start=0, step=1, limit=4
  $region2: #{state_encoder_forward.4} parent=0 // loop_pre_header
    _
  $region3: #{state_encoder_forward.4} parent=0 // loop_header
    %s10 = sphi 0, %s14
    %p11 = scmp.ge.s32.totalorder %s10, 4
    %s20 = sphi 0, %s22
    %s23 = sphi 0, %s20
    %s24 = sphi 0, %s23
    %s40 = sphi 0, %s24
    %s44 = sphi 0, %s44
    %s46 = sphi 0, %s44
    %s47 = sphi 0, %s46
    %s61 = sphi 0, %s47
    %s65 = sphi 0, %s65
    %s67 = sphi 0, %s65
    %s68 = sphi 0, %s67
    %s82 = sphi 0, %s68
    %s86 = sphi 0, %s86
    %s88 = sphi 0, %s86
    %s89 = sphi 0, %s88
    %s103 = sphi 0, %s89
    %s109 = sphi 0, %s111
    %s112 = sphi 0, %s109
    %s113 = sphi 0, %s112
    %s129 = sphi 0, %s113
  $region4: #{state_encoder_forward.4} parent=0 // loop_header_branch
    %13 = sbr.rel (%p11) target = $region8
  $region5: #{state_encoder_forward.4} parent=0 // loop_body
    %s15 = ssub.s32 %s10, 1
    %s16 = ssub.s32 %s10, 2
    %s17 = sadd.s32 %s10, 1
    %s18 = ssub.s32 %s10, %s17
    %p19 = scmp.eq.s32.totalorder %s18, 0
    %s21 = sadd.s32 %s20, 1
    %s22 = scalar_select %p19, %s20, %s21
    %p25 = pneg %p19
    %p26 = scmp.eq.s32.totalorder %s10, 1
    %p27 = por %p25, %p26
    %p28 = scmp.ne.s32.totalorder %s20, %s23
    %p29 = scmp.eq.s32.totalorder %s10, 0
    %p30 = por %p28, %p29
    %p31 = scmp.ne.s32.totalorder %s20, %s23
    %p32 = scmp.eq.s32.totalorder %s15, 1
    %p33 = por %p31, %p32
    %p34 = scmp.ne.s32.totalorder %s23, %s24
    %p35 = scmp.eq.s32.totalorder %s15, 0
    %p36 = por %p34, %p35
    %p37 = scmp.ne.s32.totalorder %s23, %s24
    %p38 = scmp.eq.s32.totalorder %s16, 1
    %p39 = por %p37, %p38
    %p41 = scmp.ne.s32.totalorder %s24, %s40
    %p42 = scmp.eq.s32.totalorder %s16, 0
    %p43 = por %p41, %p42
    %s45 = sadd.s32 %s44, 1
    %p48 = scmp.eq.s32.totalorder %s10, 1
    %p49 = scmp.ne.s32.totalorder %s44, %s46
    %p50 = scmp.eq.s32.totalorder %s10, 0
    %p51 = por %p49, %p50
    %p52 = scmp.ne.s32.totalorder %s44, %s46
    %p53 = scmp.eq.s32.totalorder %s15, 1
    %p54 = por %p52, %p53
    %p55 = scmp.ne.s32.totalorder %s46, %s47
    %p56 = scmp.eq.s32.totalorder %s15, 0
    %p57 = por %p55, %p56
    %p58 = scmp.ne.s32.totalorder %s46, %s47
    %p59 = scmp.eq.s32.totalorder %s16, 1
    %p60 = por %p58, %p59
    %p62 = scmp.ne.s32.totalorder %s47, %s61
    %p63 = scmp.eq.s32.totalorder %s16, 0
    %p64 = por %p62, %p63
    %s66 = sadd.s32 %s65, 1
    %p69 = scmp.eq.s32.totalorder %s10, 1
    %p70 = scmp.ne.s32.totalorder %s65, %s67
    %p71 = scmp.eq.s32.totalorder %s10, 0
    %p72 = por %p70, %p71
    %p73 = scmp.ne.s32.totalorder %s65, %s67
    %p74 = scmp.eq.s32.totalorder %s15, 1
    %p75 = por %p73, %p74
    %p76 = scmp.ne.s32.totalorder %s67, %s68
    %p77 = scmp.eq.s32.totalorder %s15, 0
    %p78 = por %p76, %p77
    %p79 = scmp.ne.s32.totalorder %s67, %s68
    %p80 = scmp.eq.s32.totalorder %s16, 1
    %p81 = por %p79, %p80
    %p83 = scmp.ne.s32.totalorder %s68, %s82
    %p84 = scmp.eq.s32.totalorder %s16, 0
    %p85 = por %p83, %p84
    %s87 = sadd.s32 %s86, 1
    %p90 = scmp.eq.s32.totalorder %s10, 1
    %p91 = scmp.ne.s32.totalorder %s86, %s88
    %p92 = scmp.eq.s32.totalorder %s10, 0
    %p93 = por %p91, %p92
    %p94 = scmp.ne.s32.totalorder %s86, %s88
    %p95 = scmp.eq.s32.totalorder %s15, 1
    %p96 = por %p94, %p95
    %p97 = scmp.ne.s32.totalorder %s88, %s89
    %p98 = scmp.eq.s32.totalorder %s15, 0
    %p99 = por %p97, %p98
    %p100 = scmp.ne.s32.totalorder %s88, %s89
    %p101 = scmp.eq.s32.totalorder %s16, 1
    %p102 = por %p100, %p101
    %p104 = scmp.ne.s32.totalorder %s89, %s103
    %p105 = scmp.eq.s32.totalorder %s16, 0
    %p106 = por %p104, %p105
    %s107 = ssub.s32 %s10, %s17
    %p108 = scmp.eq.s32.totalorder %s107, 0
    %s110 = sadd.s32 %s109, 1
    %s111 = scalar_select %p108, %s109, %s110
    %p114 = pneg %p108
    %p115 = scmp.eq.s32.totalorder %s10, 1
    %p116 = por %p114, %p115
    %p117 = scmp.ne.s32.totalorder %s109, %s112
    %p118 = scmp.eq.s32.totalorder %s10, 0
    %p119 = por %p117, %p118
    %p120 = scmp.ne.s32.totalorder %s109, %s112
    %p121 = scmp.eq.s32.totalorder %s15, 1
    %p122 = por %p120, %p121
    %p123 = scmp.ne.s32.totalorder %s112, %s113
    %p124 = scmp.eq.s32.totalorder %s15, 0
    %p125 = por %p123, %p124
    %p126 = scmp.ne.s32.totalorder %s112, %s113
    %p127 = scmp.eq.s32.totalorder %s16, 1
    %p128 = por %p126, %p127
    %p130 = scmp.ne.s32.totalorder %s113, %s129
    %p131 = scmp.eq.s32.totalorder %s16, 0
    %p132 = por %p130, %p131
    %p133 = scmp.le.s32.totalorder 1, %s10
    %p134 = scmp.lt.s32.totalorder %s10, 3
    %p135 = pnand %p133, %p134
    %p136 = pneg %p135
    // Predicated region
    $region9: #{state_encoder_forward.4} parent=5 // pred_check
      _
    $region10: #{state_encoder_forward.4} parent=5 // pred_check_branch
      %138 = sbr.rel (%p135) target = $region12
    $region11: #{state_encoder_forward.4} parent=5 // pred_region
      %s139 = ssub.s32 %s10, 1
      // Predicated region
      $region13: #{state_encoder_forward.4} parent=11 // pred_check
        %p140 = pneg %p57
      $region14: #{state_encoder_forward.4} parent=11 // pred_check_branch
        %142 = sbr.rel (%p140) target = $region16
      $region15: #{state_encoder_forward.4} parent=11 // pred_region
        _
      $region16: #{state_encoder_forward.4} parent=11 // pred_fallthru
        _
      // Predicated region
      $region17: #{state_encoder_forward.4} parent=11 // pred_check
        %p143 = pneg %p78
      $region18: #{state_encoder_forward.4} parent=11 // pred_check_branch
        %145 = sbr.rel (%p143) target = $region20
      $region19: #{state_encoder_forward.4} parent=11 // pred_region
        _
      $region20: #{state_encoder_forward.4} parent=11 // pred_fallthru
        _
      // Predicated region
      $region21: #{state_encoder_forward.4} parent=11 // pred_check
        %p146 = pneg %p99
      $region22: #{state_encoder_forward.4} parent=11 // pred_check_branch
        %148 = sbr.rel (%p146) target = $region24
      $region23: #{state_encoder_forward.4} parent=11 // pred_region
        _
      $region24: #{state_encoder_forward.4} parent=11 // pred_fallthru
        _
    $region12: #{state_encoder_forward.4} parent=5 // pred_fallthru
      _
    %p149 = scmp.lt.s32.totalorder %s10, 2
    // Predicated region
    $region25: #{state_encoder_forward.4} parent=5 // pred_check
      %p150 = pneg %p149
    $region26: #{state_encoder_forward.4} parent=5 // pred_check_branch
      %152 = sbr.rel (%p150) target = $region28
    $region27: #{state_encoder_forward.4} parent=5 // pred_region
      // Predicated region
      $region29: #{state_encoder_forward.4} parent=27 // pred_check
        %p153 = pneg %p30
      $region30: #{state_encoder_forward.4} parent=27 // pred_check_branch
        %155 = sbr.rel (%p153) target = $region32
      $region31: #{state_encoder_forward.4} parent=27 // pred_region
        %s156 = smul.u32 200, %s10
        %p157 = scmp.lt.s32.totalorder %s156, 399
        %s158 = scalar_select %p157, %s156, 399
        %s159 = smul.addr %s158, 4
        %s160 = scalar_lea.vmem %s0, %s159
        %s161 = smul.u32 200, %s10
      $region32: #{state_encoder_forward.4} parent=27 // pred_fallthru
        _
    $region28: #{state_encoder_forward.4} parent=5 // pred_fallthru
      _
    %p162 = scmp.le.s32.totalorder 1, %s10
    %p163 = scmp.lt.s32.totalorder %s10, 3
    %p164 = pnand %p162, %p163
    %p165 = pneg %p164
    // Predicated region
    $region33: #{state_encoder_forward.4} parent=5 // pred_check
      _
    $region34: #{state_encoder_forward.4} parent=5 // pred_check_branch
      %167 = sbr.rel (%p164) target = $region36
    $region35: #{state_encoder_forward.4} parent=5 // pred_region
      %s168 = ssub.s32 %s10, 1
      %s169 = smul.u32 200, %s15
      %p170 = scmp.lt.s32.totalorder %s169, 399
      %s171 = scalar_select %p170, %s169, 399
      %s172 = smul.addr %s171, 4
      %s173 = scalar_lea.vmem %s0, %s172
      %p174 = pneg %p36
      %p175 = pneg %p33
      %p176 = pneg %p57
      %p177 = pneg %p54
      %p178 = pneg %p78
      %p179 = pneg %p75
      %p180 = pneg %p99
      %p181 = pneg %p96
      %p182 = pneg %p125
      %p183 = pneg %p122
      %s184 = smul.u32 200, %s15
      %p185 = scmp.lt.s32.totalorder %s184, 399
      %s186 = scalar_select %p185, %s184, 399
      %s187 = smul.addr %s186, 4
      %s188 = scalar_lea.vmem %s4, %s187
      %s189 = smul.u32 200, %s15
      %p190 = scmp.lt.s32.totalorder %s189, 399
      %s191 = scalar_select %p190, %s189, 399
      %s192 = smul.addr %s191, 4
      %s193 = scalar_lea.vmem %s0, %s192
      %s194 = smul.u32 200, %s15
      %s195 = smul.u32 200, %s15
      %p196 = scmp.lt.s32.totalorder %s195, 399
      %s197 = scalar_select %p196, %s195, 399
      %s198 = smul.addr %s197, 4
      %s199 = scalar_lea.vmem %s4, %s198
      %s200 = smul.u32 200, %s15
      %v202 = vld [vmem:[%s193] sm:$0xf]
      %v203 = vld [vmem:[%s193 + $0x4] sm:$0xf]
      %v204 = vld [vmem:[%s193 + $0x8] sm:$0xf]
      %v205 = vld [vmem:[%s193 + $0xc] sm:$0xf]
      %v206 = vld [vmem:[%s193 + $0x10] sm:$0xf]
      %v207 = vld [vmem:[%s193 + $0x14] sm:$0xf]
      %v208 = vld [vmem:[%s193 + $0x18] sm:$0xf]
      %v209 = vld [vmem:[%s193 + $0x1c] sm:$0xf]
      %v210 = vld [vmem:[%s193 + $0x20] sm:$0xf]
      %v211 = vld [vmem:[%s193 + $0x24] sm:$0xf]
      %v212 = vld [vmem:[%s193 + $0x28] sm:$0xf]
      %v213 = vld [vmem:[%s193 + $0x2c] sm:$0xf]
      %v214 = vld [vmem:[%s193 + $0x30] sm:$0xf]
      %v215 = vld [vmem:[%s193 + $0x34] sm:$0xf]
      %v216 = vld [vmem:[%s193 + $0x38] sm:$0xf]
      %v217 = vld [vmem:[%s193 + $0x3c] sm:$0xf]
      %v218 = vld [vmem:[%s193 + $0x40] sm:$0xf]
      %v219 = vld [vmem:[%s193 + $0x44] sm:$0xf]
      %v220 = vld [vmem:[%s193 + $0x48] sm:$0xf]
      %v221 = vld [vmem:[%s193 + $0x4c] sm:$0xf]
      %v222 = vld [vmem:[%s193 + $0x50] sm:$0xf]
      %v223 = vld [vmem:[%s193 + $0x54] sm:$0xf]
      %v224 = vld [vmem:[%s193 + $0x58] sm:$0xf]
      %v225 = vld [vmem:[%s193 + $0x5c] sm:$0xf]
      %v226 = vld [vmem:[%s193 + $0x60] sm:$0xf]
      %v227 = vld [vmem:[%s193 + $0x64] sm:$0xf]
      %v228 = vld [vmem:[%s193 + $0x68] sm:$0xf]
      %v229 = vld [vmem:[%s193 + $0x6c] sm:$0xf]
      %v230 = vld [vmem:[%s193 + $0x70] sm:$0xf]
      %v231 = vld [vmem:[%s193 + $0x74] sm:$0xf]
      %v232 = vld [vmem:[%s193 + $0x78] sm:$0xf]
      %v233 = vld [vmem:[%s193 + $0x7c] sm:$0xf]
      %v234 = vld [vmem:[%s193 + $0x80] sm:$0xf]
      %v235 = vld [vmem:[%s193 + $0x84] sm:$0xf]
      %v236 = vld [vmem:[%s193 + $0x88] sm:$0xf]
      %v237 = vld [vmem:[%s193 + $0x8c] sm:$0xf]
      %v238 = vld [vmem:[%s193 + $0x90] sm:$0xf]
      %v239 = vld [vmem:[%s193 + $0x94] sm:$0xf]
      %v240 = vld [vmem:[%s193 + $0x98] sm:$0xf]
      %v241 = vld [vmem:[%s193 + $0x9c] sm:$0xf]
      %v242 = vld [vmem:[%s193 + $0xa0] sm:$0xf]
      %v243 = vld [vmem:[%s193 + $0xa4] sm:$0xf]
      %v244 = vld [vmem:[%s193 + $0xa8] sm:$0xf]
      %v245 = vld [vmem:[%s193 + $0xac] sm:$0xf]
      %v246 = vld [vmem:[%s193 + $0xb0] sm:$0xf]
      %v247 = vld [vmem:[%s193 + $0xb4] sm:$0xf]
      %v248 = vld [vmem:[%s193 + $0xb8] sm:$0xf]
      %v249 = vld [vmem:[%s193 + $0xbc] sm:$0xf]
      %v250 = vld [vmem:[%s193 + $0xc0] sm:$0xf]
      %v251 = vld [vmem:[%s193 + $0xc4] sm:$0xf]
      %v252 = vld [vmem:[%s193 + $0xc8] sm:$0xf]
      %v253 = vld [vmem:[%s193 + $0xcc] sm:$0xf]
      %v254 = vld [vmem:[%s193 + $0xd0] sm:$0xf]
      %v255 = vld [vmem:[%s193 + $0xd4] sm:$0xf]
      %v256 = vld [vmem:[%s193 + $0xd8] sm:$0xf]
      %v257 = vld [vmem:[%s193 + $0xdc] sm:$0xf]
      %v258 = vld [vmem:[%s193 + $0xe0] sm:$0xf]
      %v259 = vld [vmem:[%s193 + $0xe4] sm:$0xf]
      %v260 = vld [vmem:[%s193 + $0xe8] sm:$0xf]
      %v261 = vld [vmem:[%s193 + $0xec] sm:$0xf]
      %v262 = vld [vmem:[%s193 + $0xf0] sm:$0xf]
      %v263 = vld [vmem:[%s193 + $0xf4] sm:$0xf]
      %v264 = vld [vmem:[%s193 + $0xf8] sm:$0xf]
      %v265 = vld [vmem:[%s193 + $0xfc] sm:$0xf]
      %v266 = vld [vmem:[%s193 + $0x100] sm:$0xf]
      %v267 = vld [vmem:[%s193 + $0x104] sm:$0xf]
      %v268 = vld [vmem:[%s193 + $0x108] sm:$0xf]
      %v269 = vld [vmem:[%s193 + $0x10c] sm:$0xf]
      %v270 = vld [vmem:[%s193 + $0x110] sm:$0xf]
      %v271 = vld [vmem:[%s193 + $0x114] sm:$0xf]
      %v272 = vld [vmem:[%s193 + $0x118] sm:$0xf]
      %v273 = vld [vmem:[%s193 + $0x11c] sm:$0xf]
      %v274 = vld [vmem:[%s193 + $0x120] sm:$0xf]
      %v275 = vld [vmem:[%s193 + $0x124] sm:$0xf]
      %v276 = vld [vmem:[%s193 + $0x128] sm:$0xf]
      %v277 = vld [vmem:[%s193 + $0x12c] sm:$0xf]
      %v278 = vld [vmem:[%s193 + $0x130] sm:$0xf]
      %v279 = vld [vmem:[%s193 + $0x134] sm:$0xf]
      %v280 = vld [vmem:[%s193 + $0x138] sm:$0xf]
      %v281 = vld [vmem:[%s193 + $0x13c] sm:$0xf]
      %v282 = vld [vmem:[%s193 + $0x140] sm:$0xf]
      %v283 = vld [vmem:[%s193 + $0x144] sm:$0xf]
      %v284 = vld [vmem:[%s193 + $0x148] sm:$0xf]
      %v285 = vld [vmem:[%s193 + $0x14c] sm:$0xf]
      %v286 = vld [vmem:[%s193 + $0x150] sm:$0xf]
      %v287 = vld [vmem:[%s193 + $0x154] sm:$0xf]
      %v288 = vld [vmem:[%s193 + $0x158] sm:$0xf]
      %v289 = vld [vmem:[%s193 + $0x15c] sm:$0xf]
      %v290 = vld [vmem:[%s193 + $0x160] sm:$0xf]
      %v291 = vld [vmem:[%s193 + $0x164] sm:$0xf]
      %v292 = vld [vmem:[%s193 + $0x168] sm:$0xf]
      %v293 = vld [vmem:[%s193 + $0x16c] sm:$0xf]
      %v294 = vld [vmem:[%s193 + $0x170] sm:$0xf]
      %v295 = vld [vmem:[%s193 + $0x174] sm:$0xf]
      %v296 = vld [vmem:[%s193 + $0x178] sm:$0xf]
      %v297 = vld [vmem:[%s193 + $0x17c] sm:$0xf]
      %v298 = vld [vmem:[%s193 + $0x180] sm:$0xf]
      %v299 = vld [vmem:[%s193 + $0x184] sm:$0xf]
      %v300 = vld [vmem:[%s193 + $0x188] sm:$0xf]
      %v301 = vld [vmem:[%s193 + $0x18c] sm:$0xf]
      %v302 = vld [vmem:[%s193 + $0x190] sm:$0xf]
      %v303 = vld [vmem:[%s193 + $0x194] sm:$0xf]
      %v304 = vld [vmem:[%s193 + $0x198] sm:$0xf]
      %v305 = vld [vmem:[%s193 + $0x19c] sm:$0xf]
      %v306 = vld [vmem:[%s193 + $0x1a0] sm:$0xf]
      %v307 = vld [vmem:[%s193 + $0x1a4] sm:$0xf]
      %v308 = vld [vmem:[%s193 + $0x1a8] sm:$0xf]
      %v309 = vld [vmem:[%s193 + $0x1ac] sm:$0xf]
      %v310 = vld [vmem:[%s193 + $0x1b0] sm:$0xf]
      %v311 = vld [vmem:[%s193 + $0x1b4] sm:$0xf]
      %v312 = vld [vmem:[%s193 + $0x1b8] sm:$0xf]
      %v313 = vld [vmem:[%s193 + $0x1bc] sm:$0xf]
      %v314 = vld [vmem:[%s193 + $0x1c0] sm:$0xf]
      %v315 = vld [vmem:[%s193 + $0x1c4] sm:$0xf]
      %v316 = vld [vmem:[%s193 + $0x1c8] sm:$0xf]
      %v317 = vld [vmem:[%s193 + $0x1cc] sm:$0xf]
      %v318 = vld [vmem:[%s193 + $0x1d0] sm:$0xf]
      %v319 = vld [vmem:[%s193 + $0x1d4] sm:$0xf]
      %v320 = vld [vmem:[%s193 + $0x1d8] sm:$0xf]
      %v321 = vld [vmem:[%s193 + $0x1dc] sm:$0xf]
      %v322 = vld [vmem:[%s193 + $0x1e0] sm:$0xf]
      %v323 = vld [vmem:[%s193 + $0x1e4] sm:$0xf]
      %v324 = vld [vmem:[%s193 + $0x1e8] sm:$0xf]
      %v325 = vld [vmem:[%s193 + $0x1ec] sm:$0xf]
      %v326 = vld [vmem:[%s193 + $0x1f0] sm:$0xf]
      %v327 = vld [vmem:[%s193 + $0x1f4] sm:$0xf]
      %v328 = vld [vmem:[%s193 + $0x1f8] sm:$0xf]
      %v329 = vld [vmem:[%s193 + $0x1fc] sm:$0xf]
      %v330 = vld [vmem:[%s193 + $0x200] sm:$0xf]
      %v331 = vld [vmem:[%s193 + $0x204] sm:$0xf]
      %v332 = vld [vmem:[%s193 + $0x208] sm:$0xf]
      %v333 = vld [vmem:[%s193 + $0x20c] sm:$0xf]
      %v334 = vld [vmem:[%s193 + $0x210] sm:$0xf]
      %v335 = vld [vmem:[%s193 + $0x214] sm:$0xf]
      %v336 = vld [vmem:[%s193 + $0x218] sm:$0xf]
      %v337 = vld [vmem:[%s193 + $0x21c] sm:$0xf]
      %v338 = vld [vmem:[%s193 + $0x220] sm:$0xf]
      %v339 = vld [vmem:[%s193 + $0x224] sm:$0xf]
      %v340 = vld [vmem:[%s193 + $0x228] sm:$0xf]
      %v341 = vld [vmem:[%s193 + $0x22c] sm:$0xf]
      %v342 = vld [vmem:[%s193 + $0x230] sm:$0xf]
      %v343 = vld [vmem:[%s193 + $0x234] sm:$0xf]
      %v344 = vld [vmem:[%s193 + $0x238] sm:$0xf]
      %v345 = vld [vmem:[%s193 + $0x23c] sm:$0xf]
      %v346 = vld [vmem:[%s193 + $0x240] sm:$0xf]
      %v347 = vld [vmem:[%s193 + $0x244] sm:$0xf]
      %v348 = vld [vmem:[%s193 + $0x248] sm:$0xf]
      %v349 = vld [vmem:[%s193 + $0x24c] sm:$0xf]
      %v350 = vld [vmem:[%s193 + $0x250] sm:$0xf]
      %v351 = vld [vmem:[%s193 + $0x254] sm:$0xf]
      %v352 = vld [vmem:[%s193 + $0x258] sm:$0xf]
      %v353 = vld [vmem:[%s193 + $0x25c] sm:$0xf]
      %v354 = vld [vmem:[%s193 + $0x260] sm:$0xf]
      %v355 = vld [vmem:[%s193 + $0x264] sm:$0xf]
      %v356 = vld [vmem:[%s193 + $0x268] sm:$0xf]
      %v357 = vld [vmem:[%s193 + $0x26c] sm:$0xf]
      %v358 = vld [vmem:[%s193 + $0x270] sm:$0xf]
      %v359 = vld [vmem:[%s193 + $0x274] sm:$0xf]
      %v360 = vld [vmem:[%s193 + $0x278] sm:$0xf]
      %v361 = vld [vmem:[%s193 + $0x27c] sm:$0xf]
      %v362 = vld [vmem:[%s193 + $0x280] sm:$0xf]
      %v363 = vld [vmem:[%s193 + $0x284] sm:$0xf]
      %v364 = vld [vmem:[%s193 + $0x288] sm:$0xf]
      %v365 = vld [vmem:[%s193 + $0x28c] sm:$0xf]
      %v366 = vld [vmem:[%s193 + $0x290] sm:$0xf]
      %v367 = vld [vmem:[%s193 + $0x294] sm:$0xf]
      %v368 = vld [vmem:[%s193 + $0x298] sm:$0xf]
      %v369 = vld [vmem:[%s193 + $0x29c] sm:$0xf]
      %v370 = vld [vmem:[%s193 + $0x2a0] sm:$0xf]
      %v371 = vld [vmem:[%s193 + $0x2a4] sm:$0xf]
      %v372 = vld [vmem:[%s193 + $0x2a8] sm:$0xf]
      %v373 = vld [vmem:[%s193 + $0x2ac] sm:$0xf]
      %v374 = vld [vmem:[%s193 + $0x2b0] sm:$0xf]
      %v375 = vld [vmem:[%s193 + $0x2b4] sm:$0xf]
      %v376 = vld [vmem:[%s193 + $0x2b8] sm:$0xf]
      %v377 = vld [vmem:[%s193 + $0x2bc] sm:$0xf]
      %v378 = vld [vmem:[%s193 + $0x2c0] sm:$0xf]
      %v379 = vld [vmem:[%s193 + $0x2c4] sm:$0xf]
      %v380 = vld [vmem:[%s193 + $0x2c8] sm:$0xf]
      %v381 = vld [vmem:[%s193 + $0x2cc] sm:$0xf]
      %v382 = vld [vmem:[%s193 + $0x2d0] sm:$0xf]
      %v383 = vld [vmem:[%s193 + $0x2d4] sm:$0xf]
      %v384 = vld [vmem:[%s193 + $0x2d8] sm:$0xf]
      %v385 = vld [vmem:[%s193 + $0x2dc] sm:$0xf]
      %v386 = vld [vmem:[%s193 + $0x2e0] sm:$0xf]
      %v387 = vld [vmem:[%s193 + $0x2e4] sm:$0xf]
      %v388 = vld [vmem:[%s193 + $0x2e8] sm:$0xf]
      %v389 = vld [vmem:[%s193 + $0x2ec] sm:$0xf]
      %v390 = vld [vmem:[%s193 + $0x2f0] sm:$0xf]
      %v391 = vld [vmem:[%s193 + $0x2f4] sm:$0xf]
      %v392 = vld [vmem:[%s193 + $0x2f8] sm:$0xf]
      %v393 = vld [vmem:[%s193 + $0x2fc] sm:$0xf]
      %v394 = vld [vmem:[%s193 + $0x300] sm:$0xf]
      %v395 = vld [vmem:[%s193 + $0x304] sm:$0xf]
      %v396 = vld [vmem:[%s193 + $0x308] sm:$0xf]
      %v397 = vld [vmem:[%s193 + $0x30c] sm:$0xf]
      %v398 = vld [vmem:[%s193 + $0x310] sm:$0xf]
      %v399 = vld [vmem:[%s193 + $0x314] sm:$0xf]
      %v400 = vld [vmem:[%s193 + $0x318] sm:$0xf]
      %v401 = vld [vmem:[%s193 + $0x31c] sm:$0xf]
      %v402 = vld [vmem:[%s1] sm:$0xf]
      %v403 = vld [vmem:[%s1 + $0x4] sm:$0xf]
      %v404 = vld [vmem:[%s1 + $0x8] sm:$0xf]
      %v405 = vld [vmem:[%s1 + $0xc] sm:$0xf]
      %v406 = vld [vmem:[%s1 + $0x10] sm:$0xf]
      %v407 = vld [vmem:[%s1 + $0x14] sm:$0xf]
      %v408 = vld [vmem:[%s1 + $0x18] sm:$0xf]
      %v409 = vld [vmem:[%s1 + $0x1c] sm:$0xf]
      %v610 = vunpack.c.l.b16 %v202
      %v611 = vunpack.c.l.b16 %v203
      %v612 = vunpack.c.l.b16 %v204
      %v613 = vunpack.c.l.b16 %v205
      %v614 = vunpack.c.l.b16 %v206
      %v615 = vunpack.c.l.b16 %v207
      %v616 = vunpack.c.l.b16 %v208
      %v617 = vunpack.c.l.b16 %v209
      %v618 = vunpack.c.l.b16 %v210
      %v619 = vunpack.c.l.b16 %v211
      %v620 = vunpack.c.l.b16 %v212
      %v621 = vunpack.c.l.b16 %v213
      %v622 = vunpack.c.l.b16 %v214
      %v623 = vunpack.c.l.b16 %v215
      %v624 = vunpack.c.l.b16 %v216
      %v625 = vunpack.c.l.b16 %v217
      %v626 = vunpack.c.l.b16 %v218
      %v627 = vunpack.c.l.b16 %v219
      %v628 = vunpack.c.l.b16 %v220
      %v629 = vunpack.c.l.b16 %v221
      %v630 = vunpack.c.l.b16 %v222
      %v631 = vunpack.c.l.b16 %v223
      %v632 = vunpack.c.l.b16 %v224
      %v633 = vunpack.c.l.b16 %v225
      %v634 = vunpack.c.l.b16 %v226
      %v635 = vunpack.c.l.b16 %v227
      %v636 = vunpack.c.l.b16 %v228
      %v637 = vunpack.c.l.b16 %v229
      %v638 = vunpack.c.l.b16 %v230
      %v639 = vunpack.c.l.b16 %v231
      %v640 = vunpack.c.l.b16 %v232
      %v641 = vunpack.c.l.b16 %v233
      %v642 = vunpack.c.l.b16 %v234
      %v643 = vunpack.c.l.b16 %v235
      %v644 = vunpack.c.l.b16 %v236
      %v645 = vunpack.c.l.b16 %v237
      %v646 = vunpack.c.l.b16 %v238
      %v647 = vunpack.c.l.b16 %v239
      %v648 = vunpack.c.l.b16 %v240
      %v649 = vunpack.c.l.b16 %v241
      %v650 = vunpack.c.l.b16 %v242
      %v651 = vunpack.c.l.b16 %v243
      %v652 = vunpack.c.l.b16 %v244
      %v653 = vunpack.c.l.b16 %v245
      %v654 = vunpack.c.l.b16 %v246
      %v655 = vunpack.c.l.b16 %v247
      %v656 = vunpack.c.l.b16 %v248
      %v657 = vunpack.c.l.b16 %v249
      %v658 = vunpack.c.l.b16 %v250
      %v659 = vunpack.c.l.b16 %v251
      %v660 = vunpack.c.l.b16 %v252
      %v661 = vunpack.c.l.b16 %v253
      %v662 = vunpack.c.l.b16 %v254
      %v663 = vunpack.c.l.b16 %v255
      %v664 = vunpack.c.l.b16 %v256
      %v665 = vunpack.c.l.b16 %v257
      %v666 = vunpack.c.l.b16 %v258
      %v667 = vunpack.c.l.b16 %v259
      %v668 = vunpack.c.l.b16 %v260
      %v669 = vunpack.c.l.b16 %v261
      %v670 = vunpack.c.l.b16 %v262
      %v671 = vunpack.c.l.b16 %v263
      %v672 = vunpack.c.l.b16 %v264
      %v673 = vunpack.c.l.b16 %v265
      %v674 = vunpack.c.l.b16 %v266
      %v675 = vunpack.c.l.b16 %v267
      %v676 = vunpack.c.l.b16 %v268
      %v677 = vunpack.c.l.b16 %v269
      %v678 = vunpack.c.l.b16 %v270
      %v679 = vunpack.c.l.b16 %v271
      %v680 = vunpack.c.l.b16 %v272
      %v681 = vunpack.c.l.b16 %v273
      %v682 = vunpack.c.l.b16 %v274
      %v683 = vunpack.c.l.b16 %v275
      %v684 = vunpack.c.l.b16 %v276
      %v685 = vunpack.c.l.b16 %v277
      %v686 = vunpack.c.l.b16 %v278
      %v687 = vunpack.c.l.b16 %v279
      %v688 = vunpack.c.l.b16 %v280
      %v689 = vunpack.c.l.b16 %v281
      %v690 = vunpack.c.l.b16 %v282
      %v691 = vunpack.c.l.b16 %v283
      %v692 = vunpack.c.l.b16 %v284
      %v693 = vunpack.c.l.b16 %v285
      %v694 = vunpack.c.l.b16 %v286
      %v695 = vunpack.c.l.b16 %v287
      %v696 = vunpack.c.l.b16 %v288
      %v697 = vunpack.c.l.b16 %v289
      %v698 = vunpack.c.l.b16 %v290
      %v699 = vunpack.c.l.b16 %v291
      %v700 = vunpack.c.l.b16 %v292
      %v701 = vunpack.c.l.b16 %v293
      %v702 = vunpack.c.l.b16 %v294
      %v703 = vunpack.c.l.b16 %v295
      %v704 = vunpack.c.l.b16 %v296
      %v705 = vunpack.c.l.b16 %v297
      %v706 = vunpack.c.l.b16 %v298
      %v707 = vunpack.c.l.b16 %v299
      %v708 = vunpack.c.l.b16 %v300
      %v709 = vunpack.c.l.b16 %v301
      %v710 = vunpack.c.l.b16 %v302
      %v711 = vunpack.c.l.b16 %v303
      %v712 = vunpack.c.l.b16 %v304
      %v713 = vunpack.c.l.b16 %v305
      %v714 = vunpack.c.l.b16 %v306
      %v715 = vunpack.c.l.b16 %v307
      %v716 = vunpack.c.l.b16 %v308
      %v717 = vunpack.c.l.b16 %v309
      %v718 = vunpack.c.l.b16 %v310
      %v719 = vunpack.c.l.b16 %v311
      %v720 = vunpack.c.l.b16 %v312
      %v721 = vunpack.c.l.b16 %v313
      %v722 = vunpack.c.l.b16 %v314
      %v723 = vunpack.c.l.b16 %v315
      %v724 = vunpack.c.l.b16 %v316
      %v725 = vunpack.c.l.b16 %v317
      %v726 = vunpack.c.l.b16 %v318
      %v727 = vunpack.c.l.b16 %v319
      %v728 = vunpack.c.l.b16 %v320
      %v729 = vunpack.c.l.b16 %v321
      %v730 = vunpack.c.l.b16 %v322
      %v731 = vunpack.c.l.b16 %v323
      %v732 = vunpack.c.l.b16 %v324
      %v733 = vunpack.c.l.b16 %v325
      %v734 = vunpack.c.l.b16 %v326
      %v735 = vunpack.c.l.b16 %v327
      %v736 = vunpack.c.l.b16 %v328
      %v737 = vunpack.c.l.b16 %v329
      %v738 = vunpack.c.l.b16 %v330
      %v739 = vunpack.c.l.b16 %v331
      %v740 = vunpack.c.l.b16 %v332
      %v741 = vunpack.c.l.b16 %v333
      %v742 = vunpack.c.l.b16 %v334
      %v743 = vunpack.c.l.b16 %v335
      %v744 = vunpack.c.l.b16 %v336
      %v745 = vunpack.c.l.b16 %v337
      %v746 = vunpack.c.l.b16 %v338
      %v747 = vunpack.c.l.b16 %v339
      %v748 = vunpack.c.l.b16 %v340
      %v749 = vunpack.c.l.b16 %v341
      %v750 = vunpack.c.l.b16 %v342
      %v751 = vunpack.c.l.b16 %v343
      %v752 = vunpack.c.l.b16 %v344
      %v753 = vunpack.c.l.b16 %v345
      %v754 = vunpack.c.l.b16 %v346
      %v755 = vunpack.c.l.b16 %v347
      %v756 = vunpack.c.l.b16 %v348
      %v757 = vunpack.c.l.b16 %v349
      %v758 = vunpack.c.l.b16 %v350
      %v759 = vunpack.c.l.b16 %v351
      %v760 = vunpack.c.l.b16 %v352
      %v761 = vunpack.c.l.b16 %v353
      %v762 = vunpack.c.l.b16 %v354
      %v763 = vunpack.c.l.b16 %v355
      %v764 = vunpack.c.l.b16 %v356
      %v765 = vunpack.c.l.b16 %v357
      %v766 = vunpack.c.l.b16 %v358
      %v767 = vunpack.c.l.b16 %v359
      %v768 = vunpack.c.l.b16 %v360
      %v769 = vunpack.c.l.b16 %v361
      %v770 = vunpack.c.l.b16 %v362
      %v771 = vunpack.c.l.b16 %v363
      %v772 = vunpack.c.l.b16 %v364
      %v773 = vunpack.c.l.b16 %v365
      %v774 = vunpack.c.l.b16 %v366
      %v775 = vunpack.c.l.b16 %v367
      %v776 = vunpack.c.l.b16 %v368
      %v777 = vunpack.c.l.b16 %v369
      %v778 = vunpack.c.l.b16 %v370
      %v779 = vunpack.c.l.b16 %v371
      %v780 = vunpack.c.l.b16 %v372
      %v781 = vunpack.c.l.b16 %v373
      %v782 = vunpack.c.l.b16 %v374
      %v783 = vunpack.c.l.b16 %v375
      %v784 = vunpack.c.l.b16 %v376
      %v785 = vunpack.c.l.b16 %v377
      %v786 = vunpack.c.l.b16 %v378
      %v787 = vunpack.c.l.b16 %v379
      %v788 = vunpack.c.l.b16 %v380
      %v789 = vunpack.c.l.b16 %v381
      %v790 = vunpack.c.l.b16 %v382
      %v791 = vunpack.c.l.b16 %v383
      %v792 = vunpack.c.l.b16 %v384
      %v793 = vunpack.c.l.b16 %v385
      %v794 = vunpack.c.l.b16 %v386
      %v795 = vunpack.c.l.b16 %v387
      %v796 = vunpack.c.l.b16 %v388
      %v797 = vunpack.c.l.b16 %v389
      %v798 = vunpack.c.l.b16 %v390
      %v799 = vunpack.c.l.b16 %v391
      %v800 = vunpack.c.l.b16 %v392
      %v801 = vunpack.c.l.b16 %v393
      %v802 = vunpack.c.l.b16 %v394
      %v803 = vunpack.c.l.b16 %v395
      %v804 = vunpack.c.l.b16 %v396
      %v805 = vunpack.c.l.b16 %v397
      %v806 = vunpack.c.l.b16 %v398
      %v807 = vunpack.c.l.b16 %v399
      %v808 = vunpack.c.l.b16 %v400
      %v809 = vunpack.c.l.b16 %v401
      %v810 = vpack.c.b16 %v611, %v610
      %v811 = vpack.c.b16 %v613, %v612
      %v812 = vpack.c.b16 %v615, %v614
      %v813 = vpack.c.b16 %v617, %v616
      %v814 = vpack.c.b16 %v619, %v618
      %v815 = vpack.c.b16 %v621, %v620
      %v816 = vpack.c.b16 %v623, %v622
      %v817 = vpack.c.b16 %v625, %v624
      %v818 = vpack.c.b16 %v627, %v626
      %v819 = vpack.c.b16 %v629, %v628
      %v820 = vpack.c.b16 %v631, %v630
      %v821 = vpack.c.b16 %v633, %v632
      %v822 = vpack.c.b16 %v635, %v634
      %v823 = vpack.c.b16 %v637, %v636
      %v824 = vpack.c.b16 %v639, %v638
      %v825 = vpack.c.b16 %v641, %v640
      %v826 = vpack.c.b16 %v643, %v642
      %v827 = vpack.c.b16 %v645, %v644
      %v828 = vpack.c.b16 %v647, %v646
      %v829 = vpack.c.b16 %v649, %v648
      %v830 = vpack.c.b16 %v651, %v650
      %v831 = vpack.c.b16 %v653, %v652
      %v832 = vpack.c.b16 %v655, %v654
      %v833 = vpack.c.b16 %v657, %v656
      %v834 = vpack.c.b16 %v659, %v658
      %v835 = vpack.c.b16 %v661, %v660
      %v836 = vpack.c.b16 %v663, %v662
      %v837 = vpack.c.b16 %v665, %v664
      %v838 = vpack.c.b16 %v667, %v666
      %v839 = vpack.c.b16 %v669, %v668
      %v840 = vpack.c.b16 %v671, %v670
      %v841 = vpack.c.b16 %v673, %v672
      %v842 = vpack.c.b16 %v675, %v674
      %v843 = vpack.c.b16 %v677, %v676
      %v844 = vpack.c.b16 %v679, %v678
      %v845 = vpack.c.b16 %v681, %v680
      %v846 = vpack.c.b16 %v683, %v682
      %v847 = vpack.c.b16 %v685, %v684
      %v848 = vpack.c.b16 %v687, %v686
      %v849 = vpack.c.b16 %v689, %v688
      %v850 = vpack.c.b16 %v691, %v690
      %v851 = vpack.c.b16 %v693, %v692
      %v852 = vpack.c.b16 %v695, %v694
      %v853 = vpack.c.b16 %v697, %v696
      %v854 = vpack.c.b16 %v699, %v698
      %v855 = vpack.c.b16 %v701, %v700
      %v856 = vpack.c.b16 %v703, %v702
      %v857 = vpack.c.b16 %v705, %v704
      %v858 = vpack.c.b16 %v707, %v706
      %v859 = vpack.c.b16 %v709, %v708
      %v860 = vpack.c.b16 %v711, %v710
      %v861 = vpack.c.b16 %v713, %v712
      %v862 = vpack.c.b16 %v715, %v714
      %v863 = vpack.c.b16 %v717, %v716
      %v864 = vpack.c.b16 %v719, %v718
      %v865 = vpack.c.b16 %v721, %v720
      %v866 = vpack.c.b16 %v723, %v722
      %v867 = vpack.c.b16 %v725, %v724
      %v868 = vpack.c.b16 %v727, %v726
      %v869 = vpack.c.b16 %v729, %v728
      %v870 = vpack.c.b16 %v731, %v730
      %v871 = vpack.c.b16 %v733, %v732
      %v872 = vpack.c.b16 %v735, %v734
      %v873 = vpack.c.b16 %v737, %v736
      %v874 = vpack.c.b16 %v739, %v738
      %v875 = vpack.c.b16 %v741, %v740
      %v876 = vpack.c.b16 %v743, %v742
      %v877 = vpack.c.b16 %v745, %v744
      %v878 = vpack.c.b16 %v747, %v746
      %v879 = vpack.c.b16 %v749, %v748
      %v880 = vpack.c.b16 %v751, %v750
      %v881 = vpack.c.b16 %v753, %v752
      %v882 = vpack.c.b16 %v755, %v754
      %v883 = vpack.c.b16 %v757, %v756
      %v884 = vpack.c.b16 %v759, %v758
      %v885 = vpack.c.b16 %v761, %v760
      %v886 = vpack.c.b16 %v763, %v762
      %v887 = vpack.c.b16 %v765, %v764
      %v888 = vpack.c.b16 %v767, %v766
      %v889 = vpack.c.b16 %v769, %v768
      %v890 = vpack.c.b16 %v771, %v770
      %v891 = vpack.c.b16 %v773, %v772
      %v892 = vpack.c.b16 %v775, %v774
      %v893 = vpack.c.b16 %v777, %v776
      %v894 = vpack.c.b16 %v779, %v778
      %v895 = vpack.c.b16 %v781, %v780
      %v896 = vpack.c.b16 %v783, %v782
      %v897 = vpack.c.b16 %v785, %v784
      %v898 = vpack.c.b16 %v787, %v786
      %v899 = vpack.c.b16 %v789, %v788
      %v900 = vpack.c.b16 %v791, %v790
      %v901 = vpack.c.b16 %v793, %v792
      %v902 = vpack.c.b16 %v795, %v794
      %v903 = vpack.c.b16 %v797, %v796
      %v904 = vpack.c.b16 %v799, %v798
      %v905 = vpack.c.b16 %v801, %v800
      %v906 = vpack.c.b16 %v803, %v802
      %v907 = vpack.c.b16 %v805, %v804
      %v908 = vpack.c.b16 %v807, %v806
      %v909 = vpack.c.b16 %v809, %v808
      %v918 = vunpack.c.l.b16 %v402
      %v919 = vunpack.c.l.b16 %v403
      %v920 = vunpack.c.l.b16 %v404
      %v921 = vunpack.c.l.b16 %v405
      %v922 = vunpack.c.l.b16 %v406
      %v923 = vunpack.c.l.b16 %v407
      %v924 = vunpack.c.l.b16 %v408
      %v925 = vunpack.c.l.b16 %v409
      %v926 = vpack.c.b16 %v919, %v918
      %v927 = vpack.c.b16 %v921, %v920
      %v928 = vpack.c.b16 %v923, %v922
      %v929 = vpack.c.b16 %v925, %v924
      %vm934 = vcmask 523264
      %v936 = vsel %vm934, %v810, 0
      %v939 = vsel %vm934, %v811, 0
      %v942 = vsel %vm934, %v812, 0
      %v945 = vsel %vm934, %v813, 0
      %v948 = vsel %vm934, %v814, 0
      %v951 = vsel %vm934, %v815, 0
      %v954 = vsel %vm934, %v816, 0
      %v957 = vsel %vm934, %v817, 0
      %v960 = vsel %vm934, %v818, 0
      %v963 = vsel %vm934, %v819, 0
      %v966 = vsel %vm934, %v820, 0
      %v969 = vsel %vm934, %v821, 0
      %v972 = vsel %vm934, %v822, 0
      %v975 = vsel %vm934, %v823, 0
      %v978 = vsel %vm934, %v824, 0
      %v981 = vsel %vm934, %v825, 0
      %v984 = vsel %vm934, %v826, 0
      %v987 = vsel %vm934, %v827, 0
      %v990 = vsel %vm934, %v828, 0
      %v993 = vsel %vm934, %v829, 0
      %v996 = vsel %vm934, %v830, 0
      %v999 = vsel %vm934, %v831, 0
      %v1002 = vsel %vm934, %v832, 0
      %v1005 = vsel %vm934, %v833, 0
      %v1008 = vsel %vm934, %v834, 0
      %v1011 = vsel %vm934, %v835, 0
      %v1014 = vsel %vm934, %v836, 0
      %v1017 = vsel %vm934, %v837, 0
      %v1020 = vsel %vm934, %v838, 0
      %v1023 = vsel %vm934, %v839, 0
      %v1026 = vsel %vm934, %v840, 0
      %v1029 = vsel %vm934, %v841, 0
      %v1032 = vsel %vm934, %v842, 0
      %v1035 = vsel %vm934, %v843, 0
      %v1038 = vsel %vm934, %v844, 0
      %v1041 = vsel %vm934, %v845, 0
      %v1044 = vsel %vm934, %v846, 0
      %v1047 = vsel %vm934, %v847, 0
      %v1050 = vsel %vm934, %v848, 0
      %v1053 = vsel %vm934, %v849, 0
      %v1056 = vsel %vm934, %v850, 0
      %v1059 = vsel %vm934, %v851, 0
      %v1062 = vsel %vm934, %v852, 0
      %v1065 = vsel %vm934, %v853, 0
      %v1068 = vsel %vm934, %v854, 0
      %v1071 = vsel %vm934, %v855, 0
      %v1074 = vsel %vm934, %v856, 0
      %v1077 = vsel %vm934, %v857, 0
      %v1080 = vsel %vm934, %v858, 0
      %v1083 = vsel %vm934, %v859, 0
      %v1086 = vsel %vm934, %v860, 0
      %v1089 = vsel %vm934, %v861, 0
      %v1092 = vsel %vm934, %v862, 0
      %v1095 = vsel %vm934, %v863, 0
      %v1098 = vsel %vm934, %v864, 0
      %v1101 = vsel %vm934, %v865, 0
      %v1104 = vsel %vm934, %v866, 0
      %v1107 = vsel %vm934, %v867, 0
      %v1110 = vsel %vm934, %v868, 0
      %v1113 = vsel %vm934, %v869, 0
      %v1116 = vsel %vm934, %v870, 0
      %v1119 = vsel %vm934, %v871, 0
      %v1122 = vsel %vm934, %v872, 0
      %v1125 = vsel %vm934, %v873, 0
      %v1128 = vsel %vm934, %v874, 0
      %v1131 = vsel %vm934, %v875, 0
      %v1134 = vsel %vm934, %v876, 0
      %v1137 = vsel %vm934, %v877, 0
      %v1140 = vsel %vm934, %v878, 0
      %v1143 = vsel %vm934, %v879, 0
      %v1146 = vsel %vm934, %v880, 0
      %v1149 = vsel %vm934, %v881, 0
      %v1152 = vsel %vm934, %v882, 0
      %v1155 = vsel %vm934, %v883, 0
      %v1158 = vsel %vm934, %v884, 0
      %v1161 = vsel %vm934, %v885, 0
      %v1164 = vsel %vm934, %v886, 0
      %v1167 = vsel %vm934, %v887, 0
      %v1170 = vsel %vm934, %v888, 0
      %v1173 = vsel %vm934, %v889, 0
      %v1176 = vsel %vm934, %v890, 0
      %v1179 = vsel %vm934, %v891, 0
      %v1182 = vsel %vm934, %v892, 0
      %v1185 = vsel %vm934, %v893, 0
      %v1188 = vsel %vm934, %v894, 0
      %v1191 = vsel %vm934, %v895, 0
      %v1194 = vsel %vm934, %v896, 0
      %v1197 = vsel %vm934, %v897, 0
      %v1200 = vsel %vm934, %v898, 0
      %v1203 = vsel %vm934, %v899, 0
      %v1206 = vsel %vm934, %v900, 0
      %v1209 = vsel %vm934, %v901, 0
      %v1212 = vsel %vm934, %v902, 0
      %v1215 = vsel %vm934, %v903, 0
      %v1218 = vsel %vm934, %v904, 0
      %v1221 = vsel %vm934, %v905, 0
      %v1224 = vsel %vm934, %v906, 0
      %v1227 = vsel %vm934, %v907, 0
      %v1230 = vsel %vm934, %v908, 0
      %v1233 = vsel %vm934, %v909, 0
      %1235 = vmatprep.subr.bf16.mxu0 0
      %1236 = vmatpush1.bf16.msra.mxu0 %v926
      %1237 = vmatprep.subr.bf16.mxu0 0
      %1238 = vmatpush1.bf16.msra.mxu0 %v927
      %1239 = vmatprep.subr.bf16.mxu0 0
      %1240 = vmatpush1.bf16.msra.mxu0 %v928
      %1241 = vmatprep.subr.bf16.mxu0 0
      %1242 = vmatpush1.bf16.msra.mxu0 %v929
      %1243 = vmatprep.subr.bf16.mxu0 0
      %1244 = vmatpush1.bf16.msra.mxu0 0
      %1245 = vmatprep.subr.bf16.mxu0 0
      %1246 = vmatpush1.bf16.msra.mxu0 0
      %1247 = vmatprep.subr.bf16.mxu0 0
      %1248 = vmatpush1.bf16.msra.mxu0 0
      %1249 = vmatprep.subr.bf16.mxu0 0
      %1250 = vmatpush1.bf16.msra.mxu0 0
      %1251 = vmatprep.subr.bf16.mxu0 0
      %1252 = vmatpush1.bf16.msra.mxu0 0
      %1253 = vmatprep.subr.bf16.mxu0 0
      %1254 = vmatpush1.bf16.msra.mxu0 0
      %1255 = vmatprep.subr.bf16.mxu0 0
      %1256 = vmatpush1.bf16.msra.mxu0 0
      %1257 = vmatprep.subr.bf16.mxu0 0
      %1258 = vmatpush1.bf16.msra.mxu0 0
      %1259 = vmatprep.subr.bf16.mxu0 0
      %1260 = vmatpush1.bf16.msra.mxu0 0
      %1261 = vmatprep.subr.bf16.mxu0 0
      %1262 = vmatpush1.bf16.msra.mxu0 0
      %1263 = vmatprep.subr.bf16.mxu0 0
      %1264 = vmatpush1.bf16.msra.mxu0 0
      %1265 = vmatprep.subr.bf16.mxu0 0
      %1266 = vmatpush1.bf16.msra.mxu0 0
      %1267 = vmatprep.mubr.bf16.mxu0 0
      %1268 = vmatmul.mubr.bf16.gmra.mrb[0].mxu0 %v936
      %v1269 = vpop.f32.mrb[0].mxu0
      %v1270 = vadd.f32 0.0, %v1269
      %v1271 = vpop.f32.mrb[0].mxu0
      %v1272 = vpop.f32.mrb[0].mxu0
      %v1273 = vadd.f32 0.0, %v1272
      %v1274 = vpop.f32.mrb[0].mxu0
      %1275 = vmatprep.mubr.bf16.mxu0 0
      %1276 = vmatmul.mubr.bf16.gmra.mrb[0].mxu0 %v939
      %v1277 = vpop.f32.mrb[0].mxu0
      %v1278 = vadd.f32 0.0, %v1277
      %v1279 = vpop.f32.mrb[0].mxu0
      %v1280 = vpop.f32.mrb[0].mxu0
      %v1281 = vadd.f32 0.0, %v1280
      %v1282 = vpop.f32.mrb[0].mxu0
      %1283 = vmatprep.mubr.bf16.mxu0 0
      %1284 = vmatmul.mubr.bf16.gmra.mrb[0].mxu0 %v942
      %v1285 = vpop.f32.mrb[0].mxu0
      %v1286 = vadd.f32 0.0, %v1285
      %v1287 = vpop.f32.mrb[0].mxu0
      %v1288 = vpop.f32.mrb[0].mxu0
      %v1289 = vadd.f32 0.0, %v1288
      %v1290 = vpop.f32.mrb[0].mxu0
      %1291 = vmatprep.mubr.bf16.mxu0 0
      %1292 = vmatmul.mubr.bf16.gmra.mrb[0].mxu0 %v945
      %v1293 = vpop.f32.mrb[0].mxu0
      %v1294 = vadd.f32 0.0, %v1293
      %v1295 = vpop.f32.mrb[0].mxu0
      %v1296 = vpop.f32.mrb[0].mxu0
      %v1297 = vadd.f32 0.0, %v1296
      %v1298 = vpop.f32.mrb[0].mxu0
      %1299 = vmatprep.mubr.bf16.mxu0 0
      %1300 = vmatmul.mubr.bf16.gmra.mrb[0].mxu0 %v948
      %v1301 = vpop.f32.mrb[0].mxu0
      %v1302 = vadd.f32 0.0, %v1301
      %v1303 = vpop.f32.mrb[0].mxu0
      %v1304 = vpop.f32.mrb[0].mxu0
      %v1305 = vadd.f32 0.0, %v1304
      %v1306 = vpop.f32.mrb[0].mxu0
      %1307 = vmatprep.mubr.bf16.mxu0 0
      %1308 = vmatmul.mubr.bf16.gmra.mrb[0].mxu0 %v951
      %v1309 = vpop.f32.mrb[0].mxu0
      %v1310 = vadd.f32 0.0, %v1309
      %v1311 = vpop.f32.mrb[0].mxu0
      %v1312 = vpop.f32.mrb[0].mxu0
      %v1313 = vadd.f32 0.0, %v1312
      %v1314 = vpop.f32.mrb[0].mxu0
      %1315 = vmatprep.mubr.bf16.mxu0 0
      %1316 = vmatmul.mubr.bf16.gmra.mrb[0].mxu0 %v954
      %v1317 = vpop.f32.mrb[0].mxu0
      %v1318 = vadd.f32 0.0, %v1317
      %v1319 = vpop.f32.mrb[0].mxu0
      %v1320 = vpop.f32.mrb[0].mxu0
      %v1321 = vadd.f32 0.0, %v1320
      %v1322 = vpop.f32.mrb[0].mxu0
      %1323 = vmatprep.mubr.bf16.mxu0 0
      %1324 = vmatmul.mubr.bf16.gmra.mrb[0].mxu0 %v957
      %v1325 = vpop.f32.mrb[0].mxu0
      %v1326 = vadd.f32 0.0, %v1325
      %v1327 = vpop.f32.mrb[0].mxu0
      %v1328 = vpop.f32.mrb[0].mxu0
      %v1329 = vadd.f32 0.0, %v1328
      %v1330 = vpop.f32.mrb[0].mxu0
      %1331 = vmatprep.mubr.bf16.mxu0 0
      %1332 = vmatmul.mubr.bf16.gmra.mrb[0].mxu0 %v960
      %v1333 = vpop.f32.mrb[0].mxu0
      %v1334 = vadd.f32 0.0, %v1333
      %v1335 = vpop.f32.mrb[0].mxu0
      %v1336 = vpop.f32.mrb[0].mxu0
      %v1337 = vadd.f32 0.0, %v1336
      %v1338 = vpop.f32.mrb[0].mxu0
      %1339 = vmatprep.mubr.bf16.mxu0 0
      %1340 = vmatmul.mubr.bf16.gmra.mrb[0].mxu0 %v963
      %v1341 = vpop.f32.mrb[0].mxu0
      %v1342 = vadd.f32 0.0, %v1341
      %v1343 = vpop.f32.mrb[0].mxu0
      %v1344 = vpop.f32.mrb[0].mxu0
      %v1345 = vadd.f32 0.0, %v1344
      %v1346 = vpop.f32.mrb[0].mxu0
      %1347 = vmatprep.mubr.bf16.mxu0 0
      %1348 = vmatmul.mubr.bf16.gmra.mrb[0].mxu0 %v966
      %v1349 = vpop.f32.mrb[0].mxu0
      %v1350 = vadd.f32 0.0, %v1349
      %v1351 = vpop.f32.mrb[0].mxu0
      %v1352 = vpop.f32.mrb[0].mxu0
      %v1353 = vadd.f32 0.0, %v1352
      %v1354 = vpop.f32.mrb[0].mxu0
      %1355 = vmatprep.mubr.bf16.mxu0 0
      %1356 = vmatmul.mubr.bf16.gmra.mrb[0].mxu0 %v969
      %v1357 = vpop.f32.mrb[0].mxu0
      %v1358 = vadd.f32 0.0, %v1357
      %v1359 = vpop.f32.mrb[0].mxu0
      %v1360 = vpop.f32.mrb[0].mxu0
      %v1361 = vadd.f32 0.0, %v1360
      %v1362 = vpop.f32.mrb[0].mxu0
      %1363 = vmatprep.mubr.bf16.mxu0 0
      %1364 = vmatmul.mubr.bf16.gmra.mrb[0].mxu0 %v972
      %v1365 = vpop.f32.mrb[0].mxu0
      %v1366 = vadd.f32 0.0, %v1365
      %v1367 = vpop.f32.mrb[0].mxu0
      %v1368 = vpop.f32.mrb[0].mxu0
      %v1369 = vadd.f32 0.0, %v1368
      %v1370 = vpop.f32.mrb[0].mxu0
      %1371 = vmatprep.mubr.bf16.mxu0 0
      %1372 = vmatmul.mubr.bf16.gmra.mrb[0].mxu0 %v975
      %v1373 = vpop.f32.mrb[0].mxu0
      %v1374 = vadd.f32 0.0, %v1373
      %v1375 = vpop.f32.mrb[0].mxu0
      %v1376 = vpop.f32.mrb[0].mxu0
      %v1377 = vadd.f32 0.0, %v1376
      %v1378 = vpop.f32.mrb[0].mxu0
      %1379 = vmatprep.mubr.bf16.mxu0 0
      %1380 = vmatmul.mubr.bf16.gmra.mrb[0].mxu0 %v978
      %v1381 = vpop.f32.mrb[0].mxu0
      %v1382 = vadd.f32 0.0, %v1381
      %v1383 = vpop.f32.mrb[0].mxu0
      %v1384 = vpop.f32.mrb[0].mxu0
      %v1385 = vadd.f32 0.0, %v1384
      %v1386 = vpop.f32.mrb[0].mxu0
      %1387 = vmatprep.mubr.bf16.mxu0 0
      %1388 = vmatmul.mubr.bf16.gmra.mrb[0].mxu0 %v981
      %v1389 = vpop.f32.mrb[0].mxu0
      %v1390 = vadd.f32 0.0, %v1389
      %v1391 = vpop.f32.mrb[0].mxu0
      %v1392 = vpop.f32.mrb[0].mxu0
      %v1393 = vadd.f32 0.0, %v1392
      %v1394 = vpop.f32.mrb[0].mxu0
      %1395 = vmatprep.mubr.bf16.mxu0 0
      %1396 = vmatmul.mubr.bf16.gmra.mrb[0].mxu0 %v984
      %v1397 = vpop.f32.mrb[0].mxu0
      %v1398 = vadd.f32 0.0, %v1397
      %v1399 = vpop.f32.mrb[0].mxu0
      %v1400 = vpop.f32.mrb[0].mxu0
      %v1401 = vadd.f32 0.0, %v1400
      %v1402 = vpop.f32.mrb[0].mxu0
      %1403 = vmatprep.mubr.bf16.mxu0 0
      %1404 = vmatmul.mubr.bf16.gmra.mrb[0].mxu0 %v987
      %v1405 = vpop.f32.mrb[0].mxu0
      %v1406 = vadd.f32 0.0, %v1405
      %v1407 = vpop.f32.mrb[0].mxu0
      %v1408 = vpop.f32.mrb[0].mxu0
      %v1409 = vadd.f32 0.0, %v1408
      %v1410 = vpop.f32.mrb[0].mxu0
      %1411 = vmatprep.mubr.bf16.mxu0 0
      %1412 = vmatmul.mubr.bf16.gmra.mrb[0].mxu0 %v990
      %v1413 = vpop.f32.mrb[0].mxu0
      %v1414 = vadd.f32 0.0, %v1413
      %v1415 = vpop.f32.mrb[0].mxu0
      %v1416 = vpop.f32.mrb[0].mxu0
      %v1417 = vadd.f32 0.0, %v1416
      %v1418 = vpop.f32.mrb[0].mxu0
      %1419 = vmatprep.mubr.bf16.mxu0 0
      %1420 = vmatmul.mubr.bf16.gmra.mrb[0].mxu0 %v993
      %v1421 = vpop.f32.mrb[0].mxu0
      %v1422 = vadd.f32 0.0, %v1421
      %v1423 = vpop.f32.mrb[0].mxu0
      %v1424 = vpop.f32.mrb[0].mxu0
      %v1425 = vadd.f32 0.0, %v1424
      %v1426 = vpop.f32.mrb[0].mxu0
      %1427 = vmatprep.mubr.bf16.mxu0 0
      %1428 = vmatmul.mubr.bf16.gmra.mrb[0].mxu0 %v996
      %v1429 = vpop.f32.mrb[0].mxu0
      %v1430 = vadd.f32 0.0, %v1429
      %v1431 = vpop.f32.mrb[0].mxu0
      %v1432 = vpop.f32.mrb[0].mxu0
      %v1433 = vadd.f32 0.0, %v1432
      %v1434 = vpop.f32.mrb[0].mxu0
      %1435 = vmatprep.mubr.bf16.mxu0 0
      %1436 = vmatmul.mubr.bf16.gmra.mrb[0].mxu0 %v999
      %v1437 = vpop.f32.mrb[0].mxu0
      %v1438 = vadd.f32 0.0, %v1437
      %v1439 = vpop.f32.mrb[0].mxu0
      %v1440 = vpop.f32.mrb[0].mxu0
      %v1441 = vadd.f32 0.0, %v1440
      %v1442 = vpop.f32.mrb[0].mxu0
      %1443 = vmatprep.mubr.bf16.mxu0 0
      %1444 = vmatmul.mubr.bf16.gmra.mrb[0].mxu0 %v1002
      %v1445 = vpop.f32.mrb[0].mxu0
      %v1446 = vadd.f32 0.0, %v1445
      %v1447 = vpop.f32.mrb[0].mxu0
      %v1448 = vpop.f32.mrb[0].mxu0
      %v1449 = vadd.f32 0.0, %v1448
      %v1450 = vpop.f32.mrb[0].mxu0
      %1451 = vmatprep.mubr.bf16.mxu0 0
      %1452 = vmatmul.mubr.bf16.gmra.mrb[0].mxu0 %v1005
      %v1453 = vpop.f32.mrb[0].mxu0
      %v1454 = vadd.f32 0.0, %v1453
      %v1455 = vpop.f32.mrb[0].mxu0
      %v1456 = vpop.f32.mrb[0].mxu0
      %v1457 = vadd.f32 0.0, %v1456
      %v1458 = vpop.f32.mrb[0].mxu0
      %1459 = vmatprep.mubr.bf16.mxu0 0
      %1460 = vmatmul.mubr.bf16.gmra.mrb[0].mxu0 %v1008
      %v1461 = vpop.f32.mrb[0].mxu0
      %v1462 = vadd.f32 0.0, %v1461
      %v1463 = vpop.f32.mrb[0].mxu0
      %v1464 = vpop.f32.mrb[0].mxu0
      %v1465 = vadd.f32 0.0, %v1464
      %v1466 = vpop.f32.mrb[0].mxu0
      %1467 = vmatprep.mubr.bf16.mxu0 0
      %1468 = vmatmul.mubr.bf16.gmra.mrb[0].mxu0 %v1011
      %v1469 = vpop.f32.mrb[0].mxu0
      %v1470 = vadd.f32 0.0, %v1469
      %v1471 = vpop.f32.mrb[0].mxu0
      %v1472 = vpop.f32.mrb[0].mxu0
      %v1473 = vadd.f32 0.0, %v1472
      %v1474 = vpop.f32.mrb[0].mxu0
      %1475 = vmatprep.mubr.bf16.mxu0 0
      %1476 = vmatmul.mubr.bf16.gmra.mrb[0].mxu0 %v1014
      %v1477 = vpop.f32.mrb[0].mxu0
      %v1478 = vadd.f32 0.0, %v1477
      %v1479 = vpop.f32.mrb[0].mxu0
      %v1480 = vpop.f32.mrb[0].mxu0
      %v1481 = vadd.f32 0.0, %v1480
      %v1482 = vpop.f32.mrb[0].mxu0
      %1483 = vmatprep.mubr.bf16.mxu0 0
      %1484 = vmatmul.mubr.bf16.gmra.mrb[0].mxu0 %v1017
      %v1485 = vpop.f32.mrb[0].mxu0
      %v1486 = vadd.f32 0.0, %v1485
      %v1487 = vpop.f32.mrb[0].mxu0
      %v1488 = vpop.f32.mrb[0].mxu0
      %v1489 = vadd.f32 0.0, %v1488
      %v1490 = vpop.f32.mrb[0].mxu0
      %1491 = vmatprep.mubr.bf16.mxu0 0
      %1492 = vmatmul.mubr.bf16.gmra.mrb[0].mxu0 %v1020
      %v1493 = vpop.f32.mrb[0].mxu0
      %v1494 = vadd.f32 0.0, %v1493
      %v1495 = vpop.f32.mrb[0].mxu0
      %v1496 = vpop.f32.mrb[0].mxu0
      %v1497 = vadd.f32 0.0, %v1496
      %v1498 = vpop.f32.mrb[0].mxu0
      %1499 = vmatprep.mubr.bf16.mxu0 0
      %1500 = vmatmul.mubr.bf16.gmra.mrb[0].mxu0 %v1023
      %v1501 = vpop.f32.mrb[0].mxu0
      %v1502 = vadd.f32 0.0, %v1501
      %v1503 = vpop.f32.mrb[0].mxu0
      %v1504 = vpop.f32.mrb[0].mxu0
      %v1505 = vadd.f32 0.0, %v1504
      %v1506 = vpop.f32.mrb[0].mxu0
      %1507 = vmatprep.mubr.bf16.mxu0 0
      %1508 = vmatmul.mubr.bf16.gmra.mrb[0].mxu0 %v1026
      %v1509 = vpop.f32.mrb[0].mxu0
      %v1510 = vadd.f32 0.0, %v1509
      %v1511 = vpop.f32.mrb[0].mxu0
      %v1512 = vpop.f32.mrb[0].mxu0
      %v1513 = vadd.f32 0.0, %v1512
      %v1514 = vpop.f32.mrb[0].mxu0
      %1515 = vmatprep.mubr.bf16.mxu0 0
      %1516 = vmatmul.mubr.bf16.gmra.mrb[0].mxu0 %v1029
      %v1517 = vpop.f32.mrb[0].mxu0
      %v1518 = vadd.f32 0.0, %v1517
      %v1519 = vpop.f32.mrb[0].mxu0
      %v1520 = vpop.f32.mrb[0].mxu0
      %v1521 = vadd.f32 0.0, %v1520
      %v1522 = vpop.f32.mrb[0].mxu0
      %1523 = vmatprep.mubr.bf16.mxu0 0
      %1524 = vmatmul.mubr.bf16.gmra.mrb[0].mxu0 %v1032
      %v1525 = vpop.f32.mrb[0].mxu0
      %v1526 = vadd.f32 0.0, %v1525
      %v1527 = vpop.f32.mrb[0].mxu0
      %v1528 = vpop.f32.mrb[0].mxu0
      %v1529 = vadd.f32 0.0, %v1528
      %v1530 = vpop.f32.mrb[0].mxu0
      %1531 = vmatprep.mubr.bf16.mxu0 0
      %1532 = vmatmul.mubr.bf16.gmra.mrb[0].mxu0 %v1035
      %v1533 = vpop.f32.mrb[0].mxu0
      %v1534 = vadd.f32 0.0, %v1533
      %v1535 = vpop.f32.mrb[0].mxu0
      %v1536 = vpop.f32.mrb[0].mxu0
      %v1537 = vadd.f32 0.0, %v1536
      %v1538 = vpop.f32.mrb[0].mxu0
      %1539 = vmatprep.mubr.bf16.mxu0 0
      %1540 = vmatmul.mubr.bf16.gmra.mrb[0].mxu0 %v1038
      %v1541 = vpop.f32.mrb[0].mxu0
      %v1542 = vadd.f32 0.0, %v1541
      %v1543 = vpop.f32.mrb[0].mxu0
      %v1544 = vpop.f32.mrb[0].mxu0
      %v1545 = vadd.f32 0.0, %v1544
      %v1546 = vpop.f32.mrb[0].mxu0
      %1547 = vmatprep.mubr.bf16.mxu0 0
      %1548 = vmatmul.mubr.bf16.gmra.mrb[0].mxu0 %v1041
      %v1549 = vpop.f32.mrb[0].mxu0
      %v1550 = vadd.f32 0.0, %v1549
      %v1551 = vpop.f32.mrb[0].mxu0
      %v1552 = vpop.f32.mrb[0].mxu0
      %v1553 = vadd.f32 0.0, %v1552
      %v1554 = vpop.f32.mrb[0].mxu0
      %1555 = vmatprep.mubr.bf16.mxu0 0
      %1556 = vmatmul.mubr.bf16.gmra.mrb[0].mxu0 %v1044
      %v1557 = vpop.f32.mrb[0].mxu0
      %v1558 = vadd.f32 0.0, %v1557
      %v1559 = vpop.f32.mrb[0].mxu0
      %v1560 = vpop.f32.mrb[0].mxu0
      %v1561 = vadd.f32 0.0, %v1560
      %v1562 = vpop.f32.mrb[0].mxu0
      %1563 = vmatprep.mubr.bf16.mxu0 0
      %1564 = vmatmul.mubr.bf16.gmra.mrb[0].mxu0 %v1047
      %v1565 = vpop.f32.mrb[0].mxu0
      %v1566 = vadd.f32 0.0, %v1565
      %v1567 = vpop.f32.mrb[0].mxu0
      %v1568 = vpop.f32.mrb[0].mxu0
      %v1569 = vadd.f32 0.0, %v1568
      %v1570 = vpop.f32.mrb[0].mxu0
      %1571 = vmatprep.mubr.bf16.mxu0 0
      %1572 = vmatmul.mubr.bf16.gmra.mrb[0].mxu0 %v1050
      %v1573 = vpop.f32.mrb[0].mxu0
      %v1574 = vadd.f32 0.0, %v1573
      %v1575 = vpop.f32.mrb[0].mxu0
      %v1576 = vpop.f32.mrb[0].mxu0
      %v1577 = vadd.f32 0.0, %v1576
      %v1578 = vpop.f32.mrb[0].mxu0
      %1579 = vmatprep.mubr.bf16.mxu0 0
      %1580 = vmatmul.mubr.bf16.gmra.mrb[0].mxu0 %v1053
      %v1581 = vpop.f32.mrb[0].mxu0
      %v1582 = vadd.f32 0.0, %v1581
      %v1583 = vpop.f32.mrb[0].mxu0
      %v1584 = vpop.f32.mrb[0].mxu0
      %v1585 = vadd.f32 0.0, %v1584
      %v1586 = vpop.f32.mrb[0].mxu0
      %1587 = vmatprep.mubr.bf16.mxu0 0
      %1588 = vmatmul.mubr.bf16.gmra.mrb[0].mxu0 %v1056
      %v1589 = vpop.f32.mrb[0].mxu0
      %v1590 = vadd.f32 0.0, %v1589
      %v1591 = vpop.f32.mrb[0].mxu0
      %v1592 = vpop.f32.mrb[0].mxu0
      %v1593 = vadd.f32 0.0, %v1592
      %v1594 = vpop.f32.mrb[0].mxu0
      %1595 = vmatprep.mubr.bf16.mxu0 0
      %1596 = vmatmul.mubr.bf16.gmra.mrb[0].mxu0 %v1059
      %v1597 = vpop.f32.mrb[0].mxu0
      %v1598 = vadd.f32 0.0, %v1597
      %v1599 = vpop.f32.mrb[0].mxu0
      %v1600 = vpop.f32.mrb[0].mxu0
      %v1601 = vadd.f32 0.0, %v1600
      %v1602 = vpop.f32.mrb[0].mxu0
      %1603 = vmatprep.mubr.bf16.mxu0 0
      %1604 = vmatmul.mubr.bf16.gmra.mrb[0].mxu0 %v1062
      %v1605 = vpop.f32.mrb[0].mxu0
      %v1606 = vadd.f32 0.0, %v1605
      %v1607 = vpop.f32.mrb[0].mxu0
      %v1608 = vpop.f32.mrb[0].mxu0
      %v1609 = vadd.f32 0.0, %v1608
      %v1610 = vpop.f32.mrb[0].mxu0
      %1611 = vmatprep.mubr.bf16.mxu0 0
      %1612 = vmatmul.mubr.bf16.gmra.mrb[0].mxu0 %v1065
      %v1613 = vpop.f32.mrb[0].mxu0
      %v1614 = vadd.f32 0.0, %v1613
      %v1615 = vpop.f32.mrb[0].mxu0
      %v1616 = vpop.f32.mrb[0].mxu0
      %v1617 = vadd.f32 0.0, %v1616
      %v1618 = vpop.f32.mrb[0].mxu0
      %1619 = vmatprep.mubr.bf16.mxu0 0
      %1620 = vmatmul.mubr.bf16.gmra.mrb[0].mxu0 %v1068
      %v1621 = vpop.f32.mrb[0].mxu0
      %v1622 = vadd.f32 0.0, %v1621
      %v1623 = vpop.f32.mrb[0].mxu0
      %v1624 = vpop.f32.mrb[0].mxu0
      %v1625 = vadd.f32 0.0, %v1624
      %v1626 = vpop.f32.mrb[0].mxu0
      %1627 = vmatprep.mubr.bf16.mxu0 0
      %1628 = vmatmul.mubr.bf16.gmra.mrb[0].mxu0 %v1071
      %v1629 = vpop.f32.mrb[0].mxu0
      %v1630 = vadd.f32 0.0, %v1629
      %v1631 = vpop.f32.mrb[0].mxu0
      %v1632 = vpop.f32.mrb[0].mxu0
      %v1633 = vadd.f32 0.0, %v1632
      %v1634 = vpop.f32.mrb[0].mxu0
      %1635 = vmatprep.mubr.bf16.mxu0 0
      %1636 = vmatmul.mubr.bf16.gmra.mrb[0].mxu0 %v1074
      %v1637 = vpop.f32.mrb[0].mxu0
      %v1638 = vadd.f32 0.0, %v1637
      %v1639 = vpop.f32.mrb[0].mxu0
      %v1640 = vpop.f32.mrb[0].mxu0
      %v1641 = vadd.f32 0.0, %v1640
      %v1642 = vpop.f32.mrb[0].mxu0
      %1643 = vmatprep.mubr.bf16.mxu0 0
      %1644 = vmatmul.mubr.bf16.gmra.mrb[0].mxu0 %v1077
      %v1645 = vpop.f32.mrb[0].mxu0
      %v1646 = vadd.f32 0.0, %v1645
      %v1647 = vpop.f32.mrb[0].mxu0
      %v1648 = vpop.f32.mrb[0].mxu0
      %v1649 = vadd.f32 0.0, %v1648
      %v1650 = vpop.f32.mrb[0].mxu0
      %1651 = vmatprep.mubr.bf16.mxu0 0
      %1652 = vmatmul.mubr.bf16.gmra.mrb[0].mxu0 %v1080
      %v1653 = vpop.f32.mrb[0].mxu0
      %v1654 = vadd.f32 0.0, %v1653
      %v1655 = vpop.f32.mrb[0].mxu0
      %v1656 = vpop.f32.mrb[0].mxu0
      %v1657 = vadd.f32 0.0, %v1656
      %v1658 = vpop.f32.mrb[0].mxu0
      %1659 = vmatprep.mubr.bf16.mxu0 0
      %1660 = vmatmul.mubr.bf16.gmra.mrb[0].mxu0 %v1083
      %v1661 = vpop.f32.mrb[0].mxu0
      %v1662 = vadd.f32 0.0, %v1661
      %v1663 = vpop.f32.mrb[0].mxu0
      %v1664 = vpop.f32.mrb[0].mxu0
      %v1665 = vadd.f32 0.0, %v1664
      %v1666 = vpop.f32.mrb[0].mxu0
      %1667 = vmatprep.mubr.bf16.mxu0 0
      %1668 = vmatmul.mubr.bf16.gmra.mrb[0].mxu0 %v1086
      %v1669 = vpop.f32.mrb[0].mxu0
      %v1670 = vadd.f32 0.0, %v1669
      %v1671 = vpop.f32.mrb[0].mxu0
      %v1672 = vpop.f32.mrb[0].mxu0
      %v1673 = vadd.f32 0.0, %v1672
      %v1674 = vpop.f32.mrb[0].mxu0
      %1675 = vmatprep.mubr.bf16.mxu0 0
      %1676 = vmatmul.mubr.bf16.gmra.mrb[0].mxu0 %v1089
      %v1677 = vpop.f32.mrb[0].mxu0
      %v1678 = vadd.f32 0.0, %v1677
      %v1679 = vpop.f32.mrb[0].mxu0
      %v1680 = vpop.f32.mrb[0].mxu0
      %v1681 = vadd.f32 0.0, %v1680
      %v1682 = vpop.f32.mrb[0].mxu0
      %1683 = vmatprep.mubr.bf16.mxu0 0
      %1684 = vmatmul.mubr.bf16.gmra.mrb[0].mxu0 %v1092
      %v1685 = vpop.f32.mrb[0].mxu0
      %v1686 = vadd.f32 0.0, %v1685
      %v1687 = vpop.f32.mrb[0].mxu0
      %v1688 = vpop.f32.mrb[0].mxu0
      %v1689 = vadd.f32 0.0, %v1688
      %v1690 = vpop.f32.mrb[0].mxu0
      %1691 = vmatprep.mubr.bf16.mxu0 0
      %1692 = vmatmul.mubr.bf16.gmra.mrb[0].mxu0 %v1095
      %v1693 = vpop.f32.mrb[0].mxu0
      %v1694 = vadd.f32 0.0, %v1693
      %v1695 = vpop.f32.mrb[0].mxu0
      %v1696 = vpop.f32.mrb[0].mxu0
      %v1697 = vadd.f32 0.0, %v1696
      %v1698 = vpop.f32.mrb[0].mxu0
      %1699 = vmatprep.mubr.bf16.mxu0 0
      %1700 = vmatmul.mubr.bf16.gmra.mrb[0].mxu0 %v1098
      %v1701 = vpop.f32.mrb[0].mxu0
      %v1702 = vadd.f32 0.0, %v1701
      %v1703 = vpop.f32.mrb[0].mxu0
      %v1704 = vpop.f32.mrb[0].mxu0
      %v1705 = vadd.f32 0.0, %v1704
      %v1706 = vpop.f32.mrb[0].mxu0
      %1707 = vmatprep.mubr.bf16.mxu0 0
      %1708 = vmatmul.mubr.bf16.gmra.mrb[0].mxu0 %v1101
      %v1709 = vpop.f32.mrb[0].mxu0
      %v1710 = vadd.f32 0.0, %v1709
      %v1711 = vpop.f32.mrb[0].mxu0
      %v1712 = vpop.f32.mrb[0].mxu0
      %v1713 = vadd.f32 0.0, %v1712
      %v1714 = vpop.f32.mrb[0].mxu0
      %1715 = vmatprep.mubr.bf16.mxu0 0
      %1716 = vmatmul.mubr.bf16.gmra.mrb[0].mxu0 %v1104
      %v1717 = vpop.f32.mrb[0].mxu0
      %v1718 = vadd.f32 0.0, %v1717
      %v1719 = vpop.f32.mrb[0].mxu0
      %v1720 = vpop.f32.mrb[0].mxu0
      %v1721 = vadd.f32 0.0, %v1720
      %v1722 = vpop.f32.mrb[0].mxu0
      %1723 = vmatprep.mubr.bf16.mxu0 0
      %1724 = vmatmul.mubr.bf16.gmra.mrb[0].mxu0 %v1107
      %v1725 = vpop.f32.mrb[0].mxu0
      %v1726 = vadd.f32 0.0, %v1725
      %v1727 = vpop.f32.mrb[0].mxu0
      %v1728 = vpop.f32.mrb[0].mxu0
      %v1729 = vadd.f32 0.0, %v1728
      %v1730 = vpop.f32.mrb[0].mxu0
      %1731 = vmatprep.mubr.bf16.mxu0 0
      %1732 = vmatmul.mubr.bf16.gmra.mrb[0].mxu0 %v1110
      %v1733 = vpop.f32.mrb[0].mxu0
      %v1734 = vadd.f32 0.0, %v1733
      %v1735 = vpop.f32.mrb[0].mxu0
      %v1736 = vpop.f32.mrb[0].mxu0
      %v1737 = vadd.f32 0.0, %v1736
      %v1738 = vpop.f32.mrb[0].mxu0
      %1739 = vmatprep.mubr.bf16.mxu0 0
      %1740 = vmatmul.mubr.bf16.gmra.mrb[0].mxu0 %v1113
      %v1741 = vpop.f32.mrb[0].mxu0
      %v1742 = vadd.f32 0.0, %v1741
      %v1743 = vpop.f32.mrb[0].mxu0
      %v1744 = vpop.f32.mrb[0].mxu0
      %v1745 = vadd.f32 0.0, %v1744
      %v1746 = vpop.f32.mrb[0].mxu0
      %1747 = vmatprep.mubr.bf16.mxu0 0
      %1748 = vmatmul.mubr.bf16.gmra.mrb[0].mxu0 %v1116
      %v1749 = vpop.f32.mrb[0].mxu0
      %v1750 = vadd.f32 0.0, %v1749
      %v1751 = vpop.f32.mrb[0].mxu0
      %v1752 = vpop.f32.mrb[0].mxu0
      %v1753 = vadd.f32 0.0, %v1752
      %v1754 = vpop.f32.mrb[0].mxu0
      %1755 = vmatprep.mubr.bf16.mxu0 0
      %1756 = vmatmul.mubr.bf16.gmra.mrb[0].mxu0 %v1119
      %v1757 = vpop.f32.mrb[0].mxu0
      %v1758 = vadd.f32 0.0, %v1757
      %v1759 = vpop.f32.mrb[0].mxu0
      %v1760 = vpop.f32.mrb[0].mxu0
      %v1761 = vadd.f32 0.0, %v1760
      %v1762 = vpop.f32.mrb[0].mxu0
      %1763 = vmatprep.mubr.bf16.mxu0 0
      %1764 = vmatmul.mubr.bf16.gmra.mrb[0].mxu0 %v1122
      %v1765 = vpop.f32.mrb[0].mxu0
      %v1766 = vadd.f32 0.0, %v1765
      %v1767 = vpop.f32.mrb[0].mxu0
      %v1768 = vpop.f32.mrb[0].mxu0
      %v1769 = vadd.f32 0.0, %v1768
      %v1770 = vpop.f32.mrb[0].mxu0
      %1771 = vmatprep.mubr.bf16.mxu0 0
      %1772 = vmatmul.mubr.bf16.gmra.mrb[0].mxu0 %v1125
      %v1773 = vpop.f32.mrb[0].mxu0
      %v1774 = vadd.f32 0.0, %v1773
      %v1775 = vpop.f32.mrb[0].mxu0
      %v1776 = vpop.f32.mrb[0].mxu0
      %v1777 = vadd.f32 0.0, %v1776
      %v1778 = vpop.f32.mrb[0].mxu0
      %1779 = vmatprep.mubr.bf16.mxu0 0
      %1780 = vmatmul.mubr.bf16.gmra.mrb[0].mxu0 %v1128
      %v1781 = vpop.f32.mrb[0].mxu0
      %v1782 = vadd.f32 0.0, %v1781
      %v1783 = vpop.f32.mrb[0].mxu0
      %v1784 = vpop.f32.mrb[0].mxu0
      %v1785 = vadd.f32 0.0, %v1784
      %v1786 = vpop.f32.mrb[0].mxu0
      %1787 = vmatprep.mubr.bf16.mxu0 0
      %1788 = vmatmul.mubr.bf16.gmra.mrb[0].mxu0 %v1131
      %v1789 = vpop.f32.mrb[0].mxu0
      %v1790 = vadd.f32 0.0, %v1789
      %v1791 = vpop.f32.mrb[0].mxu0
      %v1792 = vpop.f32.mrb[0].mxu0
      %v1793 = vadd.f32 0.0, %v1792
      %v1794 = vpop.f32.mrb[0].mxu0
      %1795 = vmatprep.mubr.bf16.mxu0 0
      %1796 = vmatmul.mubr.bf16.gmra.mrb[0].mxu0 %v1134
      %v1797 = vpop.f32.mrb[0].mxu0
      %v1798 = vadd.f32 0.0, %v1797
      %v1799 = vpop.f32.mrb[0].mxu0
      %v1800 = vpop.f32.mrb[0].mxu0
      %v1801 = vadd.f32 0.0, %v1800
      %v1802 = vpop.f32.mrb[0].mxu0
      %1803 = vmatprep.mubr.bf16.mxu0 0
      %1804 = vmatmul.mubr.bf16.gmra.mrb[0].mxu0 %v1137
      %v1805 = vpop.f32.mrb[0].mxu0
      %v1806 = vadd.f32 0.0, %v1805
      %v1807 = vpop.f32.mrb[0].mxu0
      %v1808 = vpop.f32.mrb[0].mxu0
      %v1809 = vadd.f32 0.0, %v1808
      %v1810 = vpop.f32.mrb[0].mxu0
      %1811 = vmatprep.mubr.bf16.mxu0 0
      %1812 = vmatmul.mubr.bf16.gmra.mrb[0].mxu0 %v1140
      %v1813 = vpop.f32.mrb[0].mxu0
      %v1814 = vadd.f32 0.0, %v1813
      %v1815 = vpop.f32.mrb[0].mxu0
      %v1816 = vpop.f32.mrb[0].mxu0
      %v1817 = vadd.f32 0.0, %v1816
      %v1818 = vpop.f32.mrb[0].mxu0
      %1819 = vmatprep.mubr.bf16.mxu0 0
      %1820 = vmatmul.mubr.bf16.gmra.mrb[0].mxu0 %v1143
      %v1821 = vpop.f32.mrb[0].mxu0
      %v1822 = vadd.f32 0.0, %v1821
      %v1823 = vpop.f32.mrb[0].mxu0
      %v1824 = vpop.f32.mrb[0].mxu0
      %v1825 = vadd.f32 0.0, %v1824
      %v1826 = vpop.f32.mrb[0].mxu0
      %1827 = vmatprep.mubr.bf16.mxu0 0
      %1828 = vmatmul.mubr.bf16.gmra.mrb[0].mxu0 %v1146
      %v1829 = vpop.f32.mrb[0].mxu0
      %v1830 = vadd.f32 0.0, %v1829
      %v1831 = vpop.f32.mrb[0].mxu0
      %v1832 = vpop.f32.mrb[0].mxu0
      %v1833 = vadd.f32 0.0, %v1832
      %v1834 = vpop.f32.mrb[0].mxu0
      %1835 = vmatprep.mubr.bf16.mxu0 0
      %1836 = vmatmul.mubr.bf16.gmra.mrb[0].mxu0 %v1149
      %v1837 = vpop.f32.mrb[0].mxu0
      %v1838 = vadd.f32 0.0, %v1837
      %v1839 = vpop.f32.mrb[0].mxu0
      %v1840 = vpop.f32.mrb[0].mxu0
      %v1841 = vadd.f32 0.0, %v1840
      %v1842 = vpop.f32.mrb[0].mxu0
      %1843 = vmatprep.mubr.bf16.mxu0 0
      %1844 = vmatmul.mubr.bf16.gmra.mrb[0].mxu0 %v1152
      %v1845 = vpop.f32.mrb[0].mxu0
      %v1846 = vadd.f32 0.0, %v1845
      %v1847 = vpop.f32.mrb[0].mxu0
      %v1848 = vpop.f32.mrb[0].mxu0
      %v1849 = vadd.f32 0.0, %v1848
      %v1850 = vpop.f32.mrb[0].mxu0
      %1851 = vmatprep.mubr.bf16.mxu0 0
      %1852 = vmatmul.mubr.bf16.gmra.mrb[0].mxu0 %v1155
      %v1853 = vpop.f32.mrb[0].mxu0
      %v1854 = vadd.f32 0.0, %v1853
      %v1855 = vpop.f32.mrb[0].mxu0
      %v1856 = vpop.f32.mrb[0].mxu0
      %v1857 = vadd.f32 0.0, %v1856
      %v1858 = vpop.f32.mrb[0].mxu0
      %1859 = vmatprep.mubr.bf16.mxu0 0
      %1860 = vmatmul.mubr.bf16.gmra.mrb[0].mxu0 %v1158
      %v1861 = vpop.f32.mrb[0].mxu0
      %v1862 = vadd.f32 0.0, %v1861
      %v1863 = vpop.f32.mrb[0].mxu0
      %v1864 = vpop.f32.mrb[0].mxu0
      %v1865 = vadd.f32 0.0, %v1864
      %v1866 = vpop.f32.mrb[0].mxu0
      %1867 = vmatprep.mubr.bf16.mxu0 0
      %1868 = vmatmul.mubr.bf16.gmra.mrb[0].mxu0 %v1161
      %v1869 = vpop.f32.mrb[0].mxu0
      %v1870 = vadd.f32 0.0, %v1869
      %v1871 = vpop.f32.mrb[0].mxu0
      %v1872 = vpop.f32.mrb[0].mxu0
      %v1873 = vadd.f32 0.0, %v1872
      %v1874 = vpop.f32.mrb[0].mxu0
      %1875 = vmatprep.mubr.bf16.mxu0 0
      %1876 = vmatmul.mubr.bf16.gmra.mrb[0].mxu0 %v1164
      %v1877 = vpop.f32.mrb[0].mxu0
      %v1878 = vadd.f32 0.0, %v1877
      %v1879 = vpop.f32.mrb[0].mxu0
      %v1880 = vpop.f32.mrb[0].mxu0
      %v1881 = vadd.f32 0.0, %v1880
      %v1882 = vpop.f32.mrb[0].mxu0
      %1883 = vmatprep.mubr.bf16.mxu0 0
      %1884 = vmatmul.mubr.bf16.gmra.mrb[0].mxu0 %v1167
      %v1885 = vpop.f32.mrb[0].mxu0
      %v1886 = vadd.f32 0.0, %v1885
      %v1887 = vpop.f32.mrb[0].mxu0
      %v1888 = vpop.f32.mrb[0].mxu0
      %v1889 = vadd.f32 0.0, %v1888
      %v1890 = vpop.f32.mrb[0].mxu0
      %1891 = vmatprep.mubr.bf16.mxu0 0
      %1892 = vmatmul.mubr.bf16.gmra.mrb[0].mxu0 %v1170
      %v1893 = vpop.f32.mrb[0].mxu0
      %v1894 = vadd.f32 0.0, %v1893
      %v1895 = vpop.f32.mrb[0].mxu0
      %v1896 = vpop.f32.mrb[0].mxu0
      %v1897 = vadd.f32 0.0, %v1896
      %v1898 = vpop.f32.mrb[0].mxu0
      %1899 = vmatprep.mubr.bf16.mxu0 0
      %1900 = vmatmul.mubr.bf16.gmra.mrb[0].mxu0 %v1173
      %v1901 = vpop.f32.mrb[0].mxu0
      %v1902 = vadd.f32 0.0, %v1901
      %v1903 = vpop.f32.mrb[0].mxu0
      %v1904 = vpop.f32.mrb[0].mxu0
      %v1905 = vadd.f32 0.0, %v1904
      %v1906 = vpop.f32.mrb[0].mxu0
      %1907 = vmatprep.mubr.bf16.mxu0 0
      %1908 = vmatmul.mubr.bf16.gmra.mrb[0].mxu0 %v1176
      %v1909 = vpop.f32.mrb[0].mxu0
      %v1910 = vadd.f32 0.0, %v1909
      %v1911 = vpop.f32.mrb[0].mxu0
      %v1912 = vpop.f32.mrb[0].mxu0
      %v1913 = vadd.f32 0.0, %v1912
      %v1914 = vpop.f32.mrb[0].mxu0
      %1915 = vmatprep.mubr.bf16.mxu0 0
      %1916 = vmatmul.mubr.bf16.gmra.mrb[0].mxu0 %v1179
      %v1917 = vpop.f32.mrb[0].mxu0
      %v1918 = vadd.f32 0.0, %v1917
      %v1919 = vpop.f32.mrb[0].mxu0
      %v1920 = vpop.f32.mrb[0].mxu0
      %v1921 = vadd.f32 0.0, %v1920
      %v1922 = vpop.f32.mrb[0].mxu0
      %1923 = vmatprep.mubr.bf16.mxu0 0
      %1924 = vmatmul.mubr.bf16.gmra.mrb[0].mxu0 %v1182
      %v1925 = vpop.f32.mrb[0].mxu0
      %v1926 = vadd.f32 0.0, %v1925
      %v1927 = vpop.f32.mrb[0].mxu0
      %v1928 = vpop.f32.mrb[0].mxu0
      %v1929 = vadd.f32 0.0, %v1928
      %v1930 = vpop.f32.mrb[0].mxu0
      %1931 = vmatprep.mubr.bf16.mxu0 0
      %1932 = vmatmul.mubr.bf16.gmra.mrb[0].mxu0 %v1185
      %v1933 = vpop.f32.mrb[0].mxu0
      %v1934 = vadd.f32 0.0, %v1933
      %v1935 = vpop.f32.mrb[0].mxu0
      %v1936 = vpop.f32.mrb[0].mxu0
      %v1937 = vadd.f32 0.0, %v1936
      %v1938 = vpop.f32.mrb[0].mxu0
      %1939 = vmatprep.mubr.bf16.mxu0 0
      %1940 = vmatmul.mubr.bf16.gmra.mrb[0].mxu0 %v1188
      %v1941 = vpop.f32.mrb[0].mxu0
      %v1942 = vadd.f32 0.0, %v1941
      %v1943 = vpop.f32.mrb[0].mxu0
      %v1944 = vpop.f32.mrb[0].mxu0
      %v1945 = vadd.f32 0.0, %v1944
      %v1946 = vpop.f32.mrb[0].mxu0
      %1947 = vmatprep.mubr.bf16.mxu0 0
      %1948 = vmatmul.mubr.bf16.gmra.mrb[0].mxu0 %v1191
      %v1949 = vpop.f32.mrb[0].mxu0
      %v1950 = vadd.f32 0.0, %v1949
      %v1951 = vpop.f32.mrb[0].mxu0
      %v1952 = vpop.f32.mrb[0].mxu0
      %v1953 = vadd.f32 0.0, %v1952
      %v1954 = vpop.f32.mrb[0].mxu0
      %1955 = vmatprep.mubr.bf16.mxu0 0
      %1956 = vmatmul.mubr.bf16.gmra.mrb[0].mxu0 %v1194
      %v1957 = vpop.f32.mrb[0].mxu0
      %v1958 = vadd.f32 0.0, %v1957
      %v1959 = vpop.f32.mrb[0].mxu0
      %v1960 = vpop.f32.mrb[0].mxu0
      %v1961 = vadd.f32 0.0, %v1960
      %v1962 = vpop.f32.mrb[0].mxu0
      %1963 = vmatprep.mubr.bf16.mxu0 0
      %1964 = vmatmul.mubr.bf16.gmra.mrb[0].mxu0 %v1197
      %v1965 = vpop.f32.mrb[0].mxu0
      %v1966 = vadd.f32 0.0, %v1965
      %v1967 = vpop.f32.mrb[0].mxu0
      %v1968 = vpop.f32.mrb[0].mxu0
      %v1969 = vadd.f32 0.0, %v1968
      %v1970 = vpop.f32.mrb[0].mxu0
      %1971 = vmatprep.mubr.bf16.mxu0 0
      %1972 = vmatmul.mubr.bf16.gmra.mrb[0].mxu0 %v1200
      %v1973 = vpop.f32.mrb[0].mxu0
      %v1974 = vadd.f32 0.0, %v1973
      %v1975 = vpop.f32.mrb[0].mxu0
      %v1976 = vpop.f32.mrb[0].mxu0
      %v1977 = vadd.f32 0.0, %v1976
      %v1978 = vpop.f32.mrb[0].mxu0
      %1979 = vmatprep.mubr.bf16.mxu0 0
      %1980 = vmatmul.mubr.bf16.gmra.mrb[0].mxu0 %v1203
      %v1981 = vpop.f32.mrb[0].mxu0
      %v1982 = vadd.f32 0.0, %v1981
      %v1983 = vpop.f32.mrb[0].mxu0
      %v1984 = vpop.f32.mrb[0].mxu0
      %v1985 = vadd.f32 0.0, %v1984
      %v1986 = vpop.f32.mrb[0].mxu0
      %1987 = vmatprep.mubr.bf16.mxu0 0
      %1988 = vmatmul.mubr.bf16.gmra.mrb[0].mxu0 %v1206
      %v1989 = vpop.f32.mrb[0].mxu0
      %v1990 = vadd.f32 0.0, %v1989
      %v1991 = vpop.f32.mrb[0].mxu0
      %v1992 = vpop.f32.mrb[0].mxu0
      %v1993 = vadd.f32 0.0, %v1992
      %v1994 = vpop.f32.mrb[0].mxu0
      %1995 = vmatprep.mubr.bf16.mxu0 0
      %1996 = vmatmul.mubr.bf16.gmra.mrb[0].mxu0 %v1209
      %v1997 = vpop.f32.mrb[0].mxu0
      %v1998 = vadd.f32 0.0, %v1997
      %v1999 = vpop.f32.mrb[0].mxu0
      %v2000 = vpop.f32.mrb[0].mxu0
      %v2001 = vadd.f32 0.0, %v2000
      %v2002 = vpop.f32.mrb[0].mxu0
      %2003 = vmatprep.mubr.bf16.mxu0 0
      %2004 = vmatmul.mubr.bf16.gmra.mrb[0].mxu0 %v1212
      %v2005 = vpop.f32.mrb[0].mxu0
      %v2006 = vadd.f32 0.0, %v2005
      %v2007 = vpop.f32.mrb[0].mxu0
      %v2008 = vpop.f32.mrb[0].mxu0
      %v2009 = vadd.f32 0.0, %v2008
      %v2010 = vpop.f32.mrb[0].mxu0
      %2011 = vmatprep.mubr.bf16.mxu0 0
      %2012 = vmatmul.mubr.bf16.gmra.mrb[0].mxu0 %v1215
      %v2013 = vpop.f32.mrb[0].mxu0
      %v2014 = vadd.f32 0.0, %v2013
      %v2015 = vpop.f32.mrb[0].mxu0
      %v2016 = vpop.f32.mrb[0].mxu0
      %v2017 = vadd.f32 0.0, %v2016
      %v2018 = vpop.f32.mrb[0].mxu0
      %2019 = vmatprep.mubr.bf16.mxu0 0
      %2020 = vmatmul.mubr.bf16.gmra.mrb[0].mxu0 %v1218
      %v2021 = vpop.f32.mrb[0].mxu0
      %v2022 = vadd.f32 0.0, %v2021
      %v2023 = vpop.f32.mrb[0].mxu0
      %v2024 = vpop.f32.mrb[0].mxu0
      %v2025 = vadd.f32 0.0, %v2024
      %v2026 = vpop.f32.mrb[0].mxu0
      %2027 = vmatprep.mubr.bf16.mxu0 0
      %2028 = vmatmul.mubr.bf16.gmra.mrb[0].mxu0 %v1221
      %v2029 = vpop.f32.mrb[0].mxu0
      %v2030 = vadd.f32 0.0, %v2029
      %v2031 = vpop.f32.mrb[0].mxu0
      %v2032 = vpop.f32.mrb[0].mxu0
      %v2033 = vadd.f32 0.0, %v2032
      %v2034 = vpop.f32.mrb[0].mxu0
      %2035 = vmatprep.mubr.bf16.mxu0 0
      %2036 = vmatmul.mubr.bf16.gmra.mrb[0].mxu0 %v1224
      %v2037 = vpop.f32.mrb[0].mxu0
      %v2038 = vadd.f32 0.0, %v2037
      %v2039 = vpop.f32.mrb[0].mxu0
      %v2040 = vpop.f32.mrb[0].mxu0
      %v2041 = vadd.f32 0.0, %v2040
      %v2042 = vpop.f32.mrb[0].mxu0
      %2043 = vmatprep.mubr.bf16.mxu0 0
      %2044 = vmatmul.mubr.bf16.gmra.mrb[0].mxu0 %v1227
      %v2045 = vpop.f32.mrb[0].mxu0
      %v2046 = vadd.f32 0.0, %v2045
      %v2047 = vpop.f32.mrb[0].mxu0
      %v2048 = vpop.f32.mrb[0].mxu0
      %v2049 = vadd.f32 0.0, %v2048
      %v2050 = vpop.f32.mrb[0].mxu0
      %2051 = vmatprep.mubr.bf16.mxu0 0
      %2052 = vmatmul.mubr.bf16.gmra.mrb[0].mxu0 %v1230
      %v2053 = vpop.f32.mrb[0].mxu0
      %v2054 = vadd.f32 0.0, %v2053
      %v2055 = vpop.f32.mrb[0].mxu0
      %v2056 = vpop.f32.mrb[0].mxu0
      %v2057 = vadd.f32 0.0, %v2056
      %v2058 = vpop.f32.mrb[0].mxu0
      %2059 = vmatprep.mubr.bf16.mxu0 0
      %2060 = vmatmul.mubr.bf16.gmra.mrb[0].mxu0 %v1233
      %v2061 = vpop.f32.mrb[0].mxu0
      %v2062 = vadd.f32 0.0, %v2061
      %v2063 = vpop.f32.mrb[0].mxu0
      %v2064 = vpop.f32.mrb[0].mxu0
      %v2065 = vadd.f32 0.0, %v2064
      %v2066 = vpop.f32.mrb[0].mxu0
      %2067 = vdwg.mxu0
      %v2068 = vld [vmem:[%s2] sm:$0x1]
      %v2070 = vlaneseq
      %v2071 = vshrl.u32 %v2070, 7
      %v2072 = vsub.s32 0, %v2071
      %v2073 = vrot.slane %v2068, %v2072
      %v2075 = vmul.f32 %v1270, %v2073
      %v2076 = vmul.f32 %v1273, %v2073
      %v2077 = vmul.f32 %v1278, %v2073
      %v2078 = vmul.f32 %v1281, %v2073
      %v2079 = vmul.f32 %v1286, %v2073
      %v2080 = vmul.f32 %v1289, %v2073
      %v2081 = vmul.f32 %v1294, %v2073
      %v2082 = vmul.f32 %v1297, %v2073
      %v2083 = vmul.f32 %v1302, %v2073
      %v2084 = vmul.f32 %v1305, %v2073
      %v2085 = vmul.f32 %v1310, %v2073
      %v2086 = vmul.f32 %v1313, %v2073
      %v2087 = vmul.f32 %v1318, %v2073
      %v2088 = vmul.f32 %v1321, %v2073
      %v2089 = vmul.f32 %v1326, %v2073
      %v2090 = vmul.f32 %v1329, %v2073
      %v2091 = vmul.f32 %v1334, %v2073
      %v2092 = vmul.f32 %v1337, %v2073
      %v2093 = vmul.f32 %v1342, %v2073
      %v2094 = vmul.f32 %v1345, %v2073
      %v2095 = vmul.f32 %v1350, %v2073
      %v2096 = vmul.f32 %v1353, %v2073
      %v2097 = vmul.f32 %v1358, %v2073
      %v2098 = vmul.f32 %v1361, %v2073
      %v2099 = vmul.f32 %v1366, %v2073
      %v2100 = vmul.f32 %v1369, %v2073
      %v2101 = vmul.f32 %v1374, %v2073
      %v2102 = vmul.f32 %v1377, %v2073
      %v2103 = vmul.f32 %v1382, %v2073
      %v2104 = vmul.f32 %v1385, %v2073
      %v2105 = vmul.f32 %v1390, %v2073
      %v2106 = vmul.f32 %v1393, %v2073
      %v2107 = vmul.f32 %v1398, %v2073
      %v2108 = vmul.f32 %v1401, %v2073
      %v2109 = vmul.f32 %v1406, %v2073
      %v2110 = vmul.f32 %v1409, %v2073
      %v2111 = vmul.f32 %v1414, %v2073
      %v2112 = vmul.f32 %v1417, %v2073
      %v2113 = vmul.f32 %v1422, %v2073
      %v2114 = vmul.f32 %v1425, %v2073
      %v2115 = vmul.f32 %v1430, %v2073
      %v2116 = vmul.f32 %v1433, %v2073
      %v2117 = vmul.f32 %v1438, %v2073
      %v2118 = vmul.f32 %v1441, %v2073
      %v2119 = vmul.f32 %v1446, %v2073
      %v2120 = vmul.f32 %v1449, %v2073
      %v2121 = vmul.f32 %v1454, %v2073
      %v2122 = vmul.f32 %v1457, %v2073
      %v2123 = vmul.f32 %v1462, %v2073
      %v2124 = vmul.f32 %v1465, %v2073
      %v2125 = vmul.f32 %v1470, %v2073
      %v2126 = vmul.f32 %v1473, %v2073
      %v2127 = vmul.f32 %v1478, %v2073
      %v2128 = vmul.f32 %v1481, %v2073
      %v2129 = vmul.f32 %v1486, %v2073
      %v2130 = vmul.f32 %v1489, %v2073
      %v2131 = vmul.f32 %v1494, %v2073
      %v2132 = vmul.f32 %v1497, %v2073
      %v2133 = vmul.f32 %v1502, %v2073
      %v2134 = vmul.f32 %v1505, %v2073
      %v2135 = vmul.f32 %v1510, %v2073
      %v2136 = vmul.f32 %v1513, %v2073
      %v2137 = vmul.f32 %v1518, %v2073
      %v2138 = vmul.f32 %v1521, %v2073
      %v2139 = vmul.f32 %v1526, %v2073
      %v2140 = vmul.f32 %v1529, %v2073
      %v2141 = vmul.f32 %v1534, %v2073
      %v2142 = vmul.f32 %v1537, %v2073
      %v2143 = vmul.f32 %v1542, %v2073
      %v2144 = vmul.f32 %v1545, %v2073
      %v2145 = vmul.f32 %v1550, %v2073
      %v2146 = vmul.f32 %v1553, %v2073
      %v2147 = vmul.f32 %v1558, %v2073
      %v2148 = vmul.f32 %v1561, %v2073
      %v2149 = vmul.f32 %v1566, %v2073
      %v2150 = vmul.f32 %v1569, %v2073
      %v2151 = vmul.f32 %v1574, %v2073
      %v2152 = vmul.f32 %v1577, %v2073
      %v2153 = vmul.f32 %v1582, %v2073
      %v2154 = vmul.f32 %v1585, %v2073
      %v2155 = vmul.f32 %v1590, %v2073
      %v2156 = vmul.f32 %v1593, %v2073
      %v2157 = vmul.f32 %v1598, %v2073
      %v2158 = vmul.f32 %v1601, %v2073
      %v2159 = vmul.f32 %v1606, %v2073
      %v2160 = vmul.f32 %v1609, %v2073
      %v2161 = vmul.f32 %v1614, %v2073
      %v2162 = vmul.f32 %v1617, %v2073
      %v2163 = vmul.f32 %v1622, %v2073
      %v2164 = vmul.f32 %v1625, %v2073
      %v2165 = vmul.f32 %v1630, %v2073
      %v2166 = vmul.f32 %v1633, %v2073
      %v2167 = vmul.f32 %v1638, %v2073
      %v2168 = vmul.f32 %v1641, %v2073
      %v2169 = vmul.f32 %v1646, %v2073
      %v2170 = vmul.f32 %v1649, %v2073
      %v2171 = vmul.f32 %v1654, %v2073
      %v2172 = vmul.f32 %v1657, %v2073
      %v2173 = vmul.f32 %v1662, %v2073
      %v2174 = vmul.f32 %v1665, %v2073
      %v2175 = vmul.f32 %v1670, %v2073
      %v2176 = vmul.f32 %v1673, %v2073
      %v2177 = vmul.f32 %v1678, %v2073
      %v2178 = vmul.f32 %v1681, %v2073
      %v2179 = vmul.f32 %v1686, %v2073
      %v2180 = vmul.f32 %v1689, %v2073
      %v2181 = vmul.f32 %v1694, %v2073
      %v2182 = vmul.f32 %v1697, %v2073
      %v2183 = vmul.f32 %v1702, %v2073
      %v2184 = vmul.f32 %v1705, %v2073
      %v2185 = vmul.f32 %v1710, %v2073
      %v2186 = vmul.f32 %v1713, %v2073
      %v2187 = vmul.f32 %v1718, %v2073
      %v2188 = vmul.f32 %v1721, %v2073
      %v2189 = vmul.f32 %v1726, %v2073
      %v2190 = vmul.f32 %v1729, %v2073
      %v2191 = vmul.f32 %v1734, %v2073
      %v2192 = vmul.f32 %v1737, %v2073
      %v2193 = vmul.f32 %v1742, %v2073
      %v2194 = vmul.f32 %v1745, %v2073
      %v2195 = vmul.f32 %v1750, %v2073
      %v2196 = vmul.f32 %v1753, %v2073
      %v2197 = vmul.f32 %v1758, %v2073
      %v2198 = vmul.f32 %v1761, %v2073
      %v2199 = vmul.f32 %v1766, %v2073
      %v2200 = vmul.f32 %v1769, %v2073
      %v2201 = vmul.f32 %v1774, %v2073
      %v2202 = vmul.f32 %v1777, %v2073
      %v2203 = vmul.f32 %v1782, %v2073
      %v2204 = vmul.f32 %v1785, %v2073
      %v2205 = vmul.f32 %v1790, %v2073
      %v2206 = vmul.f32 %v1793, %v2073
      %v2207 = vmul.f32 %v1798, %v2073
      %v2208 = vmul.f32 %v1801, %v2073
      %v2209 = vmul.f32 %v1806, %v2073
      %v2210 = vmul.f32 %v1809, %v2073
      %v2211 = vmul.f32 %v1814, %v2073
      %v2212 = vmul.f32 %v1817, %v2073
      %v2213 = vmul.f32 %v1822, %v2073
      %v2214 = vmul.f32 %v1825, %v2073
      %v2215 = vmul.f32 %v1830, %v2073
      %v2216 = vmul.f32 %v1833, %v2073
      %v2217 = vmul.f32 %v1838, %v2073
      %v2218 = vmul.f32 %v1841, %v2073
      %v2219 = vmul.f32 %v1846, %v2073
      %v2220 = vmul.f32 %v1849, %v2073
      %v2221 = vmul.f32 %v1854, %v2073
      %v2222 = vmul.f32 %v1857, %v2073
      %v2223 = vmul.f32 %v1862, %v2073
      %v2224 = vmul.f32 %v1865, %v2073
      %v2225 = vmul.f32 %v1870, %v2073
      %v2226 = vmul.f32 %v1873, %v2073
      %v2227 = vmul.f32 %v1878, %v2073
      %v2228 = vmul.f32 %v1881, %v2073
      %v2229 = vmul.f32 %v1886, %v2073
      %v2230 = vmul.f32 %v1889, %v2073
      %v2231 = vmul.f32 %v1894, %v2073
      %v2232 = vmul.f32 %v1897, %v2073
      %v2233 = vmul.f32 %v1902, %v2073
      %v2234 = vmul.f32 %v1905, %v2073
      %v2235 = vmul.f32 %v1910, %v2073
      %v2236 = vmul.f32 %v1913, %v2073
      %v2237 = vmul.f32 %v1918, %v2073
      %v2238 = vmul.f32 %v1921, %v2073
      %v2239 = vmul.f32 %v1926, %v2073
      %v2240 = vmul.f32 %v1929, %v2073
      %v2241 = vmul.f32 %v1934, %v2073
      %v2242 = vmul.f32 %v1937, %v2073
      %v2243 = vmul.f32 %v1942, %v2073
      %v2244 = vmul.f32 %v1945, %v2073
      %v2245 = vmul.f32 %v1950, %v2073
      %v2246 = vmul.f32 %v1953, %v2073
      %v2247 = vmul.f32 %v1958, %v2073
      %v2248 = vmul.f32 %v1961, %v2073
      %v2249 = vmul.f32 %v1966, %v2073
      %v2250 = vmul.f32 %v1969, %v2073
      %v2251 = vmul.f32 %v1974, %v2073
      %v2252 = vmul.f32 %v1977, %v2073
      %v2253 = vmul.f32 %v1982, %v2073
      %v2254 = vmul.f32 %v1985, %v2073
      %v2255 = vmul.f32 %v1990, %v2073
      %v2256 = vmul.f32 %v1993, %v2073
      %v2257 = vmul.f32 %v1998, %v2073
      %v2258 = vmul.f32 %v2001, %v2073
      %v2259 = vmul.f32 %v2006, %v2073
      %v2260 = vmul.f32 %v2009, %v2073
      %v2261 = vmul.f32 %v2014, %v2073
      %v2262 = vmul.f32 %v2017, %v2073
      %v2263 = vmul.f32 %v2022, %v2073
      %v2264 = vmul.f32 %v2025, %v2073
      %v2265 = vmul.f32 %v2030, %v2073
      %v2266 = vmul.f32 %v2033, %v2073
      %v2267 = vmul.f32 %v2038, %v2073
      %v2268 = vmul.f32 %v2041, %v2073
      %v2269 = vmul.f32 %v2046, %v2073
      %v2270 = vmul.f32 %v2049, %v2073
      %v2271 = vmul.f32 %v2054, %v2073
      %v2272 = vmul.f32 %v2057, %v2073
      %v2273 = vmul.f32 %v2062, %v2073
      %v2274 = vmul.f32 %v2065, %v2073
      %v2275 = vld [vmem:[%s3] sm:$0x1]
      %v2277 = vlaneseq
      %v2278 = vshrl.u32 %v2277, 7
      %v2279 = vsub.s32 0, %v2278
      %v2280 = vrot.slane %v2275, %v2279
      %v2282 = vadd.f32 %v2075, %v2280
      %v2283 = vadd.f32 %v2076, %v2280
      %v2284 = vadd.f32 %v2077, %v2280
      %v2285 = vadd.f32 %v2078, %v2280
      %v2286 = vadd.f32 %v2079, %v2280
      %v2287 = vadd.f32 %v2080, %v2280
      %v2288 = vadd.f32 %v2081, %v2280
      %v2289 = vadd.f32 %v2082, %v2280
      %v2290 = vadd.f32 %v2083, %v2280
      %v2291 = vadd.f32 %v2084, %v2280
      %v2292 = vadd.f32 %v2085, %v2280
      %v2293 = vadd.f32 %v2086, %v2280
      %v2294 = vadd.f32 %v2087, %v2280
      %v2295 = vadd.f32 %v2088, %v2280
      %v2296 = vadd.f32 %v2089, %v2280
      %v2297 = vadd.f32 %v2090, %v2280
      %v2298 = vadd.f32 %v2091, %v2280
      %v2299 = vadd.f32 %v2092, %v2280
      %v2300 = vadd.f32 %v2093, %v2280
      %v2301 = vadd.f32 %v2094, %v2280
      %v2302 = vadd.f32 %v2095, %v2280
      %v2303 = vadd.f32 %v2096, %v2280
      %v2304 = vadd.f32 %v2097, %v2280
      %v2305 = vadd.f32 %v2098, %v2280
      %v2306 = vadd.f32 %v2099, %v2280
      %v2307 = vadd.f32 %v2100, %v2280
      %v2308 = vadd.f32 %v2101, %v2280
      %v2309 = vadd.f32 %v2102, %v2280
      %v2310 = vadd.f32 %v2103, %v2280
      %v2311 = vadd.f32 %v2104, %v2280
      %v2312 = vadd.f32 %v2105, %v2280
      %v2313 = vadd.f32 %v2106, %v2280
      %v2314 = vadd.f32 %v2107, %v2280
      %v2315 = vadd.f32 %v2108, %v2280
      %v2316 = vadd.f32 %v2109, %v2280
      %v2317 = vadd.f32 %v2110, %v2280
      %v2318 = vadd.f32 %v2111, %v2280
      %v2319 = vadd.f32 %v2112, %v2280
      %v2320 = vadd.f32 %v2113, %v2280
      %v2321 = vadd.f32 %v2114, %v2280
      %v2322 = vadd.f32 %v2115, %v2280
      %v2323 = vadd.f32 %v2116, %v2280
      %v2324 = vadd.f32 %v2117, %v2280
      %v2325 = vadd.f32 %v2118, %v2280
      %v2326 = vadd.f32 %v2119, %v2280
      %v2327 = vadd.f32 %v2120, %v2280
      %v2328 = vadd.f32 %v2121, %v2280
      %v2329 = vadd.f32 %v2122, %v2280
      %v2330 = vadd.f32 %v2123, %v2280
      %v2331 = vadd.f32 %v2124, %v2280
      %v2332 = vadd.f32 %v2125, %v2280
      %v2333 = vadd.f32 %v2126, %v2280
      %v2334 = vadd.f32 %v2127, %v2280
      %v2335 = vadd.f32 %v2128, %v2280
      %v2336 = vadd.f32 %v2129, %v2280
      %v2337 = vadd.f32 %v2130, %v2280
      %v2338 = vadd.f32 %v2131, %v2280
      %v2339 = vadd.f32 %v2132, %v2280
      %v2340 = vadd.f32 %v2133, %v2280
      %v2341 = vadd.f32 %v2134, %v2280
      %v2342 = vadd.f32 %v2135, %v2280
      %v2343 = vadd.f32 %v2136, %v2280
      %v2344 = vadd.f32 %v2137, %v2280
      %v2345 = vadd.f32 %v2138, %v2280
      %v2346 = vadd.f32 %v2139, %v2280
      %v2347 = vadd.f32 %v2140, %v2280
      %v2348 = vadd.f32 %v2141, %v2280
      %v2349 = vadd.f32 %v2142, %v2280
      %v2350 = vadd.f32 %v2143, %v2280
      %v2351 = vadd.f32 %v2144, %v2280
      %v2352 = vadd.f32 %v2145, %v2280
      %v2353 = vadd.f32 %v2146, %v2280
      %v2354 = vadd.f32 %v2147, %v2280
      %v2355 = vadd.f32 %v2148, %v2280
      %v2356 = vadd.f32 %v2149, %v2280
      %v2357 = vadd.f32 %v2150, %v2280
      %v2358 = vadd.f32 %v2151, %v2280
      %v2359 = vadd.f32 %v2152, %v2280
      %v2360 = vadd.f32 %v2153, %v2280
      %v2361 = vadd.f32 %v2154, %v2280
      %v2362 = vadd.f32 %v2155, %v2280
      %v2363 = vadd.f32 %v2156, %v2280
      %v2364 = vadd.f32 %v2157, %v2280
      %v2365 = vadd.f32 %v2158, %v2280
      %v2366 = vadd.f32 %v2159, %v2280
      %v2367 = vadd.f32 %v2160, %v2280
      %v2368 = vadd.f32 %v2161, %v2280
      %v2369 = vadd.f32 %v2162, %v2280
      %v2370 = vadd.f32 %v2163, %v2280
      %v2371 = vadd.f32 %v2164, %v2280
      %v2372 = vadd.f32 %v2165, %v2280
      %v2373 = vadd.f32 %v2166, %v2280
      %v2374 = vadd.f32 %v2167, %v2280
      %v2375 = vadd.f32 %v2168, %v2280
      %v2376 = vadd.f32 %v2169, %v2280
      %v2377 = vadd.f32 %v2170, %v2280
      %v2378 = vadd.f32 %v2171, %v2280
      %v2379 = vadd.f32 %v2172, %v2280
      %v2380 = vadd.f32 %v2173, %v2280
      %v2381 = vadd.f32 %v2174, %v2280
      %v2382 = vadd.f32 %v2175, %v2280
      %v2383 = vadd.f32 %v2176, %v2280
      %v2384 = vadd.f32 %v2177, %v2280
      %v2385 = vadd.f32 %v2178, %v2280
      %v2386 = vadd.f32 %v2179, %v2280
      %v2387 = vadd.f32 %v2180, %v2280
      %v2388 = vadd.f32 %v2181, %v2280
      %v2389 = vadd.f32 %v2182, %v2280
      %v2390 = vadd.f32 %v2183, %v2280
      %v2391 = vadd.f32 %v2184, %v2280
      %v2392 = vadd.f32 %v2185, %v2280
      %v2393 = vadd.f32 %v2186, %v2280
      %v2394 = vadd.f32 %v2187, %v2280
      %v2395 = vadd.f32 %v2188, %v2280
      %v2396 = vadd.f32 %v2189, %v2280
      %v2397 = vadd.f32 %v2190, %v2280
      %v2398 = vadd.f32 %v2191, %v2280
      %v2399 = vadd.f32 %v2192, %v2280
      %v2400 = vadd.f32 %v2193, %v2280
      %v2401 = vadd.f32 %v2194, %v2280
      %v2402 = vadd.f32 %v2195, %v2280
      %v2403 = vadd.f32 %v2196, %v2280
      %v2404 = vadd.f32 %v2197, %v2280
      %v2405 = vadd.f32 %v2198, %v2280
      %v2406 = vadd.f32 %v2199, %v2280
      %v2407 = vadd.f32 %v2200, %v2280
      %v2408 = vadd.f32 %v2201, %v2280
      %v2409 = vadd.f32 %v2202, %v2280
      %v2410 = vadd.f32 %v2203, %v2280
      %v2411 = vadd.f32 %v2204, %v2280
      %v2412 = vadd.f32 %v2205, %v2280
      %v2413 = vadd.f32 %v2206, %v2280
      %v2414 = vadd.f32 %v2207, %v2280
      %v2415 = vadd.f32 %v2208, %v2280
      %v2416 = vadd.f32 %v2209, %v2280
      %v2417 = vadd.f32 %v2210, %v2280
      %v2418 = vadd.f32 %v2211, %v2280
      %v2419 = vadd.f32 %v2212, %v2280
      %v2420 = vadd.f32 %v2213, %v2280
      %v2421 = vadd.f32 %v2214, %v2280
      %v2422 = vadd.f32 %v2215, %v2280
      %v2423 = vadd.f32 %v2216, %v2280
      %v2424 = vadd.f32 %v2217, %v2280
      %v2425 = vadd.f32 %v2218, %v2280
      %v2426 = vadd.f32 %v2219, %v2280
      %v2427 = vadd.f32 %v2220, %v2280
      %v2428 = vadd.f32 %v2221, %v2280
      %v2429 = vadd.f32 %v2222, %v2280
      %v2430 = vadd.f32 %v2223, %v2280
      %v2431 = vadd.f32 %v2224, %v2280
      %v2432 = vadd.f32 %v2225, %v2280
      %v2433 = vadd.f32 %v2226, %v2280
      %v2434 = vadd.f32 %v2227, %v2280
      %v2435 = vadd.f32 %v2228, %v2280
      %v2436 = vadd.f32 %v2229, %v2280
      %v2437 = vadd.f32 %v2230, %v2280
      %v2438 = vadd.f32 %v2231, %v2280
      %v2439 = vadd.f32 %v2232, %v2280
      %v2440 = vadd.f32 %v2233, %v2280
      %v2441 = vadd.f32 %v2234, %v2280
      %v2442 = vadd.f32 %v2235, %v2280
      %v2443 = vadd.f32 %v2236, %v2280
      %v2444 = vadd.f32 %v2237, %v2280
      %v2445 = vadd.f32 %v2238, %v2280
      %v2446 = vadd.f32 %v2239, %v2280
      %v2447 = vadd.f32 %v2240, %v2280
      %v2448 = vadd.f32 %v2241, %v2280
      %v2449 = vadd.f32 %v2242, %v2280
      %v2450 = vadd.f32 %v2243, %v2280
      %v2451 = vadd.f32 %v2244, %v2280
      %v2452 = vadd.f32 %v2245, %v2280
      %v2453 = vadd.f32 %v2246, %v2280
      %v2454 = vadd.f32 %v2247, %v2280
      %v2455 = vadd.f32 %v2248, %v2280
      %v2456 = vadd.f32 %v2249, %v2280
      %v2457 = vadd.f32 %v2250, %v2280
      %v2458 = vadd.f32 %v2251, %v2280
      %v2459 = vadd.f32 %v2252, %v2280
      %v2460 = vadd.f32 %v2253, %v2280
      %v2461 = vadd.f32 %v2254, %v2280
      %v2462 = vadd.f32 %v2255, %v2280
      %v2463 = vadd.f32 %v2256, %v2280
      %v2464 = vadd.f32 %v2257, %v2280
      %v2465 = vadd.f32 %v2258, %v2280
      %v2466 = vadd.f32 %v2259, %v2280
      %v2467 = vadd.f32 %v2260, %v2280
      %v2468 = vadd.f32 %v2261, %v2280
      %v2469 = vadd.f32 %v2262, %v2280
      %v2470 = vadd.f32 %v2263, %v2280
      %v2471 = vadd.f32 %v2264, %v2280
      %v2472 = vadd.f32 %v2265, %v2280
      %v2473 = vadd.f32 %v2266, %v2280
      %v2474 = vadd.f32 %v2267, %v2280
      %v2475 = vadd.f32 %v2268, %v2280
      %v2476 = vadd.f32 %v2269, %v2280
      %v2477 = vadd.f32 %v2270, %v2280
      %v2478 = vadd.f32 %v2271, %v2280
      %v2479 = vadd.f32 %v2272, %v2280
      %v2480 = vadd.f32 %v2273, %v2280
      %v2481 = vadd.f32 %v2274, %v2280
      %v2482 = vmax.f32 %v2282, 0.0
      %v2483 = vmax.f32 %v2283, 0.0
      %v2484 = vmax.f32 %v2284, 0.0
      %v2485 = vmax.f32 %v2285, 0.0
      %v2486 = vmax.f32 %v2286, 0.0
      %v2487 = vmax.f32 %v2287, 0.0
      %v2488 = vmax.f32 %v2288, 0.0
      %v2489 = vmax.f32 %v2289, 0.0
      %v2490 = vmax.f32 %v2290, 0.0
      %v2491 = vmax.f32 %v2291, 0.0
      %v2492 = vmax.f32 %v2292, 0.0
      %v2493 = vmax.f32 %v2293, 0.0
      %v2494 = vmax.f32 %v2294, 0.0
      %v2495 = vmax.f32 %v2295, 0.0
      %v2496 = vmax.f32 %v2296, 0.0
      %v2497 = vmax.f32 %v2297, 0.0
      %v2498 = vmax.f32 %v2298, 0.0
      %v2499 = vmax.f32 %v2299, 0.0
      %v2500 = vmax.f32 %v2300, 0.0
      %v2501 = vmax.f32 %v2301, 0.0
      %v2502 = vmax.f32 %v2302, 0.0
      %v2503 = vmax.f32 %v2303, 0.0
      %v2504 = vmax.f32 %v2304, 0.0
      %v2505 = vmax.f32 %v2305, 0.0
      %v2506 = vmax.f32 %v2306, 0.0
      %v2507 = vmax.f32 %v2307, 0.0
      %v2508 = vmax.f32 %v2308, 0.0
      %v2509 = vmax.f32 %v2309, 0.0
      %v2510 = vmax.f32 %v2310, 0.0
      %v2511 = vmax.f32 %v2311, 0.0
      %v2512 = vmax.f32 %v2312, 0.0
      %v2513 = vmax.f32 %v2313, 0.0
      %v2514 = vmax.f32 %v2314, 0.0
      %v2515 = vmax.f32 %v2315, 0.0
      %v2516 = vmax.f32 %v2316, 0.0
      %v2517 = vmax.f32 %v2317, 0.0
      %v2518 = vmax.f32 %v2318, 0.0
      %v2519 = vmax.f32 %v2319, 0.0
      %v2520 = vmax.f32 %v2320, 0.0
      %v2521 = vmax.f32 %v2321, 0.0
      %v2522 = vmax.f32 %v2322, 0.0
      %v2523 = vmax.f32 %v2323, 0.0
      %v2524 = vmax.f32 %v2324, 0.0
      %v2525 = vmax.f32 %v2325, 0.0
      %v2526 = vmax.f32 %v2326, 0.0
      %v2527 = vmax.f32 %v2327, 0.0
      %v2528 = vmax.f32 %v2328, 0.0
      %v2529 = vmax.f32 %v2329, 0.0
      %v2530 = vmax.f32 %v2330, 0.0
      %v2531 = vmax.f32 %v2331, 0.0
      %v2532 = vmax.f32 %v2332, 0.0
      %v2533 = vmax.f32 %v2333, 0.0
      %v2534 = vmax.f32 %v2334, 0.0
      %v2535 = vmax.f32 %v2335, 0.0
      %v2536 = vmax.f32 %v2336, 0.0
      %v2537 = vmax.f32 %v2337, 0.0
      %v2538 = vmax.f32 %v2338, 0.0
      %v2539 = vmax.f32 %v2339, 0.0
      %v2540 = vmax.f32 %v2340, 0.0
      %v2541 = vmax.f32 %v2341, 0.0
      %v2542 = vmax.f32 %v2342, 0.0
      %v2543 = vmax.f32 %v2343, 0.0
      %v2544 = vmax.f32 %v2344, 0.0
      %v2545 = vmax.f32 %v2345, 0.0
      %v2546 = vmax.f32 %v2346, 0.0
      %v2547 = vmax.f32 %v2347, 0.0
      %v2548 = vmax.f32 %v2348, 0.0
      %v2549 = vmax.f32 %v2349, 0.0
      %v2550 = vmax.f32 %v2350, 0.0
      %v2551 = vmax.f32 %v2351, 0.0
      %v2552 = vmax.f32 %v2352, 0.0
      %v2553 = vmax.f32 %v2353, 0.0
      %v2554 = vmax.f32 %v2354, 0.0
      %v2555 = vmax.f32 %v2355, 0.0
      %v2556 = vmax.f32 %v2356, 0.0
      %v2557 = vmax.f32 %v2357, 0.0
      %v2558 = vmax.f32 %v2358, 0.0
      %v2559 = vmax.f32 %v2359, 0.0
      %v2560 = vmax.f32 %v2360, 0.0
      %v2561 = vmax.f32 %v2361, 0.0
      %v2562 = vmax.f32 %v2362, 0.0
      %v2563 = vmax.f32 %v2363, 0.0
      %v2564 = vmax.f32 %v2364, 0.0
      %v2565 = vmax.f32 %v2365, 0.0
      %v2566 = vmax.f32 %v2366, 0.0
      %v2567 = vmax.f32 %v2367, 0.0
      %v2568 = vmax.f32 %v2368, 0.0
      %v2569 = vmax.f32 %v2369, 0.0
      %v2570 = vmax.f32 %v2370, 0.0
      %v2571 = vmax.f32 %v2371, 0.0
      %v2572 = vmax.f32 %v2372, 0.0
      %v2573 = vmax.f32 %v2373, 0.0
      %v2574 = vmax.f32 %v2374, 0.0
      %v2575 = vmax.f32 %v2375, 0.0
      %v2576 = vmax.f32 %v2376, 0.0
      %v2577 = vmax.f32 %v2377, 0.0
      %v2578 = vmax.f32 %v2378, 0.0
      %v2579 = vmax.f32 %v2379, 0.0
      %v2580 = vmax.f32 %v2380, 0.0
      %v2581 = vmax.f32 %v2381, 0.0
      %v2582 = vmax.f32 %v2382, 0.0
      %v2583 = vmax.f32 %v2383, 0.0
      %v2584 = vmax.f32 %v2384, 0.0
      %v2585 = vmax.f32 %v2385, 0.0
      %v2586 = vmax.f32 %v2386, 0.0
      %v2587 = vmax.f32 %v2387, 0.0
      %v2588 = vmax.f32 %v2388, 0.0
      %v2589 = vmax.f32 %v2389, 0.0
      %v2590 = vmax.f32 %v2390, 0.0
      %v2591 = vmax.f32 %v2391, 0.0
      %v2592 = vmax.f32 %v2392, 0.0
      %v2593 = vmax.f32 %v2393, 0.0
      %v2594 = vmax.f32 %v2394, 0.0
      %v2595 = vmax.f32 %v2395, 0.0
      %v2596 = vmax.f32 %v2396, 0.0
      %v2597 = vmax.f32 %v2397, 0.0
      %v2598 = vmax.f32 %v2398, 0.0
      %v2599 = vmax.f32 %v2399, 0.0
      %v2600 = vmax.f32 %v2400, 0.0
      %v2601 = vmax.f32 %v2401, 0.0
      %v2602 = vmax.f32 %v2402, 0.0
      %v2603 = vmax.f32 %v2403, 0.0
      %v2604 = vmax.f32 %v2404, 0.0
      %v2605 = vmax.f32 %v2405, 0.0
      %v2606 = vmax.f32 %v2406, 0.0
      %v2607 = vmax.f32 %v2407, 0.0
      %v2608 = vmax.f32 %v2408, 0.0
      %v2609 = vmax.f32 %v2409, 0.0
      %v2610 = vmax.f32 %v2410, 0.0
      %v2611 = vmax.f32 %v2411, 0.0
      %v2612 = vmax.f32 %v2412, 0.0
      %v2613 = vmax.f32 %v2413, 0.0
      %v2614 = vmax.f32 %v2414, 0.0
      %v2615 = vmax.f32 %v2415, 0.0
      %v2616 = vmax.f32 %v2416, 0.0
      %v2617 = vmax.f32 %v2417, 0.0
      %v2618 = vmax.f32 %v2418, 0.0
      %v2619 = vmax.f32 %v2419, 0.0
      %v2620 = vmax.f32 %v2420, 0.0
      %v2621 = vmax.f32 %v2421, 0.0
      %v2622 = vmax.f32 %v2422, 0.0
      %v2623 = vmax.f32 %v2423, 0.0
      %v2624 = vmax.f32 %v2424, 0.0
      %v2625 = vmax.f32 %v2425, 0.0
      %v2626 = vmax.f32 %v2426, 0.0
      %v2627 = vmax.f32 %v2427, 0.0
      %v2628 = vmax.f32 %v2428, 0.0
      %v2629 = vmax.f32 %v2429, 0.0
      %v2630 = vmax.f32 %v2430, 0.0
      %v2631 = vmax.f32 %v2431, 0.0
      %v2632 = vmax.f32 %v2432, 0.0
      %v2633 = vmax.f32 %v2433, 0.0
      %v2634 = vmax.f32 %v2434, 0.0
      %v2635 = vmax.f32 %v2435, 0.0
      %v2636 = vmax.f32 %v2436, 0.0
      %v2637 = vmax.f32 %v2437, 0.0
      %v2638 = vmax.f32 %v2438, 0.0
      %v2639 = vmax.f32 %v2439, 0.0
      %v2640 = vmax.f32 %v2440, 0.0
      %v2641 = vmax.f32 %v2441, 0.0
      %v2642 = vmax.f32 %v2442, 0.0
      %v2643 = vmax.f32 %v2443, 0.0
      %v2644 = vmax.f32 %v2444, 0.0
      %v2645 = vmax.f32 %v2445, 0.0
      %v2646 = vmax.f32 %v2446, 0.0
      %v2647 = vmax.f32 %v2447, 0.0
      %v2648 = vmax.f32 %v2448, 0.0
      %v2649 = vmax.f32 %v2449, 0.0
      %v2650 = vmax.f32 %v2450, 0.0
      %v2651 = vmax.f32 %v2451, 0.0
      %v2652 = vmax.f32 %v2452, 0.0
      %v2653 = vmax.f32 %v2453, 0.0
      %v2654 = vmax.f32 %v2454, 0.0
      %v2655 = vmax.f32 %v2455, 0.0
      %v2656 = vmax.f32 %v2456, 0.0
      %v2657 = vmax.f32 %v2457, 0.0
      %v2658 = vmax.f32 %v2458, 0.0
      %v2659 = vmax.f32 %v2459, 0.0
      %v2660 = vmax.f32 %v2460, 0.0
      %v2661 = vmax.f32 %v2461, 0.0
      %v2662 = vmax.f32 %v2462, 0.0
      %v2663 = vmax.f32 %v2463, 0.0
      %v2664 = vmax.f32 %v2464, 0.0
      %v2665 = vmax.f32 %v2465, 0.0
      %v2666 = vmax.f32 %v2466, 0.0
      %v2667 = vmax.f32 %v2467, 0.0
      %v2668 = vmax.f32 %v2468, 0.0
      %v2669 = vmax.f32 %v2469, 0.0
      %v2670 = vmax.f32 %v2470, 0.0
      %v2671 = vmax.f32 %v2471, 0.0
      %v2672 = vmax.f32 %v2472, 0.0
      %v2673 = vmax.f32 %v2473, 0.0
      %v2674 = vmax.f32 %v2474, 0.0
      %v2675 = vmax.f32 %v2475, 0.0
      %v2676 = vmax.f32 %v2476, 0.0
      %v2677 = vmax.f32 %v2477, 0.0
      %v2678 = vmax.f32 %v2478, 0.0
      %v2679 = vmax.f32 %v2479, 0.0
      %v2680 = vmax.f32 %v2480, 0.0
      %v2681 = vmax.f32 %v2481, 0.0
      %v2682 = vpack.c.bf16 %v2483, %v2482
      %v2683 = vpack.c.bf16 %v2485, %v2484
      %v2684 = vpack.c.bf16 %v2487, %v2486
      %v2685 = vpack.c.bf16 %v2489, %v2488
      %v2686 = vpack.c.bf16 %v2491, %v2490
      %v2687 = vpack.c.bf16 %v2493, %v2492
      %v2688 = vpack.c.bf16 %v2495, %v2494
      %v2689 = vpack.c.bf16 %v2497, %v2496
      %v2690 = vpack.c.bf16 %v2499, %v2498
      %v2691 = vpack.c.bf16 %v2501, %v2500
      %v2692 = vpack.c.bf16 %v2503, %v2502
      %v2693 = vpack.c.bf16 %v2505, %v2504
      %v2694 = vpack.c.bf16 %v2507, %v2506
      %v2695 = vpack.c.bf16 %v2509, %v2508
      %v2696 = vpack.c.bf16 %v2511, %v2510
      %v2697 = vpack.c.bf16 %v2513, %v2512
      %v2698 = vpack.c.bf16 %v2515, %v2514
      %v2699 = vpack.c.bf16 %v2517, %v2516
      %v2700 = vpack.c.bf16 %v2519, %v2518
      %v2701 = vpack.c.bf16 %v2521, %v2520
      %v2702 = vpack.c.bf16 %v2523, %v2522
      %v2703 = vpack.c.bf16 %v2525, %v2524
      %v2704 = vpack.c.bf16 %v2527, %v2526
      %v2705 = vpack.c.bf16 %v2529, %v2528
      %v2706 = vpack.c.bf16 %v2531, %v2530
      %v2707 = vpack.c.bf16 %v2533, %v2532
      %v2708 = vpack.c.bf16 %v2535, %v2534
      %v2709 = vpack.c.bf16 %v2537, %v2536
      %v2710 = vpack.c.bf16 %v2539, %v2538
      %v2711 = vpack.c.bf16 %v2541, %v2540
      %v2712 = vpack.c.bf16 %v2543, %v2542
      %v2713 = vpack.c.bf16 %v2545, %v2544
      %v2714 = vpack.c.bf16 %v2547, %v2546
      %v2715 = vpack.c.bf16 %v2549, %v2548
      %v2716 = vpack.c.bf16 %v2551, %v2550
      %v2717 = vpack.c.bf16 %v2553, %v2552
      %v2718 = vpack.c.bf16 %v2555, %v2554
      %v2719 = vpack.c.bf16 %v2557, %v2556
      %v2720 = vpack.c.bf16 %v2559, %v2558
      %v2721 = vpack.c.bf16 %v2561, %v2560
      %v2722 = vpack.c.bf16 %v2563, %v2562
      %v2723 = vpack.c.bf16 %v2565, %v2564
      %v2724 = vpack.c.bf16 %v2567, %v2566
      %v2725 = vpack.c.bf16 %v2569, %v2568
      %v2726 = vpack.c.bf16 %v2571, %v2570
      %v2727 = vpack.c.bf16 %v2573, %v2572
      %v2728 = vpack.c.bf16 %v2575, %v2574
      %v2729 = vpack.c.bf16 %v2577, %v2576
      %v2730 = vpack.c.bf16 %v2579, %v2578
      %v2731 = vpack.c.bf16 %v2581, %v2580
      %v2732 = vpack.c.bf16 %v2583, %v2582
      %v2733 = vpack.c.bf16 %v2585, %v2584
      %v2734 = vpack.c.bf16 %v2587, %v2586
      %v2735 = vpack.c.bf16 %v2589, %v2588
      %v2736 = vpack.c.bf16 %v2591, %v2590
      %v2737 = vpack.c.bf16 %v2593, %v2592
      %v2738 = vpack.c.bf16 %v2595, %v2594
      %v2739 = vpack.c.bf16 %v2597, %v2596
      %v2740 = vpack.c.bf16 %v2599, %v2598
      %v2741 = vpack.c.bf16 %v2601, %v2600
      %v2742 = vpack.c.bf16 %v2603, %v2602
      %v2743 = vpack.c.bf16 %v2605, %v2604
      %v2744 = vpack.c.bf16 %v2607, %v2606
      %v2745 = vpack.c.bf16 %v2609, %v2608
      %v2746 = vpack.c.bf16 %v2611, %v2610
      %v2747 = vpack.c.bf16 %v2613, %v2612
      %v2748 = vpack.c.bf16 %v2615, %v2614
      %v2749 = vpack.c.bf16 %v2617, %v2616
      %v2750 = vpack.c.bf16 %v2619, %v2618
      %v2751 = vpack.c.bf16 %v2621, %v2620
      %v2752 = vpack.c.bf16 %v2623, %v2622
      %v2753 = vpack.c.bf16 %v2625, %v2624
      %v2754 = vpack.c.bf16 %v2627, %v2626
      %v2755 = vpack.c.bf16 %v2629, %v2628
      %v2756 = vpack.c.bf16 %v2631, %v2630
      %v2757 = vpack.c.bf16 %v2633, %v2632
      %v2758 = vpack.c.bf16 %v2635, %v2634
      %v2759 = vpack.c.bf16 %v2637, %v2636
      %v2760 = vpack.c.bf16 %v2639, %v2638
      %v2761 = vpack.c.bf16 %v2641, %v2640
      %v2762 = vpack.c.bf16 %v2643, %v2642
      %v2763 = vpack.c.bf16 %v2645, %v2644
      %v2764 = vpack.c.bf16 %v2647, %v2646
      %v2765 = vpack.c.bf16 %v2649, %v2648
      %v2766 = vpack.c.bf16 %v2651, %v2650
      %v2767 = vpack.c.bf16 %v2653, %v2652
      %v2768 = vpack.c.bf16 %v2655, %v2654
      %v2769 = vpack.c.bf16 %v2657, %v2656
      %v2770 = vpack.c.bf16 %v2659, %v2658
      %v2771 = vpack.c.bf16 %v2661, %v2660
      %v2772 = vpack.c.bf16 %v2663, %v2662
      %v2773 = vpack.c.bf16 %v2665, %v2664
      %v2774 = vpack.c.bf16 %v2667, %v2666
      %v2775 = vpack.c.bf16 %v2669, %v2668
      %v2776 = vpack.c.bf16 %v2671, %v2670
      %v2777 = vpack.c.bf16 %v2673, %v2672
      %v2778 = vpack.c.bf16 %v2675, %v2674
      %v2779 = vpack.c.bf16 %v2677, %v2676
      %v2780 = vpack.c.bf16 %v2679, %v2678
      %v2781 = vpack.c.bf16 %v2681, %v2680
      %v2882 = vunpack.c.l.b16 %v2682
      %v2883 = vunpack.c.h.b16 %v2682
      %v2884 = vunpack.c.l.b16 %v2683
      %v2885 = vunpack.c.h.b16 %v2683
      %v2886 = vunpack.c.l.b16 %v2684
      %v2887 = vunpack.c.h.b16 %v2684
      %v2888 = vunpack.c.l.b16 %v2685
      %v2889 = vunpack.c.h.b16 %v2685
      %v2890 = vunpack.c.l.b16 %v2686
      %v2891 = vunpack.c.h.b16 %v2686
      %v2892 = vunpack.c.l.b16 %v2687
      %v2893 = vunpack.c.h.b16 %v2687
      %v2894 = vunpack.c.l.b16 %v2688
      %v2895 = vunpack.c.h.b16 %v2688
      %v2896 = vunpack.c.l.b16 %v2689
      %v2897 = vunpack.c.h.b16 %v2689
      %v2898 = vunpack.c.l.b16 %v2690
      %v2899 = vunpack.c.h.b16 %v2690
      %v2900 = vunpack.c.l.b16 %v2691
      %v2901 = vunpack.c.h.b16 %v2691
      %v2902 = vunpack.c.l.b16 %v2692
      %v2903 = vunpack.c.h.b16 %v2692
      %v2904 = vunpack.c.l.b16 %v2693
      %v2905 = vunpack.c.h.b16 %v2693
      %v2906 = vunpack.c.l.b16 %v2694
      %v2907 = vunpack.c.h.b16 %v2694
      %v2908 = vunpack.c.l.b16 %v2695
      %v2909 = vunpack.c.h.b16 %v2695
      %v2910 = vunpack.c.l.b16 %v2696
      %v2911 = vunpack.c.h.b16 %v2696
      %v2912 = vunpack.c.l.b16 %v2697
      %v2913 = vunpack.c.h.b16 %v2697
      %v2914 = vunpack.c.l.b16 %v2698
      %v2915 = vunpack.c.h.b16 %v2698
      %v2916 = vunpack.c.l.b16 %v2699
      %v2917 = vunpack.c.h.b16 %v2699
      %v2918 = vunpack.c.l.b16 %v2700
      %v2919 = vunpack.c.h.b16 %v2700
      %v2920 = vunpack.c.l.b16 %v2701
      %v2921 = vunpack.c.h.b16 %v2701
      %v2922 = vunpack.c.l.b16 %v2702
      %v2923 = vunpack.c.h.b16 %v2702
      %v2924 = vunpack.c.l.b16 %v2703
      %v2925 = vunpack.c.h.b16 %v2703
      %v2926 = vunpack.c.l.b16 %v2704
      %v2927 = vunpack.c.h.b16 %v2704
      %v2928 = vunpack.c.l.b16 %v2705
      %v2929 = vunpack.c.h.b16 %v2705
      %v2930 = vunpack.c.l.b16 %v2706
      %v2931 = vunpack.c.h.b16 %v2706
      %v2932 = vunpack.c.l.b16 %v2707
      %v2933 = vunpack.c.h.b16 %v2707
      %v2934 = vunpack.c.l.b16 %v2708
      %v2935 = vunpack.c.h.b16 %v2708
      %v2936 = vunpack.c.l.b16 %v2709
      %v2937 = vunpack.c.h.b16 %v2709
      %v2938 = vunpack.c.l.b16 %v2710
      %v2939 = vunpack.c.h.b16 %v2710
      %v2940 = vunpack.c.l.b16 %v2711
      %v2941 = vunpack.c.h.b16 %v2711
      %v2942 = vunpack.c.l.b16 %v2712
      %v2943 = vunpack.c.h.b16 %v2712
      %v2944 = vunpack.c.l.b16 %v2713
      %v2945 = vunpack.c.h.b16 %v2713
      %v2946 = vunpack.c.l.b16 %v2714
      %v2947 = vunpack.c.h.b16 %v2714
      %v2948 = vunpack.c.l.b16 %v2715
      %v2949 = vunpack.c.h.b16 %v2715
      %v2950 = vunpack.c.l.b16 %v2716
      %v2951 = vunpack.c.h.b16 %v2716
      %v2952 = vunpack.c.l.b16 %v2717
      %v2953 = vunpack.c.h.b16 %v2717
      %v2954 = vunpack.c.l.b16 %v2718
      %v2955 = vunpack.c.h.b16 %v2718
      %v2956 = vunpack.c.l.b16 %v2719
      %v2957 = vunpack.c.h.b16 %v2719
      %v2958 = vunpack.c.l.b16 %v2720
      %v2959 = vunpack.c.h.b16 %v2720
      %v2960 = vunpack.c.l.b16 %v2721
      %v2961 = vunpack.c.h.b16 %v2721
      %v2962 = vunpack.c.l.b16 %v2722
      %v2963 = vunpack.c.h.b16 %v2722
      %v2964 = vunpack.c.l.b16 %v2723
      %v2965 = vunpack.c.h.b16 %v2723
      %v2966 = vunpack.c.l.b16 %v2724
      %v2967 = vunpack.c.h.b16 %v2724
      %v2968 = vunpack.c.l.b16 %v2725
      %v2969 = vunpack.c.h.b16 %v2725
      %v2970 = vunpack.c.l.b16 %v2726
      %v2971 = vunpack.c.h.b16 %v2726
      %v2972 = vunpack.c.l.b16 %v2727
      %v2973 = vunpack.c.h.b16 %v2727
      %v2974 = vunpack.c.l.b16 %v2728
      %v2975 = vunpack.c.h.b16 %v2728
      %v2976 = vunpack.c.l.b16 %v2729
      %v2977 = vunpack.c.h.b16 %v2729
      %v2978 = vunpack.c.l.b16 %v2730
      %v2979 = vunpack.c.h.b16 %v2730
      %v2980 = vunpack.c.l.b16 %v2731
      %v2981 = vunpack.c.h.b16 %v2731
      %v2982 = vunpack.c.l.b16 %v2732
      %v2983 = vunpack.c.h.b16 %v2732
      %v2984 = vunpack.c.l.b16 %v2733
      %v2985 = vunpack.c.h.b16 %v2733
      %v2986 = vunpack.c.l.b16 %v2734
      %v2987 = vunpack.c.h.b16 %v2734
      %v2988 = vunpack.c.l.b16 %v2735
      %v2989 = vunpack.c.h.b16 %v2735
      %v2990 = vunpack.c.l.b16 %v2736
      %v2991 = vunpack.c.h.b16 %v2736
      %v2992 = vunpack.c.l.b16 %v2737
      %v2993 = vunpack.c.h.b16 %v2737
      %v2994 = vunpack.c.l.b16 %v2738
      %v2995 = vunpack.c.h.b16 %v2738
      %v2996 = vunpack.c.l.b16 %v2739
      %v2997 = vunpack.c.h.b16 %v2739
      %v2998 = vunpack.c.l.b16 %v2740
      %v2999 = vunpack.c.h.b16 %v2740
      %v3000 = vunpack.c.l.b16 %v2741
      %v3001 = vunpack.c.h.b16 %v2741
      %v3002 = vunpack.c.l.b16 %v2742
      %v3003 = vunpack.c.h.b16 %v2742
      %v3004 = vunpack.c.l.b16 %v2743
      %v3005 = vunpack.c.h.b16 %v2743
      %v3006 = vunpack.c.l.b16 %v2744
      %v3007 = vunpack.c.h.b16 %v2744
      %v3008 = vunpack.c.l.b16 %v2745
      %v3009 = vunpack.c.h.b16 %v2745
      %v3010 = vunpack.c.l.b16 %v2746
      %v3011 = vunpack.c.h.b16 %v2746
      %v3012 = vunpack.c.l.b16 %v2747
      %v3013 = vunpack.c.h.b16 %v2747
      %v3014 = vunpack.c.l.b16 %v2748
      %v3015 = vunpack.c.h.b16 %v2748
      %v3016 = vunpack.c.l.b16 %v2749
      %v3017 = vunpack.c.h.b16 %v2749
      %v3018 = vunpack.c.l.b16 %v2750
      %v3019 = vunpack.c.h.b16 %v2750
      %v3020 = vunpack.c.l.b16 %v2751
      %v3021 = vunpack.c.h.b16 %v2751
      %v3022 = vunpack.c.l.b16 %v2752
      %v3023 = vunpack.c.h.b16 %v2752
      %v3024 = vunpack.c.l.b16 %v2753
      %v3025 = vunpack.c.h.b16 %v2753
      %v3026 = vunpack.c.l.b16 %v2754
      %v3027 = vunpack.c.h.b16 %v2754
      %v3028 = vunpack.c.l.b16 %v2755
      %v3029 = vunpack.c.h.b16 %v2755
      %v3030 = vunpack.c.l.b16 %v2756
      %v3031 = vunpack.c.h.b16 %v2756
      %v3032 = vunpack.c.l.b16 %v2757
      %v3033 = vunpack.c.h.b16 %v2757
      %v3034 = vunpack.c.l.b16 %v2758
      %v3035 = vunpack.c.h.b16 %v2758
      %v3036 = vunpack.c.l.b16 %v2759
      %v3037 = vunpack.c.h.b16 %v2759
      %v3038 = vunpack.c.l.b16 %v2760
      %v3039 = vunpack.c.h.b16 %v2760
      %v3040 = vunpack.c.l.b16 %v2761
      %v3041 = vunpack.c.h.b16 %v2761
      %v3042 = vunpack.c.l.b16 %v2762
      %v3043 = vunpack.c.h.b16 %v2762
      %v3044 = vunpack.c.l.b16 %v2763
      %v3045 = vunpack.c.h.b16 %v2763
      %v3046 = vunpack.c.l.b16 %v2764
      %v3047 = vunpack.c.h.b16 %v2764
      %v3048 = vunpack.c.l.b16 %v2765
      %v3049 = vunpack.c.h.b16 %v2765
      %v3050 = vunpack.c.l.b16 %v2766
      %v3051 = vunpack.c.h.b16 %v2766
      %v3052 = vunpack.c.l.b16 %v2767
      %v3053 = vunpack.c.h.b16 %v2767
      %v3054 = vunpack.c.l.b16 %v2768
      %v3055 = vunpack.c.h.b16 %v2768
      %v3056 = vunpack.c.l.b16 %v2769
      %v3057 = vunpack.c.h.b16 %v2769
      %v3058 = vunpack.c.l.b16 %v2770
      %v3059 = vunpack.c.h.b16 %v2770
      %v3060 = vunpack.c.l.b16 %v2771
      %v3061 = vunpack.c.h.b16 %v2771
      %v3062 = vunpack.c.l.b16 %v2772
      %v3063 = vunpack.c.h.b16 %v2772
      %v3064 = vunpack.c.l.b16 %v2773
      %v3065 = vunpack.c.h.b16 %v2773
      %v3066 = vunpack.c.l.b16 %v2774
      %v3067 = vunpack.c.h.b16 %v2774
      %v3068 = vunpack.c.l.b16 %v2775
      %v3069 = vunpack.c.h.b16 %v2775
      %v3070 = vunpack.c.l.b16 %v2776
      %v3071 = vunpack.c.h.b16 %v2776
      %v3072 = vunpack.c.l.b16 %v2777
      %v3073 = vunpack.c.h.b16 %v2777
      %v3074 = vunpack.c.l.b16 %v2778
      %v3075 = vunpack.c.h.b16 %v2778
      %v3076 = vunpack.c.l.b16 %v2779
      %v3077 = vunpack.c.h.b16 %v2779
      %v3078 = vunpack.c.l.b16 %v2780
      %v3079 = vunpack.c.h.b16 %v2780
      %v3080 = vunpack.c.l.b16 %v2781
      %v3081 = vunpack.c.h.b16 %v2781
      %v3082 = vpack.c.b16 %v2882, %v2882
      %v3083 = vpack.c.b16 %v2883, %v2883
      %v3084 = vpack.c.b16 %v2884, %v2884
      %v3085 = vpack.c.b16 %v2885, %v2885
      %v3086 = vpack.c.b16 %v2886, %v2886
      %v3087 = vpack.c.b16 %v2887, %v2887
      %v3088 = vpack.c.b16 %v2888, %v2888
      %v3089 = vpack.c.b16 %v2889, %v2889
      %v3090 = vpack.c.b16 %v2890, %v2890
      %v3091 = vpack.c.b16 %v2891, %v2891
      %v3092 = vpack.c.b16 %v2892, %v2892
      %v3093 = vpack.c.b16 %v2893, %v2893
      %v3094 = vpack.c.b16 %v2894, %v2894
      %v3095 = vpack.c.b16 %v2895, %v2895
      %v3096 = vpack.c.b16 %v2896, %v2896
      %v3097 = vpack.c.b16 %v2897, %v2897
      %v3098 = vpack.c.b16 %v2898, %v2898
      %v3099 = vpack.c.b16 %v2899, %v2899
      %v3100 = vpack.c.b16 %v2900, %v2900
      %v3101 = vpack.c.b16 %v2901, %v2901
      %v3102 = vpack.c.b16 %v2902, %v2902
      %v3103 = vpack.c.b16 %v2903, %v2903
      %v3104 = vpack.c.b16 %v2904, %v2904
      %v3105 = vpack.c.b16 %v2905, %v2905
      %v3106 = vpack.c.b16 %v2906, %v2906
      %v3107 = vpack.c.b16 %v2907, %v2907
      %v3108 = vpack.c.b16 %v2908, %v2908
      %v3109 = vpack.c.b16 %v2909, %v2909
      %v3110 = vpack.c.b16 %v2910, %v2910
      %v3111 = vpack.c.b16 %v2911, %v2911
      %v3112 = vpack.c.b16 %v2912, %v2912
      %v3113 = vpack.c.b16 %v2913, %v2913
      %v3114 = vpack.c.b16 %v2914, %v2914
      %v3115 = vpack.c.b16 %v2915, %v2915
      %v3116 = vpack.c.b16 %v2916, %v2916
      %v3117 = vpack.c.b16 %v2917, %v2917
      %v3118 = vpack.c.b16 %v2918, %v2918
      %v3119 = vpack.c.b16 %v2919, %v2919
      %v3120 = vpack.c.b16 %v2920, %v2920
      %v3121 = vpack.c.b16 %v2921, %v2921
      %v3122 = vpack.c.b16 %v2922, %v2922
      %v3123 = vpack.c.b16 %v2923, %v2923
      %v3124 = vpack.c.b16 %v2924, %v2924
      %v3125 = vpack.c.b16 %v2925, %v2925
      %v3126 = vpack.c.b16 %v2926, %v2926
      %v3127 = vpack.c.b16 %v2927, %v2927
      %v3128 = vpack.c.b16 %v2928, %v2928
      %v3129 = vpack.c.b16 %v2929, %v2929
      %v3130 = vpack.c.b16 %v2930, %v2930
      %v3131 = vpack.c.b16 %v2931, %v2931
      %v3132 = vpack.c.b16 %v2932, %v2932
      %v3133 = vpack.c.b16 %v2933, %v2933
      %v3134 = vpack.c.b16 %v2934, %v2934
      %v3135 = vpack.c.b16 %v2935, %v2935
      %v3136 = vpack.c.b16 %v2936, %v2936
      %v3137 = vpack.c.b16 %v2937, %v2937
      %v3138 = vpack.c.b16 %v2938, %v2938
      %v3139 = vpack.c.b16 %v2939, %v2939
      %v3140 = vpack.c.b16 %v2940, %v2940
      %v3141 = vpack.c.b16 %v2941, %v2941
      %v3142 = vpack.c.b16 %v2942, %v2942
      %v3143 = vpack.c.b16 %v2943, %v2943
      %v3144 = vpack.c.b16 %v2944, %v2944
      %v3145 = vpack.c.b16 %v2945, %v2945
      %v3146 = vpack.c.b16 %v2946, %v2946
      %v3147 = vpack.c.b16 %v2947, %v2947
      %v3148 = vpack.c.b16 %v2948, %v2948
      %v3149 = vpack.c.b16 %v2949, %v2949
      %v3150 = vpack.c.b16 %v2950, %v2950
      %v3151 = vpack.c.b16 %v2951, %v2951
      %v3152 = vpack.c.b16 %v2952, %v2952
      %v3153 = vpack.c.b16 %v2953, %v2953
      %v3154 = vpack.c.b16 %v2954, %v2954
      %v3155 = vpack.c.b16 %v2955, %v2955
      %v3156 = vpack.c.b16 %v2956, %v2956
      %v3157 = vpack.c.b16 %v2957, %v2957
      %v3158 = vpack.c.b16 %v2958, %v2958
      %v3159 = vpack.c.b16 %v2959, %v2959
      %v3160 = vpack.c.b16 %v2960, %v2960
      %v3161 = vpack.c.b16 %v2961, %v2961
      %v3162 = vpack.c.b16 %v2962, %v2962
      %v3163 = vpack.c.b16 %v2963, %v2963
      %v3164 = vpack.c.b16 %v2964, %v2964
      %v3165 = vpack.c.b16 %v2965, %v2965
      %v3166 = vpack.c.b16 %v2966, %v2966
      %v3167 = vpack.c.b16 %v2967, %v2967
      %v3168 = vpack.c.b16 %v2968, %v2968
      %v3169 = vpack.c.b16 %v2969, %v2969
      %v3170 = vpack.c.b16 %v2970, %v2970
      %v3171 = vpack.c.b16 %v2971, %v2971
      %v3172 = vpack.c.b16 %v2972, %v2972
      %v3173 = vpack.c.b16 %v2973, %v2973
      %v3174 = vpack.c.b16 %v2974, %v2974
      %v3175 = vpack.c.b16 %v2975, %v2975
      %v3176 = vpack.c.b16 %v2976, %v2976
      %v3177 = vpack.c.b16 %v2977, %v2977
      %v3178 = vpack.c.b16 %v2978, %v2978
      %v3179 = vpack.c.b16 %v2979, %v2979
      %v3180 = vpack.c.b16 %v2980, %v2980
      %v3181 = vpack.c.b16 %v2981, %v2981
      %v3182 = vpack.c.b16 %v2982, %v2982
      %v3183 = vpack.c.b16 %v2983, %v2983
      %v3184 = vpack.c.b16 %v2984, %v2984
      %v3185 = vpack.c.b16 %v2985, %v2985
      %v3186 = vpack.c.b16 %v2986, %v2986
      %v3187 = vpack.c.b16 %v2987, %v2987
      %v3188 = vpack.c.b16 %v2988, %v2988
      %v3189 = vpack.c.b16 %v2989, %v2989
      %v3190 = vpack.c.b16 %v2990, %v2990
      %v3191 = vpack.c.b16 %v2991, %v2991
      %v3192 = vpack.c.b16 %v2992, %v2992
      %v3193 = vpack.c.b16 %v2993, %v2993
      %v3194 = vpack.c.b16 %v2994, %v2994
      %v3195 = vpack.c.b16 %v2995, %v2995
      %v3196 = vpack.c.b16 %v2996, %v2996
      %v3197 = vpack.c.b16 %v2997, %v2997
      %v3198 = vpack.c.b16 %v2998, %v2998
      %v3199 = vpack.c.b16 %v2999, %v2999
      %v3200 = vpack.c.b16 %v3000, %v3000
      %v3201 = vpack.c.b16 %v3001, %v3001
      %v3202 = vpack.c.b16 %v3002, %v3002
      %v3203 = vpack.c.b16 %v3003, %v3003
      %v3204 = vpack.c.b16 %v3004, %v3004
      %v3205 = vpack.c.b16 %v3005, %v3005
      %v3206 = vpack.c.b16 %v3006, %v3006
      %v3207 = vpack.c.b16 %v3007, %v3007
      %v3208 = vpack.c.b16 %v3008, %v3008
      %v3209 = vpack.c.b16 %v3009, %v3009
      %v3210 = vpack.c.b16 %v3010, %v3010
      %v3211 = vpack.c.b16 %v3011, %v3011
      %v3212 = vpack.c.b16 %v3012, %v3012
      %v3213 = vpack.c.b16 %v3013, %v3013
      %v3214 = vpack.c.b16 %v3014, %v3014
      %v3215 = vpack.c.b16 %v3015, %v3015
      %v3216 = vpack.c.b16 %v3016, %v3016
      %v3217 = vpack.c.b16 %v3017, %v3017
      %v3218 = vpack.c.b16 %v3018, %v3018
      %v3219 = vpack.c.b16 %v3019, %v3019
      %v3220 = vpack.c.b16 %v3020, %v3020
      %v3221 = vpack.c.b16 %v3021, %v3021
      %v3222 = vpack.c.b16 %v3022, %v3022
      %v3223 = vpack.c.b16 %v3023, %v3023
      %v3224 = vpack.c.b16 %v3024, %v3024
      %v3225 = vpack.c.b16 %v3025, %v3025
      %v3226 = vpack.c.b16 %v3026, %v3026
      %v3227 = vpack.c.b16 %v3027, %v3027
      %v3228 = vpack.c.b16 %v3028, %v3028
      %v3229 = vpack.c.b16 %v3029, %v3029
      %v3230 = vpack.c.b16 %v3030, %v3030
      %v3231 = vpack.c.b16 %v3031, %v3031
      %v3232 = vpack.c.b16 %v3032, %v3032
      %v3233 = vpack.c.b16 %v3033, %v3033
      %v3234 = vpack.c.b16 %v3034, %v3034
      %v3235 = vpack.c.b16 %v3035, %v3035
      %v3236 = vpack.c.b16 %v3036, %v3036
      %v3237 = vpack.c.b16 %v3037, %v3037
      %v3238 = vpack.c.b16 %v3038, %v3038
      %v3239 = vpack.c.b16 %v3039, %v3039
      %v3240 = vpack.c.b16 %v3040, %v3040
      %v3241 = vpack.c.b16 %v3041, %v3041
      %v3242 = vpack.c.b16 %v3042, %v3042
      %v3243 = vpack.c.b16 %v3043, %v3043
      %v3244 = vpack.c.b16 %v3044, %v3044
      %v3245 = vpack.c.b16 %v3045, %v3045
      %v3246 = vpack.c.b16 %v3046, %v3046
      %v3247 = vpack.c.b16 %v3047, %v3047
      %v3248 = vpack.c.b16 %v3048, %v3048
      %v3249 = vpack.c.b16 %v3049, %v3049
      %v3250 = vpack.c.b16 %v3050, %v3050
      %v3251 = vpack.c.b16 %v3051, %v3051
      %v3252 = vpack.c.b16 %v3052, %v3052
      %v3253 = vpack.c.b16 %v3053, %v3053
      %v3254 = vpack.c.b16 %v3054, %v3054
      %v3255 = vpack.c.b16 %v3055, %v3055
      %v3256 = vpack.c.b16 %v3056, %v3056
      %v3257 = vpack.c.b16 %v3057, %v3057
      %v3258 = vpack.c.b16 %v3058, %v3058
      %v3259 = vpack.c.b16 %v3059, %v3059
      %v3260 = vpack.c.b16 %v3060, %v3060
      %v3261 = vpack.c.b16 %v3061, %v3061
      %v3262 = vpack.c.b16 %v3062, %v3062
      %v3263 = vpack.c.b16 %v3063, %v3063
      %v3264 = vpack.c.b16 %v3064, %v3064
      %v3265 = vpack.c.b16 %v3065, %v3065
      %v3266 = vpack.c.b16 %v3066, %v3066
      %v3267 = vpack.c.b16 %v3067, %v3067
      %v3268 = vpack.c.b16 %v3068, %v3068
      %v3269 = vpack.c.b16 %v3069, %v3069
      %v3270 = vpack.c.b16 %v3070, %v3070
      %v3271 = vpack.c.b16 %v3071, %v3071
      %v3272 = vpack.c.b16 %v3072, %v3072
      %v3273 = vpack.c.b16 %v3073, %v3073
      %v3274 = vpack.c.b16 %v3074, %v3074
      %v3275 = vpack.c.b16 %v3075, %v3075
      %v3276 = vpack.c.b16 %v3076, %v3076
      %v3277 = vpack.c.b16 %v3077, %v3077
      %v3278 = vpack.c.b16 %v3078, %v3078
      %v3279 = vpack.c.b16 %v3079, %v3079
      %v3280 = vpack.c.b16 %v3080, %v3080
      %v3281 = vpack.c.b16 %v3081, %v3081
      %vm3482 = vcmask 257024
      %3483 = vst.msk [vmem:[%s199] sm:$0xf] %vm3482, %v3082
      %3484 = vst.msk [vmem:[%s199 + $0x4] sm:$0xf] %vm3482, %v3083
      %3485 = vst.msk [vmem:[%s199 + $0x8] sm:$0xf] %vm3482, %v3084
      %3486 = vst.msk [vmem:[%s199 + $0xc] sm:$0xf] %vm3482, %v3085
      %3487 = vst.msk [vmem:[%s199 + $0x10] sm:$0xf] %vm3482, %v3086
      %3488 = vst.msk [vmem:[%s199 + $0x14] sm:$0xf] %vm3482, %v3087
      %3489 = vst.msk [vmem:[%s199 + $0x18] sm:$0xf] %vm3482, %v3088
      %3490 = vst.msk [vmem:[%s199 + $0x1c] sm:$0xf] %vm3482, %v3089
      %3491 = vst.msk [vmem:[%s199 + $0x20] sm:$0xf] %vm3482, %v3090
      %3492 = vst.msk [vmem:[%s199 + $0x24] sm:$0xf] %vm3482, %v3091
      %3493 = vst.msk [vmem:[%s199 + $0x28] sm:$0xf] %vm3482, %v3092
      %3494 = vst.msk [vmem:[%s199 + $0x2c] sm:$0xf] %vm3482, %v3093
      %3495 = vst.msk [vmem:[%s199 + $0x30] sm:$0xf] %vm3482, %v3094
      %3496 = vst.msk [vmem:[%s199 + $0x34] sm:$0xf] %vm3482, %v3095
      %3497 = vst.msk [vmem:[%s199 + $0x38] sm:$0xf] %vm3482, %v3096
      %3498 = vst.msk [vmem:[%s199 + $0x3c] sm:$0xf] %vm3482, %v3097
      %3499 = vst.msk [vmem:[%s199 + $0x40] sm:$0xf] %vm3482, %v3098
      %3500 = vst.msk [vmem:[%s199 + $0x44] sm:$0xf] %vm3482, %v3099
      %3501 = vst.msk [vmem:[%s199 + $0x48] sm:$0xf] %vm3482, %v3100
      %3502 = vst.msk [vmem:[%s199 + $0x4c] sm:$0xf] %vm3482, %v3101
      %3503 = vst.msk [vmem:[%s199 + $0x50] sm:$0xf] %vm3482, %v3102
      %3504 = vst.msk [vmem:[%s199 + $0x54] sm:$0xf] %vm3482, %v3103
      %3505 = vst.msk [vmem:[%s199 + $0x58] sm:$0xf] %vm3482, %v3104
      %3506 = vst.msk [vmem:[%s199 + $0x5c] sm:$0xf] %vm3482, %v3105
      %3507 = vst.msk [vmem:[%s199 + $0x60] sm:$0xf] %vm3482, %v3106
      %3508 = vst.msk [vmem:[%s199 + $0x64] sm:$0xf] %vm3482, %v3107
      %3509 = vst.msk [vmem:[%s199 + $0x68] sm:$0xf] %vm3482, %v3108
      %3510 = vst.msk [vmem:[%s199 + $0x6c] sm:$0xf] %vm3482, %v3109
      %3511 = vst.msk [vmem:[%s199 + $0x70] sm:$0xf] %vm3482, %v3110
      %3512 = vst.msk [vmem:[%s199 + $0x74] sm:$0xf] %vm3482, %v3111
      %3513 = vst.msk [vmem:[%s199 + $0x78] sm:$0xf] %vm3482, %v3112
      %3514 = vst.msk [vmem:[%s199 + $0x7c] sm:$0xf] %vm3482, %v3113
      %3515 = vst.msk [vmem:[%s199 + $0x80] sm:$0xf] %vm3482, %v3114
      %3516 = vst.msk [vmem:[%s199 + $0x84] sm:$0xf] %vm3482, %v3115
      %3517 = vst.msk [vmem:[%s199 + $0x88] sm:$0xf] %vm3482, %v3116
      %3518 = vst.msk [vmem:[%s199 + $0x8c] sm:$0xf] %vm3482, %v3117
      %3519 = vst.msk [vmem:[%s199 + $0x90] sm:$0xf] %vm3482, %v3118
      %3520 = vst.msk [vmem:[%s199 + $0x94] sm:$0xf] %vm3482, %v3119
      %3521 = vst.msk [vmem:[%s199 + $0x98] sm:$0xf] %vm3482, %v3120
      %3522 = vst.msk [vmem:[%s199 + $0x9c] sm:$0xf] %vm3482, %v3121
      %3523 = vst.msk [vmem:[%s199 + $0xa0] sm:$0xf] %vm3482, %v3122
      %3524 = vst.msk [vmem:[%s199 + $0xa4] sm:$0xf] %vm3482, %v3123
      %3525 = vst.msk [vmem:[%s199 + $0xa8] sm:$0xf] %vm3482, %v3124
      %3526 = vst.msk [vmem:[%s199 + $0xac] sm:$0xf] %vm3482, %v3125
      %3527 = vst.msk [vmem:[%s199 + $0xb0] sm:$0xf] %vm3482, %v3126
      %3528 = vst.msk [vmem:[%s199 + $0xb4] sm:$0xf] %vm3482, %v3127
      %3529 = vst.msk [vmem:[%s199 + $0xb8] sm:$0xf] %vm3482, %v3128
      %3530 = vst.msk [vmem:[%s199 + $0xbc] sm:$0xf] %vm3482, %v3129
      %3531 = vst.msk [vmem:[%s199 + $0xc0] sm:$0xf] %vm3482, %v3130
      %3532 = vst.msk [vmem:[%s199 + $0xc4] sm:$0xf] %vm3482, %v3131
      %3533 = vst.msk [vmem:[%s199 + $0xc8] sm:$0xf] %vm3482, %v3132
      %3534 = vst.msk [vmem:[%s199 + $0xcc] sm:$0xf] %vm3482, %v3133
      %3535 = vst.msk [vmem:[%s199 + $0xd0] sm:$0xf] %vm3482, %v3134
      %3536 = vst.msk [vmem:[%s199 + $0xd4] sm:$0xf] %vm3482, %v3135
      %3537 = vst.msk [vmem:[%s199 + $0xd8] sm:$0xf] %vm3482, %v3136
      %3538 = vst.msk [vmem:[%s199 + $0xdc] sm:$0xf] %vm3482, %v3137
      %3539 = vst.msk [vmem:[%s199 + $0xe0] sm:$0xf] %vm3482, %v3138
      %3540 = vst.msk [vmem:[%s199 + $0xe4] sm:$0xf] %vm3482, %v3139
      %3541 = vst.msk [vmem:[%s199 + $0xe8] sm:$0xf] %vm3482, %v3140
      %3542 = vst.msk [vmem:[%s199 + $0xec] sm:$0xf] %vm3482, %v3141
      %3543 = vst.msk [vmem:[%s199 + $0xf0] sm:$0xf] %vm3482, %v3142
      %3544 = vst.msk [vmem:[%s199 + $0xf4] sm:$0xf] %vm3482, %v3143
      %3545 = vst.msk [vmem:[%s199 + $0xf8] sm:$0xf] %vm3482, %v3144
      %3546 = vst.msk [vmem:[%s199 + $0xfc] sm:$0xf] %vm3482, %v3145
      %3547 = vst.msk [vmem:[%s199 + $0x100] sm:$0xf] %vm3482, %v3146
      %3548 = vst.msk [vmem:[%s199 + $0x104] sm:$0xf] %vm3482, %v3147
      %3549 = vst.msk [vmem:[%s199 + $0x108] sm:$0xf] %vm3482, %v3148
      %3550 = vst.msk [vmem:[%s199 + $0x10c] sm:$0xf] %vm3482, %v3149
      %3551 = vst.msk [vmem:[%s199 + $0x110] sm:$0xf] %vm3482, %v3150
      %3552 = vst.msk [vmem:[%s199 + $0x114] sm:$0xf] %vm3482, %v3151
      %3553 = vst.msk [vmem:[%s199 + $0x118] sm:$0xf] %vm3482, %v3152
      %3554 = vst.msk [vmem:[%s199 + $0x11c] sm:$0xf] %vm3482, %v3153
      %3555 = vst.msk [vmem:[%s199 + $0x120] sm:$0xf] %vm3482, %v3154
      %3556 = vst.msk [vmem:[%s199 + $0x124] sm:$0xf] %vm3482, %v3155
      %3557 = vst.msk [vmem:[%s199 + $0x128] sm:$0xf] %vm3482, %v3156
      %3558 = vst.msk [vmem:[%s199 + $0x12c] sm:$0xf] %vm3482, %v3157
      %3559 = vst.msk [vmem:[%s199 + $0x130] sm:$0xf] %vm3482, %v3158
      %3560 = vst.msk [vmem:[%s199 + $0x134] sm:$0xf] %vm3482, %v3159
      %3561 = vst.msk [vmem:[%s199 + $0x138] sm:$0xf] %vm3482, %v3160
      %3562 = vst.msk [vmem:[%s199 + $0x13c] sm:$0xf] %vm3482, %v3161
      %3563 = vst.msk [vmem:[%s199 + $0x140] sm:$0xf] %vm3482, %v3162
      %3564 = vst.msk [vmem:[%s199 + $0x144] sm:$0xf] %vm3482, %v3163
      %3565 = vst.msk [vmem:[%s199 + $0x148] sm:$0xf] %vm3482, %v3164
      %3566 = vst.msk [vmem:[%s199 + $0x14c] sm:$0xf] %vm3482, %v3165
      %3567 = vst.msk [vmem:[%s199 + $0x150] sm:$0xf] %vm3482, %v3166
      %3568 = vst.msk [vmem:[%s199 + $0x154] sm:$0xf] %vm3482, %v3167
      %3569 = vst.msk [vmem:[%s199 + $0x158] sm:$0xf] %vm3482, %v3168
      %3570 = vst.msk [vmem:[%s199 + $0x15c] sm:$0xf] %vm3482, %v3169
      %3571 = vst.msk [vmem:[%s199 + $0x160] sm:$0xf] %vm3482, %v3170
      %3572 = vst.msk [vmem:[%s199 + $0x164] sm:$0xf] %vm3482, %v3171
      %3573 = vst.msk [vmem:[%s199 + $0x168] sm:$0xf] %vm3482, %v3172
      %3574 = vst.msk [vmem:[%s199 + $0x16c] sm:$0xf] %vm3482, %v3173
      %3575 = vst.msk [vmem:[%s199 + $0x170] sm:$0xf] %vm3482, %v3174
      %3576 = vst.msk [vmem:[%s199 + $0x174] sm:$0xf] %vm3482, %v3175
      %3577 = vst.msk [vmem:[%s199 + $0x178] sm:$0xf] %vm3482, %v3176
      %3578 = vst.msk [vmem:[%s199 + $0x17c] sm:$0xf] %vm3482, %v3177
      %3579 = vst.msk [vmem:[%s199 + $0x180] sm:$0xf] %vm3482, %v3178
      %3580 = vst.msk [vmem:[%s199 + $0x184] sm:$0xf] %vm3482, %v3179
      %3581 = vst.msk [vmem:[%s199 + $0x188] sm:$0xf] %vm3482, %v3180
      %3582 = vst.msk [vmem:[%s199 + $0x18c] sm:$0xf] %vm3482, %v3181
      %3583 = vst.msk [vmem:[%s199 + $0x190] sm:$0xf] %vm3482, %v3182
      %3584 = vst.msk [vmem:[%s199 + $0x194] sm:$0xf] %vm3482, %v3183
      %3585 = vst.msk [vmem:[%s199 + $0x198] sm:$0xf] %vm3482, %v3184
      %3586 = vst.msk [vmem:[%s199 + $0x19c] sm:$0xf] %vm3482, %v3185
      %3587 = vst.msk [vmem:[%s199 + $0x1a0] sm:$0xf] %vm3482, %v3186
      %3588 = vst.msk [vmem:[%s199 + $0x1a4] sm:$0xf] %vm3482, %v3187
      %3589 = vst.msk [vmem:[%s199 + $0x1a8] sm:$0xf] %vm3482, %v3188
      %3590 = vst.msk [vmem:[%s199 + $0x1ac] sm:$0xf] %vm3482, %v3189
      %3591 = vst.msk [vmem:[%s199 + $0x1b0] sm:$0xf] %vm3482, %v3190
      %3592 = vst.msk [vmem:[%s199 + $0x1b4] sm:$0xf] %vm3482, %v3191
      %3593 = vst.msk [vmem:[%s199 + $0x1b8] sm:$0xf] %vm3482, %v3192
      %3594 = vst.msk [vmem:[%s199 + $0x1bc] sm:$0xf] %vm3482, %v3193
      %3595 = vst.msk [vmem:[%s199 + $0x1c0] sm:$0xf] %vm3482, %v3194
      %3596 = vst.msk [vmem:[%s199 + $0x1c4] sm:$0xf] %vm3482, %v3195
      %3597 = vst.msk [vmem:[%s199 + $0x1c8] sm:$0xf] %vm3482, %v3196
      %3598 = vst.msk [vmem:[%s199 + $0x1cc] sm:$0xf] %vm3482, %v3197
      %3599 = vst.msk [vmem:[%s199 + $0x1d0] sm:$0xf] %vm3482, %v3198
      %3600 = vst.msk [vmem:[%s199 + $0x1d4] sm:$0xf] %vm3482, %v3199
      %3601 = vst.msk [vmem:[%s199 + $0x1d8] sm:$0xf] %vm3482, %v3200
      %3602 = vst.msk [vmem:[%s199 + $0x1dc] sm:$0xf] %vm3482, %v3201
      %3603 = vst.msk [vmem:[%s199 + $0x1e0] sm:$0xf] %vm3482, %v3202
      %3604 = vst.msk [vmem:[%s199 + $0x1e4] sm:$0xf] %vm3482, %v3203
      %3605 = vst.msk [vmem:[%s199 + $0x1e8] sm:$0xf] %vm3482, %v3204
      %3606 = vst.msk [vmem:[%s199 + $0x1ec] sm:$0xf] %vm3482, %v3205
      %3607 = vst.msk [vmem:[%s199 + $0x1f0] sm:$0xf] %vm3482, %v3206
      %3608 = vst.msk [vmem:[%s199 + $0x1f4] sm:$0xf] %vm3482, %v3207
      %3609 = vst.msk [vmem:[%s199 + $0x1f8] sm:$0xf] %vm3482, %v3208
      %3610 = vst.msk [vmem:[%s199 + $0x1fc] sm:$0xf] %vm3482, %v3209
      %3611 = vst.msk [vmem:[%s199 + $0x200] sm:$0xf] %vm3482, %v3210
      %3612 = vst.msk [vmem:[%s199 + $0x204] sm:$0xf] %vm3482, %v3211
      %3613 = vst.msk [vmem:[%s199 + $0x208] sm:$0xf] %vm3482, %v3212
      %3614 = vst.msk [vmem:[%s199 + $0x20c] sm:$0xf] %vm3482, %v3213
      %3615 = vst.msk [vmem:[%s199 + $0x210] sm:$0xf] %vm3482, %v3214
      %3616 = vst.msk [vmem:[%s199 + $0x214] sm:$0xf] %vm3482, %v3215
      %3617 = vst.msk [vmem:[%s199 + $0x218] sm:$0xf] %vm3482, %v3216
      %3618 = vst.msk [vmem:[%s199 + $0x21c] sm:$0xf] %vm3482, %v3217
      %3619 = vst.msk [vmem:[%s199 + $0x220] sm:$0xf] %vm3482, %v3218
      %3620 = vst.msk [vmem:[%s199 + $0x224] sm:$0xf] %vm3482, %v3219
      %3621 = vst.msk [vmem:[%s199 + $0x228] sm:$0xf] %vm3482, %v3220
      %3622 = vst.msk [vmem:[%s199 + $0x22c] sm:$0xf] %vm3482, %v3221
      %3623 = vst.msk [vmem:[%s199 + $0x230] sm:$0xf] %vm3482, %v3222
      %3624 = vst.msk [vmem:[%s199 + $0x234] sm:$0xf] %vm3482, %v3223
      %3625 = vst.msk [vmem:[%s199 + $0x238] sm:$0xf] %vm3482, %v3224
      %3626 = vst.msk [vmem:[%s199 + $0x23c] sm:$0xf] %vm3482, %v3225
      %3627 = vst.msk [vmem:[%s199 + $0x240] sm:$0xf] %vm3482, %v3226
      %3628 = vst.msk [vmem:[%s199 + $0x244] sm:$0xf] %vm3482, %v3227
      %3629 = vst.msk [vmem:[%s199 + $0x248] sm:$0xf] %vm3482, %v3228
      %3630 = vst.msk [vmem:[%s199 + $0x24c] sm:$0xf] %vm3482, %v3229
      %3631 = vst.msk [vmem:[%s199 + $0x250] sm:$0xf] %vm3482, %v3230
      %3632 = vst.msk [vmem:[%s199 + $0x254] sm:$0xf] %vm3482, %v3231
      %3633 = vst.msk [vmem:[%s199 + $0x258] sm:$0xf] %vm3482, %v3232
      %3634 = vst.msk [vmem:[%s199 + $0x25c] sm:$0xf] %vm3482, %v3233
      %3635 = vst.msk [vmem:[%s199 + $0x260] sm:$0xf] %vm3482, %v3234
      %3636 = vst.msk [vmem:[%s199 + $0x264] sm:$0xf] %vm3482, %v3235
      %3637 = vst.msk [vmem:[%s199 + $0x268] sm:$0xf] %vm3482, %v3236
      %3638 = vst.msk [vmem:[%s199 + $0x26c] sm:$0xf] %vm3482, %v3237
      %3639 = vst.msk [vmem:[%s199 + $0x270] sm:$0xf] %vm3482, %v3238
      %3640 = vst.msk [vmem:[%s199 + $0x274] sm:$0xf] %vm3482, %v3239
      %3641 = vst.msk [vmem:[%s199 + $0x278] sm:$0xf] %vm3482, %v3240
      %3642 = vst.msk [vmem:[%s199 + $0x27c] sm:$0xf] %vm3482, %v3241
      %3643 = vst.msk [vmem:[%s199 + $0x280] sm:$0xf] %vm3482, %v3242
      %3644 = vst.msk [vmem:[%s199 + $0x284] sm:$0xf] %vm3482, %v3243
      %3645 = vst.msk [vmem:[%s199 + $0x288] sm:$0xf] %vm3482, %v3244
      %3646 = vst.msk [vmem:[%s199 + $0x28c] sm:$0xf] %vm3482, %v3245
      %3647 = vst.msk [vmem:[%s199 + $0x290] sm:$0xf] %vm3482, %v3246
      %3648 = vst.msk [vmem:[%s199 + $0x294] sm:$0xf] %vm3482, %v3247
      %3649 = vst.msk [vmem:[%s199 + $0x298] sm:$0xf] %vm3482, %v3248
      %3650 = vst.msk [vmem:[%s199 + $0x29c] sm:$0xf] %vm3482, %v3249
      %3651 = vst.msk [vmem:[%s199 + $0x2a0] sm:$0xf] %vm3482, %v3250
      %3652 = vst.msk [vmem:[%s199 + $0x2a4] sm:$0xf] %vm3482, %v3251
      %3653 = vst.msk [vmem:[%s199 + $0x2a8] sm:$0xf] %vm3482, %v3252
      %3654 = vst.msk [vmem:[%s199 + $0x2ac] sm:$0xf] %vm3482, %v3253
      %3655 = vst.msk [vmem:[%s199 + $0x2b0] sm:$0xf] %vm3482, %v3254
      %3656 = vst.msk [vmem:[%s199 + $0x2b4] sm:$0xf] %vm3482, %v3255
      %3657 = vst.msk [vmem:[%s199 + $0x2b8] sm:$0xf] %vm3482, %v3256
      %3658 = vst.msk [vmem:[%s199 + $0x2bc] sm:$0xf] %vm3482, %v3257
      %3659 = vst.msk [vmem:[%s199 + $0x2c0] sm:$0xf] %vm3482, %v3258
      %3660 = vst.msk [vmem:[%s199 + $0x2c4] sm:$0xf] %vm3482, %v3259
      %3661 = vst.msk [vmem:[%s199 + $0x2c8] sm:$0xf] %vm3482, %v3260
      %3662 = vst.msk [vmem:[%s199 + $0x2cc] sm:$0xf] %vm3482, %v3261
      %3663 = vst.msk [vmem:[%s199 + $0x2d0] sm:$0xf] %vm3482, %v3262
      %3664 = vst.msk [vmem:[%s199 + $0x2d4] sm:$0xf] %vm3482, %v3263
      %3665 = vst.msk [vmem:[%s199 + $0x2d8] sm:$0xf] %vm3482, %v3264
      %3666 = vst.msk [vmem:[%s199 + $0x2dc] sm:$0xf] %vm3482, %v3265
      %3667 = vst.msk [vmem:[%s199 + $0x2e0] sm:$0xf] %vm3482, %v3266
      %3668 = vst.msk [vmem:[%s199 + $0x2e4] sm:$0xf] %vm3482, %v3267
      %3669 = vst.msk [vmem:[%s199 + $0x2e8] sm:$0xf] %vm3482, %v3268
      %3670 = vst.msk [vmem:[%s199 + $0x2ec] sm:$0xf] %vm3482, %v3269
      %3671 = vst.msk [vmem:[%s199 + $0x2f0] sm:$0xf] %vm3482, %v3270
      %3672 = vst.msk [vmem:[%s199 + $0x2f4] sm:$0xf] %vm3482, %v3271
      %3673 = vst.msk [vmem:[%s199 + $0x2f8] sm:$0xf] %vm3482, %v3272
      %3674 = vst.msk [vmem:[%s199 + $0x2fc] sm:$0xf] %vm3482, %v3273
      %3675 = vst.msk [vmem:[%s199 + $0x300] sm:$0xf] %vm3482, %v3274
      %3676 = vst.msk [vmem:[%s199 + $0x304] sm:$0xf] %vm3482, %v3275
      %3677 = vst.msk [vmem:[%s199 + $0x308] sm:$0xf] %vm3482, %v3276
      %3678 = vst.msk [vmem:[%s199 + $0x30c] sm:$0xf] %vm3482, %v3277
      %3679 = vst.msk [vmem:[%s199 + $0x310] sm:$0xf] %vm3482, %v3278
      %3680 = vst.msk [vmem:[%s199 + $0x314] sm:$0xf] %vm3482, %v3279
      %3681 = vst.msk [vmem:[%s199 + $0x318] sm:$0xf] %vm3482, %v3280
      %3682 = vst.msk [vmem:[%s199 + $0x31c] sm:$0xf] %vm3482, %v3281
      %s3683 = smul.u32 200, %s15
      %p3684 = scmp.lt.s32.totalorder %s3683, 399
      %s3685 = scalar_select %p3684, %s3683, 399
      %s3686 = smul.addr %s3685, 4
      %s3687 = scalar_lea.vmem %s4, %s3686
      // Predicated region
      $region37: #{state_encoder_forward.4} parent=35 // pred_check
        %p3688 = pneg %p122
      $region38: #{state_encoder_forward.4} parent=35 // pred_check_branch
        %3690 = sbr.rel (%p3688) target = $region40
      $region39: #{state_encoder_forward.4} parent=35 // pred_region
        %s3691 = smul.u32 200, %s15
      $region40: #{state_encoder_forward.4} parent=35 // pred_fallthru
        _
    $region36: #{state_encoder_forward.4} parent=5 // pred_fallthru
      _
    %p3692 = scmp.le.s32.totalorder 2, %s10
    // Predicated region
    $region41: #{state_encoder_forward.4} parent=5 // pred_check
      %p3693 = pneg %p3692
    $region42: #{state_encoder_forward.4} parent=5 // pred_check_branch
      %3695 = sbr.rel (%p3693) target = $region44
    $region43: #{state_encoder_forward.4} parent=5 // pred_region
      %s3696 = ssub.s32 %s10, 2
      // Predicated region
      $region45: #{state_encoder_forward.4} parent=43 // pred_check
        %p3697 = pneg %p128
      $region46: #{state_encoder_forward.4} parent=43 // pred_check_branch
        %3699 = sbr.rel (%p3697) target = $region48
      $region47: #{state_encoder_forward.4} parent=43 // pred_region
        %s3700 = smul.u32 200, %s16
        %p3701 = scmp.lt.s32.totalorder %s3700, 399
        %s3702 = scalar_select %p3701, %s3700, 399
        %s3703 = smul.addr %s3702, 4
        %s3704 = scalar_lea.vmem %s4, %s3703
      $region48: #{state_encoder_forward.4} parent=43 // pred_fallthru
        _
    $region44: #{state_encoder_forward.4} parent=5 // pred_fallthru
      _
  $region6: #{state_encoder_forward.4} parent=0 // loop_footer
    %s14 = sadd.s32 1, %s10
  $region7: #{state_encoder_forward.4} parent=0 // loop_footer_branch
    %9 = sbr.rel target = $region3
  $region8: #{state_encoder_forward.4} parent=0 // loop_exit
    _

// kernel: state_encoder_forward.5
$region0: #{state_encoder_forward.5}
  #allocation0 [shape = 'u32[]', space=smem, size = 0x4, offset = 0x4, fixed_abs, tag = 'smem constant byte address 0x4 - core index']
  #allocation1 [shape = 'u32[144,128]{1,0:T(1,128)}', space=vmem, size = 0x12000, scoped, tag = 'internal scratch']
  %s0 = inlined_call_operand.vmem [shape: bf16[800,512], index: 0, kind: input, shape index: {}]
  %s1 = inlined_call_operand.vmem [shape: bf16[512,64], index: 1, kind: input, shape index: {}]
  %s2 = inlined_call_operand.vmem [shape: f32[1,64], index: 2, kind: input, shape index: {}]
  %s3 = inlined_call_operand.vmem [shape: f32[1,64], index: 3, kind: input, shape index: {}]
  %s4 = inlined_call_operand.vmem [shape: bf16[800,64], index: 4, kind: output, shape index: {}]
  %s5 = sld [smem:[#allocation0]]
  $region49: #{state_encoder_forward.5} parent=0
    _
  %s7 = ssub.s32 1, %s5
  %s8 = scalar_select 0, %s7, %s5
  loop: start=0, step=1, limit=4
  $region2: #{state_encoder_forward.5} parent=0 // loop_pre_header
    _
  $region3: #{state_encoder_forward.5} parent=0 // loop_header
    %s10 = sphi 0, %s14
    %p11 = scmp.ge.s32.totalorder %s10, 4
    %s20 = sphi 0, %s22
    %s23 = sphi 0, %s20
    %s24 = sphi 0, %s23
    %s40 = sphi 0, %s24
    %s44 = sphi 0, %s44
    %s46 = sphi 0, %s44
    %s47 = sphi 0, %s46
    %s61 = sphi 0, %s47
    %s65 = sphi 0, %s65
    %s67 = sphi 0, %s65
    %s68 = sphi 0, %s67
    %s82 = sphi 0, %s68
    %s86 = sphi 0, %s86
    %s88 = sphi 0, %s86
    %s89 = sphi 0, %s88
    %s103 = sphi 0, %s89
    %s109 = sphi 0, %s111
    %s112 = sphi 0, %s109
    %s113 = sphi 0, %s112
    %s129 = sphi 0, %s113
  $region4: #{state_encoder_forward.5} parent=0 // loop_header_branch
    %13 = sbr.rel (%p11) target = $region8
  $region5: #{state_encoder_forward.5} parent=0 // loop_body
    %s15 = ssub.s32 %s10, 1
    %s16 = ssub.s32 %s10, 2
    %s17 = sadd.s32 %s10, 1
    %s18 = ssub.s32 %s10, %s17
    %p19 = scmp.eq.s32.totalorder %s18, 0
    %s21 = sadd.s32 %s20, 1
    %s22 = scalar_select %p19, %s20, %s21
    %p25 = pneg %p19
    %p26 = scmp.eq.s32.totalorder %s10, 1
    %p27 = por %p25, %p26
    %p28 = scmp.ne.s32.totalorder %s20, %s23
    %p29 = scmp.eq.s32.totalorder %s10, 0
    %p30 = por %p28, %p29
    %p31 = scmp.ne.s32.totalorder %s20, %s23
    %p32 = scmp.eq.s32.totalorder %s15, 1
    %p33 = por %p31, %p32
    %p34 = scmp.ne.s32.totalorder %s23, %s24
    %p35 = scmp.eq.s32.totalorder %s15, 0
    %p36 = por %p34, %p35
    %p37 = scmp.ne.s32.totalorder %s23, %s24
    %p38 = scmp.eq.s32.totalorder %s16, 1
    %p39 = por %p37, %p38
    %p41 = scmp.ne.s32.totalorder %s24, %s40
    %p42 = scmp.eq.s32.totalorder %s16, 0
    %p43 = por %p41, %p42
    %s45 = sadd.s32 %s44, 1
    %p48 = scmp.eq.s32.totalorder %s10, 1
    %p49 = scmp.ne.s32.totalorder %s44, %s46
    %p50 = scmp.eq.s32.totalorder %s10, 0
    %p51 = por %p49, %p50
    %p52 = scmp.ne.s32.totalorder %s44, %s46
    %p53 = scmp.eq.s32.totalorder %s15, 1
    %p54 = por %p52, %p53
    %p55 = scmp.ne.s32.totalorder %s46, %s47
    %p56 = scmp.eq.s32.totalorder %s15, 0
    %p57 = por %p55, %p56
    %p58 = scmp.ne.s32.totalorder %s46, %s47
    %p59 = scmp.eq.s32.totalorder %s16, 1
    %p60 = por %p58, %p59
    %p62 = scmp.ne.s32.totalorder %s47, %s61
    %p63 = scmp.eq.s32.totalorder %s16, 0
    %p64 = por %p62, %p63
    %s66 = sadd.s32 %s65, 1
    %p69 = scmp.eq.s32.totalorder %s10, 1
    %p70 = scmp.ne.s32.totalorder %s65, %s67
    %p71 = scmp.eq.s32.totalorder %s10, 0
    %p72 = por %p70, %p71
    %p73 = scmp.ne.s32.totalorder %s65, %s67
    %p74 = scmp.eq.s32.totalorder %s15, 1
    %p75 = por %p73, %p74
    %p76 = scmp.ne.s32.totalorder %s67, %s68
    %p77 = scmp.eq.s32.totalorder %s15, 0
    %p78 = por %p76, %p77
    %p79 = scmp.ne.s32.totalorder %s67, %s68
    %p80 = scmp.eq.s32.totalorder %s16, 1
    %p81 = por %p79, %p80
    %p83 = scmp.ne.s32.totalorder %s68, %s82
    %p84 = scmp.eq.s32.totalorder %s16, 0
    %p85 = por %p83, %p84
    %s87 = sadd.s32 %s86, 1
    %p90 = scmp.eq.s32.totalorder %s10, 1
    %p91 = scmp.ne.s32.totalorder %s86, %s88
    %p92 = scmp.eq.s32.totalorder %s10, 0
    %p93 = por %p91, %p92
    %p94 = scmp.ne.s32.totalorder %s86, %s88
    %p95 = scmp.eq.s32.totalorder %s15, 1
    %p96 = por %p94, %p95
    %p97 = scmp.ne.s32.totalorder %s88, %s89
    %p98 = scmp.eq.s32.totalorder %s15, 0
    %p99 = por %p97, %p98
    %p100 = scmp.ne.s32.totalorder %s88, %s89
    %p101 = scmp.eq.s32.totalorder %s16, 1
    %p102 = por %p100, %p101
    %p104 = scmp.ne.s32.totalorder %s89, %s103
    %p105 = scmp.eq.s32.totalorder %s16, 0
    %p106 = por %p104, %p105
    %s107 = ssub.s32 %s10, %s17
    %p108 = scmp.eq.s32.totalorder %s107, 0
    %s110 = sadd.s32 %s109, 1
    %s111 = scalar_select %p108, %s109, %s110
    %p114 = pneg %p108
    %p115 = scmp.eq.s32.totalorder %s10, 1
    %p116 = por %p114, %p115
    %p117 = scmp.ne.s32.totalorder %s109, %s112
    %p118 = scmp.eq.s32.totalorder %s10, 0
    %p119 = por %p117, %p118
    %p120 = scmp.ne.s32.totalorder %s109, %s112
    %p121 = scmp.eq.s32.totalorder %s15, 1
    %p122 = por %p120, %p121
    %p123 = scmp.ne.s32.totalorder %s112, %s113
    %p124 = scmp.eq.s32.totalorder %s15, 0
    %p125 = por %p123, %p124
    %p126 = scmp.ne.s32.totalorder %s112, %s113
    %p127 = scmp.eq.s32.totalorder %s16, 1
    %p128 = por %p126, %p127
    %p130 = scmp.ne.s32.totalorder %s113, %s129
    %p131 = scmp.eq.s32.totalorder %s16, 0
    %p132 = por %p130, %p131
    %p133 = scmp.le.s32.totalorder 1, %s10
    %p134 = scmp.lt.s32.totalorder %s10, 3
    %p135 = pnand %p133, %p134
    %p136 = pneg %p135
    // Predicated region
    $region9: #{state_encoder_forward.5} parent=5 // pred_check
      _
    $region10: #{state_encoder_forward.5} parent=5 // pred_check_branch
      %138 = sbr.rel (%p135) target = $region12
    $region11: #{state_encoder_forward.5} parent=5 // pred_region
      %s139 = ssub.s32 %s10, 1
      // Predicated region
      $region13: #{state_encoder_forward.5} parent=11 // pred_check
        %p140 = pneg %p57
      $region14: #{state_encoder_forward.5} parent=11 // pred_check_branch
        %142 = sbr.rel (%p140) target = $region16
      $region15: #{state_encoder_forward.5} parent=11 // pred_region
        _
      $region16: #{state_encoder_forward.5} parent=11 // pred_fallthru
        _
      // Predicated region
      $region17: #{state_encoder_forward.5} parent=11 // pred_check
        %p143 = pneg %p78
      $region18: #{state_encoder_forward.5} parent=11 // pred_check_branch
        %145 = sbr.rel (%p143) target = $region20
      $region19: #{state_encoder_forward.5} parent=11 // pred_region
        _
      $region20: #{state_encoder_forward.5} parent=11 // pred_fallthru
        _
      // Predicated region
      $region21: #{state_encoder_forward.5} parent=11 // pred_check
        %p146 = pneg %p99
      $region22: #{state_encoder_forward.5} parent=11 // pred_check_branch
        %148 = sbr.rel (%p146) target = $region24
      $region23: #{state_encoder_forward.5} parent=11 // pred_region
        _
      $region24: #{state_encoder_forward.5} parent=11 // pred_fallthru
        _
    $region12: #{state_encoder_forward.5} parent=5 // pred_fallthru
      _
    %p149 = scmp.lt.s32.totalorder %s10, 2
    // Predicated region
    $region25: #{state_encoder_forward.5} parent=5 // pred_check
      %p150 = pneg %p149
    $region26: #{state_encoder_forward.5} parent=5 // pred_check_branch
      %152 = sbr.rel (%p150) target = $region28
    $region27: #{state_encoder_forward.5} parent=5 // pred_region
      // Predicated region
      $region29: #{state_encoder_forward.5} parent=27 // pred_check
        %p153 = pneg %p30
      $region30: #{state_encoder_forward.5} parent=27 // pred_check_branch
        %155 = sbr.rel (%p153) target = $region32
      $region31: #{state_encoder_forward.5} parent=27 // pred_region
        %s156 = smul.u32 50, %s10
        %p157 = scmp.lt.s32.totalorder %s156, 99
        %s158 = scalar_select %p157, %s156, 99
        %s159 = smul.addr %s158, 4
        %s160 = smul.addr %s159, 4
        %s161 = scalar_lea.vmem %s0, %s160
        %s162 = smul.u32 50, %s10
      $region32: #{state_encoder_forward.5} parent=27 // pred_fallthru
        _
    $region28: #{state_encoder_forward.5} parent=5 // pred_fallthru
      _
    %p163 = scmp.le.s32.totalorder 1, %s10
    %p164 = scmp.lt.s32.totalorder %s10, 3
    %p165 = pnand %p163, %p164
    %p166 = pneg %p165
    // Predicated region
    $region33: #{state_encoder_forward.5} parent=5 // pred_check
      _
    $region34: #{state_encoder_forward.5} parent=5 // pred_check_branch
      %168 = sbr.rel (%p165) target = $region36
    $region35: #{state_encoder_forward.5} parent=5 // pred_region
      %s169 = ssub.s32 %s10, 1
      %s170 = smul.u32 50, %s15
      %p171 = scmp.lt.s32.totalorder %s170, 99
      %s172 = scalar_select %p171, %s170, 99
      %s173 = smul.addr %s172, 4
      %s174 = smul.addr %s173, 4
      %s175 = scalar_lea.vmem %s0, %s174
      %p176 = pneg %p36
      %p177 = pneg %p33
      %p178 = pneg %p57
      %p179 = pneg %p54
      %p180 = pneg %p78
      %p181 = pneg %p75
      %p182 = pneg %p99
      %p183 = pneg %p96
      %p184 = pneg %p125
      %p185 = pneg %p122
      %s186 = smul.u32 50, %s15
      %p187 = scmp.lt.s32.totalorder %s186, 99
      %s188 = scalar_select %p187, %s186, 99
      %s189 = smul.addr %s188, 4
      %s190 = scalar_lea.vmem %s4, %s189
      %s191 = smul.u32 50, %s15
      %p192 = scmp.lt.s32.totalorder %s191, 99
      %s193 = scalar_select %p192, %s191, 99
      %s194 = smul.addr %s193, 4
      %s195 = smul.addr %s194, 4
      %s196 = scalar_lea.vmem %s0, %s195
      %s197 = smul.u32 50, %s15
      %s198 = smul.u32 50, %s15
      %p199 = scmp.lt.s32.totalorder %s198, 99
      %s200 = scalar_select %p199, %s198, 99
      %s201 = smul.addr %s200, 4
      %s202 = scalar_lea.vmem %s4, %s201
      %s203 = smul.u32 50, %s15
      %v205 = vld [vmem:[%s196] sm:$0xff]
      %v206 = vld [vmem:[%s196 + $0x8] sm:$0xff]
      %v207 = vld [vmem:[%s196 + $0x10] sm:$0xff]
      %v208 = vld [vmem:[%s196 + $0x18] sm:$0xff]
      %v209 = vld [vmem:[%s196 + $0x20] sm:$0xff]
      %v210 = vld [vmem:[%s196 + $0x28] sm:$0xff]
      %v211 = vld [vmem:[%s196 + $0x30] sm:$0xff]
      %v212 = vld [vmem:[%s196 + $0x38] sm:$0xff]
      %v213 = vld [vmem:[%s196 + $0x40] sm:$0xff]
      %v214 = vld [vmem:[%s196 + $0x48] sm:$0xff]
      %v215 = vld [vmem:[%s196 + $0x50] sm:$0xff]
      %v216 = vld [vmem:[%s196 + $0x58] sm:$0xff]
      %v217 = vld [vmem:[%s196 + $0x60] sm:$0xff]
      %v218 = vld [vmem:[%s196 + $0x68] sm:$0xff]
      %v219 = vld [vmem:[%s196 + $0x70] sm:$0xff]
      %v220 = vld [vmem:[%s196 + $0x78] sm:$0xff]
      %v221 = vld [vmem:[%s196 + $0x80] sm:$0xff]
      %v222 = vld [vmem:[%s196 + $0x88] sm:$0xff]
      %v223 = vld [vmem:[%s196 + $0x90] sm:$0xff]
      %v224 = vld [vmem:[%s196 + $0x98] sm:$0xff]
      %v225 = vld [vmem:[%s196 + $0xa0] sm:$0xff]
      %v226 = vld [vmem:[%s196 + $0xa8] sm:$0xff]
      %v227 = vld [vmem:[%s196 + $0xb0] sm:$0xff]
      %v228 = vld [vmem:[%s196 + $0xb8] sm:$0xff]
      %v229 = vld [vmem:[%s196 + $0xc0] sm:$0xff]
      %v230 = vld [vmem:[%s196 + $0xc8] sm:$0xff]
      %v231 = vld [vmem:[%s196 + $0xd0] sm:$0xff]
      %v232 = vld [vmem:[%s196 + $0xd8] sm:$0xff]
      %v233 = vld [vmem:[%s196 + $0xe0] sm:$0xff]
      %v234 = vld [vmem:[%s196 + $0xe8] sm:$0xff]
      %v235 = vld [vmem:[%s196 + $0xf0] sm:$0xff]
      %v236 = vld [vmem:[%s196 + $0xf8] sm:$0xff]
      %v237 = vld [vmem:[%s196 + $0x100] sm:$0xff]
      %v238 = vld [vmem:[%s196 + $0x108] sm:$0xff]
      %v239 = vld [vmem:[%s196 + $0x110] sm:$0xff]
      %v240 = vld [vmem:[%s196 + $0x118] sm:$0xff]
      %v241 = vld [vmem:[%s196 + $0x120] sm:$0xff]
      %v242 = vld [vmem:[%s196 + $0x128] sm:$0xff]
      %v243 = vld [vmem:[%s196 + $0x130] sm:$0xff]
      %v244 = vld [vmem:[%s196 + $0x138] sm:$0xff]
      %v245 = vld [vmem:[%s196 + $0x140] sm:$0xff]
      %v246 = vld [vmem:[%s196 + $0x148] sm:$0xff]
      %v247 = vld [vmem:[%s196 + $0x150] sm:$0xff]
      %v248 = vld [vmem:[%s196 + $0x158] sm:$0xff]
      %v249 = vld [vmem:[%s196 + $0x160] sm:$0xff]
      %v250 = vld [vmem:[%s196 + $0x168] sm:$0xff]
      %v251 = vld [vmem:[%s196 + $0x170] sm:$0xff]
      %v252 = vld [vmem:[%s196 + $0x178] sm:$0xff]
      %v253 = vld [vmem:[%s196 + $0x180] sm:$0xff]
      %v254 = vld [vmem:[%s196 + $0x188] sm:$0xff]
      %v255 = vld [vmem:[%s196 + $0x190] sm:$0xff]
      %v256 = vld [vmem:[%s196 + $0x198] sm:$0xff]
      %v257 = vld [vmem:[%s196 + $0x1a0] sm:$0xff]
      %v258 = vld [vmem:[%s196 + $0x1a8] sm:$0xff]
      %v259 = vld [vmem:[%s196 + $0x1b0] sm:$0xff]
      %v260 = vld [vmem:[%s196 + $0x1b8] sm:$0xff]
      %v261 = vld [vmem:[%s196 + $0x1c0] sm:$0xff]
      %v262 = vld [vmem:[%s196 + $0x1c8] sm:$0xff]
      %v263 = vld [vmem:[%s196 + $0x1d0] sm:$0xff]
      %v264 = vld [vmem:[%s196 + $0x1d8] sm:$0xff]
      %v265 = vld [vmem:[%s196 + $0x1e0] sm:$0xff]
      %v266 = vld [vmem:[%s196 + $0x1e8] sm:$0xff]
      %v267 = vld [vmem:[%s196 + $0x1f0] sm:$0xff]
      %v268 = vld [vmem:[%s196 + $0x1f8] sm:$0xff]
      %v269 = vld [vmem:[%s196 + $0x200] sm:$0xff]
      %v270 = vld [vmem:[%s196 + $0x208] sm:$0xff]
      %v271 = vld [vmem:[%s196 + $0x210] sm:$0xff]
      %v272 = vld [vmem:[%s196 + $0x218] sm:$0xff]
      %v273 = vld [vmem:[%s196 + $0x220] sm:$0xff]
      %v274 = vld [vmem:[%s196 + $0x228] sm:$0xff]
      %v275 = vld [vmem:[%s196 + $0x230] sm:$0xff]
      %v276 = vld [vmem:[%s196 + $0x238] sm:$0xff]
      %v277 = vld [vmem:[%s196 + $0x240] sm:$0xff]
      %v278 = vld [vmem:[%s196 + $0x248] sm:$0xff]
      %v279 = vld [vmem:[%s196 + $0x250] sm:$0xff]
      %v280 = vld [vmem:[%s196 + $0x258] sm:$0xff]
      %v281 = vld [vmem:[%s196 + $0x260] sm:$0xff]
      %v282 = vld [vmem:[%s196 + $0x268] sm:$0xff]
      %v283 = vld [vmem:[%s196 + $0x270] sm:$0xff]
      %v284 = vld [vmem:[%s196 + $0x278] sm:$0xff]
      %v285 = vld [vmem:[%s196 + $0x280] sm:$0xff]
      %v286 = vld [vmem:[%s196 + $0x288] sm:$0xff]
      %v287 = vld [vmem:[%s196 + $0x290] sm:$0xff]
      %v288 = vld [vmem:[%s196 + $0x298] sm:$0xff]
      %v289 = vld [vmem:[%s196 + $0x2a0] sm:$0xff]
      %v290 = vld [vmem:[%s196 + $0x2a8] sm:$0xff]
      %v291 = vld [vmem:[%s196 + $0x2b0] sm:$0xff]
      %v292 = vld [vmem:[%s196 + $0x2b8] sm:$0xff]
      %v293 = vld [vmem:[%s196 + $0x2c0] sm:$0xff]
      %v294 = vld [vmem:[%s196 + $0x2c8] sm:$0xff]
      %v295 = vld [vmem:[%s196 + $0x2d0] sm:$0xff]
      %v296 = vld [vmem:[%s196 + $0x2d8] sm:$0xff]
      %v297 = vld [vmem:[%s196 + $0x2e0] sm:$0xff]
      %v298 = vld [vmem:[%s196 + $0x2e8] sm:$0xff]
      %v299 = vld [vmem:[%s196 + $0x2f0] sm:$0xff]
      %v300 = vld [vmem:[%s196 + $0x2f8] sm:$0xff]
      %v301 = vld [vmem:[%s196 + $0x300] sm:$0xff]
      %v302 = vld [vmem:[%s196 + $0x308] sm:$0xff]
      %v303 = vld [vmem:[%s196 + $0x310] sm:$0xff]
      %v304 = vld [vmem:[%s196 + $0x318] sm:$0xff]
      %v305 = vld [vmem:[%s1] sm:$0xf]
      %v306 = vld [vmem:[%s1 + $0x4] sm:$0xf]
      %v307 = vld [vmem:[%s1 + $0x8] sm:$0xf]
      %v308 = vld [vmem:[%s1 + $0xc] sm:$0xf]
      %v309 = vld [vmem:[%s1 + $0x10] sm:$0xf]
      %v310 = vld [vmem:[%s1 + $0x14] sm:$0xf]
      %v311 = vld [vmem:[%s1 + $0x18] sm:$0xf]
      %v312 = vld [vmem:[%s1 + $0x1c] sm:$0xf]
      %v313 = vld [vmem:[%s1 + $0x20] sm:$0xf]
      %v314 = vld [vmem:[%s1 + $0x24] sm:$0xf]
      %v315 = vld [vmem:[%s1 + $0x28] sm:$0xf]
      %v316 = vld [vmem:[%s1 + $0x2c] sm:$0xf]
      %v317 = vld [vmem:[%s1 + $0x30] sm:$0xf]
      %v318 = vld [vmem:[%s1 + $0x34] sm:$0xf]
      %v319 = vld [vmem:[%s1 + $0x38] sm:$0xf]
      %v320 = vld [vmem:[%s1 + $0x3c] sm:$0xf]
      %v321 = vld [vmem:[%s1 + $0x40] sm:$0xf]
      %v322 = vld [vmem:[%s1 + $0x44] sm:$0xf]
      %v323 = vld [vmem:[%s1 + $0x48] sm:$0xf]
      %v324 = vld [vmem:[%s1 + $0x4c] sm:$0xf]
      %v325 = vld [vmem:[%s1 + $0x50] sm:$0xf]
      %v326 = vld [vmem:[%s1 + $0x54] sm:$0xf]
      %v327 = vld [vmem:[%s1 + $0x58] sm:$0xf]
      %v328 = vld [vmem:[%s1 + $0x5c] sm:$0xf]
      %v329 = vld [vmem:[%s1 + $0x60] sm:$0xf]
      %v330 = vld [vmem:[%s1 + $0x64] sm:$0xf]
      %v331 = vld [vmem:[%s1 + $0x68] sm:$0xf]
      %v332 = vld [vmem:[%s1 + $0x6c] sm:$0xf]
      %v333 = vld [vmem:[%s1 + $0x70] sm:$0xf]
      %v334 = vld [vmem:[%s1 + $0x74] sm:$0xf]
      %v335 = vld [vmem:[%s1 + $0x78] sm:$0xf]
      %v336 = vld [vmem:[%s1 + $0x7c] sm:$0xf]
      %v337 = vld [vmem:[%s1 + $0x80] sm:$0xf]
      %v338 = vld [vmem:[%s1 + $0x84] sm:$0xf]
      %v339 = vld [vmem:[%s1 + $0x88] sm:$0xf]
      %v340 = vld [vmem:[%s1 + $0x8c] sm:$0xf]
      %v341 = vld [vmem:[%s1 + $0x90] sm:$0xf]
      %v342 = vld [vmem:[%s1 + $0x94] sm:$0xf]
      %v343 = vld [vmem:[%s1 + $0x98] sm:$0xf]
      %v344 = vld [vmem:[%s1 + $0x9c] sm:$0xf]
      %v345 = vld [vmem:[%s1 + $0xa0] sm:$0xf]
      %v346 = vld [vmem:[%s1 + $0xa4] sm:$0xf]
      %v347 = vld [vmem:[%s1 + $0xa8] sm:$0xf]
      %v348 = vld [vmem:[%s1 + $0xac] sm:$0xf]
      %v349 = vld [vmem:[%s1 + $0xb0] sm:$0xf]
      %v350 = vld [vmem:[%s1 + $0xb4] sm:$0xf]
      %v351 = vld [vmem:[%s1 + $0xb8] sm:$0xf]
      %v352 = vld [vmem:[%s1 + $0xbc] sm:$0xf]
      %v353 = vld [vmem:[%s1 + $0xc0] sm:$0xf]
      %v354 = vld [vmem:[%s1 + $0xc4] sm:$0xf]
      %v355 = vld [vmem:[%s1 + $0xc8] sm:$0xf]
      %v356 = vld [vmem:[%s1 + $0xcc] sm:$0xf]
      %v357 = vld [vmem:[%s1 + $0xd0] sm:$0xf]
      %v358 = vld [vmem:[%s1 + $0xd4] sm:$0xf]
      %v359 = vld [vmem:[%s1 + $0xd8] sm:$0xf]
      %v360 = vld [vmem:[%s1 + $0xdc] sm:$0xf]
      %v361 = vld [vmem:[%s1 + $0xe0] sm:$0xf]
      %v362 = vld [vmem:[%s1 + $0xe4] sm:$0xf]
      %v363 = vld [vmem:[%s1 + $0xe8] sm:$0xf]
      %v364 = vld [vmem:[%s1 + $0xec] sm:$0xf]
      %v365 = vld [vmem:[%s1 + $0xf0] sm:$0xf]
      %v366 = vld [vmem:[%s1 + $0xf4] sm:$0xf]
      %v367 = vld [vmem:[%s1 + $0xf8] sm:$0xf]
      %v368 = vld [vmem:[%s1 + $0xfc] sm:$0xf]
      %v469 = vunpack.c.l.b16 %v205
      %v470 = vunpack.c.h.b16 %v205
      %v471 = vunpack.c.l.b16 %v206
      %v472 = vunpack.c.h.b16 %v206
      %v473 = vunpack.c.l.b16 %v207
      %v474 = vunpack.c.h.b16 %v207
      %v475 = vunpack.c.l.b16 %v208
      %v476 = vunpack.c.h.b16 %v208
      %v477 = vunpack.c.l.b16 %v209
      %v478 = vunpack.c.h.b16 %v209
      %v479 = vunpack.c.l.b16 %v210
      %v480 = vunpack.c.h.b16 %v210
      %v481 = vunpack.c.l.b16 %v211
      %v482 = vunpack.c.h.b16 %v211
      %v483 = vunpack.c.l.b16 %v212
      %v484 = vunpack.c.h.b16 %v212
      %v485 = vunpack.c.l.b16 %v213
      %v486 = vunpack.c.h.b16 %v213
      %v487 = vunpack.c.l.b16 %v214
      %v488 = vunpack.c.h.b16 %v214
      %v489 = vunpack.c.l.b16 %v215
      %v490 = vunpack.c.h.b16 %v215
      %v491 = vunpack.c.l.b16 %v216
      %v492 = vunpack.c.h.b16 %v216
      %v493 = vunpack.c.l.b16 %v217
      %v494 = vunpack.c.h.b16 %v217
      %v495 = vunpack.c.l.b16 %v218
      %v496 = vunpack.c.h.b16 %v218
      %v497 = vunpack.c.l.b16 %v219
      %v498 = vunpack.c.h.b16 %v219
      %v499 = vunpack.c.l.b16 %v220
      %v500 = vunpack.c.h.b16 %v220
      %v501 = vunpack.c.l.b16 %v221
      %v502 = vunpack.c.h.b16 %v221
      %v503 = vunpack.c.l.b16 %v222
      %v504 = vunpack.c.h.b16 %v222
      %v505 = vunpack.c.l.b16 %v223
      %v506 = vunpack.c.h.b16 %v223
      %v507 = vunpack.c.l.b16 %v224
      %v508 = vunpack.c.h.b16 %v224
      %v509 = vunpack.c.l.b16 %v225
      %v510 = vunpack.c.h.b16 %v225
      %v511 = vunpack.c.l.b16 %v226
      %v512 = vunpack.c.h.b16 %v226
      %v513 = vunpack.c.l.b16 %v227
      %v514 = vunpack.c.h.b16 %v227
      %v515 = vunpack.c.l.b16 %v228
      %v516 = vunpack.c.h.b16 %v228
      %v517 = vunpack.c.l.b16 %v229
      %v518 = vunpack.c.h.b16 %v229
      %v519 = vunpack.c.l.b16 %v230
      %v520 = vunpack.c.h.b16 %v230
      %v521 = vunpack.c.l.b16 %v231
      %v522 = vunpack.c.h.b16 %v231
      %v523 = vunpack.c.l.b16 %v232
      %v524 = vunpack.c.h.b16 %v232
      %v525 = vunpack.c.l.b16 %v233
      %v526 = vunpack.c.h.b16 %v233
      %v527 = vunpack.c.l.b16 %v234
      %v528 = vunpack.c.h.b16 %v234
      %v529 = vunpack.c.l.b16 %v235
      %v530 = vunpack.c.h.b16 %v235
      %v531 = vunpack.c.l.b16 %v236
      %v532 = vunpack.c.h.b16 %v236
      %v533 = vunpack.c.l.b16 %v237
      %v534 = vunpack.c.h.b16 %v237
      %v535 = vunpack.c.l.b16 %v238
      %v536 = vunpack.c.h.b16 %v238
      %v537 = vunpack.c.l.b16 %v239
      %v538 = vunpack.c.h.b16 %v239
      %v539 = vunpack.c.l.b16 %v240
      %v540 = vunpack.c.h.b16 %v240
      %v541 = vunpack.c.l.b16 %v241
      %v542 = vunpack.c.h.b16 %v241
      %v543 = vunpack.c.l.b16 %v242
      %v544 = vunpack.c.h.b16 %v242
      %v545 = vunpack.c.l.b16 %v243
      %v546 = vunpack.c.h.b16 %v243
      %v547 = vunpack.c.l.b16 %v244
      %v548 = vunpack.c.h.b16 %v244
      %v549 = vunpack.c.l.b16 %v245
      %v550 = vunpack.c.h.b16 %v245
      %v551 = vunpack.c.l.b16 %v246
      %v552 = vunpack.c.h.b16 %v246
      %v553 = vunpack.c.l.b16 %v247
      %v554 = vunpack.c.h.b16 %v247
      %v555 = vunpack.c.l.b16 %v248
      %v556 = vunpack.c.h.b16 %v248
      %v557 = vunpack.c.l.b16 %v249
      %v558 = vunpack.c.h.b16 %v249
      %v559 = vunpack.c.l.b16 %v250
      %v560 = vunpack.c.h.b16 %v250
      %v561 = vunpack.c.l.b16 %v251
      %v562 = vunpack.c.h.b16 %v251
      %v563 = vunpack.c.l.b16 %v252
      %v564 = vunpack.c.h.b16 %v252
      %v565 = vunpack.c.l.b16 %v253
      %v566 = vunpack.c.h.b16 %v253
      %v567 = vunpack.c.l.b16 %v254
      %v568 = vunpack.c.h.b16 %v254
      %v569 = vunpack.c.l.b16 %v255
      %v570 = vunpack.c.h.b16 %v255
      %v571 = vunpack.c.l.b16 %v256
      %v572 = vunpack.c.h.b16 %v256
      %v573 = vunpack.c.l.b16 %v257
      %v574 = vunpack.c.h.b16 %v257
      %v575 = vunpack.c.l.b16 %v258
      %v576 = vunpack.c.h.b16 %v258
      %v577 = vunpack.c.l.b16 %v259
      %v578 = vunpack.c.h.b16 %v259
      %v579 = vunpack.c.l.b16 %v260
      %v580 = vunpack.c.h.b16 %v260
      %v581 = vunpack.c.l.b16 %v261
      %v582 = vunpack.c.h.b16 %v261
      %v583 = vunpack.c.l.b16 %v262
      %v584 = vunpack.c.h.b16 %v262
      %v585 = vunpack.c.l.b16 %v263
      %v586 = vunpack.c.h.b16 %v263
      %v587 = vunpack.c.l.b16 %v264
      %v588 = vunpack.c.h.b16 %v264
      %v589 = vunpack.c.l.b16 %v265
      %v590 = vunpack.c.h.b16 %v265
      %v591 = vunpack.c.l.b16 %v266
      %v592 = vunpack.c.h.b16 %v266
      %v593 = vunpack.c.l.b16 %v267
      %v594 = vunpack.c.h.b16 %v267
      %v595 = vunpack.c.l.b16 %v268
      %v596 = vunpack.c.h.b16 %v268
      %v597 = vunpack.c.l.b16 %v269
      %v598 = vunpack.c.h.b16 %v269
      %v599 = vunpack.c.l.b16 %v270
      %v600 = vunpack.c.h.b16 %v270
      %v601 = vunpack.c.l.b16 %v271
      %v602 = vunpack.c.h.b16 %v271
      %v603 = vunpack.c.l.b16 %v272
      %v604 = vunpack.c.h.b16 %v272
      %v605 = vunpack.c.l.b16 %v273
      %v606 = vunpack.c.h.b16 %v273
      %v607 = vunpack.c.l.b16 %v274
      %v608 = vunpack.c.h.b16 %v274
      %v609 = vunpack.c.l.b16 %v275
      %v610 = vunpack.c.h.b16 %v275
      %v611 = vunpack.c.l.b16 %v276
      %v612 = vunpack.c.h.b16 %v276
      %v613 = vunpack.c.l.b16 %v277
      %v614 = vunpack.c.h.b16 %v277
      %v615 = vunpack.c.l.b16 %v278
      %v616 = vunpack.c.h.b16 %v278
      %v617 = vunpack.c.l.b16 %v279
      %v618 = vunpack.c.h.b16 %v279
      %v619 = vunpack.c.l.b16 %v280
      %v620 = vunpack.c.h.b16 %v280
      %v621 = vunpack.c.l.b16 %v281
      %v622 = vunpack.c.h.b16 %v281
      %v623 = vunpack.c.l.b16 %v282
      %v624 = vunpack.c.h.b16 %v282
      %v625 = vunpack.c.l.b16 %v283
      %v626 = vunpack.c.h.b16 %v283
      %v627 = vunpack.c.l.b16 %v284
      %v628 = vunpack.c.h.b16 %v284
      %v629 = vunpack.c.l.b16 %v285
      %v630 = vunpack.c.h.b16 %v285
      %v631 = vunpack.c.l.b16 %v286
      %v632 = vunpack.c.h.b16 %v286
      %v633 = vunpack.c.l.b16 %v287
      %v634 = vunpack.c.h.b16 %v287
      %v635 = vunpack.c.l.b16 %v288
      %v636 = vunpack.c.h.b16 %v288
      %v637 = vunpack.c.l.b16 %v289
      %v638 = vunpack.c.h.b16 %v289
      %v639 = vunpack.c.l.b16 %v290
      %v640 = vunpack.c.h.b16 %v290
      %v641 = vunpack.c.l.b16 %v291
      %v642 = vunpack.c.h.b16 %v291
      %v643 = vunpack.c.l.b16 %v292
      %v644 = vunpack.c.h.b16 %v292
      %v645 = vunpack.c.l.b16 %v293
      %v646 = vunpack.c.h.b16 %v293
      %v647 = vunpack.c.l.b16 %v294
      %v648 = vunpack.c.h.b16 %v294
      %v649 = vunpack.c.l.b16 %v295
      %v650 = vunpack.c.h.b16 %v295
      %v651 = vunpack.c.l.b16 %v296
      %v652 = vunpack.c.h.b16 %v296
      %v653 = vunpack.c.l.b16 %v297
      %v654 = vunpack.c.h.b16 %v297
      %v655 = vunpack.c.l.b16 %v298
      %v656 = vunpack.c.h.b16 %v298
      %v657 = vunpack.c.l.b16 %v299
      %v658 = vunpack.c.h.b16 %v299
      %v659 = vunpack.c.l.b16 %v300
      %v660 = vunpack.c.h.b16 %v300
      %v661 = vunpack.c.l.b16 %v301
      %v662 = vunpack.c.h.b16 %v301
      %v663 = vunpack.c.l.b16 %v302
      %v664 = vunpack.c.h.b16 %v302
      %v665 = vunpack.c.l.b16 %v303
      %v666 = vunpack.c.h.b16 %v303
      %v667 = vunpack.c.l.b16 %v304
      %v668 = vunpack.c.h.b16 %v304
      %v669 = vpack.c.b16 %v473, %v469
      %v670 = vpack.c.b16 %v474, %v470
      %v671 = vpack.c.b16 %v475, %v471
      %v672 = vpack.c.b16 %v476, %v472
      %v673 = vpack.c.b16 %v481, %v477
      %v674 = vpack.c.b16 %v482, %v478
      %v675 = vpack.c.b16 %v483, %v479
      %v676 = vpack.c.b16 %v484, %v480
      %v677 = vpack.c.b16 %v489, %v485
      %v678 = vpack.c.b16 %v490, %v486
      %v679 = vpack.c.b16 %v491, %v487
      %v680 = vpack.c.b16 %v492, %v488
      %v681 = vpack.c.b16 %v497, %v493
      %v682 = vpack.c.b16 %v498, %v494
      %v683 = vpack.c.b16 %v499, %v495
      %v684 = vpack.c.b16 %v500, %v496
      %v685 = vpack.c.b16 %v505, %v501
      %v686 = vpack.c.b16 %v506, %v502
      %v687 = vpack.c.b16 %v507, %v503
      %v688 = vpack.c.b16 %v508, %v504
      %v689 = vpack.c.b16 %v513, %v509
      %v690 = vpack.c.b16 %v514, %v510
      %v691 = vpack.c.b16 %v515, %v511
      %v692 = vpack.c.b16 %v516, %v512
      %v693 = vpack.c.b16 %v521, %v517
      %v694 = vpack.c.b16 %v522, %v518
      %v695 = vpack.c.b16 %v523, %v519
      %v696 = vpack.c.b16 %v524, %v520
      %v697 = vpack.c.b16 %v529, %v525
      %v698 = vpack.c.b16 %v530, %v526
      %v699 = vpack.c.b16 %v531, %v527
      %v700 = vpack.c.b16 %v532, %v528
      %v701 = vpack.c.b16 %v537, %v533
      %v702 = vpack.c.b16 %v538, %v534
      %v703 = vpack.c.b16 %v539, %v535
      %v704 = vpack.c.b16 %v540, %v536
      %v705 = vpack.c.b16 %v545, %v541
      %v706 = vpack.c.b16 %v546, %v542
      %v707 = vpack.c.b16 %v547, %v543
      %v708 = vpack.c.b16 %v548, %v544
      %v709 = vpack.c.b16 %v553, %v549
      %v710 = vpack.c.b16 %v554, %v550
      %v711 = vpack.c.b16 %v555, %v551
      %v712 = vpack.c.b16 %v556, %v552
      %v713 = vpack.c.b16 %v561, %v557
      %v714 = vpack.c.b16 %v562, %v558
      %v715 = vpack.c.b16 %v563, %v559
      %v716 = vpack.c.b16 %v564, %v560
      %v717 = vpack.c.b16 %v569, %v565
      %v718 = vpack.c.b16 %v570, %v566
      %v719 = vpack.c.b16 %v571, %v567
      %v720 = vpack.c.b16 %v572, %v568
      %v721 = vpack.c.b16 %v577, %v573
      %v722 = vpack.c.b16 %v578, %v574
      %v723 = vpack.c.b16 %v579, %v575
      %v724 = vpack.c.b16 %v580, %v576
      %v725 = vpack.c.b16 %v585, %v581
      %v726 = vpack.c.b16 %v586, %v582
      %v727 = vpack.c.b16 %v587, %v583
      %v728 = vpack.c.b16 %v588, %v584
      %v729 = vpack.c.b16 %v593, %v589
      %v730 = vpack.c.b16 %v594, %v590
      %v731 = vpack.c.b16 %v595, %v591
      %v732 = vpack.c.b16 %v596, %v592
      %v733 = vpack.c.b16 %v601, %v597
      %v734 = vpack.c.b16 %v602, %v598
      %v735 = vpack.c.b16 %v603, %v599
      %v736 = vpack.c.b16 %v604, %v600
      %v737 = vpack.c.b16 %v609, %v605
      %v738 = vpack.c.b16 %v610, %v606
      %v739 = vpack.c.b16 %v611, %v607
      %v740 = vpack.c.b16 %v612, %v608
      %v741 = vpack.c.b16 %v617, %v613
      %v742 = vpack.c.b16 %v618, %v614
      %v743 = vpack.c.b16 %v619, %v615
      %v744 = vpack.c.b16 %v620, %v616
      %v745 = vpack.c.b16 %v625, %v621
      %v746 = vpack.c.b16 %v626, %v622
      %v747 = vpack.c.b16 %v627, %v623
      %v748 = vpack.c.b16 %v628, %v624
      %v749 = vpack.c.b16 %v633, %v629
      %v750 = vpack.c.b16 %v634, %v630
      %v751 = vpack.c.b16 %v635, %v631
      %v752 = vpack.c.b16 %v636, %v632
      %v753 = vpack.c.b16 %v641, %v637
      %v754 = vpack.c.b16 %v642, %v638
      %v755 = vpack.c.b16 %v643, %v639
      %v756 = vpack.c.b16 %v644, %v640
      %v757 = vpack.c.b16 %v649, %v645
      %v758 = vpack.c.b16 %v650, %v646
      %v759 = vpack.c.b16 %v651, %v647
      %v760 = vpack.c.b16 %v652, %v648
      %v761 = vpack.c.b16 %v657, %v653
      %v762 = vpack.c.b16 %v658, %v654
      %v763 = vpack.c.b16 %v659, %v655
      %v764 = vpack.c.b16 %v660, %v656
      %v765 = vpack.c.b16 %v665, %v661
      %v766 = vpack.c.b16 %v666, %v662
      %v767 = vpack.c.b16 %v667, %v663
      %v768 = vpack.c.b16 %v668, %v664
      %v933 = vunpack.c.l.b16 %v305
      %v934 = vunpack.c.l.b16 %v306
      %v935 = vunpack.c.l.b16 %v307
      %v936 = vunpack.c.l.b16 %v308
      %v937 = vunpack.c.l.b16 %v309
      %v938 = vunpack.c.l.b16 %v310
      %v939 = vunpack.c.l.b16 %v311
      %v940 = vunpack.c.l.b16 %v312
      %v941 = vunpack.c.l.b16 %v313
      %v942 = vunpack.c.l.b16 %v314
      %v943 = vunpack.c.l.b16 %v315
      %v944 = vunpack.c.l.b16 %v316
      %v945 = vunpack.c.l.b16 %v317
      %v946 = vunpack.c.l.b16 %v318
      %v947 = vunpack.c.l.b16 %v319
      %v948 = vunpack.c.l.b16 %v320
      %v949 = vunpack.c.l.b16 %v321
      %v950 = vunpack.c.l.b16 %v322
      %v951 = vunpack.c.l.b16 %v323
      %v952 = vunpack.c.l.b16 %v324
      %v953 = vunpack.c.l.b16 %v325
      %v954 = vunpack.c.l.b16 %v326
      %v955 = vunpack.c.l.b16 %v327
      %v956 = vunpack.c.l.b16 %v328
      %v957 = vunpack.c.l.b16 %v329
      %v958 = vunpack.c.l.b16 %v330
      %v959 = vunpack.c.l.b16 %v331
      %v960 = vunpack.c.l.b16 %v332
      %v961 = vunpack.c.l.b16 %v333
      %v962 = vunpack.c.l.b16 %v334
      %v963 = vunpack.c.l.b16 %v335
      %v964 = vunpack.c.l.b16 %v336
      %v965 = vunpack.c.l.b16 %v337
      %v966 = vunpack.c.l.b16 %v338
      %v967 = vunpack.c.l.b16 %v339
      %v968 = vunpack.c.l.b16 %v340
      %v969 = vunpack.c.l.b16 %v341
      %v970 = vunpack.c.l.b16 %v342
      %v971 = vunpack.c.l.b16 %v343
      %v972 = vunpack.c.l.b16 %v344
      %v973 = vunpack.c.l.b16 %v345
      %v974 = vunpack.c.l.b16 %v346
      %v975 = vunpack.c.l.b16 %v347
      %v976 = vunpack.c.l.b16 %v348
      %v977 = vunpack.c.l.b16 %v349
      %v978 = vunpack.c.l.b16 %v350
      %v979 = vunpack.c.l.b16 %v351
      %v980 = vunpack.c.l.b16 %v352
      %v981 = vunpack.c.l.b16 %v353
      %v982 = vunpack.c.l.b16 %v354
      %v983 = vunpack.c.l.b16 %v355
      %v984 = vunpack.c.l.b16 %v356
      %v985 = vunpack.c.l.b16 %v357
      %v986 = vunpack.c.l.b16 %v358
      %v987 = vunpack.c.l.b16 %v359
      %v988 = vunpack.c.l.b16 %v360
      %v989 = vunpack.c.l.b16 %v361
      %v990 = vunpack.c.l.b16 %v362
      %v991 = vunpack.c.l.b16 %v363
      %v992 = vunpack.c.l.b16 %v364
      %v993 = vunpack.c.l.b16 %v365
      %v994 = vunpack.c.l.b16 %v366
      %v995 = vunpack.c.l.b16 %v367
      %v996 = vunpack.c.l.b16 %v368
      %v997 = vpack.c.b16 %v934, %v933
      %v998 = vpack.c.b16 %v936, %v935
      %v999 = vpack.c.b16 %v938, %v937
      %v1000 = vpack.c.b16 %v940, %v939
      %v1001 = vpack.c.b16 %v942, %v941
      %v1002 = vpack.c.b16 %v944, %v943
      %v1003 = vpack.c.b16 %v946, %v945
      %v1004 = vpack.c.b16 %v948, %v947
      %v1005 = vpack.c.b16 %v950, %v949
      %v1006 = vpack.c.b16 %v952, %v951
      %v1007 = vpack.c.b16 %v954, %v953
      %v1008 = vpack.c.b16 %v956, %v955
      %v1009 = vpack.c.b16 %v958, %v957
      %v1010 = vpack.c.b16 %v960, %v959
      %v1011 = vpack.c.b16 %v962, %v961
      %v1012 = vpack.c.b16 %v964, %v963
      %v1013 = vpack.c.b16 %v966, %v965
      %v1014 = vpack.c.b16 %v968, %v967
      %v1015 = vpack.c.b16 %v970, %v969
      %v1016 = vpack.c.b16 %v972, %v971
      %v1017 = vpack.c.b16 %v974, %v973
      %v1018 = vpack.c.b16 %v976, %v975
      %v1019 = vpack.c.b16 %v978, %v977
      %v1020 = vpack.c.b16 %v980, %v979
      %v1021 = vpack.c.b16 %v982, %v981
      %v1022 = vpack.c.b16 %v984, %v983
      %v1023 = vpack.c.b16 %v986, %v985
      %v1024 = vpack.c.b16 %v988, %v987
      %v1025 = vpack.c.b16 %v990, %v989
      %v1026 = vpack.c.b16 %v992, %v991
      %v1027 = vpack.c.b16 %v994, %v993
      %v1028 = vpack.c.b16 %v996, %v995
      %1061 = vmatprep.subr.bf16.mxu0 0
      %1062 = vmatpush1.bf16.msra.mxu0 %v997
      %1063 = vmatprep.subr.bf16.mxu0 0
      %1064 = vmatpush1.bf16.msra.mxu0 %v998
      %1065 = vmatprep.subr.bf16.mxu0 0
      %1066 = vmatpush1.bf16.msra.mxu0 %v999
      %1067 = vmatprep.subr.bf16.mxu0 0
      %1068 = vmatpush1.bf16.msra.mxu0 %v1000
      %1069 = vmatprep.subr.bf16.mxu0 0
      %1070 = vmatpush1.bf16.msra.mxu0 %v1001
      %1071 = vmatprep.subr.bf16.mxu0 0
      %1072 = vmatpush1.bf16.msra.mxu0 %v1002
      %1073 = vmatprep.subr.bf16.mxu0 0
      %1074 = vmatpush1.bf16.msra.mxu0 %v1003
      %1075 = vmatprep.subr.bf16.mxu0 0
      %1076 = vmatpush1.bf16.msra.mxu0 %v1004
      %1077 = vmatprep.subr.bf16.mxu0 0
      %1078 = vmatpush1.bf16.msra.mxu0 %v1005
      %1079 = vmatprep.subr.bf16.mxu0 0
      %1080 = vmatpush1.bf16.msra.mxu0 %v1006
      %1081 = vmatprep.subr.bf16.mxu0 0
      %1082 = vmatpush1.bf16.msra.mxu0 %v1007
      %1083 = vmatprep.subr.bf16.mxu0 0
      %1084 = vmatpush1.bf16.msra.mxu0 %v1008
      %1085 = vmatprep.subr.bf16.mxu0 0
      %1086 = vmatpush1.bf16.msra.mxu0 %v1009
      %1087 = vmatprep.subr.bf16.mxu0 0
      %1088 = vmatpush1.bf16.msra.mxu0 %v1010
      %1089 = vmatprep.subr.bf16.mxu0 0
      %1090 = vmatpush1.bf16.msra.mxu0 %v1011
      %1091 = vmatprep.subr.bf16.mxu0 0
      %1092 = vmatpush1.bf16.msra.mxu0 %v1012
      %1093 = vmatprep.mubr.bf16.mxu0 %v670
      %1094 = vmatmul.mubr.bf16.gmra.mrb[0].mxu0 %v669
      %v1095 = vpop.f32.mrb[0].mxu0
      %v1096 = vadd.f32 0.0, %v1095
      %v1097 = vpop.f32.mrb[0].mxu0
      %v1098 = vpop.f32.mrb[0].mxu0
      %v1099 = vadd.f32 0.0, %v1098
      %v1100 = vpop.f32.mrb[0].mxu0
      %1101 = vmatprep.mubr.bf16.mxu0 %v674
      %1102 = vmatmul.mubr.bf16.gmra.mrb[0].mxu0 %v673
      %v1103 = vpop.f32.mrb[0].mxu0
      %v1104 = vadd.f32 0.0, %v1103
      %v1105 = vpop.f32.mrb[0].mxu0
      %v1106 = vpop.f32.mrb[0].mxu0
      %v1107 = vadd.f32 0.0, %v1106
      %v1108 = vpop.f32.mrb[0].mxu0
      %1109 = vmatprep.mubr.bf16.mxu0 %v678
      %1110 = vmatmul.mubr.bf16.gmra.mrb[0].mxu0 %v677
      %v1111 = vpop.f32.mrb[0].mxu0
      %v1112 = vadd.f32 0.0, %v1111
      %v1113 = vpop.f32.mrb[0].mxu0
      %v1114 = vpop.f32.mrb[0].mxu0
      %v1115 = vadd.f32 0.0, %v1114
      %v1116 = vpop.f32.mrb[0].mxu0
      %1117 = vmatprep.mubr.bf16.mxu0 %v682
      %1118 = vmatmul.mubr.bf16.gmra.mrb[0].mxu0 %v681
      %v1119 = vpop.f32.mrb[0].mxu0
      %v1120 = vadd.f32 0.0, %v1119
      %v1121 = vpop.f32.mrb[0].mxu0
      %v1122 = vpop.f32.mrb[0].mxu0
      %v1123 = vadd.f32 0.0, %v1122
      %v1124 = vpop.f32.mrb[0].mxu0
      %1125 = vmatprep.mubr.bf16.mxu0 %v686
      %1126 = vmatmul.mubr.bf16.gmra.mrb[0].mxu0 %v685
      %v1127 = vpop.f32.mrb[0].mxu0
      %v1128 = vadd.f32 0.0, %v1127
      %v1129 = vpop.f32.mrb[0].mxu0
      %v1130 = vpop.f32.mrb[0].mxu0
      %v1131 = vadd.f32 0.0, %v1130
      %v1132 = vpop.f32.mrb[0].mxu0
      %1133 = vmatprep.mubr.bf16.mxu0 %v690
      %1134 = vmatmul.mubr.bf16.gmra.mrb[0].mxu0 %v689
      %v1135 = vpop.f32.mrb[0].mxu0
      %v1136 = vadd.f32 0.0, %v1135
      %v1137 = vpop.f32.mrb[0].mxu0
      %v1138 = vpop.f32.mrb[0].mxu0
      %v1139 = vadd.f32 0.0, %v1138
      %v1140 = vpop.f32.mrb[0].mxu0
      %1141 = vmatprep.mubr.bf16.mxu0 %v694
      %1142 = vmatmul.mubr.bf16.gmra.mrb[0].mxu0 %v693
      %v1143 = vpop.f32.mrb[0].mxu0
      %v1144 = vadd.f32 0.0, %v1143
      %v1145 = vpop.f32.mrb[0].mxu0
      %v1146 = vpop.f32.mrb[0].mxu0
      %v1147 = vadd.f32 0.0, %v1146
      %v1148 = vpop.f32.mrb[0].mxu0
      %1149 = vmatprep.mubr.bf16.mxu0 %v698
      %1150 = vmatmul.mubr.bf16.gmra.mrb[0].mxu0 %v697
      %v1151 = vpop.f32.mrb[0].mxu0
      %v1152 = vadd.f32 0.0, %v1151
      %v1153 = vpop.f32.mrb[0].mxu0
      %v1154 = vpop.f32.mrb[0].mxu0
      %v1155 = vadd.f32 0.0, %v1154
      %v1156 = vpop.f32.mrb[0].mxu0
      %1157 = vmatprep.mubr.bf16.mxu0 %v702
      %1158 = vmatmul.mubr.bf16.gmra.mrb[0].mxu0 %v701
      %v1159 = vpop.f32.mrb[0].mxu0
      %v1160 = vadd.f32 0.0, %v1159
      %v1161 = vpop.f32.mrb[0].mxu0
      %v1162 = vpop.f32.mrb[0].mxu0
      %v1163 = vadd.f32 0.0, %v1162
      %v1164 = vpop.f32.mrb[0].mxu0
      %1165 = vmatprep.mubr.bf16.mxu0 %v706
      %1166 = vmatmul.mubr.bf16.gmra.mrb[0].mxu0 %v705
      %v1167 = vpop.f32.mrb[0].mxu0
      %v1168 = vadd.f32 0.0, %v1167
      %v1169 = vpop.f32.mrb[0].mxu0
      %v1170 = vpop.f32.mrb[0].mxu0
      %v1171 = vadd.f32 0.0, %v1170
      %v1172 = vpop.f32.mrb[0].mxu0
      %1173 = vmatprep.mubr.bf16.mxu0 %v710
      %1174 = vmatmul.mubr.bf16.gmra.mrb[0].mxu0 %v709
      %v1175 = vpop.f32.mrb[0].mxu0
      %v1176 = vadd.f32 0.0, %v1175
      %v1177 = vpop.f32.mrb[0].mxu0
      %v1178 = vpop.f32.mrb[0].mxu0
      %v1179 = vadd.f32 0.0, %v1178
      %v1180 = vpop.f32.mrb[0].mxu0
      %1181 = vmatprep.mubr.bf16.mxu0 %v714
      %1182 = vmatmul.mubr.bf16.gmra.mrb[0].mxu0 %v713
      %v1183 = vpop.f32.mrb[0].mxu0
      %v1184 = vadd.f32 0.0, %v1183
      %v1185 = vpop.f32.mrb[0].mxu0
      %v1186 = vpop.f32.mrb[0].mxu0
      %v1187 = vadd.f32 0.0, %v1186
      %v1188 = vpop.f32.mrb[0].mxu0
      %1189 = vmatprep.mubr.bf16.mxu0 %v718
      %1190 = vmatmul.mubr.bf16.gmra.mrb[0].mxu0 %v717
      %v1191 = vpop.f32.mrb[0].mxu0
      %v1192 = vadd.f32 0.0, %v1191
      %v1193 = vpop.f32.mrb[0].mxu0
      %v1194 = vpop.f32.mrb[0].mxu0
      %v1195 = vadd.f32 0.0, %v1194
      %v1196 = vpop.f32.mrb[0].mxu0
      %1197 = vmatprep.mubr.bf16.mxu0 %v722
      %1198 = vmatmul.mubr.bf16.gmra.mrb[0].mxu0 %v721
      %v1199 = vpop.f32.mrb[0].mxu0
      %v1200 = vadd.f32 0.0, %v1199
      %v1201 = vpop.f32.mrb[0].mxu0
      %v1202 = vpop.f32.mrb[0].mxu0
      %v1203 = vadd.f32 0.0, %v1202
      %v1204 = vpop.f32.mrb[0].mxu0
      %1205 = vmatprep.mubr.bf16.mxu0 %v726
      %1206 = vmatmul.mubr.bf16.gmra.mrb[0].mxu0 %v725
      %v1207 = vpop.f32.mrb[0].mxu0
      %v1208 = vadd.f32 0.0, %v1207
      %v1209 = vpop.f32.mrb[0].mxu0
      %v1210 = vpop.f32.mrb[0].mxu0
      %v1211 = vadd.f32 0.0, %v1210
      %v1212 = vpop.f32.mrb[0].mxu0
      %1213 = vmatprep.mubr.bf16.mxu0 %v730
      %1214 = vmatmul.mubr.bf16.gmra.mrb[0].mxu0 %v729
      %v1215 = vpop.f32.mrb[0].mxu0
      %v1216 = vadd.f32 0.0, %v1215
      %v1217 = vpop.f32.mrb[0].mxu0
      %v1218 = vpop.f32.mrb[0].mxu0
      %v1219 = vadd.f32 0.0, %v1218
      %v1220 = vpop.f32.mrb[0].mxu0
      %1221 = vmatprep.mubr.bf16.mxu0 %v734
      %1222 = vmatmul.mubr.bf16.gmra.mrb[0].mxu0 %v733
      %v1223 = vpop.f32.mrb[0].mxu0
      %v1224 = vadd.f32 0.0, %v1223
      %v1225 = vpop.f32.mrb[0].mxu0
      %v1226 = vpop.f32.mrb[0].mxu0
      %v1227 = vadd.f32 0.0, %v1226
      %v1228 = vpop.f32.mrb[0].mxu0
      %1229 = vmatprep.mubr.bf16.mxu0 %v738
      %1230 = vmatmul.mubr.bf16.gmra.mrb[0].mxu0 %v737
      %v1231 = vpop.f32.mrb[0].mxu0
      %v1232 = vadd.f32 0.0, %v1231
      %v1233 = vpop.f32.mrb[0].mxu0
      %v1234 = vpop.f32.mrb[0].mxu0
      %v1235 = vadd.f32 0.0, %v1234
      %v1236 = vpop.f32.mrb[0].mxu0
      %1237 = vmatprep.mubr.bf16.mxu0 %v742
      %1238 = vmatmul.mubr.bf16.gmra.mrb[0].mxu0 %v741
      %v1239 = vpop.f32.mrb[0].mxu0
      %v1240 = vadd.f32 0.0, %v1239
      %v1241 = vpop.f32.mrb[0].mxu0
      %v1242 = vpop.f32.mrb[0].mxu0
      %v1243 = vadd.f32 0.0, %v1242
      %v1244 = vpop.f32.mrb[0].mxu0
      %1245 = vmatprep.mubr.bf16.mxu0 %v746
      %1246 = vmatmul.mubr.bf16.gmra.mrb[0].mxu0 %v745
      %v1247 = vpop.f32.mrb[0].mxu0
      %v1248 = vadd.f32 0.0, %v1247
      %v1249 = vpop.f32.mrb[0].mxu0
      %v1250 = vpop.f32.mrb[0].mxu0
      %v1251 = vadd.f32 0.0, %v1250
      %v1252 = vpop.f32.mrb[0].mxu0
      %1253 = vmatprep.mubr.bf16.mxu0 %v750
      %1254 = vmatmul.mubr.bf16.gmra.mrb[0].mxu0 %v749
      %v1255 = vpop.f32.mrb[0].mxu0
      %v1256 = vadd.f32 0.0, %v1255
      %v1257 = vpop.f32.mrb[0].mxu0
      %v1258 = vpop.f32.mrb[0].mxu0
      %v1259 = vadd.f32 0.0, %v1258
      %v1260 = vpop.f32.mrb[0].mxu0
      %1261 = vmatprep.mubr.bf16.mxu0 %v754
      %1262 = vmatmul.mubr.bf16.gmra.mrb[0].mxu0 %v753
      %v1263 = vpop.f32.mrb[0].mxu0
      %v1264 = vadd.f32 0.0, %v1263
      %v1265 = vpop.f32.mrb[0].mxu0
      %v1266 = vpop.f32.mrb[0].mxu0
      %v1267 = vadd.f32 0.0, %v1266
      %v1268 = vpop.f32.mrb[0].mxu0
      %1269 = vmatprep.mubr.bf16.mxu0 %v758
      %1270 = vmatmul.mubr.bf16.gmra.mrb[0].mxu0 %v757
      %v1271 = vpop.f32.mrb[0].mxu0
      %v1272 = vadd.f32 0.0, %v1271
      %v1273 = vpop.f32.mrb[0].mxu0
      %v1274 = vpop.f32.mrb[0].mxu0
      %v1275 = vadd.f32 0.0, %v1274
      %v1276 = vpop.f32.mrb[0].mxu0
      %1277 = vmatprep.mubr.bf16.mxu0 %v762
      %1278 = vmatmul.mubr.bf16.gmra.mrb[0].mxu0 %v761
      %v1279 = vpop.f32.mrb[0].mxu0
      %v1280 = vadd.f32 0.0, %v1279
      %v1281 = vpop.f32.mrb[0].mxu0
      %v1282 = vpop.f32.mrb[0].mxu0
      %v1283 = vadd.f32 0.0, %v1282
      %v1284 = vpop.f32.mrb[0].mxu0
      %1285 = vmatprep.mubr.bf16.mxu0 %v766
      %1286 = vmatmul.mubr.bf16.gmra.mrb[0].mxu0 %v765
      %v1287 = vpop.f32.mrb[0].mxu0
      %v1288 = vadd.f32 0.0, %v1287
      %v1289 = vpop.f32.mrb[0].mxu0
      %v1290 = vpop.f32.mrb[0].mxu0
      %v1291 = vadd.f32 0.0, %v1290
      %v1292 = vpop.f32.mrb[0].mxu0
      %1293 = vdwg.mxu0
      %1294 = vmatprep.subr.bf16.mxu0 0
      %1295 = vmatpush1.bf16.msra.mxu0 %v1013
      %1296 = vmatprep.subr.bf16.mxu0 0
      %1297 = vmatpush1.bf16.msra.mxu0 %v1014
      %1298 = vmatprep.subr.bf16.mxu0 0
      %1299 = vmatpush1.bf16.msra.mxu0 %v1015
      %1300 = vmatprep.subr.bf16.mxu0 0
      %1301 = vmatpush1.bf16.msra.mxu0 %v1016
      %1302 = vmatprep.subr.bf16.mxu0 0
      %1303 = vmatpush1.bf16.msra.mxu0 %v1017
      %1304 = vmatprep.subr.bf16.mxu0 0
      %1305 = vmatpush1.bf16.msra.mxu0 %v1018
      %1306 = vmatprep.subr.bf16.mxu0 0
      %1307 = vmatpush1.bf16.msra.mxu0 %v1019
      %1308 = vmatprep.subr.bf16.mxu0 0
      %1309 = vmatpush1.bf16.msra.mxu0 %v1020
      %1310 = vmatprep.subr.bf16.mxu0 0
      %1311 = vmatpush1.bf16.msra.mxu0 %v1021
      %1312 = vmatprep.subr.bf16.mxu0 0
      %1313 = vmatpush1.bf16.msra.mxu0 %v1022
      %1314 = vmatprep.subr.bf16.mxu0 0
      %1315 = vmatpush1.bf16.msra.mxu0 %v1023
      %1316 = vmatprep.subr.bf16.mxu0 0
      %1317 = vmatpush1.bf16.msra.mxu0 %v1024
      %1318 = vmatprep.subr.bf16.mxu0 0
      %1319 = vmatpush1.bf16.msra.mxu0 %v1025
      %1320 = vmatprep.subr.bf16.mxu0 0
      %1321 = vmatpush1.bf16.msra.mxu0 %v1026
      %1322 = vmatprep.subr.bf16.mxu0 0
      %1323 = vmatpush1.bf16.msra.mxu0 %v1027
      %1324 = vmatprep.subr.bf16.mxu0 0
      %1325 = vmatpush1.bf16.msra.mxu0 %v1028
      %1326 = vmatprep.mubr.bf16.mxu0 %v672
      %1327 = vmatmul.mubr.bf16.gmra.mrb[0].mxu0 %v671
      %v1328 = vpop.f32.mrb[0].mxu0
      %v1329 = vadd.f32 %v1096, %v1328
      %v1330 = vpop.f32.mrb[0].mxu0
      %v1331 = vpop.f32.mrb[0].mxu0
      %v1332 = vadd.f32 %v1099, %v1331
      %v1333 = vpop.f32.mrb[0].mxu0
      %1334 = vmatprep.mubr.bf16.mxu0 %v676
      %1335 = vmatmul.mubr.bf16.gmra.mrb[0].mxu0 %v675
      %v1336 = vpop.f32.mrb[0].mxu0
      %v1337 = vadd.f32 %v1104, %v1336
      %v1338 = vpop.f32.mrb[0].mxu0
      %v1339 = vpop.f32.mrb[0].mxu0
      %v1340 = vadd.f32 %v1107, %v1339
      %v1341 = vpop.f32.mrb[0].mxu0
      %1342 = vmatprep.mubr.bf16.mxu0 %v680
      %1343 = vmatmul.mubr.bf16.gmra.mrb[0].mxu0 %v679
      %v1344 = vpop.f32.mrb[0].mxu0
      %v1345 = vadd.f32 %v1112, %v1344
      %v1346 = vpop.f32.mrb[0].mxu0
      %v1347 = vpop.f32.mrb[0].mxu0
      %v1348 = vadd.f32 %v1115, %v1347
      %v1349 = vpop.f32.mrb[0].mxu0
      %1350 = vmatprep.mubr.bf16.mxu0 %v684
      %1351 = vmatmul.mubr.bf16.gmra.mrb[0].mxu0 %v683
      %v1352 = vpop.f32.mrb[0].mxu0
      %v1353 = vadd.f32 %v1120, %v1352
      %v1354 = vpop.f32.mrb[0].mxu0
      %v1355 = vpop.f32.mrb[0].mxu0
      %v1356 = vadd.f32 %v1123, %v1355
      %v1357 = vpop.f32.mrb[0].mxu0
      %1358 = vmatprep.mubr.bf16.mxu0 %v688
      %1359 = vmatmul.mubr.bf16.gmra.mrb[0].mxu0 %v687
      %v1360 = vpop.f32.mrb[0].mxu0
      %v1361 = vadd.f32 %v1128, %v1360
      %v1362 = vpop.f32.mrb[0].mxu0
      %v1363 = vpop.f32.mrb[0].mxu0
      %v1364 = vadd.f32 %v1131, %v1363
      %v1365 = vpop.f32.mrb[0].mxu0
      %1366 = vmatprep.mubr.bf16.mxu0 %v692
      %1367 = vmatmul.mubr.bf16.gmra.mrb[0].mxu0 %v691
      %v1368 = vpop.f32.mrb[0].mxu0
      %v1369 = vadd.f32 %v1136, %v1368
      %v1370 = vpop.f32.mrb[0].mxu0
      %v1371 = vpop.f32.mrb[0].mxu0
      %v1372 = vadd.f32 %v1139, %v1371
      %v1373 = vpop.f32.mrb[0].mxu0
      %1374 = vmatprep.mubr.bf16.mxu0 %v696
      %1375 = vmatmul.mubr.bf16.gmra.mrb[0].mxu0 %v695
      %v1376 = vpop.f32.mrb[0].mxu0
      %v1377 = vadd.f32 %v1144, %v1376
      %v1378 = vpop.f32.mrb[0].mxu0
      %v1379 = vpop.f32.mrb[0].mxu0
      %v1380 = vadd.f32 %v1147, %v1379
      %v1381 = vpop.f32.mrb[0].mxu0
      %1382 = vmatprep.mubr.bf16.mxu0 %v700
      %1383 = vmatmul.mubr.bf16.gmra.mrb[0].mxu0 %v699
      %v1384 = vpop.f32.mrb[0].mxu0
      %v1385 = vadd.f32 %v1152, %v1384
      %v1386 = vpop.f32.mrb[0].mxu0
      %v1387 = vpop.f32.mrb[0].mxu0
      %v1388 = vadd.f32 %v1155, %v1387
      %v1389 = vpop.f32.mrb[0].mxu0
      %1390 = vmatprep.mubr.bf16.mxu0 %v704
      %1391 = vmatmul.mubr.bf16.gmra.mrb[0].mxu0 %v703
      %v1392 = vpop.f32.mrb[0].mxu0
      %v1393 = vadd.f32 %v1160, %v1392
      %v1394 = vpop.f32.mrb[0].mxu0
      %v1395 = vpop.f32.mrb[0].mxu0
      %v1396 = vadd.f32 %v1163, %v1395
      %v1397 = vpop.f32.mrb[0].mxu0
      %1398 = vmatprep.mubr.bf16.mxu0 %v708
      %1399 = vmatmul.mubr.bf16.gmra.mrb[0].mxu0 %v707
      %v1400 = vpop.f32.mrb[0].mxu0
      %v1401 = vadd.f32 %v1168, %v1400
      %v1402 = vpop.f32.mrb[0].mxu0
      %v1403 = vpop.f32.mrb[0].mxu0
      %v1404 = vadd.f32 %v1171, %v1403
      %v1405 = vpop.f32.mrb[0].mxu0
      %1406 = vmatprep.mubr.bf16.mxu0 %v712
      %1407 = vmatmul.mubr.bf16.gmra.mrb[0].mxu0 %v711
      %v1408 = vpop.f32.mrb[0].mxu0
      %v1409 = vadd.f32 %v1176, %v1408
      %v1410 = vpop.f32.mrb[0].mxu0
      %v1411 = vpop.f32.mrb[0].mxu0
      %v1412 = vadd.f32 %v1179, %v1411
      %v1413 = vpop.f32.mrb[0].mxu0
      %1414 = vmatprep.mubr.bf16.mxu0 %v716
      %1415 = vmatmul.mubr.bf16.gmra.mrb[0].mxu0 %v715
      %v1416 = vpop.f32.mrb[0].mxu0
      %v1417 = vadd.f32 %v1184, %v1416
      %v1418 = vpop.f32.mrb[0].mxu0
      %v1419 = vpop.f32.mrb[0].mxu0
      %v1420 = vadd.f32 %v1187, %v1419
      %v1421 = vpop.f32.mrb[0].mxu0
      %1422 = vmatprep.mubr.bf16.mxu0 %v720
      %1423 = vmatmul.mubr.bf16.gmra.mrb[0].mxu0 %v719
      %v1424 = vpop.f32.mrb[0].mxu0
      %v1425 = vadd.f32 %v1192, %v1424
      %v1426 = vpop.f32.mrb[0].mxu0
      %v1427 = vpop.f32.mrb[0].mxu0
      %v1428 = vadd.f32 %v1195, %v1427
      %v1429 = vpop.f32.mrb[0].mxu0
      %1430 = vmatprep.mubr.bf16.mxu0 %v724
      %1431 = vmatmul.mubr.bf16.gmra.mrb[0].mxu0 %v723
      %v1432 = vpop.f32.mrb[0].mxu0
      %v1433 = vadd.f32 %v1200, %v1432
      %v1434 = vpop.f32.mrb[0].mxu0
      %v1435 = vpop.f32.mrb[0].mxu0
      %v1436 = vadd.f32 %v1203, %v1435
      %v1437 = vpop.f32.mrb[0].mxu0
      %1438 = vmatprep.mubr.bf16.mxu0 %v728
      %1439 = vmatmul.mubr.bf16.gmra.mrb[0].mxu0 %v727
      %v1440 = vpop.f32.mrb[0].mxu0
      %v1441 = vadd.f32 %v1208, %v1440
      %v1442 = vpop.f32.mrb[0].mxu0
      %v1443 = vpop.f32.mrb[0].mxu0
      %v1444 = vadd.f32 %v1211, %v1443
      %v1445 = vpop.f32.mrb[0].mxu0
      %1446 = vmatprep.mubr.bf16.mxu0 %v732
      %1447 = vmatmul.mubr.bf16.gmra.mrb[0].mxu0 %v731
      %v1448 = vpop.f32.mrb[0].mxu0
      %v1449 = vadd.f32 %v1216, %v1448
      %v1450 = vpop.f32.mrb[0].mxu0
      %v1451 = vpop.f32.mrb[0].mxu0
      %v1452 = vadd.f32 %v1219, %v1451
      %v1453 = vpop.f32.mrb[0].mxu0
      %1454 = vmatprep.mubr.bf16.mxu0 %v736
      %1455 = vmatmul.mubr.bf16.gmra.mrb[0].mxu0 %v735
      %v1456 = vpop.f32.mrb[0].mxu0
      %v1457 = vadd.f32 %v1224, %v1456
      %v1458 = vpop.f32.mrb[0].mxu0
      %v1459 = vpop.f32.mrb[0].mxu0
      %v1460 = vadd.f32 %v1227, %v1459
      %v1461 = vpop.f32.mrb[0].mxu0
      %1462 = vmatprep.mubr.bf16.mxu0 %v740
      %1463 = vmatmul.mubr.bf16.gmra.mrb[0].mxu0 %v739
      %v1464 = vpop.f32.mrb[0].mxu0
      %v1465 = vadd.f32 %v1232, %v1464
      %v1466 = vpop.f32.mrb[0].mxu0
      %v1467 = vpop.f32.mrb[0].mxu0
      %v1468 = vadd.f32 %v1235, %v1467
      %v1469 = vpop.f32.mrb[0].mxu0
      %1470 = vmatprep.mubr.bf16.mxu0 %v744
      %1471 = vmatmul.mubr.bf16.gmra.mrb[0].mxu0 %v743
      %v1472 = vpop.f32.mrb[0].mxu0
      %v1473 = vadd.f32 %v1240, %v1472
      %v1474 = vpop.f32.mrb[0].mxu0
      %v1475 = vpop.f32.mrb[0].mxu0
      %v1476 = vadd.f32 %v1243, %v1475
      %v1477 = vpop.f32.mrb[0].mxu0
      %1478 = vmatprep.mubr.bf16.mxu0 %v748
      %1479 = vmatmul.mubr.bf16.gmra.mrb[0].mxu0 %v747
      %v1480 = vpop.f32.mrb[0].mxu0
      %v1481 = vadd.f32 %v1248, %v1480
      %v1482 = vpop.f32.mrb[0].mxu0
      %v1483 = vpop.f32.mrb[0].mxu0
      %v1484 = vadd.f32 %v1251, %v1483
      %v1485 = vpop.f32.mrb[0].mxu0
      %1486 = vmatprep.mubr.bf16.mxu0 %v752
      %1487 = vmatmul.mubr.bf16.gmra.mrb[0].mxu0 %v751
      %v1488 = vpop.f32.mrb[0].mxu0
      %v1489 = vadd.f32 %v1256, %v1488
      %v1490 = vpop.f32.mrb[0].mxu0
      %v1491 = vpop.f32.mrb[0].mxu0
      %v1492 = vadd.f32 %v1259, %v1491
      %v1493 = vpop.f32.mrb[0].mxu0
      %1494 = vmatprep.mubr.bf16.mxu0 %v756
      %1495 = vmatmul.mubr.bf16.gmra.mrb[0].mxu0 %v755
      %v1496 = vpop.f32.mrb[0].mxu0
      %v1497 = vadd.f32 %v1264, %v1496
      %v1498 = vpop.f32.mrb[0].mxu0
      %v1499 = vpop.f32.mrb[0].mxu0
      %v1500 = vadd.f32 %v1267, %v1499
      %v1501 = vpop.f32.mrb[0].mxu0
      %1502 = vmatprep.mubr.bf16.mxu0 %v760
      %1503 = vmatmul.mubr.bf16.gmra.mrb[0].mxu0 %v759
      %v1504 = vpop.f32.mrb[0].mxu0
      %v1505 = vadd.f32 %v1272, %v1504
      %v1506 = vpop.f32.mrb[0].mxu0
      %v1507 = vpop.f32.mrb[0].mxu0
      %v1508 = vadd.f32 %v1275, %v1507
      %v1509 = vpop.f32.mrb[0].mxu0
      %1510 = vmatprep.mubr.bf16.mxu0 %v764
      %1511 = vmatmul.mubr.bf16.gmra.mrb[0].mxu0 %v763
      %v1512 = vpop.f32.mrb[0].mxu0
      %v1513 = vadd.f32 %v1280, %v1512
      %v1514 = vpop.f32.mrb[0].mxu0
      %v1515 = vpop.f32.mrb[0].mxu0
      %v1516 = vadd.f32 %v1283, %v1515
      %v1517 = vpop.f32.mrb[0].mxu0
      %1518 = vmatprep.mubr.bf16.mxu0 %v768
      %1519 = vmatmul.mubr.bf16.gmra.mrb[0].mxu0 %v767
      %v1520 = vpop.f32.mrb[0].mxu0
      %v1521 = vadd.f32 %v1288, %v1520
      %v1522 = vpop.f32.mrb[0].mxu0
      %v1523 = vpop.f32.mrb[0].mxu0
      %v1524 = vadd.f32 %v1291, %v1523
      %v1525 = vpop.f32.mrb[0].mxu0
      %1526 = vdwg.mxu0
      %v1527 = vld [vmem:[%s2] sm:$0x1]
      %v1529 = vlaneseq
      %v1530 = vshrl.u32 %v1529, 7
      %v1531 = vsub.s32 0, %v1530
      %v1532 = vrot.slane %v1527, %v1531
      %v1534 = vmul.f32 %v1329, %v1532
      %v1535 = vmul.f32 %v1332, %v1532
      %v1536 = vmul.f32 %v1337, %v1532
      %v1537 = vmul.f32 %v1340, %v1532
      %v1538 = vmul.f32 %v1345, %v1532
      %v1539 = vmul.f32 %v1348, %v1532
      %v1540 = vmul.f32 %v1353, %v1532
      %v1541 = vmul.f32 %v1356, %v1532
      %v1542 = vmul.f32 %v1361, %v1532
      %v1543 = vmul.f32 %v1364, %v1532
      %v1544 = vmul.f32 %v1369, %v1532
      %v1545 = vmul.f32 %v1372, %v1532
      %v1546 = vmul.f32 %v1377, %v1532
      %v1547 = vmul.f32 %v1380, %v1532
      %v1548 = vmul.f32 %v1385, %v1532
      %v1549 = vmul.f32 %v1388, %v1532
      %v1550 = vmul.f32 %v1393, %v1532
      %v1551 = vmul.f32 %v1396, %v1532
      %v1552 = vmul.f32 %v1401, %v1532
      %v1553 = vmul.f32 %v1404, %v1532
      %v1554 = vmul.f32 %v1409, %v1532
      %v1555 = vmul.f32 %v1412, %v1532
      %v1556 = vmul.f32 %v1417, %v1532
      %v1557 = vmul.f32 %v1420, %v1532
      %v1558 = vmul.f32 %v1425, %v1532
      %v1559 = vmul.f32 %v1428, %v1532
      %v1560 = vmul.f32 %v1433, %v1532
      %v1561 = vmul.f32 %v1436, %v1532
      %v1562 = vmul.f32 %v1441, %v1532
      %v1563 = vmul.f32 %v1444, %v1532
      %v1564 = vmul.f32 %v1449, %v1532
      %v1565 = vmul.f32 %v1452, %v1532
      %v1566 = vmul.f32 %v1457, %v1532
      %v1567 = vmul.f32 %v1460, %v1532
      %v1568 = vmul.f32 %v1465, %v1532
      %v1569 = vmul.f32 %v1468, %v1532
      %v1570 = vmul.f32 %v1473, %v1532
      %v1571 = vmul.f32 %v1476, %v1532
      %v1572 = vmul.f32 %v1481, %v1532
      %v1573 = vmul.f32 %v1484, %v1532
      %v1574 = vmul.f32 %v1489, %v1532
      %v1575 = vmul.f32 %v1492, %v1532
      %v1576 = vmul.f32 %v1497, %v1532
      %v1577 = vmul.f32 %v1500, %v1532
      %v1578 = vmul.f32 %v1505, %v1532
      %v1579 = vmul.f32 %v1508, %v1532
      %v1580 = vmul.f32 %v1513, %v1532
      %v1581 = vmul.f32 %v1516, %v1532
      %v1582 = vmul.f32 %v1521, %v1532
      %v1583 = vmul.f32 %v1524, %v1532
      %v1584 = vld [vmem:[%s3] sm:$0x1]
      %v1586 = vlaneseq
      %v1587 = vshrl.u32 %v1586, 7
      %v1588 = vsub.s32 0, %v1587
      %v1589 = vrot.slane %v1584, %v1588
      %v1591 = vadd.f32 %v1534, %v1589
      %v1592 = vadd.f32 %v1535, %v1589
      %v1593 = vadd.f32 %v1536, %v1589
      %v1594 = vadd.f32 %v1537, %v1589
      %v1595 = vadd.f32 %v1538, %v1589
      %v1596 = vadd.f32 %v1539, %v1589
      %v1597 = vadd.f32 %v1540, %v1589
      %v1598 = vadd.f32 %v1541, %v1589
      %v1599 = vadd.f32 %v1542, %v1589
      %v1600 = vadd.f32 %v1543, %v1589
      %v1601 = vadd.f32 %v1544, %v1589
      %v1602 = vadd.f32 %v1545, %v1589
      %v1603 = vadd.f32 %v1546, %v1589
      %v1604 = vadd.f32 %v1547, %v1589
      %v1605 = vadd.f32 %v1548, %v1589
      %v1606 = vadd.f32 %v1549, %v1589
      %v1607 = vadd.f32 %v1550, %v1589
      %v1608 = vadd.f32 %v1551, %v1589
      %v1609 = vadd.f32 %v1552, %v1589
      %v1610 = vadd.f32 %v1553, %v1589
      %v1611 = vadd.f32 %v1554, %v1589
      %v1612 = vadd.f32 %v1555, %v1589
      %v1613 = vadd.f32 %v1556, %v1589
      %v1614 = vadd.f32 %v1557, %v1589
      %v1615 = vadd.f32 %v1558, %v1589
      %v1616 = vadd.f32 %v1559, %v1589
      %v1617 = vadd.f32 %v1560, %v1589
      %v1618 = vadd.f32 %v1561, %v1589
      %v1619 = vadd.f32 %v1562, %v1589
      %v1620 = vadd.f32 %v1563, %v1589
      %v1621 = vadd.f32 %v1564, %v1589
      %v1622 = vadd.f32 %v1565, %v1589
      %v1623 = vadd.f32 %v1566, %v1589
      %v1624 = vadd.f32 %v1567, %v1589
      %v1625 = vadd.f32 %v1568, %v1589
      %v1626 = vadd.f32 %v1569, %v1589
      %v1627 = vadd.f32 %v1570, %v1589
      %v1628 = vadd.f32 %v1571, %v1589
      %v1629 = vadd.f32 %v1572, %v1589
      %v1630 = vadd.f32 %v1573, %v1589
      %v1631 = vadd.f32 %v1574, %v1589
      %v1632 = vadd.f32 %v1575, %v1589
      %v1633 = vadd.f32 %v1576, %v1589
      %v1634 = vadd.f32 %v1577, %v1589
      %v1635 = vadd.f32 %v1578, %v1589
      %v1636 = vadd.f32 %v1579, %v1589
      %v1637 = vadd.f32 %v1580, %v1589
      %v1638 = vadd.f32 %v1581, %v1589
      %v1639 = vadd.f32 %v1582, %v1589
      %v1640 = vadd.f32 %v1583, %v1589
      %v1641 = vmax.f32 %v1591, 0.0
      %v1642 = vmax.f32 %v1592, 0.0
      %v1643 = vmax.f32 %v1593, 0.0
      %v1644 = vmax.f32 %v1594, 0.0
      %v1645 = vmax.f32 %v1595, 0.0
      %v1646 = vmax.f32 %v1596, 0.0
      %v1647 = vmax.f32 %v1597, 0.0
      %v1648 = vmax.f32 %v1598, 0.0
      %v1649 = vmax.f32 %v1599, 0.0
      %v1650 = vmax.f32 %v1600, 0.0
      %v1651 = vmax.f32 %v1601, 0.0
      %v1652 = vmax.f32 %v1602, 0.0
      %v1653 = vmax.f32 %v1603, 0.0
      %v1654 = vmax.f32 %v1604, 0.0
      %v1655 = vmax.f32 %v1605, 0.0
      %v1656 = vmax.f32 %v1606, 0.0
      %v1657 = vmax.f32 %v1607, 0.0
      %v1658 = vmax.f32 %v1608, 0.0
      %v1659 = vmax.f32 %v1609, 0.0
      %v1660 = vmax.f32 %v1610, 0.0
      %v1661 = vmax.f32 %v1611, 0.0
      %v1662 = vmax.f32 %v1612, 0.0
      %v1663 = vmax.f32 %v1613, 0.0
      %v1664 = vmax.f32 %v1614, 0.0
      %v1665 = vmax.f32 %v1615, 0.0
      %v1666 = vmax.f32 %v1616, 0.0
      %v1667 = vmax.f32 %v1617, 0.0
      %v1668 = vmax.f32 %v1618, 0.0
      %v1669 = vmax.f32 %v1619, 0.0
      %v1670 = vmax.f32 %v1620, 0.0
      %v1671 = vmax.f32 %v1621, 0.0
      %v1672 = vmax.f32 %v1622, 0.0
      %v1673 = vmax.f32 %v1623, 0.0
      %v1674 = vmax.f32 %v1624, 0.0
      %v1675 = vmax.f32 %v1625, 0.0
      %v1676 = vmax.f32 %v1626, 0.0
      %v1677 = vmax.f32 %v1627, 0.0
      %v1678 = vmax.f32 %v1628, 0.0
      %v1679 = vmax.f32 %v1629, 0.0
      %v1680 = vmax.f32 %v1630, 0.0
      %v1681 = vmax.f32 %v1631, 0.0
      %v1682 = vmax.f32 %v1632, 0.0
      %v1683 = vmax.f32 %v1633, 0.0
      %v1684 = vmax.f32 %v1634, 0.0
      %v1685 = vmax.f32 %v1635, 0.0
      %v1686 = vmax.f32 %v1636, 0.0
      %v1687 = vmax.f32 %v1637, 0.0
      %v1688 = vmax.f32 %v1638, 0.0
      %v1689 = vmax.f32 %v1639, 0.0
      %v1690 = vmax.f32 %v1640, 0.0
      %v1691 = vpack.c.bf16 %v1642, %v1641
      %v1692 = vpack.c.bf16 %v1644, %v1643
      %v1693 = vpack.c.bf16 %v1646, %v1645
      %v1694 = vpack.c.bf16 %v1648, %v1647
      %v1695 = vpack.c.bf16 %v1650, %v1649
      %v1696 = vpack.c.bf16 %v1652, %v1651
      %v1697 = vpack.c.bf16 %v1654, %v1653
      %v1698 = vpack.c.bf16 %v1656, %v1655
      %v1699 = vpack.c.bf16 %v1658, %v1657
      %v1700 = vpack.c.bf16 %v1660, %v1659
      %v1701 = vpack.c.bf16 %v1662, %v1661
      %v1702 = vpack.c.bf16 %v1664, %v1663
      %v1703 = vpack.c.bf16 %v1666, %v1665
      %v1704 = vpack.c.bf16 %v1668, %v1667
      %v1705 = vpack.c.bf16 %v1670, %v1669
      %v1706 = vpack.c.bf16 %v1672, %v1671
      %v1707 = vpack.c.bf16 %v1674, %v1673
      %v1708 = vpack.c.bf16 %v1676, %v1675
      %v1709 = vpack.c.bf16 %v1678, %v1677
      %v1710 = vpack.c.bf16 %v1680, %v1679
      %v1711 = vpack.c.bf16 %v1682, %v1681
      %v1712 = vpack.c.bf16 %v1684, %v1683
      %v1713 = vpack.c.bf16 %v1686, %v1685
      %v1714 = vpack.c.bf16 %v1688, %v1687
      %v1715 = vpack.c.bf16 %v1690, %v1689
      %v1741 = vunpack.c.l.b16 %v1691
      %v1742 = vunpack.c.h.b16 %v1691
      %v1743 = vunpack.c.l.b16 %v1692
      %v1744 = vunpack.c.h.b16 %v1692
      %v1745 = vunpack.c.l.b16 %v1693
      %v1746 = vunpack.c.h.b16 %v1693
      %v1747 = vunpack.c.l.b16 %v1694
      %v1748 = vunpack.c.h.b16 %v1694
      %v1749 = vunpack.c.l.b16 %v1695
      %v1750 = vunpack.c.h.b16 %v1695
      %v1751 = vunpack.c.l.b16 %v1696
      %v1752 = vunpack.c.h.b16 %v1696
      %v1753 = vunpack.c.l.b16 %v1697
      %v1754 = vunpack.c.h.b16 %v1697
      %v1755 = vunpack.c.l.b16 %v1698
      %v1756 = vunpack.c.h.b16 %v1698
      %v1757 = vunpack.c.l.b16 %v1699
      %v1758 = vunpack.c.h.b16 %v1699
      %v1759 = vunpack.c.l.b16 %v1700
      %v1760 = vunpack.c.h.b16 %v1700
      %v1761 = vunpack.c.l.b16 %v1701
      %v1762 = vunpack.c.h.b16 %v1701
      %v1763 = vunpack.c.l.b16 %v1702
      %v1764 = vunpack.c.h.b16 %v1702
      %v1765 = vunpack.c.l.b16 %v1703
      %v1766 = vunpack.c.h.b16 %v1703
      %v1767 = vunpack.c.l.b16 %v1704
      %v1768 = vunpack.c.h.b16 %v1704
      %v1769 = vunpack.c.l.b16 %v1705
      %v1770 = vunpack.c.h.b16 %v1705
      %v1771 = vunpack.c.l.b16 %v1706
      %v1772 = vunpack.c.h.b16 %v1706
      %v1773 = vunpack.c.l.b16 %v1707
      %v1774 = vunpack.c.h.b16 %v1707
      %v1775 = vunpack.c.l.b16 %v1708
      %v1776 = vunpack.c.h.b16 %v1708
      %v1777 = vunpack.c.l.b16 %v1709
      %v1778 = vunpack.c.h.b16 %v1709
      %v1779 = vunpack.c.l.b16 %v1710
      %v1780 = vunpack.c.h.b16 %v1710
      %v1781 = vunpack.c.l.b16 %v1711
      %v1782 = vunpack.c.h.b16 %v1711
      %v1783 = vunpack.c.l.b16 %v1712
      %v1784 = vunpack.c.h.b16 %v1712
      %v1785 = vunpack.c.l.b16 %v1713
      %v1786 = vunpack.c.h.b16 %v1713
      %v1787 = vunpack.c.l.b16 %v1714
      %v1788 = vunpack.c.h.b16 %v1714
      %v1789 = vunpack.c.l.b16 %v1715
      %v1790 = vunpack.c.h.b16 %v1715
      %v1791 = vpack.c.b16 %v1741, %v1741
      %v1792 = vpack.c.b16 %v1742, %v1742
      %v1793 = vpack.c.b16 %v1743, %v1743
      %v1794 = vpack.c.b16 %v1744, %v1744
      %v1795 = vpack.c.b16 %v1745, %v1745
      %v1796 = vpack.c.b16 %v1746, %v1746
      %v1797 = vpack.c.b16 %v1747, %v1747
      %v1798 = vpack.c.b16 %v1748, %v1748
      %v1799 = vpack.c.b16 %v1749, %v1749
      %v1800 = vpack.c.b16 %v1750, %v1750
      %v1801 = vpack.c.b16 %v1751, %v1751
      %v1802 = vpack.c.b16 %v1752, %v1752
      %v1803 = vpack.c.b16 %v1753, %v1753
      %v1804 = vpack.c.b16 %v1754, %v1754
      %v1805 = vpack.c.b16 %v1755, %v1755
      %v1806 = vpack.c.b16 %v1756, %v1756
      %v1807 = vpack.c.b16 %v1757, %v1757
      %v1808 = vpack.c.b16 %v1758, %v1758
      %v1809 = vpack.c.b16 %v1759, %v1759
      %v1810 = vpack.c.b16 %v1760, %v1760
      %v1811 = vpack.c.b16 %v1761, %v1761
      %v1812 = vpack.c.b16 %v1762, %v1762
      %v1813 = vpack.c.b16 %v1763, %v1763
      %v1814 = vpack.c.b16 %v1764, %v1764
      %v1815 = vpack.c.b16 %v1765, %v1765
      %v1816 = vpack.c.b16 %v1766, %v1766
      %v1817 = vpack.c.b16 %v1767, %v1767
      %v1818 = vpack.c.b16 %v1768, %v1768
      %v1819 = vpack.c.b16 %v1769, %v1769
      %v1820 = vpack.c.b16 %v1770, %v1770
      %v1821 = vpack.c.b16 %v1771, %v1771
      %v1822 = vpack.c.b16 %v1772, %v1772
      %v1823 = vpack.c.b16 %v1773, %v1773
      %v1824 = vpack.c.b16 %v1774, %v1774
      %v1825 = vpack.c.b16 %v1775, %v1775
      %v1826 = vpack.c.b16 %v1776, %v1776
      %v1827 = vpack.c.b16 %v1777, %v1777
      %v1828 = vpack.c.b16 %v1778, %v1778
      %v1829 = vpack.c.b16 %v1779, %v1779
      %v1830 = vpack.c.b16 %v1780, %v1780
      %v1831 = vpack.c.b16 %v1781, %v1781
      %v1832 = vpack.c.b16 %v1782, %v1782
      %v1833 = vpack.c.b16 %v1783, %v1783
      %v1834 = vpack.c.b16 %v1784, %v1784
      %v1835 = vpack.c.b16 %v1785, %v1785
      %v1836 = vpack.c.b16 %v1786, %v1786
      %v1837 = vpack.c.b16 %v1787, %v1787
      %v1838 = vpack.c.b16 %v1788, %v1788
      %v1839 = vpack.c.b16 %v1789, %v1789
      %v1840 = vpack.c.b16 %v1790, %v1790
      %vm1891 = vcmask 519168
      %1892 = vst.msk [vmem:[%s202] sm:$0xf] %vm1891, %v1791
      %1893 = vst.msk [vmem:[%s202 + $0x4] sm:$0xf] %vm1891, %v1792
      %1894 = vst.msk [vmem:[%s202 + $0x8] sm:$0xf] %vm1891, %v1793
      %1895 = vst.msk [vmem:[%s202 + $0xc] sm:$0xf] %vm1891, %v1794
      %1896 = vst.msk [vmem:[%s202 + $0x10] sm:$0xf] %vm1891, %v1795
      %1897 = vst.msk [vmem:[%s202 + $0x14] sm:$0xf] %vm1891, %v1796
      %1898 = vst.msk [vmem:[%s202 + $0x18] sm:$0xf] %vm1891, %v1797
      %1899 = vst.msk [vmem:[%s202 + $0x1c] sm:$0xf] %vm1891, %v1798
      %1900 = vst.msk [vmem:[%s202 + $0x20] sm:$0xf] %vm1891, %v1799
      %1901 = vst.msk [vmem:[%s202 + $0x24] sm:$0xf] %vm1891, %v1800
      %1902 = vst.msk [vmem:[%s202 + $0x28] sm:$0xf] %vm1891, %v1801
      %1903 = vst.msk [vmem:[%s202 + $0x2c] sm:$0xf] %vm1891, %v1802
      %1904 = vst.msk [vmem:[%s202 + $0x30] sm:$0xf] %vm1891, %v1803
      %1905 = vst.msk [vmem:[%s202 + $0x34] sm:$0xf] %vm1891, %v1804
      %1906 = vst.msk [vmem:[%s202 + $0x38] sm:$0xf] %vm1891, %v1805
      %1907 = vst.msk [vmem:[%s202 + $0x3c] sm:$0xf] %vm1891, %v1806
      %1908 = vst.msk [vmem:[%s202 + $0x40] sm:$0xf] %vm1891, %v1807
      %1909 = vst.msk [vmem:[%s202 + $0x44] sm:$0xf] %vm1891, %v1808
      %1910 = vst.msk [vmem:[%s202 + $0x48] sm:$0xf] %vm1891, %v1809
      %1911 = vst.msk [vmem:[%s202 + $0x4c] sm:$0xf] %vm1891, %v1810
      %1912 = vst.msk [vmem:[%s202 + $0x50] sm:$0xf] %vm1891, %v1811
      %1913 = vst.msk [vmem:[%s202 + $0x54] sm:$0xf] %vm1891, %v1812
      %1914 = vst.msk [vmem:[%s202 + $0x58] sm:$0xf] %vm1891, %v1813
      %1915 = vst.msk [vmem:[%s202 + $0x5c] sm:$0xf] %vm1891, %v1814
      %1916 = vst.msk [vmem:[%s202 + $0x60] sm:$0xf] %vm1891, %v1815
      %1917 = vst.msk [vmem:[%s202 + $0x64] sm:$0xf] %vm1891, %v1816
      %1918 = vst.msk [vmem:[%s202 + $0x68] sm:$0xf] %vm1891, %v1817
      %1919 = vst.msk [vmem:[%s202 + $0x6c] sm:$0xf] %vm1891, %v1818
      %1920 = vst.msk [vmem:[%s202 + $0x70] sm:$0xf] %vm1891, %v1819
      %1921 = vst.msk [vmem:[%s202 + $0x74] sm:$0xf] %vm1891, %v1820
      %1922 = vst.msk [vmem:[%s202 + $0x78] sm:$0xf] %vm1891, %v1821
      %1923 = vst.msk [vmem:[%s202 + $0x7c] sm:$0xf] %vm1891, %v1822
      %1924 = vst.msk [vmem:[%s202 + $0x80] sm:$0xf] %vm1891, %v1823
      %1925 = vst.msk [vmem:[%s202 + $0x84] sm:$0xf] %vm1891, %v1824
      %1926 = vst.msk [vmem:[%s202 + $0x88] sm:$0xf] %vm1891, %v1825
      %1927 = vst.msk [vmem:[%s202 + $0x8c] sm:$0xf] %vm1891, %v1826
      %1928 = vst.msk [vmem:[%s202 + $0x90] sm:$0xf] %vm1891, %v1827
      %1929 = vst.msk [vmem:[%s202 + $0x94] sm:$0xf] %vm1891, %v1828
      %1930 = vst.msk [vmem:[%s202 + $0x98] sm:$0xf] %vm1891, %v1829
      %1931 = vst.msk [vmem:[%s202 + $0x9c] sm:$0xf] %vm1891, %v1830
      %1932 = vst.msk [vmem:[%s202 + $0xa0] sm:$0xf] %vm1891, %v1831
      %1933 = vst.msk [vmem:[%s202 + $0xa4] sm:$0xf] %vm1891, %v1832
      %1934 = vst.msk [vmem:[%s202 + $0xa8] sm:$0xf] %vm1891, %v1833
      %1935 = vst.msk [vmem:[%s202 + $0xac] sm:$0xf] %vm1891, %v1834
      %1936 = vst.msk [vmem:[%s202 + $0xb0] sm:$0xf] %vm1891, %v1835
      %1937 = vst.msk [vmem:[%s202 + $0xb4] sm:$0xf] %vm1891, %v1836
      %1938 = vst.msk [vmem:[%s202 + $0xb8] sm:$0xf] %vm1891, %v1837
      %1939 = vst.msk [vmem:[%s202 + $0xbc] sm:$0xf] %vm1891, %v1838
      %1940 = vst.msk [vmem:[%s202 + $0xc0] sm:$0xf] %vm1891, %v1839
      %1941 = vst.msk [vmem:[%s202 + $0xc4] sm:$0xf] %vm1891, %v1840
      %s1942 = smul.u32 50, %s15
      %p1943 = scmp.lt.s32.totalorder %s1942, 99
      %s1944 = scalar_select %p1943, %s1942, 99
      %s1945 = smul.addr %s1944, 4
      %s1946 = scalar_lea.vmem %s4, %s1945
      // Predicated region
      $region37: #{state_encoder_forward.5} parent=35 // pred_check
        %p1947 = pneg %p122
      $region38: #{state_encoder_forward.5} parent=35 // pred_check_branch
        %1949 = sbr.rel (%p1947) target = $region40
      $region39: #{state_encoder_forward.5} parent=35 // pred_region
        %s1950 = smul.u32 50, %s15
      $region40: #{state_encoder_forward.5} parent=35 // pred_fallthru
        _
    $region36: #{state_encoder_forward.5} parent=5 // pred_fallthru
      _
    %p1951 = scmp.le.s32.totalorder 2, %s10
    // Predicated region
    $region41: #{state_encoder_forward.5} parent=5 // pred_check
      %p1952 = pneg %p1951
    $region42: #{state_encoder_forward.5} parent=5 // pred_check_branch
      %1954 = sbr.rel (%p1952) target = $region44
    $region43: #{state_encoder_forward.5} parent=5 // pred_region
      %s1955 = ssub.s32 %s10, 2
      // Predicated region
      $region45: #{state_encoder_forward.5} parent=43 // pred_check
        %p1956 = pneg %p128
      $region46: #{state_encoder_forward.5} parent=43 // pred_check_branch
        %1958 = sbr.rel (%p1956) target = $region48
      $region47: #{state_encoder_forward.5} parent=43 // pred_region
        %s1959 = smul.u32 50, %s16
        %p1960 = scmp.lt.s32.totalorder %s1959, 99
        %s1961 = scalar_select %p1960, %s1959, 99
        %s1962 = smul.addr %s1961, 4
        %s1963 = scalar_lea.vmem %s4, %s1962
      $region48: #{state_encoder_forward.5} parent=43 // pred_fallthru
        _
    $region44: #{state_encoder_forward.5} parent=5 // pred_fallthru
      _
  $region6: #{state_encoder_forward.5} parent=0 // loop_footer
    %s14 = sadd.s32 1, %s10
  $region7: #{state_encoder_forward.5} parent=0 // loop_footer_branch
    %9 = sbr.rel target = $region3
  $region8: #{state_encoder_forward.5} parent=0 // loop_exit
    _

// kernel: state_encoder_forward.6
$region0: #{state_encoder_forward.6}
  #allocation0 [shape = 'u32[]', space=smem, size = 0x4, offset = 0x4, fixed_abs, tag = 'smem constant byte address 0x4 - core index']
  #allocation1 [shape = 'u32[144,128]{1,0:T(1,128)}', space=vmem, size = 0x12000, scoped, tag = 'internal scratch']
  %s0 = inlined_call_operand.vmem [shape: bf16[200,1024], index: 0, kind: input, shape index: {}]
  %s1 = inlined_call_operand.vmem [shape: bf16[1024,128], index: 1, kind: input, shape index: {}]
  %s2 = inlined_call_operand.vmem [shape: f32[1,128], index: 2, kind: input, shape index: {}]
  %s3 = inlined_call_operand.vmem [shape: f32[1,128], index: 3, kind: input, shape index: {}]
  %s4 = inlined_call_operand.vmem [shape: bf16[200,128], index: 4, kind: output, shape index: {}]
  %s5 = sld [smem:[#allocation0]]
  $region26: #{state_encoder_forward.6} parent=0
    _
  %s7 = ssub.s32 1, %s5
  %s8 = scalar_select 0, %s7, %s5
  // Predicated region
  $region2: #{state_encoder_forward.6} parent=0 // pred_check
    _
  $region3: #{state_encoder_forward.6} parent=0 // pred_check_branch
    %10 = sbr.rel (0) target = $region5
  $region4: #{state_encoder_forward.6} parent=0 // pred_region
    _
  $region5: #{state_encoder_forward.6} parent=0 // pred_fallthru
    _
  // Predicated region
  $region6: #{state_encoder_forward.6} parent=0 // pred_check
    _
  $region7: #{state_encoder_forward.6} parent=0 // pred_check_branch
    %12 = sbr.rel (0) target = $region9
  $region8: #{state_encoder_forward.6} parent=0 // pred_region
    _
  $region9: #{state_encoder_forward.6} parent=0 // pred_fallthru
    _
  // Predicated region
  $region10: #{state_encoder_forward.6} parent=0 // pred_check
    _
  $region11: #{state_encoder_forward.6} parent=0 // pred_check_branch
    %14 = sbr.rel (0) target = $region13
  $region12: #{state_encoder_forward.6} parent=0 // pred_region
    _
  $region13: #{state_encoder_forward.6} parent=0 // pred_fallthru
    _
  // Predicated region
  $region14: #{state_encoder_forward.6} parent=0 // pred_check
    _
  $region15: #{state_encoder_forward.6} parent=0 // pred_check_branch
    %16 = sbr.rel (0) target = $region17
  $region16: #{state_encoder_forward.6} parent=0 // pred_region
    _
  $region17: #{state_encoder_forward.6} parent=0 // pred_fallthru
    _
  %v18 = vld [vmem:[%s0] sm:$0xff]
  %v19 = vld [vmem:[%s0 + $0x8] sm:$0xff]
  %v20 = vld [vmem:[%s0 + $0x10] sm:$0xff]
  %v21 = vld [vmem:[%s0 + $0x18] sm:$0xff]
  %v22 = vld [vmem:[%s0 + $0x20] sm:$0xff]
  %v23 = vld [vmem:[%s0 + $0x28] sm:$0xff]
  %v24 = vld [vmem:[%s0 + $0x30] sm:$0xff]
  %v25 = vld [vmem:[%s0 + $0x38] sm:$0xff]
  %v26 = vld [vmem:[%s0 + $0x40] sm:$0xff]
  %v27 = vld [vmem:[%s0 + $0x48] sm:$0xff]
  %v28 = vld [vmem:[%s0 + $0x50] sm:$0xff]
  %v29 = vld [vmem:[%s0 + $0x58] sm:$0xff]
  %v30 = vld [vmem:[%s0 + $0x60] sm:$0xff]
  %v31 = vld [vmem:[%s0 + $0x68] sm:$0xff]
  %v32 = vld [vmem:[%s0 + $0x70] sm:$0xff]
  %v33 = vld [vmem:[%s0 + $0x78] sm:$0xff]
  %v34 = vld [vmem:[%s0 + $0x80] sm:$0xff]
  %v35 = vld [vmem:[%s0 + $0x88] sm:$0xff]
  %v36 = vld [vmem:[%s0 + $0x90] sm:$0xff]
  %v37 = vld [vmem:[%s0 + $0x98] sm:$0xff]
  %v38 = vld [vmem:[%s0 + $0xa0] sm:$0xff]
  %v39 = vld [vmem:[%s0 + $0xa8] sm:$0xff]
  %v40 = vld [vmem:[%s0 + $0xb0] sm:$0xff]
  %v41 = vld [vmem:[%s0 + $0xb8] sm:$0xff]
  %v42 = vld [vmem:[%s0 + $0xc0] sm:$0xff]
  %v43 = vld [vmem:[%s0 + $0xc8] sm:$0xff]
  %v44 = vld [vmem:[%s0 + $0xd0] sm:$0xff]
  %v45 = vld [vmem:[%s0 + $0xd8] sm:$0xff]
  %v46 = vld [vmem:[%s0 + $0xe0] sm:$0xff]
  %v47 = vld [vmem:[%s0 + $0xe8] sm:$0xff]
  %v48 = vld [vmem:[%s0 + $0xf0] sm:$0xff]
  %v49 = vld [vmem:[%s0 + $0xf8] sm:$0xff]
  %v50 = vld [vmem:[%s0 + $0x100] sm:$0xff]
  %v51 = vld [vmem:[%s0 + $0x108] sm:$0xff]
  %v52 = vld [vmem:[%s0 + $0x110] sm:$0xff]
  %v53 = vld [vmem:[%s0 + $0x118] sm:$0xff]
  %v54 = vld [vmem:[%s0 + $0x120] sm:$0xff]
  %v55 = vld [vmem:[%s0 + $0x128] sm:$0xff]
  %v56 = vld [vmem:[%s0 + $0x130] sm:$0xff]
  %v57 = vld [vmem:[%s0 + $0x138] sm:$0xff]
  %v58 = vld [vmem:[%s0 + $0x140] sm:$0xff]
  %v59 = vld [vmem:[%s0 + $0x148] sm:$0xff]
  %v60 = vld [vmem:[%s0 + $0x150] sm:$0xff]
  %v61 = vld [vmem:[%s0 + $0x158] sm:$0xff]
  %v62 = vld [vmem:[%s0 + $0x160] sm:$0xff]
  %v63 = vld [vmem:[%s0 + $0x168] sm:$0xff]
  %v64 = vld [vmem:[%s0 + $0x170] sm:$0xff]
  %v65 = vld [vmem:[%s0 + $0x178] sm:$0xff]
  %v66 = vld [vmem:[%s0 + $0x180] sm:$0xff]
  %v67 = vld [vmem:[%s0 + $0x188] sm:$0xff]
  %v68 = vld [vmem:[%s0 + $0x190] sm:$0xff]
  %v69 = vld [vmem:[%s0 + $0x198] sm:$0xff]
  %v70 = vld [vmem:[%s0 + $0x1a0] sm:$0xff]
  %v71 = vld [vmem:[%s0 + $0x1a8] sm:$0xff]
  %v72 = vld [vmem:[%s0 + $0x1b0] sm:$0xff]
  %v73 = vld [vmem:[%s0 + $0x1b8] sm:$0xff]
  %v74 = vld [vmem:[%s0 + $0x1c0] sm:$0xff]
  %v75 = vld [vmem:[%s0 + $0x1c8] sm:$0xff]
  %v76 = vld [vmem:[%s0 + $0x1d0] sm:$0xff]
  %v77 = vld [vmem:[%s0 + $0x1d8] sm:$0xff]
  %v78 = vld [vmem:[%s0 + $0x1e0] sm:$0xff]
  %v79 = vld [vmem:[%s0 + $0x1e8] sm:$0xff]
  %v80 = vld [vmem:[%s0 + $0x1f0] sm:$0xff]
  %v81 = vld [vmem:[%s0 + $0x1f8] sm:$0xff]
  %v82 = vld [vmem:[%s0 + $0x200] sm:$0xff]
  %v83 = vld [vmem:[%s0 + $0x208] sm:$0xff]
  %v84 = vld [vmem:[%s0 + $0x210] sm:$0xff]
  %v85 = vld [vmem:[%s0 + $0x218] sm:$0xff]
  %v86 = vld [vmem:[%s0 + $0x220] sm:$0xff]
  %v87 = vld [vmem:[%s0 + $0x228] sm:$0xff]
  %v88 = vld [vmem:[%s0 + $0x230] sm:$0xff]
  %v89 = vld [vmem:[%s0 + $0x238] sm:$0xff]
  %v90 = vld [vmem:[%s0 + $0x240] sm:$0xff]
  %v91 = vld [vmem:[%s0 + $0x248] sm:$0xff]
  %v92 = vld [vmem:[%s0 + $0x250] sm:$0xff]
  %v93 = vld [vmem:[%s0 + $0x258] sm:$0xff]
  %v94 = vld [vmem:[%s0 + $0x260] sm:$0xff]
  %v95 = vld [vmem:[%s0 + $0x268] sm:$0xff]
  %v96 = vld [vmem:[%s0 + $0x270] sm:$0xff]
  %v97 = vld [vmem:[%s0 + $0x278] sm:$0xff]
  %v98 = vld [vmem:[%s0 + $0x280] sm:$0xff]
  %v99 = vld [vmem:[%s0 + $0x288] sm:$0xff]
  %v100 = vld [vmem:[%s0 + $0x290] sm:$0xff]
  %v101 = vld [vmem:[%s0 + $0x298] sm:$0xff]
  %v102 = vld [vmem:[%s0 + $0x2a0] sm:$0xff]
  %v103 = vld [vmem:[%s0 + $0x2a8] sm:$0xff]
  %v104 = vld [vmem:[%s0 + $0x2b0] sm:$0xff]
  %v105 = vld [vmem:[%s0 + $0x2b8] sm:$0xff]
  %v106 = vld [vmem:[%s0 + $0x2c0] sm:$0xff]
  %v107 = vld [vmem:[%s0 + $0x2c8] sm:$0xff]
  %v108 = vld [vmem:[%s0 + $0x2d0] sm:$0xff]
  %v109 = vld [vmem:[%s0 + $0x2d8] sm:$0xff]
  %v110 = vld [vmem:[%s0 + $0x2e0] sm:$0xff]
  %v111 = vld [vmem:[%s0 + $0x2e8] sm:$0xff]
  %v112 = vld [vmem:[%s0 + $0x2f0] sm:$0xff]
  %v113 = vld [vmem:[%s0 + $0x2f8] sm:$0xff]
  %v114 = vld [vmem:[%s0 + $0x300] sm:$0xff]
  %v115 = vld [vmem:[%s0 + $0x308] sm:$0xff]
  %v116 = vld [vmem:[%s0 + $0x310] sm:$0xff]
  %v117 = vld [vmem:[%s0 + $0x318] sm:$0xff]
  %v118 = vld [vmem:[%s1] sm:$0xf]
  %v119 = vld [vmem:[%s1 + $0x4] sm:$0xf]
  %v120 = vld [vmem:[%s1 + $0x8] sm:$0xf]
  %v121 = vld [vmem:[%s1 + $0xc] sm:$0xf]
  %v122 = vld [vmem:[%s1 + $0x10] sm:$0xf]
  %v123 = vld [vmem:[%s1 + $0x14] sm:$0xf]
  %v124 = vld [vmem:[%s1 + $0x18] sm:$0xf]
  %v125 = vld [vmem:[%s1 + $0x1c] sm:$0xf]
  %v126 = vld [vmem:[%s1 + $0x20] sm:$0xf]
  %v127 = vld [vmem:[%s1 + $0x24] sm:$0xf]
  %v128 = vld [vmem:[%s1 + $0x28] sm:$0xf]
  %v129 = vld [vmem:[%s1 + $0x2c] sm:$0xf]
  %v130 = vld [vmem:[%s1 + $0x30] sm:$0xf]
  %v131 = vld [vmem:[%s1 + $0x34] sm:$0xf]
  %v132 = vld [vmem:[%s1 + $0x38] sm:$0xf]
  %v133 = vld [vmem:[%s1 + $0x3c] sm:$0xf]
  %v134 = vld [vmem:[%s1 + $0x40] sm:$0xf]
  %v135 = vld [vmem:[%s1 + $0x44] sm:$0xf]
  %v136 = vld [vmem:[%s1 + $0x48] sm:$0xf]
  %v137 = vld [vmem:[%s1 + $0x4c] sm:$0xf]
  %v138 = vld [vmem:[%s1 + $0x50] sm:$0xf]
  %v139 = vld [vmem:[%s1 + $0x54] sm:$0xf]
  %v140 = vld [vmem:[%s1 + $0x58] sm:$0xf]
  %v141 = vld [vmem:[%s1 + $0x5c] sm:$0xf]
  %v142 = vld [vmem:[%s1 + $0x60] sm:$0xf]
  %v143 = vld [vmem:[%s1 + $0x64] sm:$0xf]
  %v144 = vld [vmem:[%s1 + $0x68] sm:$0xf]
  %v145 = vld [vmem:[%s1 + $0x6c] sm:$0xf]
  %v146 = vld [vmem:[%s1 + $0x70] sm:$0xf]
  %v147 = vld [vmem:[%s1 + $0x74] sm:$0xf]
  %v148 = vld [vmem:[%s1 + $0x78] sm:$0xf]
  %v149 = vld [vmem:[%s1 + $0x7c] sm:$0xf]
  %v150 = vld [vmem:[%s1 + $0x80] sm:$0xf]
  %v151 = vld [vmem:[%s1 + $0x84] sm:$0xf]
  %v152 = vld [vmem:[%s1 + $0x88] sm:$0xf]
  %v153 = vld [vmem:[%s1 + $0x8c] sm:$0xf]
  %v154 = vld [vmem:[%s1 + $0x90] sm:$0xf]
  %v155 = vld [vmem:[%s1 + $0x94] sm:$0xf]
  %v156 = vld [vmem:[%s1 + $0x98] sm:$0xf]
  %v157 = vld [vmem:[%s1 + $0x9c] sm:$0xf]
  %v158 = vld [vmem:[%s1 + $0xa0] sm:$0xf]
  %v159 = vld [vmem:[%s1 + $0xa4] sm:$0xf]
  %v160 = vld [vmem:[%s1 + $0xa8] sm:$0xf]
  %v161 = vld [vmem:[%s1 + $0xac] sm:$0xf]
  %v162 = vld [vmem:[%s1 + $0xb0] sm:$0xf]
  %v163 = vld [vmem:[%s1 + $0xb4] sm:$0xf]
  %v164 = vld [vmem:[%s1 + $0xb8] sm:$0xf]
  %v165 = vld [vmem:[%s1 + $0xbc] sm:$0xf]
  %v166 = vld [vmem:[%s1 + $0xc0] sm:$0xf]
  %v167 = vld [vmem:[%s1 + $0xc4] sm:$0xf]
  %v168 = vld [vmem:[%s1 + $0xc8] sm:$0xf]
  %v169 = vld [vmem:[%s1 + $0xcc] sm:$0xf]
  %v170 = vld [vmem:[%s1 + $0xd0] sm:$0xf]
  %v171 = vld [vmem:[%s1 + $0xd4] sm:$0xf]
  %v172 = vld [vmem:[%s1 + $0xd8] sm:$0xf]
  %v173 = vld [vmem:[%s1 + $0xdc] sm:$0xf]
  %v174 = vld [vmem:[%s1 + $0xe0] sm:$0xf]
  %v175 = vld [vmem:[%s1 + $0xe4] sm:$0xf]
  %v176 = vld [vmem:[%s1 + $0xe8] sm:$0xf]
  %v177 = vld [vmem:[%s1 + $0xec] sm:$0xf]
  %v178 = vld [vmem:[%s1 + $0xf0] sm:$0xf]
  %v179 = vld [vmem:[%s1 + $0xf4] sm:$0xf]
  %v180 = vld [vmem:[%s1 + $0xf8] sm:$0xf]
  %v181 = vld [vmem:[%s1 + $0xfc] sm:$0xf]
  %v182 = vld [vmem:[%s1 + $0x100] sm:$0xf]
  %v183 = vld [vmem:[%s1 + $0x104] sm:$0xf]
  %v184 = vld [vmem:[%s1 + $0x108] sm:$0xf]
  %v185 = vld [vmem:[%s1 + $0x10c] sm:$0xf]
  %v186 = vld [vmem:[%s1 + $0x110] sm:$0xf]
  %v187 = vld [vmem:[%s1 + $0x114] sm:$0xf]
  %v188 = vld [vmem:[%s1 + $0x118] sm:$0xf]
  %v189 = vld [vmem:[%s1 + $0x11c] sm:$0xf]
  %v190 = vld [vmem:[%s1 + $0x120] sm:$0xf]
  %v191 = vld [vmem:[%s1 + $0x124] sm:$0xf]
  %v192 = vld [vmem:[%s1 + $0x128] sm:$0xf]
  %v193 = vld [vmem:[%s1 + $0x12c] sm:$0xf]
  %v194 = vld [vmem:[%s1 + $0x130] sm:$0xf]
  %v195 = vld [vmem:[%s1 + $0x134] sm:$0xf]
  %v196 = vld [vmem:[%s1 + $0x138] sm:$0xf]
  %v197 = vld [vmem:[%s1 + $0x13c] sm:$0xf]
  %v198 = vld [vmem:[%s1 + $0x140] sm:$0xf]
  %v199 = vld [vmem:[%s1 + $0x144] sm:$0xf]
  %v200 = vld [vmem:[%s1 + $0x148] sm:$0xf]
  %v201 = vld [vmem:[%s1 + $0x14c] sm:$0xf]
  %v202 = vld [vmem:[%s1 + $0x150] sm:$0xf]
  %v203 = vld [vmem:[%s1 + $0x154] sm:$0xf]
  %v204 = vld [vmem:[%s1 + $0x158] sm:$0xf]
  %v205 = vld [vmem:[%s1 + $0x15c] sm:$0xf]
  %v206 = vld [vmem:[%s1 + $0x160] sm:$0xf]
  %v207 = vld [vmem:[%s1 + $0x164] sm:$0xf]
  %v208 = vld [vmem:[%s1 + $0x168] sm:$0xf]
  %v209 = vld [vmem:[%s1 + $0x16c] sm:$0xf]
  %v210 = vld [vmem:[%s1 + $0x170] sm:$0xf]
  %v211 = vld [vmem:[%s1 + $0x174] sm:$0xf]
  %v212 = vld [vmem:[%s1 + $0x178] sm:$0xf]
  %v213 = vld [vmem:[%s1 + $0x17c] sm:$0xf]
  %v214 = vld [vmem:[%s1 + $0x180] sm:$0xf]
  %v215 = vld [vmem:[%s1 + $0x184] sm:$0xf]
  %v216 = vld [vmem:[%s1 + $0x188] sm:$0xf]
  %v217 = vld [vmem:[%s1 + $0x18c] sm:$0xf]
  %v218 = vld [vmem:[%s1 + $0x190] sm:$0xf]
  %v219 = vld [vmem:[%s1 + $0x194] sm:$0xf]
  %v220 = vld [vmem:[%s1 + $0x198] sm:$0xf]
  %v221 = vld [vmem:[%s1 + $0x19c] sm:$0xf]
  %v222 = vld [vmem:[%s1 + $0x1a0] sm:$0xf]
  %v223 = vld [vmem:[%s1 + $0x1a4] sm:$0xf]
  %v224 = vld [vmem:[%s1 + $0x1a8] sm:$0xf]
  %v225 = vld [vmem:[%s1 + $0x1ac] sm:$0xf]
  %v226 = vld [vmem:[%s1 + $0x1b0] sm:$0xf]
  %v227 = vld [vmem:[%s1 + $0x1b4] sm:$0xf]
  %v228 = vld [vmem:[%s1 + $0x1b8] sm:$0xf]
  %v229 = vld [vmem:[%s1 + $0x1bc] sm:$0xf]
  %v230 = vld [vmem:[%s1 + $0x1c0] sm:$0xf]
  %v231 = vld [vmem:[%s1 + $0x1c4] sm:$0xf]
  %v232 = vld [vmem:[%s1 + $0x1c8] sm:$0xf]
  %v233 = vld [vmem:[%s1 + $0x1cc] sm:$0xf]
  %v234 = vld [vmem:[%s1 + $0x1d0] sm:$0xf]
  %v235 = vld [vmem:[%s1 + $0x1d4] sm:$0xf]
  %v236 = vld [vmem:[%s1 + $0x1d8] sm:$0xf]
  %v237 = vld [vmem:[%s1 + $0x1dc] sm:$0xf]
  %v238 = vld [vmem:[%s1 + $0x1e0] sm:$0xf]
  %v239 = vld [vmem:[%s1 + $0x1e4] sm:$0xf]
  %v240 = vld [vmem:[%s1 + $0x1e8] sm:$0xf]
  %v241 = vld [vmem:[%s1 + $0x1ec] sm:$0xf]
  %v242 = vld [vmem:[%s1 + $0x1f0] sm:$0xf]
  %v243 = vld [vmem:[%s1 + $0x1f4] sm:$0xf]
  %v244 = vld [vmem:[%s1 + $0x1f8] sm:$0xf]
  %v245 = vld [vmem:[%s1 + $0x1fc] sm:$0xf]
  %v346 = vunpack.c.l.b16 %v18
  %v347 = vunpack.c.h.b16 %v18
  %v348 = vunpack.c.l.b16 %v19
  %v349 = vunpack.c.h.b16 %v19
  %v350 = vunpack.c.l.b16 %v20
  %v351 = vunpack.c.h.b16 %v20
  %v352 = vunpack.c.l.b16 %v21
  %v353 = vunpack.c.h.b16 %v21
  %v354 = vunpack.c.l.b16 %v22
  %v355 = vunpack.c.h.b16 %v22
  %v356 = vunpack.c.l.b16 %v23
  %v357 = vunpack.c.h.b16 %v23
  %v358 = vunpack.c.l.b16 %v24
  %v359 = vunpack.c.h.b16 %v24
  %v360 = vunpack.c.l.b16 %v25
  %v361 = vunpack.c.h.b16 %v25
  %v362 = vunpack.c.l.b16 %v26
  %v363 = vunpack.c.h.b16 %v26
  %v364 = vunpack.c.l.b16 %v27
  %v365 = vunpack.c.h.b16 %v27
  %v366 = vunpack.c.l.b16 %v28
  %v367 = vunpack.c.h.b16 %v28
  %v368 = vunpack.c.l.b16 %v29
  %v369 = vunpack.c.h.b16 %v29
  %v370 = vunpack.c.l.b16 %v30
  %v371 = vunpack.c.h.b16 %v30
  %v372 = vunpack.c.l.b16 %v31
  %v373 = vunpack.c.h.b16 %v31
  %v374 = vunpack.c.l.b16 %v32
  %v375 = vunpack.c.h.b16 %v32
  %v376 = vunpack.c.l.b16 %v33
  %v377 = vunpack.c.h.b16 %v33
  %v378 = vunpack.c.l.b16 %v34
  %v379 = vunpack.c.h.b16 %v34
  %v380 = vunpack.c.l.b16 %v35
  %v381 = vunpack.c.h.b16 %v35
  %v382 = vunpack.c.l.b16 %v36
  %v383 = vunpack.c.h.b16 %v36
  %v384 = vunpack.c.l.b16 %v37
  %v385 = vunpack.c.h.b16 %v37
  %v386 = vunpack.c.l.b16 %v38
  %v387 = vunpack.c.h.b16 %v38
  %v388 = vunpack.c.l.b16 %v39
  %v389 = vunpack.c.h.b16 %v39
  %v390 = vunpack.c.l.b16 %v40
  %v391 = vunpack.c.h.b16 %v40
  %v392 = vunpack.c.l.b16 %v41
  %v393 = vunpack.c.h.b16 %v41
  %v394 = vunpack.c.l.b16 %v42
  %v395 = vunpack.c.h.b16 %v42
  %v396 = vunpack.c.l.b16 %v43
  %v397 = vunpack.c.h.b16 %v43
  %v398 = vunpack.c.l.b16 %v44
  %v399 = vunpack.c.h.b16 %v44
  %v400 = vunpack.c.l.b16 %v45
  %v401 = vunpack.c.h.b16 %v45
  %v402 = vunpack.c.l.b16 %v46
  %v403 = vunpack.c.h.b16 %v46
  %v404 = vunpack.c.l.b16 %v47
  %v405 = vunpack.c.h.b16 %v47
  %v406 = vunpack.c.l.b16 %v48
  %v407 = vunpack.c.h.b16 %v48
  %v408 = vunpack.c.l.b16 %v49
  %v409 = vunpack.c.h.b16 %v49
  %v410 = vunpack.c.l.b16 %v50
  %v411 = vunpack.c.h.b16 %v50
  %v412 = vunpack.c.l.b16 %v51
  %v413 = vunpack.c.h.b16 %v51
  %v414 = vunpack.c.l.b16 %v52
  %v415 = vunpack.c.h.b16 %v52
  %v416 = vunpack.c.l.b16 %v53
  %v417 = vunpack.c.h.b16 %v53
  %v418 = vunpack.c.l.b16 %v54
  %v419 = vunpack.c.h.b16 %v54
  %v420 = vunpack.c.l.b16 %v55
  %v421 = vunpack.c.h.b16 %v55
  %v422 = vunpack.c.l.b16 %v56
  %v423 = vunpack.c.h.b16 %v56
  %v424 = vunpack.c.l.b16 %v57
  %v425 = vunpack.c.h.b16 %v57
  %v426 = vunpack.c.l.b16 %v58
  %v427 = vunpack.c.h.b16 %v58
  %v428 = vunpack.c.l.b16 %v59
  %v429 = vunpack.c.h.b16 %v59
  %v430 = vunpack.c.l.b16 %v60
  %v431 = vunpack.c.h.b16 %v60
  %v432 = vunpack.c.l.b16 %v61
  %v433 = vunpack.c.h.b16 %v61
  %v434 = vunpack.c.l.b16 %v62
  %v435 = vunpack.c.h.b16 %v62
  %v436 = vunpack.c.l.b16 %v63
  %v437 = vunpack.c.h.b16 %v63
  %v438 = vunpack.c.l.b16 %v64
  %v439 = vunpack.c.h.b16 %v64
  %v440 = vunpack.c.l.b16 %v65
  %v441 = vunpack.c.h.b16 %v65
  %v442 = vunpack.c.l.b16 %v66
  %v443 = vunpack.c.h.b16 %v66
  %v444 = vunpack.c.l.b16 %v67
  %v445 = vunpack.c.h.b16 %v67
  %v446 = vunpack.c.l.b16 %v68
  %v447 = vunpack.c.h.b16 %v68
  %v448 = vunpack.c.l.b16 %v69
  %v449 = vunpack.c.h.b16 %v69
  %v450 = vunpack.c.l.b16 %v70
  %v451 = vunpack.c.h.b16 %v70
  %v452 = vunpack.c.l.b16 %v71
  %v453 = vunpack.c.h.b16 %v71
  %v454 = vunpack.c.l.b16 %v72
  %v455 = vunpack.c.h.b16 %v72
  %v456 = vunpack.c.l.b16 %v73
  %v457 = vunpack.c.h.b16 %v73
  %v458 = vunpack.c.l.b16 %v74
  %v459 = vunpack.c.h.b16 %v74
  %v460 = vunpack.c.l.b16 %v75
  %v461 = vunpack.c.h.b16 %v75
  %v462 = vunpack.c.l.b16 %v76
  %v463 = vunpack.c.h.b16 %v76
  %v464 = vunpack.c.l.b16 %v77
  %v465 = vunpack.c.h.b16 %v77
  %v466 = vunpack.c.l.b16 %v78
  %v467 = vunpack.c.h.b16 %v78
  %v468 = vunpack.c.l.b16 %v79
  %v469 = vunpack.c.h.b16 %v79
  %v470 = vunpack.c.l.b16 %v80
  %v471 = vunpack.c.h.b16 %v80
  %v472 = vunpack.c.l.b16 %v81
  %v473 = vunpack.c.h.b16 %v81
  %v474 = vunpack.c.l.b16 %v82
  %v475 = vunpack.c.h.b16 %v82
  %v476 = vunpack.c.l.b16 %v83
  %v477 = vunpack.c.h.b16 %v83
  %v478 = vunpack.c.l.b16 %v84
  %v479 = vunpack.c.h.b16 %v84
  %v480 = vunpack.c.l.b16 %v85
  %v481 = vunpack.c.h.b16 %v85
  %v482 = vunpack.c.l.b16 %v86
  %v483 = vunpack.c.h.b16 %v86
  %v484 = vunpack.c.l.b16 %v87
  %v485 = vunpack.c.h.b16 %v87
  %v486 = vunpack.c.l.b16 %v88
  %v487 = vunpack.c.h.b16 %v88
  %v488 = vunpack.c.l.b16 %v89
  %v489 = vunpack.c.h.b16 %v89
  %v490 = vunpack.c.l.b16 %v90
  %v491 = vunpack.c.h.b16 %v90
  %v492 = vunpack.c.l.b16 %v91
  %v493 = vunpack.c.h.b16 %v91
  %v494 = vunpack.c.l.b16 %v92
  %v495 = vunpack.c.h.b16 %v92
  %v496 = vunpack.c.l.b16 %v93
  %v497 = vunpack.c.h.b16 %v93
  %v498 = vunpack.c.l.b16 %v94
  %v499 = vunpack.c.h.b16 %v94
  %v500 = vunpack.c.l.b16 %v95
  %v501 = vunpack.c.h.b16 %v95
  %v502 = vunpack.c.l.b16 %v96
  %v503 = vunpack.c.h.b16 %v96
  %v504 = vunpack.c.l.b16 %v97
  %v505 = vunpack.c.h.b16 %v97
  %v506 = vunpack.c.l.b16 %v98
  %v507 = vunpack.c.h.b16 %v98
  %v508 = vunpack.c.l.b16 %v99
  %v509 = vunpack.c.h.b16 %v99
  %v510 = vunpack.c.l.b16 %v100
  %v511 = vunpack.c.h.b16 %v100
  %v512 = vunpack.c.l.b16 %v101
  %v513 = vunpack.c.h.b16 %v101
  %v514 = vunpack.c.l.b16 %v102
  %v515 = vunpack.c.h.b16 %v102
  %v516 = vunpack.c.l.b16 %v103
  %v517 = vunpack.c.h.b16 %v103
  %v518 = vunpack.c.l.b16 %v104
  %v519 = vunpack.c.h.b16 %v104
  %v520 = vunpack.c.l.b16 %v105
  %v521 = vunpack.c.h.b16 %v105
  %v522 = vunpack.c.l.b16 %v106
  %v523 = vunpack.c.h.b16 %v106
  %v524 = vunpack.c.l.b16 %v107
  %v525 = vunpack.c.h.b16 %v107
  %v526 = vunpack.c.l.b16 %v108
  %v527 = vunpack.c.h.b16 %v108
  %v528 = vunpack.c.l.b16 %v109
  %v529 = vunpack.c.h.b16 %v109
  %v530 = vunpack.c.l.b16 %v110
  %v531 = vunpack.c.h.b16 %v110
  %v532 = vunpack.c.l.b16 %v111
  %v533 = vunpack.c.h.b16 %v111
  %v534 = vunpack.c.l.b16 %v112
  %v535 = vunpack.c.h.b16 %v112
  %v536 = vunpack.c.l.b16 %v113
  %v537 = vunpack.c.h.b16 %v113
  %v538 = vunpack.c.l.b16 %v114
  %v539 = vunpack.c.h.b16 %v114
  %v540 = vunpack.c.l.b16 %v115
  %v541 = vunpack.c.h.b16 %v115
  %v542 = vunpack.c.l.b16 %v116
  %v543 = vunpack.c.h.b16 %v116
  %v544 = vunpack.c.l.b16 %v117
  %v545 = vunpack.c.h.b16 %v117
  %v546 = vpack.c.b16 %v354, %v346
  %v547 = vpack.c.b16 %v355, %v347
  %v548 = vpack.c.b16 %v356, %v348
  %v549 = vpack.c.b16 %v357, %v349
  %v550 = vpack.c.b16 %v358, %v350
  %v551 = vpack.c.b16 %v359, %v351
  %v552 = vpack.c.b16 %v360, %v352
  %v553 = vpack.c.b16 %v361, %v353
  %v554 = vpack.c.b16 %v370, %v362
  %v555 = vpack.c.b16 %v371, %v363
  %v556 = vpack.c.b16 %v372, %v364
  %v557 = vpack.c.b16 %v373, %v365
  %v558 = vpack.c.b16 %v374, %v366
  %v559 = vpack.c.b16 %v375, %v367
  %v560 = vpack.c.b16 %v376, %v368
  %v561 = vpack.c.b16 %v377, %v369
  %v562 = vpack.c.b16 %v386, %v378
  %v563 = vpack.c.b16 %v387, %v379
  %v564 = vpack.c.b16 %v388, %v380
  %v565 = vpack.c.b16 %v389, %v381
  %v566 = vpack.c.b16 %v390, %v382
  %v567 = vpack.c.b16 %v391, %v383
  %v568 = vpack.c.b16 %v392, %v384
  %v569 = vpack.c.b16 %v393, %v385
  %v570 = vpack.c.b16 %v402, %v394
  %v571 = vpack.c.b16 %v403, %v395
  %v572 = vpack.c.b16 %v404, %v396
  %v573 = vpack.c.b16 %v405, %v397
  %v574 = vpack.c.b16 %v406, %v398
  %v575 = vpack.c.b16 %v407, %v399
  %v576 = vpack.c.b16 %v408, %v400
  %v577 = vpack.c.b16 %v409, %v401
  %v578 = vpack.c.b16 %v418, %v410
  %v579 = vpack.c.b16 %v419, %v411
  %v580 = vpack.c.b16 %v420, %v412
  %v581 = vpack.c.b16 %v421, %v413
  %v582 = vpack.c.b16 %v422, %v414
  %v583 = vpack.c.b16 %v423, %v415
  %v584 = vpack.c.b16 %v424, %v416
  %v585 = vpack.c.b16 %v425, %v417
  %v586 = vpack.c.b16 %v434, %v426
  %v587 = vpack.c.b16 %v435, %v427
  %v588 = vpack.c.b16 %v436, %v428
  %v589 = vpack.c.b16 %v437, %v429
  %v590 = vpack.c.b16 %v438, %v430
  %v591 = vpack.c.b16 %v439, %v431
  %v592 = vpack.c.b16 %v440, %v432
  %v593 = vpack.c.b16 %v441, %v433
  %v594 = vpack.c.b16 %v450, %v442
  %v595 = vpack.c.b16 %v451, %v443
  %v596 = vpack.c.b16 %v452, %v444
  %v597 = vpack.c.b16 %v453, %v445
  %v598 = vpack.c.b16 %v454, %v446
  %v599 = vpack.c.b16 %v455, %v447
  %v600 = vpack.c.b16 %v456, %v448
  %v601 = vpack.c.b16 %v457, %v449
  %v602 = vpack.c.b16 %v466, %v458
  %v603 = vpack.c.b16 %v467, %v459
  %v604 = vpack.c.b16 %v468, %v460
  %v605 = vpack.c.b16 %v469, %v461
  %v606 = vpack.c.b16 %v470, %v462
  %v607 = vpack.c.b16 %v471, %v463
  %v608 = vpack.c.b16 %v472, %v464
  %v609 = vpack.c.b16 %v473, %v465
  %v610 = vpack.c.b16 %v482, %v474
  %v611 = vpack.c.b16 %v483, %v475
  %v612 = vpack.c.b16 %v484, %v476
  %v613 = vpack.c.b16 %v485, %v477
  %v614 = vpack.c.b16 %v486, %v478
  %v615 = vpack.c.b16 %v487, %v479
  %v616 = vpack.c.b16 %v488, %v480
  %v617 = vpack.c.b16 %v489, %v481
  %v618 = vpack.c.b16 %v498, %v490
  %v619 = vpack.c.b16 %v499, %v491
  %v620 = vpack.c.b16 %v500, %v492
  %v621 = vpack.c.b16 %v501, %v493
  %v622 = vpack.c.b16 %v502, %v494
  %v623 = vpack.c.b16 %v503, %v495
  %v624 = vpack.c.b16 %v504, %v496
  %v625 = vpack.c.b16 %v505, %v497
  %v626 = vpack.c.b16 %v514, %v506
  %v627 = vpack.c.b16 %v515, %v507
  %v628 = vpack.c.b16 %v516, %v508
  %v629 = vpack.c.b16 %v517, %v509
  %v630 = vpack.c.b16 %v518, %v510
  %v631 = vpack.c.b16 %v519, %v511
  %v632 = vpack.c.b16 %v520, %v512
  %v633 = vpack.c.b16 %v521, %v513
  %v634 = vpack.c.b16 %v530, %v522
  %v635 = vpack.c.b16 %v531, %v523
  %v636 = vpack.c.b16 %v532, %v524
  %v637 = vpack.c.b16 %v533, %v525
  %v638 = vpack.c.b16 %v534, %v526
  %v639 = vpack.c.b16 %v535, %v527
  %v640 = vpack.c.b16 %v536, %v528
  %v641 = vpack.c.b16 %v537, %v529
  %v642 = vpack.c.b16 %v538, %v538
  %v643 = vpack.c.b16 %v539, %v539
  %v644 = vpack.c.b16 %v540, %v540
  %v645 = vpack.c.b16 %v541, %v541
  %v646 = vpack.c.b16 %v542, %v542
  %v647 = vpack.c.b16 %v543, %v543
  %v648 = vpack.c.b16 %v544, %v544
  %v649 = vpack.c.b16 %v545, %v545
  %v882 = vunpack.c.l.b16 %v118
  %v883 = vunpack.c.l.b16 %v119
  %v884 = vunpack.c.l.b16 %v120
  %v885 = vunpack.c.l.b16 %v121
  %v886 = vunpack.c.l.b16 %v122
  %v887 = vunpack.c.l.b16 %v123
  %v888 = vunpack.c.l.b16 %v124
  %v889 = vunpack.c.l.b16 %v125
  %v890 = vunpack.c.l.b16 %v126
  %v891 = vunpack.c.l.b16 %v127
  %v892 = vunpack.c.l.b16 %v128
  %v893 = vunpack.c.l.b16 %v129
  %v894 = vunpack.c.l.b16 %v130
  %v895 = vunpack.c.l.b16 %v131
  %v896 = vunpack.c.l.b16 %v132
  %v897 = vunpack.c.l.b16 %v133
  %v898 = vunpack.c.l.b16 %v134
  %v899 = vunpack.c.l.b16 %v135
  %v900 = vunpack.c.l.b16 %v136
  %v901 = vunpack.c.l.b16 %v137
  %v902 = vunpack.c.l.b16 %v138
  %v903 = vunpack.c.l.b16 %v139
  %v904 = vunpack.c.l.b16 %v140
  %v905 = vunpack.c.l.b16 %v141
  %v906 = vunpack.c.l.b16 %v142
  %v907 = vunpack.c.l.b16 %v143
  %v908 = vunpack.c.l.b16 %v144
  %v909 = vunpack.c.l.b16 %v145
  %v910 = vunpack.c.l.b16 %v146
  %v911 = vunpack.c.l.b16 %v147
  %v912 = vunpack.c.l.b16 %v148
  %v913 = vunpack.c.l.b16 %v149
  %v914 = vunpack.c.l.b16 %v150
  %v915 = vunpack.c.l.b16 %v151
  %v916 = vunpack.c.l.b16 %v152
  %v917 = vunpack.c.l.b16 %v153
  %v918 = vunpack.c.l.b16 %v154
  %v919 = vunpack.c.l.b16 %v155
  %v920 = vunpack.c.l.b16 %v156
  %v921 = vunpack.c.l.b16 %v157
  %v922 = vunpack.c.l.b16 %v158
  %v923 = vunpack.c.l.b16 %v159
  %v924 = vunpack.c.l.b16 %v160
  %v925 = vunpack.c.l.b16 %v161
  %v926 = vunpack.c.l.b16 %v162
  %v927 = vunpack.c.l.b16 %v163
  %v928 = vunpack.c.l.b16 %v164
  %v929 = vunpack.c.l.b16 %v165
  %v930 = vunpack.c.l.b16 %v166
  %v931 = vunpack.c.l.b16 %v167
  %v932 = vunpack.c.l.b16 %v168
  %v933 = vunpack.c.l.b16 %v169
  %v934 = vunpack.c.l.b16 %v170
  %v935 = vunpack.c.l.b16 %v171
  %v936 = vunpack.c.l.b16 %v172
  %v937 = vunpack.c.l.b16 %v173
  %v938 = vunpack.c.l.b16 %v174
  %v939 = vunpack.c.l.b16 %v175
  %v940 = vunpack.c.l.b16 %v176
  %v941 = vunpack.c.l.b16 %v177
  %v942 = vunpack.c.l.b16 %v178
  %v943 = vunpack.c.l.b16 %v179
  %v944 = vunpack.c.l.b16 %v180
  %v945 = vunpack.c.l.b16 %v181
  %v946 = vunpack.c.l.b16 %v182
  %v947 = vunpack.c.l.b16 %v183
  %v948 = vunpack.c.l.b16 %v184
  %v949 = vunpack.c.l.b16 %v185
  %v950 = vunpack.c.l.b16 %v186
  %v951 = vunpack.c.l.b16 %v187
  %v952 = vunpack.c.l.b16 %v188
  %v953 = vunpack.c.l.b16 %v189
  %v954 = vunpack.c.l.b16 %v190
  %v955 = vunpack.c.l.b16 %v191
  %v956 = vunpack.c.l.b16 %v192
  %v957 = vunpack.c.l.b16 %v193
  %v958 = vunpack.c.l.b16 %v194
  %v959 = vunpack.c.l.b16 %v195
  %v960 = vunpack.c.l.b16 %v196
  %v961 = vunpack.c.l.b16 %v197
  %v962 = vunpack.c.l.b16 %v198
  %v963 = vunpack.c.l.b16 %v199
  %v964 = vunpack.c.l.b16 %v200
  %v965 = vunpack.c.l.b16 %v201
  %v966 = vunpack.c.l.b16 %v202
  %v967 = vunpack.c.l.b16 %v203
  %v968 = vunpack.c.l.b16 %v204
  %v969 = vunpack.c.l.b16 %v205
  %v970 = vunpack.c.l.b16 %v206
  %v971 = vunpack.c.l.b16 %v207
  %v972 = vunpack.c.l.b16 %v208
  %v973 = vunpack.c.l.b16 %v209
  %v974 = vunpack.c.l.b16 %v210
  %v975 = vunpack.c.l.b16 %v211
  %v976 = vunpack.c.l.b16 %v212
  %v977 = vunpack.c.l.b16 %v213
  %v978 = vunpack.c.l.b16 %v214
  %v979 = vunpack.c.l.b16 %v215
  %v980 = vunpack.c.l.b16 %v216
  %v981 = vunpack.c.l.b16 %v217
  %v982 = vunpack.c.l.b16 %v218
  %v983 = vunpack.c.l.b16 %v219
  %v984 = vunpack.c.l.b16 %v220
  %v985 = vunpack.c.l.b16 %v221
  %v986 = vunpack.c.l.b16 %v222
  %v987 = vunpack.c.l.b16 %v223
  %v988 = vunpack.c.l.b16 %v224
  %v989 = vunpack.c.l.b16 %v225
  %v990 = vunpack.c.l.b16 %v226
  %v991 = vunpack.c.l.b16 %v227
  %v992 = vunpack.c.l.b16 %v228
  %v993 = vunpack.c.l.b16 %v229
  %v994 = vunpack.c.l.b16 %v230
  %v995 = vunpack.c.l.b16 %v231
  %v996 = vunpack.c.l.b16 %v232
  %v997 = vunpack.c.l.b16 %v233
  %v998 = vunpack.c.l.b16 %v234
  %v999 = vunpack.c.l.b16 %v235
  %v1000 = vunpack.c.l.b16 %v236
  %v1001 = vunpack.c.l.b16 %v237
  %v1002 = vunpack.c.l.b16 %v238
  %v1003 = vunpack.c.l.b16 %v239
  %v1004 = vunpack.c.l.b16 %v240
  %v1005 = vunpack.c.l.b16 %v241
  %v1006 = vunpack.c.l.b16 %v242
  %v1007 = vunpack.c.l.b16 %v243
  %v1008 = vunpack.c.l.b16 %v244
  %v1009 = vunpack.c.l.b16 %v245
  %v1010 = vpack.c.b16 %v883, %v882
  %v1011 = vpack.c.b16 %v885, %v884
  %v1012 = vpack.c.b16 %v887, %v886
  %v1013 = vpack.c.b16 %v889, %v888
  %v1014 = vpack.c.b16 %v891, %v890
  %v1015 = vpack.c.b16 %v893, %v892
  %v1016 = vpack.c.b16 %v895, %v894
  %v1017 = vpack.c.b16 %v897, %v896
  %v1018 = vpack.c.b16 %v899, %v898
  %v1019 = vpack.c.b16 %v901, %v900
  %v1020 = vpack.c.b16 %v903, %v902
  %v1021 = vpack.c.b16 %v905, %v904
  %v1022 = vpack.c.b16 %v907, %v906
  %v1023 = vpack.c.b16 %v909, %v908
  %v1024 = vpack.c.b16 %v911, %v910
  %v1025 = vpack.c.b16 %v913, %v912
  %v1026 = vpack.c.b16 %v915, %v914
  %v1027 = vpack.c.b16 %v917, %v916
  %v1028 = vpack.c.b16 %v919, %v918
  %v1029 = vpack.c.b16 %v921, %v920
  %v1030 = vpack.c.b16 %v923, %v922
  %v1031 = vpack.c.b16 %v925, %v924
  %v1032 = vpack.c.b16 %v927, %v926
  %v1033 = vpack.c.b16 %v929, %v928
  %v1034 = vpack.c.b16 %v931, %v930
  %v1035 = vpack.c.b16 %v933, %v932
  %v1036 = vpack.c.b16 %v935, %v934
  %v1037 = vpack.c.b16 %v937, %v936
  %v1038 = vpack.c.b16 %v939, %v938
  %v1039 = vpack.c.b16 %v941, %v940
  %v1040 = vpack.c.b16 %v943, %v942
  %v1041 = vpack.c.b16 %v945, %v944
  %v1042 = vpack.c.b16 %v947, %v946
  %v1043 = vpack.c.b16 %v949, %v948
  %v1044 = vpack.c.b16 %v951, %v950
  %v1045 = vpack.c.b16 %v953, %v952
  %v1046 = vpack.c.b16 %v955, %v954
  %v1047 = vpack.c.b16 %v957, %v956
  %v1048 = vpack.c.b16 %v959, %v958
  %v1049 = vpack.c.b16 %v961, %v960
  %v1050 = vpack.c.b16 %v963, %v962
  %v1051 = vpack.c.b16 %v965, %v964
  %v1052 = vpack.c.b16 %v967, %v966
  %v1053 = vpack.c.b16 %v969, %v968
  %v1054 = vpack.c.b16 %v971, %v970
  %v1055 = vpack.c.b16 %v973, %v972
  %v1056 = vpack.c.b16 %v975, %v974
  %v1057 = vpack.c.b16 %v977, %v976
  %v1058 = vpack.c.b16 %v979, %v978
  %v1059 = vpack.c.b16 %v981, %v980
  %v1060 = vpack.c.b16 %v983, %v982
  %v1061 = vpack.c.b16 %v985, %v984
  %v1062 = vpack.c.b16 %v987, %v986
  %v1063 = vpack.c.b16 %v989, %v988
  %v1064 = vpack.c.b16 %v991, %v990
  %v1065 = vpack.c.b16 %v993, %v992
  %v1066 = vpack.c.b16 %v995, %v994
  %v1067 = vpack.c.b16 %v997, %v996
  %v1068 = vpack.c.b16 %v999, %v998
  %v1069 = vpack.c.b16 %v1001, %v1000
  %v1070 = vpack.c.b16 %v1003, %v1002
  %v1071 = vpack.c.b16 %v1005, %v1004
  %v1072 = vpack.c.b16 %v1007, %v1006
  %v1073 = vpack.c.b16 %v1009, %v1008
  %1138 = vmatprep.subr.bf16.mxu0 0
  %1139 = vmatpush1.bf16.msra.mxu0 %v1010
  %1140 = vmatprep.subr.bf16.mxu0 0
  %1141 = vmatpush1.bf16.msra.mxu0 %v1011
  %1142 = vmatprep.subr.bf16.mxu0 0
  %1143 = vmatpush1.bf16.msra.mxu0 %v1012
  %1144 = vmatprep.subr.bf16.mxu0 0
  %1145 = vmatpush1.bf16.msra.mxu0 %v1013
  %1146 = vmatprep.subr.bf16.mxu0 0
  %1147 = vmatpush1.bf16.msra.mxu0 %v1014
  %1148 = vmatprep.subr.bf16.mxu0 0
  %1149 = vmatpush1.bf16.msra.mxu0 %v1015
  %1150 = vmatprep.subr.bf16.mxu0 0
  %1151 = vmatpush1.bf16.msra.mxu0 %v1016
  %1152 = vmatprep.subr.bf16.mxu0 0
  %1153 = vmatpush1.bf16.msra.mxu0 %v1017
  %1154 = vmatprep.subr.bf16.mxu0 0
  %1155 = vmatpush1.bf16.msra.mxu0 %v1018
  %1156 = vmatprep.subr.bf16.mxu0 0
  %1157 = vmatpush1.bf16.msra.mxu0 %v1019
  %1158 = vmatprep.subr.bf16.mxu0 0
  %1159 = vmatpush1.bf16.msra.mxu0 %v1020
  %1160 = vmatprep.subr.bf16.mxu0 0
  %1161 = vmatpush1.bf16.msra.mxu0 %v1021
  %1162 = vmatprep.subr.bf16.mxu0 0
  %1163 = vmatpush1.bf16.msra.mxu0 %v1022
  %1164 = vmatprep.subr.bf16.mxu0 0
  %1165 = vmatpush1.bf16.msra.mxu0 %v1023
  %1166 = vmatprep.subr.bf16.mxu0 0
  %1167 = vmatpush1.bf16.msra.mxu0 %v1024
  %1168 = vmatprep.subr.bf16.mxu0 0
  %1169 = vmatpush1.bf16.msra.mxu0 %v1025
  %1170 = vmatprep.mubr.bf16.mxu0 %v547
  %1171 = vmatmul.mubr.bf16.gmra.mrb[0].mxu0 %v546
  %v1172 = vpop.f32.mrb[0].mxu0
  %v1173 = vadd.f32 0.0, %v1172
  %v1174 = vpop.f32.mrb[0].mxu0
  %v1175 = vpop.f32.mrb[0].mxu0
  %v1176 = vadd.f32 0.0, %v1175
  %v1177 = vpop.f32.mrb[0].mxu0
  %1178 = vmatprep.mubr.bf16.mxu0 %v555
  %1179 = vmatmul.mubr.bf16.gmra.mrb[0].mxu0 %v554
  %v1180 = vpop.f32.mrb[0].mxu0
  %v1181 = vadd.f32 0.0, %v1180
  %v1182 = vpop.f32.mrb[0].mxu0
  %v1183 = vpop.f32.mrb[0].mxu0
  %v1184 = vadd.f32 0.0, %v1183
  %v1185 = vpop.f32.mrb[0].mxu0
  %1186 = vmatprep.mubr.bf16.mxu0 %v563
  %1187 = vmatmul.mubr.bf16.gmra.mrb[0].mxu0 %v562
  %v1188 = vpop.f32.mrb[0].mxu0
  %v1189 = vadd.f32 0.0, %v1188
  %v1190 = vpop.f32.mrb[0].mxu0
  %v1191 = vpop.f32.mrb[0].mxu0
  %v1192 = vadd.f32 0.0, %v1191
  %v1193 = vpop.f32.mrb[0].mxu0
  %1194 = vmatprep.mubr.bf16.mxu0 %v571
  %1195 = vmatmul.mubr.bf16.gmra.mrb[0].mxu0 %v570
  %v1196 = vpop.f32.mrb[0].mxu0
  %v1197 = vadd.f32 0.0, %v1196
  %v1198 = vpop.f32.mrb[0].mxu0
  %v1199 = vpop.f32.mrb[0].mxu0
  %v1200 = vadd.f32 0.0, %v1199
  %v1201 = vpop.f32.mrb[0].mxu0
  %1202 = vmatprep.mubr.bf16.mxu0 %v579
  %1203 = vmatmul.mubr.bf16.gmra.mrb[0].mxu0 %v578
  %v1204 = vpop.f32.mrb[0].mxu0
  %v1205 = vadd.f32 0.0, %v1204
  %v1206 = vpop.f32.mrb[0].mxu0
  %v1207 = vpop.f32.mrb[0].mxu0
  %v1208 = vadd.f32 0.0, %v1207
  %v1209 = vpop.f32.mrb[0].mxu0
  %1210 = vmatprep.mubr.bf16.mxu0 %v587
  %1211 = vmatmul.mubr.bf16.gmra.mrb[0].mxu0 %v586
  %v1212 = vpop.f32.mrb[0].mxu0
  %v1213 = vadd.f32 0.0, %v1212
  %v1214 = vpop.f32.mrb[0].mxu0
  %v1215 = vpop.f32.mrb[0].mxu0
  %v1216 = vadd.f32 0.0, %v1215
  %v1217 = vpop.f32.mrb[0].mxu0
  %1218 = vmatprep.mubr.bf16.mxu0 %v595
  %1219 = vmatmul.mubr.bf16.gmra.mrb[0].mxu0 %v594
  %v1220 = vpop.f32.mrb[0].mxu0
  %v1221 = vadd.f32 0.0, %v1220
  %v1222 = vpop.f32.mrb[0].mxu0
  %v1223 = vpop.f32.mrb[0].mxu0
  %v1224 = vadd.f32 0.0, %v1223
  %v1225 = vpop.f32.mrb[0].mxu0
  %1226 = vmatprep.mubr.bf16.mxu0 %v603
  %1227 = vmatmul.mubr.bf16.gmra.mrb[0].mxu0 %v602
  %v1228 = vpop.f32.mrb[0].mxu0
  %v1229 = vadd.f32 0.0, %v1228
  %v1230 = vpop.f32.mrb[0].mxu0
  %v1231 = vpop.f32.mrb[0].mxu0
  %v1232 = vadd.f32 0.0, %v1231
  %v1233 = vpop.f32.mrb[0].mxu0
  %1234 = vmatprep.mubr.bf16.mxu0 %v611
  %1235 = vmatmul.mubr.bf16.gmra.mrb[0].mxu0 %v610
  %v1236 = vpop.f32.mrb[0].mxu0
  %v1237 = vadd.f32 0.0, %v1236
  %v1238 = vpop.f32.mrb[0].mxu0
  %v1239 = vpop.f32.mrb[0].mxu0
  %v1240 = vadd.f32 0.0, %v1239
  %v1241 = vpop.f32.mrb[0].mxu0
  %1242 = vmatprep.mubr.bf16.mxu0 %v619
  %1243 = vmatmul.mubr.bf16.gmra.mrb[0].mxu0 %v618
  %v1244 = vpop.f32.mrb[0].mxu0
  %v1245 = vadd.f32 0.0, %v1244
  %v1246 = vpop.f32.mrb[0].mxu0
  %v1247 = vpop.f32.mrb[0].mxu0
  %v1248 = vadd.f32 0.0, %v1247
  %v1249 = vpop.f32.mrb[0].mxu0
  %1250 = vmatprep.mubr.bf16.mxu0 %v627
  %1251 = vmatmul.mubr.bf16.gmra.mrb[0].mxu0 %v626
  %v1252 = vpop.f32.mrb[0].mxu0
  %v1253 = vadd.f32 0.0, %v1252
  %v1254 = vpop.f32.mrb[0].mxu0
  %v1255 = vpop.f32.mrb[0].mxu0
  %v1256 = vadd.f32 0.0, %v1255
  %v1257 = vpop.f32.mrb[0].mxu0
  %1258 = vmatprep.mubr.bf16.mxu0 %v635
  %1259 = vmatmul.mubr.bf16.gmra.mrb[0].mxu0 %v634
  %v1260 = vpop.f32.mrb[0].mxu0
  %v1261 = vadd.f32 0.0, %v1260
  %v1262 = vpop.f32.mrb[0].mxu0
  %v1263 = vpop.f32.mrb[0].mxu0
  %v1264 = vadd.f32 0.0, %v1263
  %v1265 = vpop.f32.mrb[0].mxu0
  %1266 = vmatprep.mubr.bf16.mxu0 %v643
  %1267 = vmatmul.mubr.bf16.gmra.mrb[0].mxu0 %v642
  %v1268 = vpop.f32.mrb[0].mxu0
  %v1269 = vadd.f32 0.0, %v1268
  %v1270 = vpop.f32.mrb[0].mxu0
  %v1271 = vpop.f32.mrb[0].mxu0
  %v1272 = vpop.f32.mrb[0].mxu0
  %1273 = vdwg.mxu0
  %1274 = vmatprep.subr.bf16.mxu0 0
  %1275 = vmatpush1.bf16.msra.mxu0 %v1026
  %1276 = vmatprep.subr.bf16.mxu0 0
  %1277 = vmatpush1.bf16.msra.mxu0 %v1027
  %1278 = vmatprep.subr.bf16.mxu0 0
  %1279 = vmatpush1.bf16.msra.mxu0 %v1028
  %1280 = vmatprep.subr.bf16.mxu0 0
  %1281 = vmatpush1.bf16.msra.mxu0 %v1029
  %1282 = vmatprep.subr.bf16.mxu0 0
  %1283 = vmatpush1.bf16.msra.mxu0 %v1030
  %1284 = vmatprep.subr.bf16.mxu0 0
  %1285 = vmatpush1.bf16.msra.mxu0 %v1031
  %1286 = vmatprep.subr.bf16.mxu0 0
  %1287 = vmatpush1.bf16.msra.mxu0 %v1032
  %1288 = vmatprep.subr.bf16.mxu0 0
  %1289 = vmatpush1.bf16.msra.mxu0 %v1033
  %1290 = vmatprep.subr.bf16.mxu0 0
  %1291 = vmatpush1.bf16.msra.mxu0 %v1034
  %1292 = vmatprep.subr.bf16.mxu0 0
  %1293 = vmatpush1.bf16.msra.mxu0 %v1035
  %1294 = vmatprep.subr.bf16.mxu0 0
  %1295 = vmatpush1.bf16.msra.mxu0 %v1036
  %1296 = vmatprep.subr.bf16.mxu0 0
  %1297 = vmatpush1.bf16.msra.mxu0 %v1037
  %1298 = vmatprep.subr.bf16.mxu0 0
  %1299 = vmatpush1.bf16.msra.mxu0 %v1038
  %1300 = vmatprep.subr.bf16.mxu0 0
  %1301 = vmatpush1.bf16.msra.mxu0 %v1039
  %1302 = vmatprep.subr.bf16.mxu0 0
  %1303 = vmatpush1.bf16.msra.mxu0 %v1040
  %1304 = vmatprep.subr.bf16.mxu0 0
  %1305 = vmatpush1.bf16.msra.mxu0 %v1041
  %1306 = vmatprep.mubr.bf16.mxu0 %v549
  %1307 = vmatmul.mubr.bf16.gmra.mrb[0].mxu0 %v548
  %v1308 = vpop.f32.mrb[0].mxu0
  %v1309 = vadd.f32 %v1173, %v1308
  %v1310 = vpop.f32.mrb[0].mxu0
  %v1311 = vpop.f32.mrb[0].mxu0
  %v1312 = vadd.f32 %v1176, %v1311
  %v1313 = vpop.f32.mrb[0].mxu0
  %1314 = vmatprep.mubr.bf16.mxu0 %v557
  %1315 = vmatmul.mubr.bf16.gmra.mrb[0].mxu0 %v556
  %v1316 = vpop.f32.mrb[0].mxu0
  %v1317 = vadd.f32 %v1181, %v1316
  %v1318 = vpop.f32.mrb[0].mxu0
  %v1319 = vpop.f32.mrb[0].mxu0
  %v1320 = vadd.f32 %v1184, %v1319
  %v1321 = vpop.f32.mrb[0].mxu0
  %1322 = vmatprep.mubr.bf16.mxu0 %v565
  %1323 = vmatmul.mubr.bf16.gmra.mrb[0].mxu0 %v564
  %v1324 = vpop.f32.mrb[0].mxu0
  %v1325 = vadd.f32 %v1189, %v1324
  %v1326 = vpop.f32.mrb[0].mxu0
  %v1327 = vpop.f32.mrb[0].mxu0
  %v1328 = vadd.f32 %v1192, %v1327
  %v1329 = vpop.f32.mrb[0].mxu0
  %1330 = vmatprep.mubr.bf16.mxu0 %v573
  %1331 = vmatmul.mubr.bf16.gmra.mrb[0].mxu0 %v572
  %v1332 = vpop.f32.mrb[0].mxu0
  %v1333 = vadd.f32 %v1197, %v1332
  %v1334 = vpop.f32.mrb[0].mxu0
  %v1335 = vpop.f32.mrb[0].mxu0
  %v1336 = vadd.f32 %v1200, %v1335
  %v1337 = vpop.f32.mrb[0].mxu0
  %1338 = vmatprep.mubr.bf16.mxu0 %v581
  %1339 = vmatmul.mubr.bf16.gmra.mrb[0].mxu0 %v580
  %v1340 = vpop.f32.mrb[0].mxu0
  %v1341 = vadd.f32 %v1205, %v1340
  %v1342 = vpop.f32.mrb[0].mxu0
  %v1343 = vpop.f32.mrb[0].mxu0
  %v1344 = vadd.f32 %v1208, %v1343
  %v1345 = vpop.f32.mrb[0].mxu0
  %1346 = vmatprep.mubr.bf16.mxu0 %v589
  %1347 = vmatmul.mubr.bf16.gmra.mrb[0].mxu0 %v588
  %v1348 = vpop.f32.mrb[0].mxu0
  %v1349 = vadd.f32 %v1213, %v1348
  %v1350 = vpop.f32.mrb[0].mxu0
  %v1351 = vpop.f32.mrb[0].mxu0
  %v1352 = vadd.f32 %v1216, %v1351
  %v1353 = vpop.f32.mrb[0].mxu0
  %1354 = vmatprep.mubr.bf16.mxu0 %v597
  %1355 = vmatmul.mubr.bf16.gmra.mrb[0].mxu0 %v596
  %v1356 = vpop.f32.mrb[0].mxu0
  %v1357 = vadd.f32 %v1221, %v1356
  %v1358 = vpop.f32.mrb[0].mxu0
  %v1359 = vpop.f32.mrb[0].mxu0
  %v1360 = vadd.f32 %v1224, %v1359
  %v1361 = vpop.f32.mrb[0].mxu0
  %1362 = vmatprep.mubr.bf16.mxu0 %v605
  %1363 = vmatmul.mubr.bf16.gmra.mrb[0].mxu0 %v604
  %v1364 = vpop.f32.mrb[0].mxu0
  %v1365 = vadd.f32 %v1229, %v1364
  %v1366 = vpop.f32.mrb[0].mxu0
  %v1367 = vpop.f32.mrb[0].mxu0
  %v1368 = vadd.f32 %v1232, %v1367
  %v1369 = vpop.f32.mrb[0].mxu0
  %1370 = vmatprep.mubr.bf16.mxu0 %v613
  %1371 = vmatmul.mubr.bf16.gmra.mrb[0].mxu0 %v612
  %v1372 = vpop.f32.mrb[0].mxu0
  %v1373 = vadd.f32 %v1237, %v1372
  %v1374 = vpop.f32.mrb[0].mxu0
  %v1375 = vpop.f32.mrb[0].mxu0
  %v1376 = vadd.f32 %v1240, %v1375
  %v1377 = vpop.f32.mrb[0].mxu0
  %1378 = vmatprep.mubr.bf16.mxu0 %v621
  %1379 = vmatmul.mubr.bf16.gmra.mrb[0].mxu0 %v620
  %v1380 = vpop.f32.mrb[0].mxu0
  %v1381 = vadd.f32 %v1245, %v1380
  %v1382 = vpop.f32.mrb[0].mxu0
  %v1383 = vpop.f32.mrb[0].mxu0
  %v1384 = vadd.f32 %v1248, %v1383
  %v1385 = vpop.f32.mrb[0].mxu0
  %1386 = vmatprep.mubr.bf16.mxu0 %v629
  %1387 = vmatmul.mubr.bf16.gmra.mrb[0].mxu0 %v628
  %v1388 = vpop.f32.mrb[0].mxu0
  %v1389 = vadd.f32 %v1253, %v1388
  %v1390 = vpop.f32.mrb[0].mxu0
  %v1391 = vpop.f32.mrb[0].mxu0
  %v1392 = vadd.f32 %v1256, %v1391
  %v1393 = vpop.f32.mrb[0].mxu0
  %1394 = vmatprep.mubr.bf16.mxu0 %v637
  %1395 = vmatmul.mubr.bf16.gmra.mrb[0].mxu0 %v636
  %v1396 = vpop.f32.mrb[0].mxu0
  %v1397 = vadd.f32 %v1261, %v1396
  %v1398 = vpop.f32.mrb[0].mxu0
  %v1399 = vpop.f32.mrb[0].mxu0
  %v1400 = vadd.f32 %v1264, %v1399
  %v1401 = vpop.f32.mrb[0].mxu0
  %1402 = vmatprep.mubr.bf16.mxu0 %v645
  %1403 = vmatmul.mubr.bf16.gmra.mrb[0].mxu0 %v644
  %v1404 = vpop.f32.mrb[0].mxu0
  %v1405 = vadd.f32 %v1269, %v1404
  %v1406 = vpop.f32.mrb[0].mxu0
  %v1407 = vpop.f32.mrb[0].mxu0
  %v1408 = vpop.f32.mrb[0].mxu0
  %1409 = vdwg.mxu0
  %1410 = vmatprep.subr.bf16.mxu0 0
  %1411 = vmatpush1.bf16.msra.mxu0 %v1042
  %1412 = vmatprep.subr.bf16.mxu0 0
  %1413 = vmatpush1.bf16.msra.mxu0 %v1043
  %1414 = vmatprep.subr.bf16.mxu0 0
  %1415 = vmatpush1.bf16.msra.mxu0 %v1044
  %1416 = vmatprep.subr.bf16.mxu0 0
  %1417 = vmatpush1.bf16.msra.mxu0 %v1045
  %1418 = vmatprep.subr.bf16.mxu0 0
  %1419 = vmatpush1.bf16.msra.mxu0 %v1046
  %1420 = vmatprep.subr.bf16.mxu0 0
  %1421 = vmatpush1.bf16.msra.mxu0 %v1047
  %1422 = vmatprep.subr.bf16.mxu0 0
  %1423 = vmatpush1.bf16.msra.mxu0 %v1048
  %1424 = vmatprep.subr.bf16.mxu0 0
  %1425 = vmatpush1.bf16.msra.mxu0 %v1049
  %1426 = vmatprep.subr.bf16.mxu0 0
  %1427 = vmatpush1.bf16.msra.mxu0 %v1050
  %1428 = vmatprep.subr.bf16.mxu0 0
  %1429 = vmatpush1.bf16.msra.mxu0 %v1051
  %1430 = vmatprep.subr.bf16.mxu0 0
  %1431 = vmatpush1.bf16.msra.mxu0 %v1052
  %1432 = vmatprep.subr.bf16.mxu0 0
  %1433 = vmatpush1.bf16.msra.mxu0 %v1053
  %1434 = vmatprep.subr.bf16.mxu0 0
  %1435 = vmatpush1.bf16.msra.mxu0 %v1054
  %1436 = vmatprep.subr.bf16.mxu0 0
  %1437 = vmatpush1.bf16.msra.mxu0 %v1055
  %1438 = vmatprep.subr.bf16.mxu0 0
  %1439 = vmatpush1.bf16.msra.mxu0 %v1056
  %1440 = vmatprep.subr.bf16.mxu0 0
  %1441 = vmatpush1.bf16.msra.mxu0 %v1057
  %1442 = vmatprep.mubr.bf16.mxu0 %v551
  %1443 = vmatmul.mubr.bf16.gmra.mrb[0].mxu0 %v550
  %v1444 = vpop.f32.mrb[0].mxu0
  %v1445 = vadd.f32 %v1309, %v1444
  %v1446 = vpop.f32.mrb[0].mxu0
  %v1447 = vpop.f32.mrb[0].mxu0
  %v1448 = vadd.f32 %v1312, %v1447
  %v1449 = vpop.f32.mrb[0].mxu0
  %1450 = vmatprep.mubr.bf16.mxu0 %v559
  %1451 = vmatmul.mubr.bf16.gmra.mrb[0].mxu0 %v558
  %v1452 = vpop.f32.mrb[0].mxu0
  %v1453 = vadd.f32 %v1317, %v1452
  %v1454 = vpop.f32.mrb[0].mxu0
  %v1455 = vpop.f32.mrb[0].mxu0
  %v1456 = vadd.f32 %v1320, %v1455
  %v1457 = vpop.f32.mrb[0].mxu0
  %1458 = vmatprep.mubr.bf16.mxu0 %v567
  %1459 = vmatmul.mubr.bf16.gmra.mrb[0].mxu0 %v566
  %v1460 = vpop.f32.mrb[0].mxu0
  %v1461 = vadd.f32 %v1325, %v1460
  %v1462 = vpop.f32.mrb[0].mxu0
  %v1463 = vpop.f32.mrb[0].mxu0
  %v1464 = vadd.f32 %v1328, %v1463
  %v1465 = vpop.f32.mrb[0].mxu0
  %1466 = vmatprep.mubr.bf16.mxu0 %v575
  %1467 = vmatmul.mubr.bf16.gmra.mrb[0].mxu0 %v574
  %v1468 = vpop.f32.mrb[0].mxu0
  %v1469 = vadd.f32 %v1333, %v1468
  %v1470 = vpop.f32.mrb[0].mxu0
  %v1471 = vpop.f32.mrb[0].mxu0
  %v1472 = vadd.f32 %v1336, %v1471
  %v1473 = vpop.f32.mrb[0].mxu0
  %1474 = vmatprep.mubr.bf16.mxu0 %v583
  %1475 = vmatmul.mubr.bf16.gmra.mrb[0].mxu0 %v582
  %v1476 = vpop.f32.mrb[0].mxu0
  %v1477 = vadd.f32 %v1341, %v1476
  %v1478 = vpop.f32.mrb[0].mxu0
  %v1479 = vpop.f32.mrb[0].mxu0
  %v1480 = vadd.f32 %v1344, %v1479
  %v1481 = vpop.f32.mrb[0].mxu0
  %1482 = vmatprep.mubr.bf16.mxu0 %v591
  %1483 = vmatmul.mubr.bf16.gmra.mrb[0].mxu0 %v590
  %v1484 = vpop.f32.mrb[0].mxu0
  %v1485 = vadd.f32 %v1349, %v1484
  %v1486 = vpop.f32.mrb[0].mxu0
  %v1487 = vpop.f32.mrb[0].mxu0
  %v1488 = vadd.f32 %v1352, %v1487
  %v1489 = vpop.f32.mrb[0].mxu0
  %1490 = vmatprep.mubr.bf16.mxu0 %v599
  %1491 = vmatmul.mubr.bf16.gmra.mrb[0].mxu0 %v598
  %v1492 = vpop.f32.mrb[0].mxu0
  %v1493 = vadd.f32 %v1357, %v1492
  %v1494 = vpop.f32.mrb[0].mxu0
  %v1495 = vpop.f32.mrb[0].mxu0
  %v1496 = vadd.f32 %v1360, %v1495
  %v1497 = vpop.f32.mrb[0].mxu0
  %1498 = vmatprep.mubr.bf16.mxu0 %v607
  %1499 = vmatmul.mubr.bf16.gmra.mrb[0].mxu0 %v606
  %v1500 = vpop.f32.mrb[0].mxu0
  %v1501 = vadd.f32 %v1365, %v1500
  %v1502 = vpop.f32.mrb[0].mxu0
  %v1503 = vpop.f32.mrb[0].mxu0
  %v1504 = vadd.f32 %v1368, %v1503
  %v1505 = vpop.f32.mrb[0].mxu0
  %1506 = vmatprep.mubr.bf16.mxu0 %v615
  %1507 = vmatmul.mubr.bf16.gmra.mrb[0].mxu0 %v614
  %v1508 = vpop.f32.mrb[0].mxu0
  %v1509 = vadd.f32 %v1373, %v1508
  %v1510 = vpop.f32.mrb[0].mxu0
  %v1511 = vpop.f32.mrb[0].mxu0
  %v1512 = vadd.f32 %v1376, %v1511
  %v1513 = vpop.f32.mrb[0].mxu0
  %1514 = vmatprep.mubr.bf16.mxu0 %v623
  %1515 = vmatmul.mubr.bf16.gmra.mrb[0].mxu0 %v622
  %v1516 = vpop.f32.mrb[0].mxu0
  %v1517 = vadd.f32 %v1381, %v1516
  %v1518 = vpop.f32.mrb[0].mxu0
  %v1519 = vpop.f32.mrb[0].mxu0
  %v1520 = vadd.f32 %v1384, %v1519
  %v1521 = vpop.f32.mrb[0].mxu0
  %1522 = vmatprep.mubr.bf16.mxu0 %v631
  %1523 = vmatmul.mubr.bf16.gmra.mrb[0].mxu0 %v630
  %v1524 = vpop.f32.mrb[0].mxu0
  %v1525 = vadd.f32 %v1389, %v1524
  %v1526 = vpop.f32.mrb[0].mxu0
  %v1527 = vpop.f32.mrb[0].mxu0
  %v1528 = vadd.f32 %v1392, %v1527
  %v1529 = vpop.f32.mrb[0].mxu0
  %1530 = vmatprep.mubr.bf16.mxu0 %v639
  %1531 = vmatmul.mubr.bf16.gmra.mrb[0].mxu0 %v638
  %v1532 = vpop.f32.mrb[0].mxu0
  %v1533 = vadd.f32 %v1397, %v1532
  %v1534 = vpop.f32.mrb[0].mxu0
  %v1535 = vpop.f32.mrb[0].mxu0
  %v1536 = vadd.f32 %v1400, %v1535
  %v1537 = vpop.f32.mrb[0].mxu0
  %1538 = vmatprep.mubr.bf16.mxu0 %v647
  %1539 = vmatmul.mubr.bf16.gmra.mrb[0].mxu0 %v646
  %v1540 = vpop.f32.mrb[0].mxu0
  %v1541 = vadd.f32 %v1405, %v1540
  %v1542 = vpop.f32.mrb[0].mxu0
  %v1543 = vpop.f32.mrb[0].mxu0
  %v1544 = vpop.f32.mrb[0].mxu0
  %1545 = vdwg.mxu0
  %1546 = vmatprep.subr.bf16.mxu0 0
  %1547 = vmatpush1.bf16.msra.mxu0 %v1058
  %1548 = vmatprep.subr.bf16.mxu0 0
  %1549 = vmatpush1.bf16.msra.mxu0 %v1059
  %1550 = vmatprep.subr.bf16.mxu0 0
  %1551 = vmatpush1.bf16.msra.mxu0 %v1060
  %1552 = vmatprep.subr.bf16.mxu0 0
  %1553 = vmatpush1.bf16.msra.mxu0 %v1061
  %1554 = vmatprep.subr.bf16.mxu0 0
  %1555 = vmatpush1.bf16.msra.mxu0 %v1062
  %1556 = vmatprep.subr.bf16.mxu0 0
  %1557 = vmatpush1.bf16.msra.mxu0 %v1063
  %1558 = vmatprep.subr.bf16.mxu0 0
  %1559 = vmatpush1.bf16.msra.mxu0 %v1064
  %1560 = vmatprep.subr.bf16.mxu0 0
  %1561 = vmatpush1.bf16.msra.mxu0 %v1065
  %1562 = vmatprep.subr.bf16.mxu0 0
  %1563 = vmatpush1.bf16.msra.mxu0 %v1066
  %1564 = vmatprep.subr.bf16.mxu0 0
  %1565 = vmatpush1.bf16.msra.mxu0 %v1067
  %1566 = vmatprep.subr.bf16.mxu0 0
  %1567 = vmatpush1.bf16.msra.mxu0 %v1068
  %1568 = vmatprep.subr.bf16.mxu0 0
  %1569 = vmatpush1.bf16.msra.mxu0 %v1069
  %1570 = vmatprep.subr.bf16.mxu0 0
  %1571 = vmatpush1.bf16.msra.mxu0 %v1070
  %1572 = vmatprep.subr.bf16.mxu0 0
  %1573 = vmatpush1.bf16.msra.mxu0 %v1071
  %1574 = vmatprep.subr.bf16.mxu0 0
  %1575 = vmatpush1.bf16.msra.mxu0 %v1072
  %1576 = vmatprep.subr.bf16.mxu0 0
  %1577 = vmatpush1.bf16.msra.mxu0 %v1073
  %1578 = vmatprep.mubr.bf16.mxu0 %v553
  %1579 = vmatmul.mubr.bf16.gmra.mrb[0].mxu0 %v552
  %v1580 = vpop.f32.mrb[0].mxu0
  %v1581 = vadd.f32 %v1445, %v1580
  %v1582 = vpop.f32.mrb[0].mxu0
  %v1583 = vpop.f32.mrb[0].mxu0
  %v1584 = vadd.f32 %v1448, %v1583
  %v1585 = vpop.f32.mrb[0].mxu0
  %1586 = vmatprep.mubr.bf16.mxu0 %v561
  %1587 = vmatmul.mubr.bf16.gmra.mrb[0].mxu0 %v560
  %v1588 = vpop.f32.mrb[0].mxu0
  %v1589 = vadd.f32 %v1453, %v1588
  %v1590 = vpop.f32.mrb[0].mxu0
  %v1591 = vpop.f32.mrb[0].mxu0
  %v1592 = vadd.f32 %v1456, %v1591
  %v1593 = vpop.f32.mrb[0].mxu0
  %1594 = vmatprep.mubr.bf16.mxu0 %v569
  %1595 = vmatmul.mubr.bf16.gmra.mrb[0].mxu0 %v568
  %v1596 = vpop.f32.mrb[0].mxu0
  %v1597 = vadd.f32 %v1461, %v1596
  %v1598 = vpop.f32.mrb[0].mxu0
  %v1599 = vpop.f32.mrb[0].mxu0
  %v1600 = vadd.f32 %v1464, %v1599
  %v1601 = vpop.f32.mrb[0].mxu0
  %1602 = vmatprep.mubr.bf16.mxu0 %v577
  %1603 = vmatmul.mubr.bf16.gmra.mrb[0].mxu0 %v576
  %v1604 = vpop.f32.mrb[0].mxu0
  %v1605 = vadd.f32 %v1469, %v1604
  %v1606 = vpop.f32.mrb[0].mxu0
  %v1607 = vpop.f32.mrb[0].mxu0
  %v1608 = vadd.f32 %v1472, %v1607
  %v1609 = vpop.f32.mrb[0].mxu0
  %1610 = vmatprep.mubr.bf16.mxu0 %v585
  %1611 = vmatmul.mubr.bf16.gmra.mrb[0].mxu0 %v584
  %v1612 = vpop.f32.mrb[0].mxu0
  %v1613 = vadd.f32 %v1477, %v1612
  %v1614 = vpop.f32.mrb[0].mxu0
  %v1615 = vpop.f32.mrb[0].mxu0
  %v1616 = vadd.f32 %v1480, %v1615
  %v1617 = vpop.f32.mrb[0].mxu0
  %1618 = vmatprep.mubr.bf16.mxu0 %v593
  %1619 = vmatmul.mubr.bf16.gmra.mrb[0].mxu0 %v592
  %v1620 = vpop.f32.mrb[0].mxu0
  %v1621 = vadd.f32 %v1485, %v1620
  %v1622 = vpop.f32.mrb[0].mxu0
  %v1623 = vpop.f32.mrb[0].mxu0
  %v1624 = vadd.f32 %v1488, %v1623
  %v1625 = vpop.f32.mrb[0].mxu0
  %1626 = vmatprep.mubr.bf16.mxu0 %v601
  %1627 = vmatmul.mubr.bf16.gmra.mrb[0].mxu0 %v600
  %v1628 = vpop.f32.mrb[0].mxu0
  %v1629 = vadd.f32 %v1493, %v1628
  %v1630 = vpop.f32.mrb[0].mxu0
  %v1631 = vpop.f32.mrb[0].mxu0
  %v1632 = vadd.f32 %v1496, %v1631
  %v1633 = vpop.f32.mrb[0].mxu0
  %1634 = vmatprep.mubr.bf16.mxu0 %v609
  %1635 = vmatmul.mubr.bf16.gmra.mrb[0].mxu0 %v608
  %v1636 = vpop.f32.mrb[0].mxu0
  %v1637 = vadd.f32 %v1501, %v1636
  %v1638 = vpop.f32.mrb[0].mxu0
  %v1639 = vpop.f32.mrb[0].mxu0
  %v1640 = vadd.f32 %v1504, %v1639
  %v1641 = vpop.f32.mrb[0].mxu0
  %1642 = vmatprep.mubr.bf16.mxu0 %v617
  %1643 = vmatmul.mubr.bf16.gmra.mrb[0].mxu0 %v616
  %v1644 = vpop.f32.mrb[0].mxu0
  %v1645 = vadd.f32 %v1509, %v1644
  %v1646 = vpop.f32.mrb[0].mxu0
  %v1647 = vpop.f32.mrb[0].mxu0
  %v1648 = vadd.f32 %v1512, %v1647
  %v1649 = vpop.f32.mrb[0].mxu0
  %1650 = vmatprep.mubr.bf16.mxu0 %v625
  %1651 = vmatmul.mubr.bf16.gmra.mrb[0].mxu0 %v624
  %v1652 = vpop.f32.mrb[0].mxu0
  %v1653 = vadd.f32 %v1517, %v1652
  %v1654 = vpop.f32.mrb[0].mxu0
  %v1655 = vpop.f32.mrb[0].mxu0
  %v1656 = vadd.f32 %v1520, %v1655
  %v1657 = vpop.f32.mrb[0].mxu0
  %1658 = vmatprep.mubr.bf16.mxu0 %v633
  %1659 = vmatmul.mubr.bf16.gmra.mrb[0].mxu0 %v632
  %v1660 = vpop.f32.mrb[0].mxu0
  %v1661 = vadd.f32 %v1525, %v1660
  %v1662 = vpop.f32.mrb[0].mxu0
  %v1663 = vpop.f32.mrb[0].mxu0
  %v1664 = vadd.f32 %v1528, %v1663
  %v1665 = vpop.f32.mrb[0].mxu0
  %1666 = vmatprep.mubr.bf16.mxu0 %v641
  %1667 = vmatmul.mubr.bf16.gmra.mrb[0].mxu0 %v640
  %v1668 = vpop.f32.mrb[0].mxu0
  %v1669 = vadd.f32 %v1533, %v1668
  %v1670 = vpop.f32.mrb[0].mxu0
  %v1671 = vpop.f32.mrb[0].mxu0
  %v1672 = vadd.f32 %v1536, %v1671
  %v1673 = vpop.f32.mrb[0].mxu0
  %1674 = vmatprep.mubr.bf16.mxu0 %v649
  %1675 = vmatmul.mubr.bf16.gmra.mrb[0].mxu0 %v648
  %v1676 = vpop.f32.mrb[0].mxu0
  %v1677 = vadd.f32 %v1541, %v1676
  %v1678 = vpop.f32.mrb[0].mxu0
  %v1679 = vpop.f32.mrb[0].mxu0
  %v1680 = vpop.f32.mrb[0].mxu0
  %1681 = vdwg.mxu0
  %v1682 = vld [vmem:[%s2] sm:$0x1]
  %v1684 = vlaneseq
  %v1685 = vshrl.u32 %v1684, 7
  %v1686 = vsub.s32 0, %v1685
  %v1687 = vrot.slane %v1682, %v1686
  %v1689 = vmul.f32 %v1581, %v1687
  %v1690 = vmul.f32 %v1584, %v1687
  %v1691 = vmul.f32 %v1589, %v1687
  %v1692 = vmul.f32 %v1592, %v1687
  %v1693 = vmul.f32 %v1597, %v1687
  %v1694 = vmul.f32 %v1600, %v1687
  %v1695 = vmul.f32 %v1605, %v1687
  %v1696 = vmul.f32 %v1608, %v1687
  %v1697 = vmul.f32 %v1613, %v1687
  %v1698 = vmul.f32 %v1616, %v1687
  %v1699 = vmul.f32 %v1621, %v1687
  %v1700 = vmul.f32 %v1624, %v1687
  %v1701 = vmul.f32 %v1629, %v1687
  %v1702 = vmul.f32 %v1632, %v1687
  %v1703 = vmul.f32 %v1637, %v1687
  %v1704 = vmul.f32 %v1640, %v1687
  %v1705 = vmul.f32 %v1645, %v1687
  %v1706 = vmul.f32 %v1648, %v1687
  %v1707 = vmul.f32 %v1653, %v1687
  %v1708 = vmul.f32 %v1656, %v1687
  %v1709 = vmul.f32 %v1661, %v1687
  %v1710 = vmul.f32 %v1664, %v1687
  %v1711 = vmul.f32 %v1669, %v1687
  %v1712 = vmul.f32 %v1672, %v1687
  %v1713 = vmul.f32 %v1677, %v1687
  %v1714 = vld [vmem:[%s3] sm:$0x1]
  %v1716 = vlaneseq
  %v1717 = vshrl.u32 %v1716, 7
  %v1718 = vsub.s32 0, %v1717
  %v1719 = vrot.slane %v1714, %v1718
  %v1721 = vadd.f32 %v1689, %v1719
  %v1722 = vadd.f32 %v1690, %v1719
  %v1723 = vadd.f32 %v1691, %v1719
  %v1724 = vadd.f32 %v1692, %v1719
  %v1725 = vadd.f32 %v1693, %v1719
  %v1726 = vadd.f32 %v1694, %v1719
  %v1727 = vadd.f32 %v1695, %v1719
  %v1728 = vadd.f32 %v1696, %v1719
  %v1729 = vadd.f32 %v1697, %v1719
  %v1730 = vadd.f32 %v1698, %v1719
  %v1731 = vadd.f32 %v1699, %v1719
  %v1732 = vadd.f32 %v1700, %v1719
  %v1733 = vadd.f32 %v1701, %v1719
  %v1734 = vadd.f32 %v1702, %v1719
  %v1735 = vadd.f32 %v1703, %v1719
  %v1736 = vadd.f32 %v1704, %v1719
  %v1737 = vadd.f32 %v1705, %v1719
  %v1738 = vadd.f32 %v1706, %v1719
  %v1739 = vadd.f32 %v1707, %v1719
  %v1740 = vadd.f32 %v1708, %v1719
  %v1741 = vadd.f32 %v1709, %v1719
  %v1742 = vadd.f32 %v1710, %v1719
  %v1743 = vadd.f32 %v1711, %v1719
  %v1744 = vadd.f32 %v1712, %v1719
  %v1745 = vadd.f32 %v1713, %v1719
  %v1746 = vmax.f32 %v1721, 0.0
  %v1747 = vmax.f32 %v1722, 0.0
  %v1748 = vmax.f32 %v1723, 0.0
  %v1749 = vmax.f32 %v1724, 0.0
  %v1750 = vmax.f32 %v1725, 0.0
  %v1751 = vmax.f32 %v1726, 0.0
  %v1752 = vmax.f32 %v1727, 0.0
  %v1753 = vmax.f32 %v1728, 0.0
  %v1754 = vmax.f32 %v1729, 0.0
  %v1755 = vmax.f32 %v1730, 0.0
  %v1756 = vmax.f32 %v1731, 0.0
  %v1757 = vmax.f32 %v1732, 0.0
  %v1758 = vmax.f32 %v1733, 0.0
  %v1759 = vmax.f32 %v1734, 0.0
  %v1760 = vmax.f32 %v1735, 0.0
  %v1761 = vmax.f32 %v1736, 0.0
  %v1762 = vmax.f32 %v1737, 0.0
  %v1763 = vmax.f32 %v1738, 0.0
  %v1764 = vmax.f32 %v1739, 0.0
  %v1765 = vmax.f32 %v1740, 0.0
  %v1766 = vmax.f32 %v1741, 0.0
  %v1767 = vmax.f32 %v1742, 0.0
  %v1768 = vmax.f32 %v1743, 0.0
  %v1769 = vmax.f32 %v1744, 0.0
  %v1770 = vmax.f32 %v1745, 0.0
  %v1771 = vpack.c.bf16 %v1747, %v1746
  %v1772 = vpack.c.bf16 %v1749, %v1748
  %v1773 = vpack.c.bf16 %v1751, %v1750
  %v1774 = vpack.c.bf16 %v1753, %v1752
  %v1775 = vpack.c.bf16 %v1755, %v1754
  %v1776 = vpack.c.bf16 %v1757, %v1756
  %v1777 = vpack.c.bf16 %v1759, %v1758
  %v1778 = vpack.c.bf16 %v1761, %v1760
  %v1779 = vpack.c.bf16 %v1763, %v1762
  %v1780 = vpack.c.bf16 %v1765, %v1764
  %v1781 = vpack.c.bf16 %v1767, %v1766
  %v1782 = vpack.c.bf16 %v1769, %v1768
  %v1783 = vpack.c.bf16 %v1770, %v1770
  %v1797 = vunpack.c.l.b16 %v1771
  %v1798 = vunpack.c.h.b16 %v1771
  %v1799 = vunpack.c.l.b16 %v1772
  %v1800 = vunpack.c.h.b16 %v1772
  %v1801 = vunpack.c.l.b16 %v1773
  %v1802 = vunpack.c.h.b16 %v1773
  %v1803 = vunpack.c.l.b16 %v1774
  %v1804 = vunpack.c.h.b16 %v1774
  %v1805 = vunpack.c.l.b16 %v1775
  %v1806 = vunpack.c.h.b16 %v1775
  %v1807 = vunpack.c.l.b16 %v1776
  %v1808 = vunpack.c.h.b16 %v1776
  %v1809 = vunpack.c.l.b16 %v1777
  %v1810 = vunpack.c.h.b16 %v1777
  %v1811 = vunpack.c.l.b16 %v1778
  %v1812 = vunpack.c.h.b16 %v1778
  %v1813 = vunpack.c.l.b16 %v1779
  %v1814 = vunpack.c.h.b16 %v1779
  %v1815 = vunpack.c.l.b16 %v1780
  %v1816 = vunpack.c.h.b16 %v1780
  %v1817 = vunpack.c.l.b16 %v1781
  %v1818 = vunpack.c.h.b16 %v1781
  %v1819 = vunpack.c.l.b16 %v1782
  %v1820 = vunpack.c.h.b16 %v1782
  %v1821 = vunpack.c.l.b16 %v1783
  %v1822 = vpack.c.b16 %v1797, %v1797
  %v1823 = vpack.c.b16 %v1798, %v1798
  %v1824 = vpack.c.b16 %v1799, %v1799
  %v1825 = vpack.c.b16 %v1800, %v1800
  %v1826 = vpack.c.b16 %v1801, %v1801
  %v1827 = vpack.c.b16 %v1802, %v1802
  %v1828 = vpack.c.b16 %v1803, %v1803
  %v1829 = vpack.c.b16 %v1804, %v1804
  %v1830 = vpack.c.b16 %v1805, %v1805
  %v1831 = vpack.c.b16 %v1806, %v1806
  %v1832 = vpack.c.b16 %v1807, %v1807
  %v1833 = vpack.c.b16 %v1808, %v1808
  %v1834 = vpack.c.b16 %v1809, %v1809
  %v1835 = vpack.c.b16 %v1810, %v1810
  %v1836 = vpack.c.b16 %v1811, %v1811
  %v1837 = vpack.c.b16 %v1812, %v1812
  %v1838 = vpack.c.b16 %v1813, %v1813
  %v1839 = vpack.c.b16 %v1814, %v1814
  %v1840 = vpack.c.b16 %v1815, %v1815
  %v1841 = vpack.c.b16 %v1816, %v1816
  %v1842 = vpack.c.b16 %v1817, %v1817
  %v1843 = vpack.c.b16 %v1818, %v1818
  %v1844 = vpack.c.b16 %v1819, %v1819
  %v1845 = vpack.c.b16 %v1820, %v1820
  %v1846 = vpack.c.b16 %v1821, %v1821
  %1872 = vst [vmem:[%s4] sm:$0xf] %v1822
  %1873 = vst [vmem:[%s4 + $0x4] sm:$0xf] %v1823
  %1874 = vst [vmem:[%s4 + $0x8] sm:$0xf] %v1824
  %1875 = vst [vmem:[%s4 + $0xc] sm:$0xf] %v1825
  %1876 = vst [vmem:[%s4 + $0x10] sm:$0xf] %v1826
  %1877 = vst [vmem:[%s4 + $0x14] sm:$0xf] %v1827
  %1878 = vst [vmem:[%s4 + $0x18] sm:$0xf] %v1828
  %1879 = vst [vmem:[%s4 + $0x1c] sm:$0xf] %v1829
  %1880 = vst [vmem:[%s4 + $0x20] sm:$0xf] %v1830
  %1881 = vst [vmem:[%s4 + $0x24] sm:$0xf] %v1831
  %1882 = vst [vmem:[%s4 + $0x28] sm:$0xf] %v1832
  %1883 = vst [vmem:[%s4 + $0x2c] sm:$0xf] %v1833
  %1884 = vst [vmem:[%s4 + $0x30] sm:$0xf] %v1834
  %1885 = vst [vmem:[%s4 + $0x34] sm:$0xf] %v1835
  %1886 = vst [vmem:[%s4 + $0x38] sm:$0xf] %v1836
  %1887 = vst [vmem:[%s4 + $0x3c] sm:$0xf] %v1837
  %1888 = vst [vmem:[%s4 + $0x40] sm:$0xf] %v1838
  %1889 = vst [vmem:[%s4 + $0x44] sm:$0xf] %v1839
  %1890 = vst [vmem:[%s4 + $0x48] sm:$0xf] %v1840
  %1891 = vst [vmem:[%s4 + $0x4c] sm:$0xf] %v1841
  %1892 = vst [vmem:[%s4 + $0x50] sm:$0xf] %v1842
  %1893 = vst [vmem:[%s4 + $0x54] sm:$0xf] %v1843
  %1894 = vst [vmem:[%s4 + $0x58] sm:$0xf] %v1844
  %1895 = vst [vmem:[%s4 + $0x5c] sm:$0xf] %v1845
  %1896 = vst [vmem:[%s4 + $0x60] sm:$0xf] %v1846
  // Predicated region
  $region18: #{state_encoder_forward.6} parent=0 // pred_check
    _
  $region19: #{state_encoder_forward.6} parent=0 // pred_check_branch
    %1898 = sbr.rel (0) target = $region21
  $region20: #{state_encoder_forward.6} parent=0 // pred_region
    _
  $region21: #{state_encoder_forward.6} parent=0 // pred_fallthru
    _
  // Predicated region
  $region22: #{state_encoder_forward.6} parent=0 // pred_check
    _
  $region23: #{state_encoder_forward.6} parent=0 // pred_check_branch
    %1900 = sbr.rel (0) target = $region25
  $region24: #{state_encoder_forward.6} parent=0 // pred_region
    _
  $region25: #{state_encoder_forward.6} parent=0 // pred_fallthru
    _

// kernel: state_encoder_forward.7
$region0: #{state_encoder_forward.7}
  #allocation0 [shape = 'u32[]', space=smem, size = 0x4, offset = 0x4, fixed_abs, tag = 'smem constant byte address 0x4 - core index']
  #allocation1 [shape = 'u32[144,128]{1,0:T(1,128)}', space=vmem, size = 0x12000, scoped, tag = 'internal scratch']
  #allocation2 [shape = 'f32[2,256]{1,0:T(2,128)}', space=vmem, size = 0x800, scoped, tag = 'scratch operand']
  %s0 = inlined_call_operand.vmem [shape: bf16[2,12800], index: 0, kind: input, shape index: {}]
  %s1 = inlined_call_operand.vmem [shape: bf16[12800,256], index: 1, kind: input, shape index: {}]
  %s2 = inlined_call_operand.vmem [shape: f32[1,256], index: 2, kind: input, shape index: {}]
  %s3 = inlined_call_operand.vmem [shape: f32[256,16], index: 3, kind: input, shape index: {}]
  %s4 = inlined_call_operand.vmem [shape: f32[1,16], index: 4, kind: input, shape index: {}]
  %s5 = inlined_call_operand.vmem [shape: f32[2,16], index: 5, kind: output, shape index: {}]
  %s6 = sld [smem:[#allocation0]]
  $region61: #{state_encoder_forward.7} parent=0
    _
  %s8 = ssub.s32 1, %s6
  %s9 = scalar_select 0, %s8, %s6
  loop: start=0, step=1, limit=4
  $region2: #{state_encoder_forward.7} parent=0 // loop_pre_header
    _
  $region3: #{state_encoder_forward.7} parent=0 // loop_header
    %s11 = sphi 0, %s15
    %p12 = scmp.ge.s32.totalorder %s11, 4
    %s21 = sphi 0, %s23
    %s24 = sphi 0, %s21
    %s25 = sphi 0, %s24
    %s41 = sphi 0, %s25
    %s47 = sphi 0, %s49
    %s50 = sphi 0, %s47
    %s51 = sphi 0, %s50
    %s67 = sphi 0, %s51
    %s71 = sphi 0, %s71
    %s73 = sphi 0, %s71
    %s74 = sphi 0, %s73
    %s88 = sphi 0, %s74
    %s92 = sphi 0, %s92
    %s94 = sphi 0, %s92
    %s95 = sphi 0, %s94
    %s109 = sphi 0, %s95
    %s113 = sphi 0, %s113
    %s115 = sphi 0, %s113
    %s116 = sphi 0, %s115
    %s130 = sphi 0, %s116
    %s134 = sphi 0, %s134
    %s136 = sphi 0, %s134
    %s137 = sphi 0, %s136
    %s151 = sphi 0, %s137
  $region4: #{state_encoder_forward.7} parent=0 // loop_header_branch
    %14 = sbr.rel (%p12) target = $region8
  $region5: #{state_encoder_forward.7} parent=0 // loop_body
    %s16 = ssub.s32 %s11, 1
    %s17 = ssub.s32 %s11, 2
    %s18 = sadd.s32 %s11, 1
    %s19 = ssub.s32 %s11, %s18
    %p20 = scmp.eq.s32.totalorder %s19, 0
    %s22 = sadd.s32 %s21, 1
    %s23 = scalar_select %p20, %s21, %s22
    %p26 = pneg %p20
    %p27 = scmp.eq.s32.totalorder %s11, 1
    %p28 = por %p26, %p27
    %p29 = scmp.ne.s32.totalorder %s21, %s24
    %p30 = scmp.eq.s32.totalorder %s11, 0
    %p31 = por %p29, %p30
    %p32 = scmp.ne.s32.totalorder %s21, %s24
    %p33 = scmp.eq.s32.totalorder %s16, 1
    %p34 = por %p32, %p33
    %p35 = scmp.ne.s32.totalorder %s24, %s25
    %p36 = scmp.eq.s32.totalorder %s16, 0
    %p37 = por %p35, %p36
    %p38 = scmp.ne.s32.totalorder %s24, %s25
    %p39 = scmp.eq.s32.totalorder %s17, 1
    %p40 = por %p38, %p39
    %p42 = scmp.ne.s32.totalorder %s25, %s41
    %p43 = scmp.eq.s32.totalorder %s17, 0
    %p44 = por %p42, %p43
    %s45 = ssub.s32 %s11, %s18
    %p46 = scmp.eq.s32.totalorder %s45, 0
    %s48 = sadd.s32 %s47, 1
    %s49 = scalar_select %p46, %s47, %s48
    %p52 = pneg %p46
    %p53 = scmp.eq.s32.totalorder %s11, 1
    %p54 = por %p52, %p53
    %p55 = scmp.ne.s32.totalorder %s47, %s50
    %p56 = scmp.eq.s32.totalorder %s11, 0
    %p57 = por %p55, %p56
    %p58 = scmp.ne.s32.totalorder %s47, %s50
    %p59 = scmp.eq.s32.totalorder %s16, 1
    %p60 = por %p58, %p59
    %p61 = scmp.ne.s32.totalorder %s50, %s51
    %p62 = scmp.eq.s32.totalorder %s16, 0
    %p63 = por %p61, %p62
    %p64 = scmp.ne.s32.totalorder %s50, %s51
    %p65 = scmp.eq.s32.totalorder %s17, 1
    %p66 = por %p64, %p65
    %p68 = scmp.ne.s32.totalorder %s51, %s67
    %p69 = scmp.eq.s32.totalorder %s17, 0
    %p70 = por %p68, %p69
    %s72 = sadd.s32 %s71, 1
    %p75 = scmp.eq.s32.totalorder %s11, 1
    %p76 = scmp.ne.s32.totalorder %s71, %s73
    %p77 = scmp.eq.s32.totalorder %s11, 0
    %p78 = por %p76, %p77
    %p79 = scmp.ne.s32.totalorder %s71, %s73
    %p80 = scmp.eq.s32.totalorder %s16, 1
    %p81 = por %p79, %p80
    %p82 = scmp.ne.s32.totalorder %s73, %s74
    %p83 = scmp.eq.s32.totalorder %s16, 0
    %p84 = por %p82, %p83
    %p85 = scmp.ne.s32.totalorder %s73, %s74
    %p86 = scmp.eq.s32.totalorder %s17, 1
    %p87 = por %p85, %p86
    %p89 = scmp.ne.s32.totalorder %s74, %s88
    %p90 = scmp.eq.s32.totalorder %s17, 0
    %p91 = por %p89, %p90
    %s93 = sadd.s32 %s92, 1
    %p96 = scmp.eq.s32.totalorder %s11, 1
    %p97 = scmp.ne.s32.totalorder %s92, %s94
    %p98 = scmp.eq.s32.totalorder %s11, 0
    %p99 = por %p97, %p98
    %p100 = scmp.ne.s32.totalorder %s92, %s94
    %p101 = scmp.eq.s32.totalorder %s16, 1
    %p102 = por %p100, %p101
    %p103 = scmp.ne.s32.totalorder %s94, %s95
    %p104 = scmp.eq.s32.totalorder %s16, 0
    %p105 = por %p103, %p104
    %p106 = scmp.ne.s32.totalorder %s94, %s95
    %p107 = scmp.eq.s32.totalorder %s17, 1
    %p108 = por %p106, %p107
    %p110 = scmp.ne.s32.totalorder %s95, %s109
    %p111 = scmp.eq.s32.totalorder %s17, 0
    %p112 = por %p110, %p111
    %s114 = sadd.s32 %s113, 1
    %p117 = scmp.eq.s32.totalorder %s11, 1
    %p118 = scmp.ne.s32.totalorder %s113, %s115
    %p119 = scmp.eq.s32.totalorder %s11, 0
    %p120 = por %p118, %p119
    %p121 = scmp.ne.s32.totalorder %s113, %s115
    %p122 = scmp.eq.s32.totalorder %s16, 1
    %p123 = por %p121, %p122
    %p124 = scmp.ne.s32.totalorder %s115, %s116
    %p125 = scmp.eq.s32.totalorder %s16, 0
    %p126 = por %p124, %p125
    %p127 = scmp.ne.s32.totalorder %s115, %s116
    %p128 = scmp.eq.s32.totalorder %s17, 1
    %p129 = por %p127, %p128
    %p131 = scmp.ne.s32.totalorder %s116, %s130
    %p132 = scmp.eq.s32.totalorder %s17, 0
    %p133 = por %p131, %p132
    %s135 = sadd.s32 %s134, 1
    %p138 = scmp.eq.s32.totalorder %s11, 1
    %p139 = scmp.ne.s32.totalorder %s134, %s136
    %p140 = scmp.eq.s32.totalorder %s11, 0
    %p141 = por %p139, %p140
    %p142 = scmp.ne.s32.totalorder %s134, %s136
    %p143 = scmp.eq.s32.totalorder %s16, 1
    %p144 = por %p142, %p143
    %p145 = scmp.ne.s32.totalorder %s136, %s137
    %p146 = scmp.eq.s32.totalorder %s16, 0
    %p147 = por %p145, %p146
    %p148 = scmp.ne.s32.totalorder %s136, %s137
    %p149 = scmp.eq.s32.totalorder %s17, 1
    %p150 = por %p148, %p149
    %p152 = scmp.ne.s32.totalorder %s137, %s151
    %p153 = scmp.eq.s32.totalorder %s17, 0
    %p154 = por %p152, %p153
    %p155 = scmp.le.s32.totalorder 1, %s11
    %p156 = scmp.lt.s32.totalorder %s11, 3
    %p157 = pnand %p155, %p156
    %p158 = pneg %p157
    // Predicated region
    $region9: #{state_encoder_forward.7} parent=5 // pred_check
      _
    $region10: #{state_encoder_forward.7} parent=5 // pred_check_branch
      %160 = sbr.rel (%p157) target = $region12
    $region11: #{state_encoder_forward.7} parent=5 // pred_region
      %s161 = ssub.s32 %s11, 1
      // Predicated region
      $region13: #{state_encoder_forward.7} parent=11 // pred_check
        %p162 = pneg %p84
      $region14: #{state_encoder_forward.7} parent=11 // pred_check_branch
        %164 = sbr.rel (%p162) target = $region16
      $region15: #{state_encoder_forward.7} parent=11 // pred_region
        _
      $region16: #{state_encoder_forward.7} parent=11 // pred_fallthru
        _
      // Predicated region
      $region17: #{state_encoder_forward.7} parent=11 // pred_check
        %p165 = pneg %p105
      $region18: #{state_encoder_forward.7} parent=11 // pred_check_branch
        %167 = sbr.rel (%p165) target = $region20
      $region19: #{state_encoder_forward.7} parent=11 // pred_region
        _
      $region20: #{state_encoder_forward.7} parent=11 // pred_fallthru
        _
      // Predicated region
      $region21: #{state_encoder_forward.7} parent=11 // pred_check
        %p168 = pneg %p126
      $region22: #{state_encoder_forward.7} parent=11 // pred_check_branch
        %170 = sbr.rel (%p168) target = $region24
      $region23: #{state_encoder_forward.7} parent=11 // pred_region
        _
      $region24: #{state_encoder_forward.7} parent=11 // pred_fallthru
        _
    $region12: #{state_encoder_forward.7} parent=5 // pred_fallthru
      _
    %p171 = scmp.lt.s32.totalorder %s11, 2
    // Predicated region
    $region25: #{state_encoder_forward.7} parent=5 // pred_check
      %p172 = pneg %p171
    $region26: #{state_encoder_forward.7} parent=5 // pred_check_branch
      %174 = sbr.rel (%p172) target = $region28
    $region27: #{state_encoder_forward.7} parent=5 // pred_region
      // Predicated region
      $region29: #{state_encoder_forward.7} parent=27 // pred_check
        %p175 = pneg %p31
      $region30: #{state_encoder_forward.7} parent=27 // pred_check_branch
        %177 = sbr.rel (%p175) target = $region32
      $region31: #{state_encoder_forward.7} parent=27 // pred_region
        %s178 = smul.u32 50, %s11
        %p179 = scmp.lt.s32.totalorder %s178, 99
        %s180 = scalar_select %p179, %s178, 99
        %s181 = scalar_lea.vmem %s0, %s180
        %s182 = smul.u32 50, %s11
      $region32: #{state_encoder_forward.7} parent=27 // pred_fallthru
        _
      // Predicated region
      $region33: #{state_encoder_forward.7} parent=27 // pred_check
        %p183 = pneg %p57
      $region34: #{state_encoder_forward.7} parent=27 // pred_check_branch
        %185 = sbr.rel (%p183) target = $region36
      $region35: #{state_encoder_forward.7} parent=27 // pred_region
        %s186 = smul.u32 800, %s11
        %p187 = scmp.lt.s32.totalorder %s186, 1599
        %s188 = scalar_select %p187, %s186, 1599
        %s189 = smul.addr %s188, 2
        %s190 = smul.addr %s189, 4
        %s191 = scalar_lea.vmem %s1, %s190
        %s192 = smul.u32 800, %s11
      $region36: #{state_encoder_forward.7} parent=27 // pred_fallthru
        _
    $region28: #{state_encoder_forward.7} parent=5 // pred_fallthru
      _
    %p193 = scmp.le.s32.totalorder 1, %s11
    %p194 = scmp.lt.s32.totalorder %s11, 3
    %p195 = pnand %p193, %p194
    %p196 = pneg %p195
    // Predicated region
    $region37: #{state_encoder_forward.7} parent=5 // pred_check
      _
    $region38: #{state_encoder_forward.7} parent=5 // pred_check_branch
      %198 = sbr.rel (%p195) target = $region40
    $region39: #{state_encoder_forward.7} parent=5 // pred_region
      %s199 = ssub.s32 %s11, 1
      %s200 = smul.u32 50, %s16
      %p201 = scmp.lt.s32.totalorder %s200, 99
      %s202 = scalar_select %p201, %s200, 99
      %s203 = scalar_lea.vmem %s0, %s202
      %p204 = pneg %p37
      %p205 = pneg %p34
      %s206 = smul.u32 800, %s16
      %p207 = scmp.lt.s32.totalorder %s206, 1599
      %s208 = scalar_select %p207, %s206, 1599
      %s209 = smul.addr %s208, 2
      %s210 = smul.addr %s209, 4
      %s211 = scalar_lea.vmem %s1, %s210
      %p212 = pneg %p63
      %p213 = pneg %p60
      %p214 = pneg %p84
      %p215 = pneg %p81
      %p216 = pneg %p105
      %p217 = pneg %p102
      %p218 = pneg %p126
      %p219 = pneg %p123
      %p220 = pneg %p147
      %p221 = pneg %p144
      %s222 = smul.u32 50, %s16
      %p223 = scmp.lt.s32.totalorder %s222, 99
      %s224 = scalar_select %p223, %s222, 99
      %s225 = scalar_lea.vmem %s0, %s224
      %s226 = smul.u32 50, %s16
      %s227 = smul.u32 800, %s16
      %p228 = scmp.lt.s32.totalorder %s227, 1599
      %s229 = scalar_select %p228, %s227, 1599
      %s230 = smul.addr %s229, 2
      %s231 = smul.addr %s230, 4
      %s232 = scalar_lea.vmem %s1, %s231
      %s233 = smul.u32 800, %s16
      %p234 = scmp.eq.s32.totalorder %s16, 0
      // Predicated region
      $region41: #{state_encoder_forward.7} parent=39 // pred_check
        %p235 = pneg %p234
      $region42: #{state_encoder_forward.7} parent=39 // pred_check_branch
        %237 = sbr.rel (%p235) target = $region44
      $region43: #{state_encoder_forward.7} parent=39 // pred_region
        %238 = vst [vmem:[#allocation2] sm:$0xf] 0.0
      $region44: #{state_encoder_forward.7} parent=39 // pred_fallthru
        _
      %v239 = vld [vmem:[#allocation2] sm:$0xf]
      %v240 = vld [vmem:[%s225] sm:$0xff]
      %v241 = vld [vmem:[%s225 + $0x8] sm:$0xff]
      %v242 = vld [vmem:[%s225 + $0x10] sm:$0xff]
      %v243 = vld [vmem:[%s225 + $0x18] sm:$0xff]
      %v244 = vld [vmem:[%s225 + $0x20] sm:$0xff]
      %v245 = vld [vmem:[%s225 + $0x28] sm:$0xff]
      %v246 = vld [vmem:[%s225 + $0x30] sm:$0x3]
      %v247 = vld [vmem:[%s232] sm:$0xff]
      %v248 = vld [vmem:[%s232 + $0x8] sm:$0xff]
      %v249 = vld [vmem:[%s232 + $0x10] sm:$0xff]
      %v250 = vld [vmem:[%s232 + $0x18] sm:$0xff]
      %v251 = vld [vmem:[%s232 + $0x20] sm:$0xff]
      %v252 = vld [vmem:[%s232 + $0x28] sm:$0xff]
      %v253 = vld [vmem:[%s232 + $0x30] sm:$0xff]
      %v254 = vld [vmem:[%s232 + $0x38] sm:$0xff]
      %v255 = vld [vmem:[%s232 + $0x40] sm:$0xff]
      %v256 = vld [vmem:[%s232 + $0x48] sm:$0xff]
      %v257 = vld [vmem:[%s232 + $0x50] sm:$0xff]
      %v258 = vld [vmem:[%s232 + $0x58] sm:$0xff]
      %v259 = vld [vmem:[%s232 + $0x60] sm:$0xff]
      %v260 = vld [vmem:[%s232 + $0x68] sm:$0xff]
      %v261 = vld [vmem:[%s232 + $0x70] sm:$0xff]
      %v262 = vld [vmem:[%s232 + $0x78] sm:$0xff]
      %v263 = vld [vmem:[%s232 + $0x80] sm:$0xff]
      %v264 = vld [vmem:[%s232 + $0x88] sm:$0xff]
      %v265 = vld [vmem:[%s232 + $0x90] sm:$0xff]
      %v266 = vld [vmem:[%s232 + $0x98] sm:$0xff]
      %v267 = vld [vmem:[%s232 + $0xa0] sm:$0xff]
      %v268 = vld [vmem:[%s232 + $0xa8] sm:$0xff]
      %v269 = vld [vmem:[%s232 + $0xb0] sm:$0xff]
      %v270 = vld [vmem:[%s232 + $0xb8] sm:$0xff]
      %v271 = vld [vmem:[%s232 + $0xc0] sm:$0xff]
      %v272 = vld [vmem:[%s232 + $0xc8] sm:$0xff]
      %v273 = vld [vmem:[%s232 + $0xd0] sm:$0xff]
      %v274 = vld [vmem:[%s232 + $0xd8] sm:$0xff]
      %v275 = vld [vmem:[%s232 + $0xe0] sm:$0xff]
      %v276 = vld [vmem:[%s232 + $0xe8] sm:$0xff]
      %v277 = vld [vmem:[%s232 + $0xf0] sm:$0xff]
      %v278 = vld [vmem:[%s232 + $0xf8] sm:$0xff]
      %v279 = vld [vmem:[%s232 + $0x100] sm:$0xff]
      %v280 = vld [vmem:[%s232 + $0x108] sm:$0xff]
      %v281 = vld [vmem:[%s232 + $0x110] sm:$0xff]
      %v282 = vld [vmem:[%s232 + $0x118] sm:$0xff]
      %v283 = vld [vmem:[%s232 + $0x120] sm:$0xff]
      %v284 = vld [vmem:[%s232 + $0x128] sm:$0xff]
      %v285 = vld [vmem:[%s232 + $0x130] sm:$0xff]
      %v286 = vld [vmem:[%s232 + $0x138] sm:$0xff]
      %v287 = vld [vmem:[%s232 + $0x140] sm:$0xff]
      %v288 = vld [vmem:[%s232 + $0x148] sm:$0xff]
      %v289 = vld [vmem:[%s232 + $0x150] sm:$0xff]
      %v290 = vld [vmem:[%s232 + $0x158] sm:$0xff]
      %v291 = vld [vmem:[%s232 + $0x160] sm:$0xff]
      %v292 = vld [vmem:[%s232 + $0x168] sm:$0xff]
      %v293 = vld [vmem:[%s232 + $0x170] sm:$0xff]
      %v294 = vld [vmem:[%s232 + $0x178] sm:$0xff]
      %v295 = vld [vmem:[%s232 + $0x180] sm:$0xff]
      %v296 = vld [vmem:[%s232 + $0x188] sm:$0xff]
      %v297 = vld [vmem:[%s232 + $0x190] sm:$0xff]
      %v298 = vld [vmem:[%s232 + $0x198] sm:$0xff]
      %v299 = vld [vmem:[%s232 + $0x1a0] sm:$0xff]
      %v300 = vld [vmem:[%s232 + $0x1a8] sm:$0xff]
      %v301 = vld [vmem:[%s232 + $0x1b0] sm:$0xff]
      %v302 = vld [vmem:[%s232 + $0x1b8] sm:$0xff]
      %v303 = vld [vmem:[%s232 + $0x1c0] sm:$0xff]
      %v304 = vld [vmem:[%s232 + $0x1c8] sm:$0xff]
      %v305 = vld [vmem:[%s232 + $0x1d0] sm:$0xff]
      %v306 = vld [vmem:[%s232 + $0x1d8] sm:$0xff]
      %v307 = vld [vmem:[%s232 + $0x1e0] sm:$0xff]
      %v308 = vld [vmem:[%s232 + $0x1e8] sm:$0xff]
      %v309 = vld [vmem:[%s232 + $0x1f0] sm:$0xff]
      %v310 = vld [vmem:[%s232 + $0x1f8] sm:$0xff]
      %v311 = vld [vmem:[%s232 + $0x200] sm:$0xff]
      %v312 = vld [vmem:[%s232 + $0x208] sm:$0xff]
      %v313 = vld [vmem:[%s232 + $0x210] sm:$0xff]
      %v314 = vld [vmem:[%s232 + $0x218] sm:$0xff]
      %v315 = vld [vmem:[%s232 + $0x220] sm:$0xff]
      %v316 = vld [vmem:[%s232 + $0x228] sm:$0xff]
      %v317 = vld [vmem:[%s232 + $0x230] sm:$0xff]
      %v318 = vld [vmem:[%s232 + $0x238] sm:$0xff]
      %v319 = vld [vmem:[%s232 + $0x240] sm:$0xff]
      %v320 = vld [vmem:[%s232 + $0x248] sm:$0xff]
      %v321 = vld [vmem:[%s232 + $0x250] sm:$0xff]
      %v322 = vld [vmem:[%s232 + $0x258] sm:$0xff]
      %v323 = vld [vmem:[%s232 + $0x260] sm:$0xff]
      %v324 = vld [vmem:[%s232 + $0x268] sm:$0xff]
      %v325 = vld [vmem:[%s232 + $0x270] sm:$0xff]
      %v326 = vld [vmem:[%s232 + $0x278] sm:$0xff]
      %v327 = vld [vmem:[%s232 + $0x280] sm:$0xff]
      %v328 = vld [vmem:[%s232 + $0x288] sm:$0xff]
      %v329 = vld [vmem:[%s232 + $0x290] sm:$0xff]
      %v330 = vld [vmem:[%s232 + $0x298] sm:$0xff]
      %v331 = vld [vmem:[%s232 + $0x2a0] sm:$0xff]
      %v332 = vld [vmem:[%s232 + $0x2a8] sm:$0xff]
      %v333 = vld [vmem:[%s232 + $0x2b0] sm:$0xff]
      %v334 = vld [vmem:[%s232 + $0x2b8] sm:$0xff]
      %v335 = vld [vmem:[%s232 + $0x2c0] sm:$0xff]
      %v336 = vld [vmem:[%s232 + $0x2c8] sm:$0xff]
      %v337 = vld [vmem:[%s232 + $0x2d0] sm:$0xff]
      %v338 = vld [vmem:[%s232 + $0x2d8] sm:$0xff]
      %v339 = vld [vmem:[%s232 + $0x2e0] sm:$0xff]
      %v340 = vld [vmem:[%s232 + $0x2e8] sm:$0xff]
      %v341 = vld [vmem:[%s232 + $0x2f0] sm:$0xff]
      %v342 = vld [vmem:[%s232 + $0x2f8] sm:$0xff]
      %v343 = vld [vmem:[%s232 + $0x300] sm:$0xff]
      %v344 = vld [vmem:[%s232 + $0x308] sm:$0xff]
      %v345 = vld [vmem:[%s232 + $0x310] sm:$0xff]
      %v346 = vld [vmem:[%s232 + $0x318] sm:$0xff]
      %v347 = vld [vmem:[%s232 + $0x320] sm:$0xff]
      %v348 = vld [vmem:[%s232 + $0x328] sm:$0xff]
      %v349 = vld [vmem:[%s232 + $0x330] sm:$0xff]
      %v350 = vld [vmem:[%s232 + $0x338] sm:$0xff]
      %v351 = vld [vmem:[%s232 + $0x340] sm:$0xff]
      %v352 = vld [vmem:[%s232 + $0x348] sm:$0xff]
      %v353 = vld [vmem:[%s232 + $0x350] sm:$0xff]
      %v354 = vld [vmem:[%s232 + $0x358] sm:$0xff]
      %v355 = vld [vmem:[%s232 + $0x360] sm:$0xff]
      %v356 = vld [vmem:[%s232 + $0x368] sm:$0xff]
      %v357 = vld [vmem:[%s232 + $0x370] sm:$0xff]
      %v358 = vld [vmem:[%s232 + $0x378] sm:$0xff]
      %v359 = vld [vmem:[%s232 + $0x380] sm:$0xff]
      %v360 = vld [vmem:[%s232 + $0x388] sm:$0xff]
      %v361 = vld [vmem:[%s232 + $0x390] sm:$0xff]
      %v362 = vld [vmem:[%s232 + $0x398] sm:$0xff]
      %v363 = vld [vmem:[%s232 + $0x3a0] sm:$0xff]
      %v364 = vld [vmem:[%s232 + $0x3a8] sm:$0xff]
      %v365 = vld [vmem:[%s232 + $0x3b0] sm:$0xff]
      %v366 = vld [vmem:[%s232 + $0x3b8] sm:$0xff]
      %v367 = vld [vmem:[%s232 + $0x3c0] sm:$0xff]
      %v368 = vld [vmem:[%s232 + $0x3c8] sm:$0xff]
      %v369 = vld [vmem:[%s232 + $0x3d0] sm:$0xff]
      %v370 = vld [vmem:[%s232 + $0x3d8] sm:$0xff]
      %v371 = vld [vmem:[%s232 + $0x3e0] sm:$0xff]
      %v372 = vld [vmem:[%s232 + $0x3e8] sm:$0xff]
      %v373 = vld [vmem:[%s232 + $0x3f0] sm:$0xff]
      %v374 = vld [vmem:[%s232 + $0x3f8] sm:$0xff]
      %v375 = vld [vmem:[%s232 + $0x400] sm:$0xff]
      %v376 = vld [vmem:[%s232 + $0x408] sm:$0xff]
      %v377 = vld [vmem:[%s232 + $0x410] sm:$0xff]
      %v378 = vld [vmem:[%s232 + $0x418] sm:$0xff]
      %v379 = vld [vmem:[%s232 + $0x420] sm:$0xff]
      %v380 = vld [vmem:[%s232 + $0x428] sm:$0xff]
      %v381 = vld [vmem:[%s232 + $0x430] sm:$0xff]
      %v382 = vld [vmem:[%s232 + $0x438] sm:$0xff]
      %v383 = vld [vmem:[%s232 + $0x440] sm:$0xff]
      %v384 = vld [vmem:[%s232 + $0x448] sm:$0xff]
      %v385 = vld [vmem:[%s232 + $0x450] sm:$0xff]
      %v386 = vld [vmem:[%s232 + $0x458] sm:$0xff]
      %v387 = vld [vmem:[%s232 + $0x460] sm:$0xff]
      %v388 = vld [vmem:[%s232 + $0x468] sm:$0xff]
      %v389 = vld [vmem:[%s232 + $0x470] sm:$0xff]
      %v390 = vld [vmem:[%s232 + $0x478] sm:$0xff]
      %v391 = vld [vmem:[%s232 + $0x480] sm:$0xff]
      %v392 = vld [vmem:[%s232 + $0x488] sm:$0xff]
      %v393 = vld [vmem:[%s232 + $0x490] sm:$0xff]
      %v394 = vld [vmem:[%s232 + $0x498] sm:$0xff]
      %v395 = vld [vmem:[%s232 + $0x4a0] sm:$0xff]
      %v396 = vld [vmem:[%s232 + $0x4a8] sm:$0xff]
      %v397 = vld [vmem:[%s232 + $0x4b0] sm:$0xff]
      %v398 = vld [vmem:[%s232 + $0x4b8] sm:$0xff]
      %v399 = vld [vmem:[%s232 + $0x4c0] sm:$0xff]
      %v400 = vld [vmem:[%s232 + $0x4c8] sm:$0xff]
      %v401 = vld [vmem:[%s232 + $0x4d0] sm:$0xff]
      %v402 = vld [vmem:[%s232 + $0x4d8] sm:$0xff]
      %v403 = vld [vmem:[%s232 + $0x4e0] sm:$0xff]
      %v404 = vld [vmem:[%s232 + $0x4e8] sm:$0xff]
      %v405 = vld [vmem:[%s232 + $0x4f0] sm:$0xff]
      %v406 = vld [vmem:[%s232 + $0x4f8] sm:$0xff]
      %v407 = vld [vmem:[%s232 + $0x500] sm:$0xff]
      %v408 = vld [vmem:[%s232 + $0x508] sm:$0xff]
      %v409 = vld [vmem:[%s232 + $0x510] sm:$0xff]
      %v410 = vld [vmem:[%s232 + $0x518] sm:$0xff]
      %v411 = vld [vmem:[%s232 + $0x520] sm:$0xff]
      %v412 = vld [vmem:[%s232 + $0x528] sm:$0xff]
      %v413 = vld [vmem:[%s232 + $0x530] sm:$0xff]
      %v414 = vld [vmem:[%s232 + $0x538] sm:$0xff]
      %v415 = vld [vmem:[%s232 + $0x540] sm:$0xff]
      %v416 = vld [vmem:[%s232 + $0x548] sm:$0xff]
      %v417 = vld [vmem:[%s232 + $0x550] sm:$0xff]
      %v418 = vld [vmem:[%s232 + $0x558] sm:$0xff]
      %v419 = vld [vmem:[%s232 + $0x560] sm:$0xff]
      %v420 = vld [vmem:[%s232 + $0x568] sm:$0xff]
      %v421 = vld [vmem:[%s232 + $0x570] sm:$0xff]
      %v422 = vld [vmem:[%s232 + $0x578] sm:$0xff]
      %v423 = vld [vmem:[%s232 + $0x580] sm:$0xff]
      %v424 = vld [vmem:[%s232 + $0x588] sm:$0xff]
      %v425 = vld [vmem:[%s232 + $0x590] sm:$0xff]
      %v426 = vld [vmem:[%s232 + $0x598] sm:$0xff]
      %v427 = vld [vmem:[%s232 + $0x5a0] sm:$0xff]
      %v428 = vld [vmem:[%s232 + $0x5a8] sm:$0xff]
      %v429 = vld [vmem:[%s232 + $0x5b0] sm:$0xff]
      %v430 = vld [vmem:[%s232 + $0x5b8] sm:$0xff]
      %v431 = vld [vmem:[%s232 + $0x5c0] sm:$0xff]
      %v432 = vld [vmem:[%s232 + $0x5c8] sm:$0xff]
      %v433 = vld [vmem:[%s232 + $0x5d0] sm:$0xff]
      %v434 = vld [vmem:[%s232 + $0x5d8] sm:$0xff]
      %v435 = vld [vmem:[%s232 + $0x5e0] sm:$0xff]
      %v436 = vld [vmem:[%s232 + $0x5e8] sm:$0xff]
      %v437 = vld [vmem:[%s232 + $0x5f0] sm:$0xff]
      %v438 = vld [vmem:[%s232 + $0x5f8] sm:$0xff]
      %v439 = vld [vmem:[%s232 + $0x600] sm:$0xff]
      %v440 = vld [vmem:[%s232 + $0x608] sm:$0xff]
      %v441 = vld [vmem:[%s232 + $0x610] sm:$0xff]
      %v442 = vld [vmem:[%s232 + $0x618] sm:$0xff]
      %v443 = vld [vmem:[%s232 + $0x620] sm:$0xff]
      %v444 = vld [vmem:[%s232 + $0x628] sm:$0xff]
      %v445 = vld [vmem:[%s232 + $0x630] sm:$0xff]
      %v446 = vld [vmem:[%s232 + $0x638] sm:$0xff]
      %v447 = vld [vmem:[%s232 + $0x640] sm:$0xff]
      %v448 = vld [vmem:[%s232 + $0x648] sm:$0xff]
      %v449 = vld [vmem:[%s232 + $0x650] sm:$0xff]
      %v450 = vld [vmem:[%s232 + $0x658] sm:$0xff]
      %v451 = vld [vmem:[%s232 + $0x660] sm:$0xff]
      %v452 = vld [vmem:[%s232 + $0x668] sm:$0xff]
      %v453 = vld [vmem:[%s232 + $0x670] sm:$0xff]
      %v454 = vld [vmem:[%s232 + $0x678] sm:$0xff]
      %v455 = vld [vmem:[%s232 + $0x680] sm:$0xff]
      %v456 = vld [vmem:[%s232 + $0x688] sm:$0xff]
      %v457 = vld [vmem:[%s232 + $0x690] sm:$0xff]
      %v458 = vld [vmem:[%s232 + $0x698] sm:$0xff]
      %v459 = vld [vmem:[%s232 + $0x6a0] sm:$0xff]
      %v460 = vld [vmem:[%s232 + $0x6a8] sm:$0xff]
      %v461 = vld [vmem:[%s232 + $0x6b0] sm:$0xff]
      %v462 = vld [vmem:[%s232 + $0x6b8] sm:$0xff]
      %v463 = vld [vmem:[%s232 + $0x6c0] sm:$0xff]
      %v464 = vld [vmem:[%s232 + $0x6c8] sm:$0xff]
      %v465 = vld [vmem:[%s232 + $0x6d0] sm:$0xff]
      %v466 = vld [vmem:[%s232 + $0x6d8] sm:$0xff]
      %v467 = vld [vmem:[%s232 + $0x6e0] sm:$0xff]
      %v468 = vld [vmem:[%s232 + $0x6e8] sm:$0xff]
      %v469 = vld [vmem:[%s232 + $0x6f0] sm:$0xff]
      %v470 = vld [vmem:[%s232 + $0x6f8] sm:$0xff]
      %v471 = vld [vmem:[%s232 + $0x700] sm:$0xff]
      %v472 = vld [vmem:[%s232 + $0x708] sm:$0xff]
      %v473 = vld [vmem:[%s232 + $0x710] sm:$0xff]
      %v474 = vld [vmem:[%s232 + $0x718] sm:$0xff]
      %v475 = vld [vmem:[%s232 + $0x720] sm:$0xff]
      %v476 = vld [vmem:[%s232 + $0x728] sm:$0xff]
      %v477 = vld [vmem:[%s232 + $0x730] sm:$0xff]
      %v478 = vld [vmem:[%s232 + $0x738] sm:$0xff]
      %v479 = vld [vmem:[%s232 + $0x740] sm:$0xff]
      %v480 = vld [vmem:[%s232 + $0x748] sm:$0xff]
      %v481 = vld [vmem:[%s232 + $0x750] sm:$0xff]
      %v482 = vld [vmem:[%s232 + $0x758] sm:$0xff]
      %v483 = vld [vmem:[%s232 + $0x760] sm:$0xff]
      %v484 = vld [vmem:[%s232 + $0x768] sm:$0xff]
      %v485 = vld [vmem:[%s232 + $0x770] sm:$0xff]
      %v486 = vld [vmem:[%s232 + $0x778] sm:$0xff]
      %v487 = vld [vmem:[%s232 + $0x780] sm:$0xff]
      %v488 = vld [vmem:[%s232 + $0x788] sm:$0xff]
      %v489 = vld [vmem:[%s232 + $0x790] sm:$0xff]
      %v490 = vld [vmem:[%s232 + $0x798] sm:$0xff]
      %v491 = vld [vmem:[%s232 + $0x7a0] sm:$0xff]
      %v492 = vld [vmem:[%s232 + $0x7a8] sm:$0xff]
      %v493 = vld [vmem:[%s232 + $0x7b0] sm:$0xff]
      %v494 = vld [vmem:[%s232 + $0x7b8] sm:$0xff]
      %v495 = vld [vmem:[%s232 + $0x7c0] sm:$0xff]
      %v496 = vld [vmem:[%s232 + $0x7c8] sm:$0xff]
      %v497 = vld [vmem:[%s232 + $0x7d0] sm:$0xff]
      %v498 = vld [vmem:[%s232 + $0x7d8] sm:$0xff]
      %v499 = vld [vmem:[%s232 + $0x7e0] sm:$0xff]
      %v500 = vld [vmem:[%s232 + $0x7e8] sm:$0xff]
      %v501 = vld [vmem:[%s232 + $0x7f0] sm:$0xff]
      %v502 = vld [vmem:[%s232 + $0x7f8] sm:$0xff]
      %v503 = vld [vmem:[%s232 + $0x800] sm:$0xff]
      %v504 = vld [vmem:[%s232 + $0x808] sm:$0xff]
      %v505 = vld [vmem:[%s232 + $0x810] sm:$0xff]
      %v506 = vld [vmem:[%s232 + $0x818] sm:$0xff]
      %v507 = vld [vmem:[%s232 + $0x820] sm:$0xff]
      %v508 = vld [vmem:[%s232 + $0x828] sm:$0xff]
      %v509 = vld [vmem:[%s232 + $0x830] sm:$0xff]
      %v510 = vld [vmem:[%s232 + $0x838] sm:$0xff]
      %v511 = vld [vmem:[%s232 + $0x840] sm:$0xff]
      %v512 = vld [vmem:[%s232 + $0x848] sm:$0xff]
      %v513 = vld [vmem:[%s232 + $0x850] sm:$0xff]
      %v514 = vld [vmem:[%s232 + $0x858] sm:$0xff]
      %v515 = vld [vmem:[%s232 + $0x860] sm:$0xff]
      %v516 = vld [vmem:[%s232 + $0x868] sm:$0xff]
      %v517 = vld [vmem:[%s232 + $0x870] sm:$0xff]
      %v518 = vld [vmem:[%s232 + $0x878] sm:$0xff]
      %v519 = vld [vmem:[%s232 + $0x880] sm:$0xff]
      %v520 = vld [vmem:[%s232 + $0x888] sm:$0xff]
      %v521 = vld [vmem:[%s232 + $0x890] sm:$0xff]
      %v522 = vld [vmem:[%s232 + $0x898] sm:$0xff]
      %v523 = vld [vmem:[%s232 + $0x8a0] sm:$0xff]
      %v524 = vld [vmem:[%s232 + $0x8a8] sm:$0xff]
      %v525 = vld [vmem:[%s232 + $0x8b0] sm:$0xff]
      %v526 = vld [vmem:[%s232 + $0x8b8] sm:$0xff]
      %v527 = vld [vmem:[%s232 + $0x8c0] sm:$0xff]
      %v528 = vld [vmem:[%s232 + $0x8c8] sm:$0xff]
      %v529 = vld [vmem:[%s232 + $0x8d0] sm:$0xff]
      %v530 = vld [vmem:[%s232 + $0x8d8] sm:$0xff]
      %v531 = vld [vmem:[%s232 + $0x8e0] sm:$0xff]
      %v532 = vld [vmem:[%s232 + $0x8e8] sm:$0xff]
      %v533 = vld [vmem:[%s232 + $0x8f0] sm:$0xff]
      %v534 = vld [vmem:[%s232 + $0x8f8] sm:$0xff]
      %v535 = vld [vmem:[%s232 + $0x900] sm:$0xff]
      %v536 = vld [vmem:[%s232 + $0x908] sm:$0xff]
      %v537 = vld [vmem:[%s232 + $0x910] sm:$0xff]
      %v538 = vld [vmem:[%s232 + $0x918] sm:$0xff]
      %v539 = vld [vmem:[%s232 + $0x920] sm:$0xff]
      %v540 = vld [vmem:[%s232 + $0x928] sm:$0xff]
      %v541 = vld [vmem:[%s232 + $0x930] sm:$0xff]
      %v542 = vld [vmem:[%s232 + $0x938] sm:$0xff]
      %v543 = vld [vmem:[%s232 + $0x940] sm:$0xff]
      %v544 = vld [vmem:[%s232 + $0x948] sm:$0xff]
      %v545 = vld [vmem:[%s232 + $0x950] sm:$0xff]
      %v546 = vld [vmem:[%s232 + $0x958] sm:$0xff]
      %v547 = vld [vmem:[%s232 + $0x960] sm:$0xff]
      %v548 = vld [vmem:[%s232 + $0x968] sm:$0xff]
      %v549 = vld [vmem:[%s232 + $0x970] sm:$0xff]
      %v550 = vld [vmem:[%s232 + $0x978] sm:$0xff]
      %v551 = vld [vmem:[%s232 + $0x980] sm:$0xff]
      %v552 = vld [vmem:[%s232 + $0x988] sm:$0xff]
      %v553 = vld [vmem:[%s232 + $0x990] sm:$0xff]
      %v554 = vld [vmem:[%s232 + $0x998] sm:$0xff]
      %v555 = vld [vmem:[%s232 + $0x9a0] sm:$0xff]
      %v556 = vld [vmem:[%s232 + $0x9a8] sm:$0xff]
      %v557 = vld [vmem:[%s232 + $0x9b0] sm:$0xff]
      %v558 = vld [vmem:[%s232 + $0x9b8] sm:$0xff]
      %v559 = vld [vmem:[%s232 + $0x9c0] sm:$0xff]
      %v560 = vld [vmem:[%s232 + $0x9c8] sm:$0xff]
      %v561 = vld [vmem:[%s232 + $0x9d0] sm:$0xff]
      %v562 = vld [vmem:[%s232 + $0x9d8] sm:$0xff]
      %v563 = vld [vmem:[%s232 + $0x9e0] sm:$0xff]
      %v564 = vld [vmem:[%s232 + $0x9e8] sm:$0xff]
      %v565 = vld [vmem:[%s232 + $0x9f0] sm:$0xff]
      %v566 = vld [vmem:[%s232 + $0x9f8] sm:$0xff]
      %v567 = vld [vmem:[%s232 + $0xa00] sm:$0xff]
      %v568 = vld [vmem:[%s232 + $0xa08] sm:$0xff]
      %v569 = vld [vmem:[%s232 + $0xa10] sm:$0xff]
      %v570 = vld [vmem:[%s232 + $0xa18] sm:$0xff]
      %v571 = vld [vmem:[%s232 + $0xa20] sm:$0xff]
      %v572 = vld [vmem:[%s232 + $0xa28] sm:$0xff]
      %v573 = vld [vmem:[%s232 + $0xa30] sm:$0xff]
      %v574 = vld [vmem:[%s232 + $0xa38] sm:$0xff]
      %v575 = vld [vmem:[%s232 + $0xa40] sm:$0xff]
      %v576 = vld [vmem:[%s232 + $0xa48] sm:$0xff]
      %v577 = vld [vmem:[%s232 + $0xa50] sm:$0xff]
      %v578 = vld [vmem:[%s232 + $0xa58] sm:$0xff]
      %v579 = vld [vmem:[%s232 + $0xa60] sm:$0xff]
      %v580 = vld [vmem:[%s232 + $0xa68] sm:$0xff]
      %v581 = vld [vmem:[%s232 + $0xa70] sm:$0xff]
      %v582 = vld [vmem:[%s232 + $0xa78] sm:$0xff]
      %v583 = vld [vmem:[%s232 + $0xa80] sm:$0xff]
      %v584 = vld [vmem:[%s232 + $0xa88] sm:$0xff]
      %v585 = vld [vmem:[%s232 + $0xa90] sm:$0xff]
      %v586 = vld [vmem:[%s232 + $0xa98] sm:$0xff]
      %v587 = vld [vmem:[%s232 + $0xaa0] sm:$0xff]
      %v588 = vld [vmem:[%s232 + $0xaa8] sm:$0xff]
      %v589 = vld [vmem:[%s232 + $0xab0] sm:$0xff]
      %v590 = vld [vmem:[%s232 + $0xab8] sm:$0xff]
      %v591 = vld [vmem:[%s232 + $0xac0] sm:$0xff]
      %v592 = vld [vmem:[%s232 + $0xac8] sm:$0xff]
      %v593 = vld [vmem:[%s232 + $0xad0] sm:$0xff]
      %v594 = vld [vmem:[%s232 + $0xad8] sm:$0xff]
      %v595 = vld [vmem:[%s232 + $0xae0] sm:$0xff]
      %v596 = vld [vmem:[%s232 + $0xae8] sm:$0xff]
      %v597 = vld [vmem:[%s232 + $0xaf0] sm:$0xff]
      %v598 = vld [vmem:[%s232 + $0xaf8] sm:$0xff]
      %v599 = vld [vmem:[%s232 + $0xb00] sm:$0xff]
      %v600 = vld [vmem:[%s232 + $0xb08] sm:$0xff]
      %v601 = vld [vmem:[%s232 + $0xb10] sm:$0xff]
      %v602 = vld [vmem:[%s232 + $0xb18] sm:$0xff]
      %v603 = vld [vmem:[%s232 + $0xb20] sm:$0xff]
      %v604 = vld [vmem:[%s232 + $0xb28] sm:$0xff]
      %v605 = vld [vmem:[%s232 + $0xb30] sm:$0xff]
      %v606 = vld [vmem:[%s232 + $0xb38] sm:$0xff]
      %v607 = vld [vmem:[%s232 + $0xb40] sm:$0xff]
      %v608 = vld [vmem:[%s232 + $0xb48] sm:$0xff]
      %v609 = vld [vmem:[%s232 + $0xb50] sm:$0xff]
      %v610 = vld [vmem:[%s232 + $0xb58] sm:$0xff]
      %v611 = vld [vmem:[%s232 + $0xb60] sm:$0xff]
      %v612 = vld [vmem:[%s232 + $0xb68] sm:$0xff]
      %v613 = vld [vmem:[%s232 + $0xb70] sm:$0xff]
      %v614 = vld [vmem:[%s232 + $0xb78] sm:$0xff]
      %v615 = vld [vmem:[%s232 + $0xb80] sm:$0xff]
      %v616 = vld [vmem:[%s232 + $0xb88] sm:$0xff]
      %v617 = vld [vmem:[%s232 + $0xb90] sm:$0xff]
      %v618 = vld [vmem:[%s232 + $0xb98] sm:$0xff]
      %v619 = vld [vmem:[%s232 + $0xba0] sm:$0xff]
      %v620 = vld [vmem:[%s232 + $0xba8] sm:$0xff]
      %v621 = vld [vmem:[%s232 + $0xbb0] sm:$0xff]
      %v622 = vld [vmem:[%s232 + $0xbb8] sm:$0xff]
      %v623 = vld [vmem:[%s232 + $0xbc0] sm:$0xff]
      %v624 = vld [vmem:[%s232 + $0xbc8] sm:$0xff]
      %v625 = vld [vmem:[%s232 + $0xbd0] sm:$0xff]
      %v626 = vld [vmem:[%s232 + $0xbd8] sm:$0xff]
      %v627 = vld [vmem:[%s232 + $0xbe0] sm:$0xff]
      %v628 = vld [vmem:[%s232 + $0xbe8] sm:$0xff]
      %v629 = vld [vmem:[%s232 + $0xbf0] sm:$0xff]
      %v630 = vld [vmem:[%s232 + $0xbf8] sm:$0xff]
      %v631 = vld [vmem:[%s232 + $0xc00] sm:$0xff]
      %v632 = vld [vmem:[%s232 + $0xc08] sm:$0xff]
      %v633 = vld [vmem:[%s232 + $0xc10] sm:$0xff]
      %v634 = vld [vmem:[%s232 + $0xc18] sm:$0xff]
      %v635 = vld [vmem:[%s232 + $0xc20] sm:$0xff]
      %v636 = vld [vmem:[%s232 + $0xc28] sm:$0xff]
      %v637 = vld [vmem:[%s232 + $0xc30] sm:$0xff]
      %v638 = vld [vmem:[%s232 + $0xc38] sm:$0xff]
      %v639 = vld [vmem:[%s232 + $0xc40] sm:$0xff]
      %v640 = vld [vmem:[%s232 + $0xc48] sm:$0xff]
      %v641 = vld [vmem:[%s232 + $0xc50] sm:$0xff]
      %v642 = vld [vmem:[%s232 + $0xc58] sm:$0xff]
      %v643 = vld [vmem:[%s232 + $0xc60] sm:$0xff]
      %v644 = vld [vmem:[%s232 + $0xc68] sm:$0xff]
      %v645 = vld [vmem:[%s232 + $0xc70] sm:$0xff]
      %v646 = vld [vmem:[%s232 + $0xc78] sm:$0xff]
      %v647 = vld [vmem:[%s232 + $0xc80] sm:$0xff]
      %v648 = vld [vmem:[%s232 + $0xc88] sm:$0xff]
      %v649 = vld [vmem:[%s232 + $0xc90] sm:$0xff]
      %v650 = vld [vmem:[%s232 + $0xc98] sm:$0xff]
      %v651 = vld [vmem:[%s232 + $0xca0] sm:$0xff]
      %v652 = vld [vmem:[%s232 + $0xca8] sm:$0xff]
      %v653 = vld [vmem:[%s232 + $0xcb0] sm:$0xff]
      %v654 = vld [vmem:[%s232 + $0xcb8] sm:$0xff]
      %v655 = vld [vmem:[%s232 + $0xcc0] sm:$0xff]
      %v656 = vld [vmem:[%s232 + $0xcc8] sm:$0xff]
      %v657 = vld [vmem:[%s232 + $0xcd0] sm:$0xff]
      %v658 = vld [vmem:[%s232 + $0xcd8] sm:$0xff]
      %v659 = vld [vmem:[%s232 + $0xce0] sm:$0xff]
      %v660 = vld [vmem:[%s232 + $0xce8] sm:$0xff]
      %v661 = vld [vmem:[%s232 + $0xcf0] sm:$0xff]
      %v662 = vld [vmem:[%s232 + $0xcf8] sm:$0xff]
      %v663 = vld [vmem:[%s232 + $0xd00] sm:$0xff]
      %v664 = vld [vmem:[%s232 + $0xd08] sm:$0xff]
      %v665 = vld [vmem:[%s232 + $0xd10] sm:$0xff]
      %v666 = vld [vmem:[%s232 + $0xd18] sm:$0xff]
      %v667 = vld [vmem:[%s232 + $0xd20] sm:$0xff]
      %v668 = vld [vmem:[%s232 + $0xd28] sm:$0xff]
      %v669 = vld [vmem:[%s232 + $0xd30] sm:$0xff]
      %v670 = vld [vmem:[%s232 + $0xd38] sm:$0xff]
      %v671 = vld [vmem:[%s232 + $0xd40] sm:$0xff]
      %v672 = vld [vmem:[%s232 + $0xd48] sm:$0xff]
      %v673 = vld [vmem:[%s232 + $0xd50] sm:$0xff]
      %v674 = vld [vmem:[%s232 + $0xd58] sm:$0xff]
      %v675 = vld [vmem:[%s232 + $0xd60] sm:$0xff]
      %v676 = vld [vmem:[%s232 + $0xd68] sm:$0xff]
      %v677 = vld [vmem:[%s232 + $0xd70] sm:$0xff]
      %v678 = vld [vmem:[%s232 + $0xd78] sm:$0xff]
      %v679 = vld [vmem:[%s232 + $0xd80] sm:$0xff]
      %v680 = vld [vmem:[%s232 + $0xd88] sm:$0xff]
      %v681 = vld [vmem:[%s232 + $0xd90] sm:$0xff]
      %v682 = vld [vmem:[%s232 + $0xd98] sm:$0xff]
      %v683 = vld [vmem:[%s232 + $0xda0] sm:$0xff]
      %v684 = vld [vmem:[%s232 + $0xda8] sm:$0xff]
      %v685 = vld [vmem:[%s232 + $0xdb0] sm:$0xff]
      %v686 = vld [vmem:[%s232 + $0xdb8] sm:$0xff]
      %v687 = vld [vmem:[%s232 + $0xdc0] sm:$0xff]
      %v688 = vld [vmem:[%s232 + $0xdc8] sm:$0xff]
      %v689 = vld [vmem:[%s232 + $0xdd0] sm:$0xff]
      %v690 = vld [vmem:[%s232 + $0xdd8] sm:$0xff]
      %v691 = vld [vmem:[%s232 + $0xde0] sm:$0xff]
      %v692 = vld [vmem:[%s232 + $0xde8] sm:$0xff]
      %v693 = vld [vmem:[%s232 + $0xdf0] sm:$0xff]
      %v694 = vld [vmem:[%s232 + $0xdf8] sm:$0xff]
      %v695 = vld [vmem:[%s232 + $0xe00] sm:$0xff]
      %v696 = vld [vmem:[%s232 + $0xe08] sm:$0xff]
      %v697 = vld [vmem:[%s232 + $0xe10] sm:$0xff]
      %v698 = vld [vmem:[%s232 + $0xe18] sm:$0xff]
      %v699 = vld [vmem:[%s232 + $0xe20] sm:$0xff]
      %v700 = vld [vmem:[%s232 + $0xe28] sm:$0xff]
      %v701 = vld [vmem:[%s232 + $0xe30] sm:$0xff]
      %v702 = vld [vmem:[%s232 + $0xe38] sm:$0xff]
      %v703 = vld [vmem:[%s232 + $0xe40] sm:$0xff]
      %v704 = vld [vmem:[%s232 + $0xe48] sm:$0xff]
      %v705 = vld [vmem:[%s232 + $0xe50] sm:$0xff]
      %v706 = vld [vmem:[%s232 + $0xe58] sm:$0xff]
      %v707 = vld [vmem:[%s232 + $0xe60] sm:$0xff]
      %v708 = vld [vmem:[%s232 + $0xe68] sm:$0xff]
      %v709 = vld [vmem:[%s232 + $0xe70] sm:$0xff]
      %v710 = vld [vmem:[%s232 + $0xe78] sm:$0xff]
      %v711 = vld [vmem:[%s232 + $0xe80] sm:$0xff]
      %v712 = vld [vmem:[%s232 + $0xe88] sm:$0xff]
      %v713 = vld [vmem:[%s232 + $0xe90] sm:$0xff]
      %v714 = vld [vmem:[%s232 + $0xe98] sm:$0xff]
      %v715 = vld [vmem:[%s232 + $0xea0] sm:$0xff]
      %v716 = vld [vmem:[%s232 + $0xea8] sm:$0xff]
      %v717 = vld [vmem:[%s232 + $0xeb0] sm:$0xff]
      %v718 = vld [vmem:[%s232 + $0xeb8] sm:$0xff]
      %v719 = vld [vmem:[%s232 + $0xec0] sm:$0xff]
      %v720 = vld [vmem:[%s232 + $0xec8] sm:$0xff]
      %v721 = vld [vmem:[%s232 + $0xed0] sm:$0xff]
      %v722 = vld [vmem:[%s232 + $0xed8] sm:$0xff]
      %v723 = vld [vmem:[%s232 + $0xee0] sm:$0xff]
      %v724 = vld [vmem:[%s232 + $0xee8] sm:$0xff]
      %v725 = vld [vmem:[%s232 + $0xef0] sm:$0xff]
      %v726 = vld [vmem:[%s232 + $0xef8] sm:$0xff]
      %v727 = vld [vmem:[%s232 + $0xf00] sm:$0xff]
      %v728 = vld [vmem:[%s232 + $0xf08] sm:$0xff]
      %v729 = vld [vmem:[%s232 + $0xf10] sm:$0xff]
      %v730 = vld [vmem:[%s232 + $0xf18] sm:$0xff]
      %v731 = vld [vmem:[%s232 + $0xf20] sm:$0xff]
      %v732 = vld [vmem:[%s232 + $0xf28] sm:$0xff]
      %v733 = vld [vmem:[%s232 + $0xf30] sm:$0xff]
      %v734 = vld [vmem:[%s232 + $0xf38] sm:$0xff]
      %v735 = vld [vmem:[%s232 + $0xf40] sm:$0xff]
      %v736 = vld [vmem:[%s232 + $0xf48] sm:$0xff]
      %v737 = vld [vmem:[%s232 + $0xf50] sm:$0xff]
      %v738 = vld [vmem:[%s232 + $0xf58] sm:$0xff]
      %v739 = vld [vmem:[%s232 + $0xf60] sm:$0xff]
      %v740 = vld [vmem:[%s232 + $0xf68] sm:$0xff]
      %v741 = vld [vmem:[%s232 + $0xf70] sm:$0xff]
      %v742 = vld [vmem:[%s232 + $0xf78] sm:$0xff]
      %v743 = vld [vmem:[%s232 + $0xf80] sm:$0xff]
      %v744 = vld [vmem:[%s232 + $0xf88] sm:$0xff]
      %v745 = vld [vmem:[%s232 + $0xf90] sm:$0xff]
      %v746 = vld [vmem:[%s232 + $0xf98] sm:$0xff]
      %v747 = vld [vmem:[%s232 + $0xfa0] sm:$0xff]
      %v748 = vld [vmem:[%s232 + $0xfa8] sm:$0xff]
      %v749 = vld [vmem:[%s232 + $0xfb0] sm:$0xff]
      %v750 = vld [vmem:[%s232 + $0xfb8] sm:$0xff]
      %v751 = vld [vmem:[%s232 + $0xfc0] sm:$0xff]
      %v752 = vld [vmem:[%s232 + $0xfc8] sm:$0xff]
      %v753 = vld [vmem:[%s232 + $0xfd0] sm:$0xff]
      %v754 = vld [vmem:[%s232 + $0xfd8] sm:$0xff]
      %v755 = vld [vmem:[%s232 + $0xfe0] sm:$0xff]
      %v756 = vld [vmem:[%s232 + $0xfe8] sm:$0xff]
      %v757 = vld [vmem:[%s232 + $0xff0] sm:$0xff]
      %v758 = vld [vmem:[%s232 + $0xff8] sm:$0xff]
      %v759 = vld [vmem:[%s232 + $0x1000] sm:$0xff]
      %v760 = vld [vmem:[%s232 + $0x1008] sm:$0xff]
      %v761 = vld [vmem:[%s232 + $0x1010] sm:$0xff]
      %v762 = vld [vmem:[%s232 + $0x1018] sm:$0xff]
      %v763 = vld [vmem:[%s232 + $0x1020] sm:$0xff]
      %v764 = vld [vmem:[%s232 + $0x1028] sm:$0xff]
      %v765 = vld [vmem:[%s232 + $0x1030] sm:$0xff]
      %v766 = vld [vmem:[%s232 + $0x1038] sm:$0xff]
      %v767 = vld [vmem:[%s232 + $0x1040] sm:$0xff]
      %v768 = vld [vmem:[%s232 + $0x1048] sm:$0xff]
      %v769 = vld [vmem:[%s232 + $0x1050] sm:$0xff]
      %v770 = vld [vmem:[%s232 + $0x1058] sm:$0xff]
      %v771 = vld [vmem:[%s232 + $0x1060] sm:$0xff]
      %v772 = vld [vmem:[%s232 + $0x1068] sm:$0xff]
      %v773 = vld [vmem:[%s232 + $0x1070] sm:$0xff]
      %v774 = vld [vmem:[%s232 + $0x1078] sm:$0xff]
      %v775 = vld [vmem:[%s232 + $0x1080] sm:$0xff]
      %v776 = vld [vmem:[%s232 + $0x1088] sm:$0xff]
      %v777 = vld [vmem:[%s232 + $0x1090] sm:$0xff]
      %v778 = vld [vmem:[%s232 + $0x1098] sm:$0xff]
      %v779 = vld [vmem:[%s232 + $0x10a0] sm:$0xff]
      %v780 = vld [vmem:[%s232 + $0x10a8] sm:$0xff]
      %v781 = vld [vmem:[%s232 + $0x10b0] sm:$0xff]
      %v782 = vld [vmem:[%s232 + $0x10b8] sm:$0xff]
      %v783 = vld [vmem:[%s232 + $0x10c0] sm:$0xff]
      %v784 = vld [vmem:[%s232 + $0x10c8] sm:$0xff]
      %v785 = vld [vmem:[%s232 + $0x10d0] sm:$0xff]
      %v786 = vld [vmem:[%s232 + $0x10d8] sm:$0xff]
      %v787 = vld [vmem:[%s232 + $0x10e0] sm:$0xff]
      %v788 = vld [vmem:[%s232 + $0x10e8] sm:$0xff]
      %v789 = vld [vmem:[%s232 + $0x10f0] sm:$0xff]
      %v790 = vld [vmem:[%s232 + $0x10f8] sm:$0xff]
      %v791 = vld [vmem:[%s232 + $0x1100] sm:$0xff]
      %v792 = vld [vmem:[%s232 + $0x1108] sm:$0xff]
      %v793 = vld [vmem:[%s232 + $0x1110] sm:$0xff]
      %v794 = vld [vmem:[%s232 + $0x1118] sm:$0xff]
      %v795 = vld [vmem:[%s232 + $0x1120] sm:$0xff]
      %v796 = vld [vmem:[%s232 + $0x1128] sm:$0xff]
      %v797 = vld [vmem:[%s232 + $0x1130] sm:$0xff]
      %v798 = vld [vmem:[%s232 + $0x1138] sm:$0xff]
      %v799 = vld [vmem:[%s232 + $0x1140] sm:$0xff]
      %v800 = vld [vmem:[%s232 + $0x1148] sm:$0xff]
      %v801 = vld [vmem:[%s232 + $0x1150] sm:$0xff]
      %v802 = vld [vmem:[%s232 + $0x1158] sm:$0xff]
      %v803 = vld [vmem:[%s232 + $0x1160] sm:$0xff]
      %v804 = vld [vmem:[%s232 + $0x1168] sm:$0xff]
      %v805 = vld [vmem:[%s232 + $0x1170] sm:$0xff]
      %v806 = vld [vmem:[%s232 + $0x1178] sm:$0xff]
      %v807 = vld [vmem:[%s232 + $0x1180] sm:$0xff]
      %v808 = vld [vmem:[%s232 + $0x1188] sm:$0xff]
      %v809 = vld [vmem:[%s232 + $0x1190] sm:$0xff]
      %v810 = vld [vmem:[%s232 + $0x1198] sm:$0xff]
      %v811 = vld [vmem:[%s232 + $0x11a0] sm:$0xff]
      %v812 = vld [vmem:[%s232 + $0x11a8] sm:$0xff]
      %v813 = vld [vmem:[%s232 + $0x11b0] sm:$0xff]
      %v814 = vld [vmem:[%s232 + $0x11b8] sm:$0xff]
      %v815 = vld [vmem:[%s232 + $0x11c0] sm:$0xff]
      %v816 = vld [vmem:[%s232 + $0x11c8] sm:$0xff]
      %v817 = vld [vmem:[%s232 + $0x11d0] sm:$0xff]
      %v818 = vld [vmem:[%s232 + $0x11d8] sm:$0xff]
      %v819 = vld [vmem:[%s232 + $0x11e0] sm:$0xff]
      %v820 = vld [vmem:[%s232 + $0x11e8] sm:$0xff]
      %v821 = vld [vmem:[%s232 + $0x11f0] sm:$0xff]
      %v822 = vld [vmem:[%s232 + $0x11f8] sm:$0xff]
      %v823 = vld [vmem:[%s232 + $0x1200] sm:$0xff]
      %v824 = vld [vmem:[%s232 + $0x1208] sm:$0xff]
      %v825 = vld [vmem:[%s232 + $0x1210] sm:$0xff]
      %v826 = vld [vmem:[%s232 + $0x1218] sm:$0xff]
      %v827 = vld [vmem:[%s232 + $0x1220] sm:$0xff]
      %v828 = vld [vmem:[%s232 + $0x1228] sm:$0xff]
      %v829 = vld [vmem:[%s232 + $0x1230] sm:$0xff]
      %v830 = vld [vmem:[%s232 + $0x1238] sm:$0xff]
      %v831 = vld [vmem:[%s232 + $0x1240] sm:$0xff]
      %v832 = vld [vmem:[%s232 + $0x1248] sm:$0xff]
      %v833 = vld [vmem:[%s232 + $0x1250] sm:$0xff]
      %v834 = vld [vmem:[%s232 + $0x1258] sm:$0xff]
      %v835 = vld [vmem:[%s232 + $0x1260] sm:$0xff]
      %v836 = vld [vmem:[%s232 + $0x1268] sm:$0xff]
      %v837 = vld [vmem:[%s232 + $0x1270] sm:$0xff]
      %v838 = vld [vmem:[%s232 + $0x1278] sm:$0xff]
      %v839 = vld [vmem:[%s232 + $0x1280] sm:$0xff]
      %v840 = vld [vmem:[%s232 + $0x1288] sm:$0xff]
      %v841 = vld [vmem:[%s232 + $0x1290] sm:$0xff]
      %v842 = vld [vmem:[%s232 + $0x1298] sm:$0xff]
      %v843 = vld [vmem:[%s232 + $0x12a0] sm:$0xff]
      %v844 = vld [vmem:[%s232 + $0x12a8] sm:$0xff]
      %v845 = vld [vmem:[%s232 + $0x12b0] sm:$0xff]
      %v846 = vld [vmem:[%s232 + $0x12b8] sm:$0xff]
      %v847 = vld [vmem:[%s232 + $0x12c0] sm:$0xff]
      %v848 = vld [vmem:[%s232 + $0x12c8] sm:$0xff]
      %v849 = vld [vmem:[%s232 + $0x12d0] sm:$0xff]
      %v850 = vld [vmem:[%s232 + $0x12d8] sm:$0xff]
      %v851 = vld [vmem:[%s232 + $0x12e0] sm:$0xff]
      %v852 = vld [vmem:[%s232 + $0x12e8] sm:$0xff]
      %v853 = vld [vmem:[%s232 + $0x12f0] sm:$0xff]
      %v854 = vld [vmem:[%s232 + $0x12f8] sm:$0xff]
      %v855 = vld [vmem:[%s232 + $0x1300] sm:$0xff]
      %v856 = vld [vmem:[%s232 + $0x1308] sm:$0xff]
      %v857 = vld [vmem:[%s232 + $0x1310] sm:$0xff]
      %v858 = vld [vmem:[%s232 + $0x1318] sm:$0xff]
      %v859 = vld [vmem:[%s232 + $0x1320] sm:$0xff]
      %v860 = vld [vmem:[%s232 + $0x1328] sm:$0xff]
      %v861 = vld [vmem:[%s232 + $0x1330] sm:$0xff]
      %v862 = vld [vmem:[%s232 + $0x1338] sm:$0xff]
      %v863 = vld [vmem:[%s232 + $0x1340] sm:$0xff]
      %v864 = vld [vmem:[%s232 + $0x1348] sm:$0xff]
      %v865 = vld [vmem:[%s232 + $0x1350] sm:$0xff]
      %v866 = vld [vmem:[%s232 + $0x1358] sm:$0xff]
      %v867 = vld [vmem:[%s232 + $0x1360] sm:$0xff]
      %v868 = vld [vmem:[%s232 + $0x1368] sm:$0xff]
      %v869 = vld [vmem:[%s232 + $0x1370] sm:$0xff]
      %v870 = vld [vmem:[%s232 + $0x1378] sm:$0xff]
      %v871 = vld [vmem:[%s232 + $0x1380] sm:$0xff]
      %v872 = vld [vmem:[%s232 + $0x1388] sm:$0xff]
      %v873 = vld [vmem:[%s232 + $0x1390] sm:$0xff]
      %v874 = vld [vmem:[%s232 + $0x1398] sm:$0xff]
      %v875 = vld [vmem:[%s232 + $0x13a0] sm:$0xff]
      %v876 = vld [vmem:[%s232 + $0x13a8] sm:$0xff]
      %v877 = vld [vmem:[%s232 + $0x13b0] sm:$0xff]
      %v878 = vld [vmem:[%s232 + $0x13b8] sm:$0xff]
      %v879 = vld [vmem:[%s232 + $0x13c0] sm:$0xff]
      %v880 = vld [vmem:[%s232 + $0x13c8] sm:$0xff]
      %v881 = vld [vmem:[%s232 + $0x13d0] sm:$0xff]
      %v882 = vld [vmem:[%s232 + $0x13d8] sm:$0xff]
      %v883 = vld [vmem:[%s232 + $0x13e0] sm:$0xff]
      %v884 = vld [vmem:[%s232 + $0x13e8] sm:$0xff]
      %v885 = vld [vmem:[%s232 + $0x13f0] sm:$0xff]
      %v886 = vld [vmem:[%s232 + $0x13f8] sm:$0xff]
      %v887 = vld [vmem:[%s232 + $0x1400] sm:$0xff]
      %v888 = vld [vmem:[%s232 + $0x1408] sm:$0xff]
      %v889 = vld [vmem:[%s232 + $0x1410] sm:$0xff]
      %v890 = vld [vmem:[%s232 + $0x1418] sm:$0xff]
      %v891 = vld [vmem:[%s232 + $0x1420] sm:$0xff]
      %v892 = vld [vmem:[%s232 + $0x1428] sm:$0xff]
      %v893 = vld [vmem:[%s232 + $0x1430] sm:$0xff]
      %v894 = vld [vmem:[%s232 + $0x1438] sm:$0xff]
      %v895 = vld [vmem:[%s232 + $0x1440] sm:$0xff]
      %v896 = vld [vmem:[%s232 + $0x1448] sm:$0xff]
      %v897 = vld [vmem:[%s232 + $0x1450] sm:$0xff]
      %v898 = vld [vmem:[%s232 + $0x1458] sm:$0xff]
      %v899 = vld [vmem:[%s232 + $0x1460] sm:$0xff]
      %v900 = vld [vmem:[%s232 + $0x1468] sm:$0xff]
      %v901 = vld [vmem:[%s232 + $0x1470] sm:$0xff]
      %v902 = vld [vmem:[%s232 + $0x1478] sm:$0xff]
      %v903 = vld [vmem:[%s232 + $0x1480] sm:$0xff]
      %v904 = vld [vmem:[%s232 + $0x1488] sm:$0xff]
      %v905 = vld [vmem:[%s232 + $0x1490] sm:$0xff]
      %v906 = vld [vmem:[%s232 + $0x1498] sm:$0xff]
      %v907 = vld [vmem:[%s232 + $0x14a0] sm:$0xff]
      %v908 = vld [vmem:[%s232 + $0x14a8] sm:$0xff]
      %v909 = vld [vmem:[%s232 + $0x14b0] sm:$0xff]
      %v910 = vld [vmem:[%s232 + $0x14b8] sm:$0xff]
      %v911 = vld [vmem:[%s232 + $0x14c0] sm:$0xff]
      %v912 = vld [vmem:[%s232 + $0x14c8] sm:$0xff]
      %v913 = vld [vmem:[%s232 + $0x14d0] sm:$0xff]
      %v914 = vld [vmem:[%s232 + $0x14d8] sm:$0xff]
      %v915 = vld [vmem:[%s232 + $0x14e0] sm:$0xff]
      %v916 = vld [vmem:[%s232 + $0x14e8] sm:$0xff]
      %v917 = vld [vmem:[%s232 + $0x14f0] sm:$0xff]
      %v918 = vld [vmem:[%s232 + $0x14f8] sm:$0xff]
      %v919 = vld [vmem:[%s232 + $0x1500] sm:$0xff]
      %v920 = vld [vmem:[%s232 + $0x1508] sm:$0xff]
      %v921 = vld [vmem:[%s232 + $0x1510] sm:$0xff]
      %v922 = vld [vmem:[%s232 + $0x1518] sm:$0xff]
      %v923 = vld [vmem:[%s232 + $0x1520] sm:$0xff]
      %v924 = vld [vmem:[%s232 + $0x1528] sm:$0xff]
      %v925 = vld [vmem:[%s232 + $0x1530] sm:$0xff]
      %v926 = vld [vmem:[%s232 + $0x1538] sm:$0xff]
      %v927 = vld [vmem:[%s232 + $0x1540] sm:$0xff]
      %v928 = vld [vmem:[%s232 + $0x1548] sm:$0xff]
      %v929 = vld [vmem:[%s232 + $0x1550] sm:$0xff]
      %v930 = vld [vmem:[%s232 + $0x1558] sm:$0xff]
      %v931 = vld [vmem:[%s232 + $0x1560] sm:$0xff]
      %v932 = vld [vmem:[%s232 + $0x1568] sm:$0xff]
      %v933 = vld [vmem:[%s232 + $0x1570] sm:$0xff]
      %v934 = vld [vmem:[%s232 + $0x1578] sm:$0xff]
      %v935 = vld [vmem:[%s232 + $0x1580] sm:$0xff]
      %v936 = vld [vmem:[%s232 + $0x1588] sm:$0xff]
      %v937 = vld [vmem:[%s232 + $0x1590] sm:$0xff]
      %v938 = vld [vmem:[%s232 + $0x1598] sm:$0xff]
      %v939 = vld [vmem:[%s232 + $0x15a0] sm:$0xff]
      %v940 = vld [vmem:[%s232 + $0x15a8] sm:$0xff]
      %v941 = vld [vmem:[%s232 + $0x15b0] sm:$0xff]
      %v942 = vld [vmem:[%s232 + $0x15b8] sm:$0xff]
      %v943 = vld [vmem:[%s232 + $0x15c0] sm:$0xff]
      %v944 = vld [vmem:[%s232 + $0x15c8] sm:$0xff]
      %v945 = vld [vmem:[%s232 + $0x15d0] sm:$0xff]
      %v946 = vld [vmem:[%s232 + $0x15d8] sm:$0xff]
      %v947 = vld [vmem:[%s232 + $0x15e0] sm:$0xff]
      %v948 = vld [vmem:[%s232 + $0x15e8] sm:$0xff]
      %v949 = vld [vmem:[%s232 + $0x15f0] sm:$0xff]
      %v950 = vld [vmem:[%s232 + $0x15f8] sm:$0xff]
      %v951 = vld [vmem:[%s232 + $0x1600] sm:$0xff]
      %v952 = vld [vmem:[%s232 + $0x1608] sm:$0xff]
      %v953 = vld [vmem:[%s232 + $0x1610] sm:$0xff]
      %v954 = vld [vmem:[%s232 + $0x1618] sm:$0xff]
      %v955 = vld [vmem:[%s232 + $0x1620] sm:$0xff]
      %v956 = vld [vmem:[%s232 + $0x1628] sm:$0xff]
      %v957 = vld [vmem:[%s232 + $0x1630] sm:$0xff]
      %v958 = vld [vmem:[%s232 + $0x1638] sm:$0xff]
      %v959 = vld [vmem:[%s232 + $0x1640] sm:$0xff]
      %v960 = vld [vmem:[%s232 + $0x1648] sm:$0xff]
      %v961 = vld [vmem:[%s232 + $0x1650] sm:$0xff]
      %v962 = vld [vmem:[%s232 + $0x1658] sm:$0xff]
      %v963 = vld [vmem:[%s232 + $0x1660] sm:$0xff]
      %v964 = vld [vmem:[%s232 + $0x1668] sm:$0xff]
      %v965 = vld [vmem:[%s232 + $0x1670] sm:$0xff]
      %v966 = vld [vmem:[%s232 + $0x1678] sm:$0xff]
      %v967 = vld [vmem:[%s232 + $0x1680] sm:$0xff]
      %v968 = vld [vmem:[%s232 + $0x1688] sm:$0xff]
      %v969 = vld [vmem:[%s232 + $0x1690] sm:$0xff]
      %v970 = vld [vmem:[%s232 + $0x1698] sm:$0xff]
      %v971 = vld [vmem:[%s232 + $0x16a0] sm:$0xff]
      %v972 = vld [vmem:[%s232 + $0x16a8] sm:$0xff]
      %v973 = vld [vmem:[%s232 + $0x16b0] sm:$0xff]
      %v974 = vld [vmem:[%s232 + $0x16b8] sm:$0xff]
      %v975 = vld [vmem:[%s232 + $0x16c0] sm:$0xff]
      %v976 = vld [vmem:[%s232 + $0x16c8] sm:$0xff]
      %v977 = vld [vmem:[%s232 + $0x16d0] sm:$0xff]
      %v978 = vld [vmem:[%s232 + $0x16d8] sm:$0xff]
      %v979 = vld [vmem:[%s232 + $0x16e0] sm:$0xff]
      %v980 = vld [vmem:[%s232 + $0x16e8] sm:$0xff]
      %v981 = vld [vmem:[%s232 + $0x16f0] sm:$0xff]
      %v982 = vld [vmem:[%s232 + $0x16f8] sm:$0xff]
      %v983 = vld [vmem:[%s232 + $0x1700] sm:$0xff]
      %v984 = vld [vmem:[%s232 + $0x1708] sm:$0xff]
      %v985 = vld [vmem:[%s232 + $0x1710] sm:$0xff]
      %v986 = vld [vmem:[%s232 + $0x1718] sm:$0xff]
      %v987 = vld [vmem:[%s232 + $0x1720] sm:$0xff]
      %v988 = vld [vmem:[%s232 + $0x1728] sm:$0xff]
      %v989 = vld [vmem:[%s232 + $0x1730] sm:$0xff]
      %v990 = vld [vmem:[%s232 + $0x1738] sm:$0xff]
      %v991 = vld [vmem:[%s232 + $0x1740] sm:$0xff]
      %v992 = vld [vmem:[%s232 + $0x1748] sm:$0xff]
      %v993 = vld [vmem:[%s232 + $0x1750] sm:$0xff]
      %v994 = vld [vmem:[%s232 + $0x1758] sm:$0xff]
      %v995 = vld [vmem:[%s232 + $0x1760] sm:$0xff]
      %v996 = vld [vmem:[%s232 + $0x1768] sm:$0xff]
      %v997 = vld [vmem:[%s232 + $0x1770] sm:$0xff]
      %v998 = vld [vmem:[%s232 + $0x1778] sm:$0xff]
      %v999 = vld [vmem:[%s232 + $0x1780] sm:$0xff]
      %v1000 = vld [vmem:[%s232 + $0x1788] sm:$0xff]
      %v1001 = vld [vmem:[%s232 + $0x1790] sm:$0xff]
      %v1002 = vld [vmem:[%s232 + $0x1798] sm:$0xff]
      %v1003 = vld [vmem:[%s232 + $0x17a0] sm:$0xff]
      %v1004 = vld [vmem:[%s232 + $0x17a8] sm:$0xff]
      %v1005 = vld [vmem:[%s232 + $0x17b0] sm:$0xff]
      %v1006 = vld [vmem:[%s232 + $0x17b8] sm:$0xff]
      %v1007 = vld [vmem:[%s232 + $0x17c0] sm:$0xff]
      %v1008 = vld [vmem:[%s232 + $0x17c8] sm:$0xff]
      %v1009 = vld [vmem:[%s232 + $0x17d0] sm:$0xff]
      %v1010 = vld [vmem:[%s232 + $0x17d8] sm:$0xff]
      %v1011 = vld [vmem:[%s232 + $0x17e0] sm:$0xff]
      %v1012 = vld [vmem:[%s232 + $0x17e8] sm:$0xff]
      %v1013 = vld [vmem:[%s232 + $0x17f0] sm:$0xff]
      %v1014 = vld [vmem:[%s232 + $0x17f8] sm:$0xff]
      %v1015 = vld [vmem:[%s232 + $0x1800] sm:$0xff]
      %v1016 = vld [vmem:[%s232 + $0x1808] sm:$0xff]
      %v1017 = vld [vmem:[%s232 + $0x1810] sm:$0xff]
      %v1018 = vld [vmem:[%s232 + $0x1818] sm:$0xff]
      %v1019 = vld [vmem:[%s232 + $0x1820] sm:$0xff]
      %v1020 = vld [vmem:[%s232 + $0x1828] sm:$0xff]
      %v1021 = vld [vmem:[%s232 + $0x1830] sm:$0xff]
      %v1022 = vld [vmem:[%s232 + $0x1838] sm:$0xff]
      %v1023 = vld [vmem:[%s232 + $0x1840] sm:$0xff]
      %v1024 = vld [vmem:[%s232 + $0x1848] sm:$0xff]
      %v1025 = vld [vmem:[%s232 + $0x1850] sm:$0xff]
      %v1026 = vld [vmem:[%s232 + $0x1858] sm:$0xff]
      %v1027 = vld [vmem:[%s232 + $0x1860] sm:$0xff]
      %v1028 = vld [vmem:[%s232 + $0x1868] sm:$0xff]
      %v1029 = vld [vmem:[%s232 + $0x1870] sm:$0xff]
      %v1030 = vld [vmem:[%s232 + $0x1878] sm:$0xff]
      %v1031 = vld [vmem:[%s232 + $0x1880] sm:$0xff]
      %v1032 = vld [vmem:[%s232 + $0x1888] sm:$0xff]
      %v1033 = vld [vmem:[%s232 + $0x1890] sm:$0xff]
      %v1034 = vld [vmem:[%s232 + $0x1898] sm:$0xff]
      %v1035 = vld [vmem:[%s232 + $0x18a0] sm:$0xff]
      %v1036 = vld [vmem:[%s232 + $0x18a8] sm:$0xff]
      %v1037 = vld [vmem:[%s232 + $0x18b0] sm:$0xff]
      %v1038 = vld [vmem:[%s232 + $0x18b8] sm:$0xff]
      %v1039 = vld [vmem:[%s232 + $0x18c0] sm:$0xff]
      %v1040 = vld [vmem:[%s232 + $0x18c8] sm:$0xff]
      %v1041 = vld [vmem:[%s232 + $0x18d0] sm:$0xff]
      %v1042 = vld [vmem:[%s232 + $0x18d8] sm:$0xff]
      %v1043 = vld [vmem:[%s232 + $0x18e0] sm:$0xff]
      %v1044 = vld [vmem:[%s232 + $0x18e8] sm:$0xff]
      %v1045 = vld [vmem:[%s232 + $0x18f0] sm:$0xff]
      %v1046 = vld [vmem:[%s232 + $0x18f8] sm:$0xff]
      %v1054 = vcombine.high %v240, %v240
      %v1056 = vunpack.c.l.s4 1966171168
      %v1057 = vunpack.c.0.s8 %v1056
      %v1058 = vlaneseq
      %v1059 = vshrl.u32 %v1058, 7
      %v1060 = vsub.s32 %v1057, %v1059
      %v1061 = vrot.slane %v240, %v1060
      %v1063 = vunpack.c.l.s4 1966171168
      %v1064 = vunpack.c.0.s8 %v1063
      %v1065 = vlaneseq
      %v1066 = vshrl.u32 %v1065, 7
      %v1067 = vsub.s32 %v1064, %v1066
      %v1068 = vrot.slane %v1054, %v1067
      %v1069 = vcombine.high %v1061, %v1061
      %v1070 = vcombine.high %v1068, %v1068
      %v1072 = vunpack.c.l.s4 1966171168
      %v1073 = vunpack.c.0.s8 %v1072
      %v1074 = vlaneseq
      %v1075 = vshrl.u32 %v1074, 7
      %v1076 = vsub.s32 %v1073, %v1075
      %v1077 = vrot.slane %v1061, %v1076
      %v1079 = vunpack.c.l.s4 1966171168
      %v1080 = vunpack.c.0.s8 %v1079
      %v1081 = vlaneseq
      %v1082 = vshrl.u32 %v1081, 7
      %v1083 = vsub.s32 %v1080, %v1082
      %v1084 = vrot.slane %v1068, %v1083
      %v1086 = vunpack.c.l.s4 1966171168
      %v1087 = vunpack.c.0.s8 %v1086
      %v1088 = vlaneseq
      %v1089 = vshrl.u32 %v1088, 7
      %v1090 = vsub.s32 %v1087, %v1089
      %v1091 = vrot.slane %v1069, %v1090
      %v1093 = vunpack.c.l.s4 1966171168
      %v1094 = vunpack.c.0.s8 %v1093
      %v1095 = vlaneseq
      %v1096 = vshrl.u32 %v1095, 7
      %v1097 = vsub.s32 %v1094, %v1096
      %v1098 = vrot.slane %v1070, %v1097
      %v1099 = vcombine.high %v1077, %v1077
      %v1100 = vcombine.high %v1084, %v1084
      %v1101 = vcombine.high %v1091, %v1091
      %v1102 = vcombine.high %v1098, %v1098
      %v1103 = vcombine.high %v241, %v241
      %v1105 = vunpack.c.l.s4 1966171168
      %v1106 = vunpack.c.0.s8 %v1105
      %v1107 = vlaneseq
      %v1108 = vshrl.u32 %v1107, 7
      %v1109 = vsub.s32 %v1106, %v1108
      %v1110 = vrot.slane %v241, %v1109
      %v1112 = vunpack.c.l.s4 1966171168
      %v1113 = vunpack.c.0.s8 %v1112
      %v1114 = vlaneseq
      %v1115 = vshrl.u32 %v1114, 7
      %v1116 = vsub.s32 %v1113, %v1115
      %v1117 = vrot.slane %v1103, %v1116
      %v1118 = vcombine.high %v1110, %v1110
      %v1119 = vcombine.high %v1117, %v1117
      %v1121 = vunpack.c.l.s4 1966171168
      %v1122 = vunpack.c.0.s8 %v1121
      %v1123 = vlaneseq
      %v1124 = vshrl.u32 %v1123, 7
      %v1125 = vsub.s32 %v1122, %v1124
      %v1126 = vrot.slane %v1110, %v1125
      %v1128 = vunpack.c.l.s4 1966171168
      %v1129 = vunpack.c.0.s8 %v1128
      %v1130 = vlaneseq
      %v1131 = vshrl.u32 %v1130, 7
      %v1132 = vsub.s32 %v1129, %v1131
      %v1133 = vrot.slane %v1117, %v1132
      %v1135 = vunpack.c.l.s4 1966171168
      %v1136 = vunpack.c.0.s8 %v1135
      %v1137 = vlaneseq
      %v1138 = vshrl.u32 %v1137, 7
      %v1139 = vsub.s32 %v1136, %v1138
      %v1140 = vrot.slane %v1118, %v1139
      %v1142 = vunpack.c.l.s4 1966171168
      %v1143 = vunpack.c.0.s8 %v1142
      %v1144 = vlaneseq
      %v1145 = vshrl.u32 %v1144, 7
      %v1146 = vsub.s32 %v1143, %v1145
      %v1147 = vrot.slane %v1119, %v1146
      %v1148 = vcombine.high %v1126, %v1126
      %v1149 = vcombine.high %v1133, %v1133
      %v1150 = vcombine.high %v1140, %v1140
      %v1151 = vcombine.high %v1147, %v1147
      %v1152 = vcombine.high %v242, %v242
      %v1154 = vunpack.c.l.s4 1966171168
      %v1155 = vunpack.c.0.s8 %v1154
      %v1156 = vlaneseq
      %v1157 = vshrl.u32 %v1156, 7
      %v1158 = vsub.s32 %v1155, %v1157
      %v1159 = vrot.slane %v242, %v1158
      %v1161 = vunpack.c.l.s4 1966171168
      %v1162 = vunpack.c.0.s8 %v1161
      %v1163 = vlaneseq
      %v1164 = vshrl.u32 %v1163, 7
      %v1165 = vsub.s32 %v1162, %v1164
      %v1166 = vrot.slane %v1152, %v1165
      %v1167 = vcombine.high %v1159, %v1159
      %v1168 = vcombine.high %v1166, %v1166
      %v1170 = vunpack.c.l.s4 1966171168
      %v1171 = vunpack.c.0.s8 %v1170
      %v1172 = vlaneseq
      %v1173 = vshrl.u32 %v1172, 7
      %v1174 = vsub.s32 %v1171, %v1173
      %v1175 = vrot.slane %v1159, %v1174
      %v1177 = vunpack.c.l.s4 1966171168
      %v1178 = vunpack.c.0.s8 %v1177
      %v1179 = vlaneseq
      %v1180 = vshrl.u32 %v1179, 7
      %v1181 = vsub.s32 %v1178, %v1180
      %v1182 = vrot.slane %v1166, %v1181
      %v1184 = vunpack.c.l.s4 1966171168
      %v1185 = vunpack.c.0.s8 %v1184
      %v1186 = vlaneseq
      %v1187 = vshrl.u32 %v1186, 7
      %v1188 = vsub.s32 %v1185, %v1187
      %v1189 = vrot.slane %v1167, %v1188
      %v1191 = vunpack.c.l.s4 1966171168
      %v1192 = vunpack.c.0.s8 %v1191
      %v1193 = vlaneseq
      %v1194 = vshrl.u32 %v1193, 7
      %v1195 = vsub.s32 %v1192, %v1194
      %v1196 = vrot.slane %v1168, %v1195
      %v1197 = vcombine.high %v1175, %v1175
      %v1198 = vcombine.high %v1182, %v1182
      %v1199 = vcombine.high %v1189, %v1189
      %v1200 = vcombine.high %v1196, %v1196
      %v1201 = vcombine.high %v243, %v243
      %v1203 = vunpack.c.l.s4 1966171168
      %v1204 = vunpack.c.0.s8 %v1203
      %v1205 = vlaneseq
      %v1206 = vshrl.u32 %v1205, 7
      %v1207 = vsub.s32 %v1204, %v1206
      %v1208 = vrot.slane %v243, %v1207
      %v1210 = vunpack.c.l.s4 1966171168
      %v1211 = vunpack.c.0.s8 %v1210
      %v1212 = vlaneseq
      %v1213 = vshrl.u32 %v1212, 7
      %v1214 = vsub.s32 %v1211, %v1213
      %v1215 = vrot.slane %v1201, %v1214
      %v1216 = vcombine.high %v1208, %v1208
      %v1217 = vcombine.high %v1215, %v1215
      %v1219 = vunpack.c.l.s4 1966171168
      %v1220 = vunpack.c.0.s8 %v1219
      %v1221 = vlaneseq
      %v1222 = vshrl.u32 %v1221, 7
      %v1223 = vsub.s32 %v1220, %v1222
      %v1224 = vrot.slane %v1208, %v1223
      %v1226 = vunpack.c.l.s4 1966171168
      %v1227 = vunpack.c.0.s8 %v1226
      %v1228 = vlaneseq
      %v1229 = vshrl.u32 %v1228, 7
      %v1230 = vsub.s32 %v1227, %v1229
      %v1231 = vrot.slane %v1215, %v1230
      %v1233 = vunpack.c.l.s4 1966171168
      %v1234 = vunpack.c.0.s8 %v1233
      %v1235 = vlaneseq
      %v1236 = vshrl.u32 %v1235, 7
      %v1237 = vsub.s32 %v1234, %v1236
      %v1238 = vrot.slane %v1216, %v1237
      %v1240 = vunpack.c.l.s4 1966171168
      %v1241 = vunpack.c.0.s8 %v1240
      %v1242 = vlaneseq
      %v1243 = vshrl.u32 %v1242, 7
      %v1244 = vsub.s32 %v1241, %v1243
      %v1245 = vrot.slane %v1217, %v1244
      %v1246 = vcombine.high %v1224, %v1224
      %v1247 = vcombine.high %v1231, %v1231
      %v1248 = vcombine.high %v1238, %v1238
      %v1249 = vcombine.high %v1245, %v1245
      %v1250 = vcombine.high %v244, %v244
      %v1252 = vunpack.c.l.s4 1966171168
      %v1253 = vunpack.c.0.s8 %v1252
      %v1254 = vlaneseq
      %v1255 = vshrl.u32 %v1254, 7
      %v1256 = vsub.s32 %v1253, %v1255
      %v1257 = vrot.slane %v244, %v1256
      %v1259 = vunpack.c.l.s4 1966171168
      %v1260 = vunpack.c.0.s8 %v1259
      %v1261 = vlaneseq
      %v1262 = vshrl.u32 %v1261, 7
      %v1263 = vsub.s32 %v1260, %v1262
      %v1264 = vrot.slane %v1250, %v1263
      %v1265 = vcombine.high %v1257, %v1257
      %v1266 = vcombine.high %v1264, %v1264
      %v1268 = vunpack.c.l.s4 1966171168
      %v1269 = vunpack.c.0.s8 %v1268
      %v1270 = vlaneseq
      %v1271 = vshrl.u32 %v1270, 7
      %v1272 = vsub.s32 %v1269, %v1271
      %v1273 = vrot.slane %v1257, %v1272
      %v1275 = vunpack.c.l.s4 1966171168
      %v1276 = vunpack.c.0.s8 %v1275
      %v1277 = vlaneseq
      %v1278 = vshrl.u32 %v1277, 7
      %v1279 = vsub.s32 %v1276, %v1278
      %v1280 = vrot.slane %v1264, %v1279
      %v1282 = vunpack.c.l.s4 1966171168
      %v1283 = vunpack.c.0.s8 %v1282
      %v1284 = vlaneseq
      %v1285 = vshrl.u32 %v1284, 7
      %v1286 = vsub.s32 %v1283, %v1285
      %v1287 = vrot.slane %v1265, %v1286
      %v1289 = vunpack.c.l.s4 1966171168
      %v1290 = vunpack.c.0.s8 %v1289
      %v1291 = vlaneseq
      %v1292 = vshrl.u32 %v1291, 7
      %v1293 = vsub.s32 %v1290, %v1292
      %v1294 = vrot.slane %v1266, %v1293
      %v1295 = vcombine.high %v1273, %v1273
      %v1296 = vcombine.high %v1280, %v1280
      %v1297 = vcombine.high %v1287, %v1287
      %v1298 = vcombine.high %v1294, %v1294
      %v1299 = vcombine.high %v245, %v245
      %v1301 = vunpack.c.l.s4 1966171168
      %v1302 = vunpack.c.0.s8 %v1301
      %v1303 = vlaneseq
      %v1304 = vshrl.u32 %v1303, 7
      %v1305 = vsub.s32 %v1302, %v1304
      %v1306 = vrot.slane %v245, %v1305
      %v1308 = vunpack.c.l.s4 1966171168
      %v1309 = vunpack.c.0.s8 %v1308
      %v1310 = vlaneseq
      %v1311 = vshrl.u32 %v1310, 7
      %v1312 = vsub.s32 %v1309, %v1311
      %v1313 = vrot.slane %v1299, %v1312
      %v1314 = vcombine.high %v1306, %v1306
      %v1315 = vcombine.high %v1313, %v1313
      %v1317 = vunpack.c.l.s4 1966171168
      %v1318 = vunpack.c.0.s8 %v1317
      %v1319 = vlaneseq
      %v1320 = vshrl.u32 %v1319, 7
      %v1321 = vsub.s32 %v1318, %v1320
      %v1322 = vrot.slane %v1306, %v1321
      %v1324 = vunpack.c.l.s4 1966171168
      %v1325 = vunpack.c.0.s8 %v1324
      %v1326 = vlaneseq
      %v1327 = vshrl.u32 %v1326, 7
      %v1328 = vsub.s32 %v1325, %v1327
      %v1329 = vrot.slane %v1313, %v1328
      %v1331 = vunpack.c.l.s4 1966171168
      %v1332 = vunpack.c.0.s8 %v1331
      %v1333 = vlaneseq
      %v1334 = vshrl.u32 %v1333, 7
      %v1335 = vsub.s32 %v1332, %v1334
      %v1336 = vrot.slane %v1314, %v1335
      %v1338 = vunpack.c.l.s4 1966171168
      %v1339 = vunpack.c.0.s8 %v1338
      %v1340 = vlaneseq
      %v1341 = vshrl.u32 %v1340, 7
      %v1342 = vsub.s32 %v1339, %v1341
      %v1343 = vrot.slane %v1315, %v1342
      %v1344 = vcombine.high %v1322, %v1322
      %v1345 = vcombine.high %v1329, %v1329
      %v1346 = vcombine.high %v1336, %v1336
      %v1347 = vcombine.high %v1343, %v1343
      %v1349 = vunpack.c.l.s4 1966171168
      %v1350 = vunpack.c.0.s8 %v1349
      %v1351 = vlaneseq
      %v1352 = vshrl.u32 %v1351, 7
      %v1353 = vsub.s32 %v1350, %v1352
      %v1354 = vrot.slane %v246, %v1353
      %v1355 = vcombine.high %v1354, %v1354
      %v1357 = vunpack.c.l.s4 1966171168
      %v1358 = vunpack.c.0.s8 %v1357
      %v1359 = vlaneseq
      %v1360 = vshrl.u32 %v1359, 7
      %v1361 = vsub.s32 %v1358, %v1360
      %v1362 = vrot.slane %v1354, %v1361
      %v1364 = vunpack.c.l.s4 1966171168
      %v1365 = vunpack.c.0.s8 %v1364
      %v1366 = vlaneseq
      %v1367 = vshrl.u32 %v1366, 7
      %v1368 = vsub.s32 %v1365, %v1367
      %v1369 = vrot.slane %v1355, %v1368
      %v2220 = vunpack.c.l.b16 %v247
      %v2221 = vunpack.c.h.b16 %v247
      %v2222 = vunpack.c.l.b16 %v248
      %v2223 = vunpack.c.h.b16 %v248
      %v2224 = vunpack.c.l.b16 %v249
      %v2225 = vunpack.c.h.b16 %v249
      %v2226 = vunpack.c.l.b16 %v250
      %v2227 = vunpack.c.h.b16 %v250
      %v2228 = vunpack.c.l.b16 %v251
      %v2229 = vunpack.c.h.b16 %v251
      %v2230 = vunpack.c.l.b16 %v252
      %v2231 = vunpack.c.h.b16 %v252
      %v2232 = vunpack.c.l.b16 %v253
      %v2233 = vunpack.c.h.b16 %v253
      %v2234 = vunpack.c.l.b16 %v254
      %v2235 = vunpack.c.h.b16 %v254
      %v2236 = vunpack.c.l.b16 %v255
      %v2237 = vunpack.c.h.b16 %v255
      %v2238 = vunpack.c.l.b16 %v256
      %v2239 = vunpack.c.h.b16 %v256
      %v2240 = vunpack.c.l.b16 %v257
      %v2241 = vunpack.c.h.b16 %v257
      %v2242 = vunpack.c.l.b16 %v258
      %v2243 = vunpack.c.h.b16 %v258
      %v2244 = vunpack.c.l.b16 %v259
      %v2245 = vunpack.c.h.b16 %v259
      %v2246 = vunpack.c.l.b16 %v260
      %v2247 = vunpack.c.h.b16 %v260
      %v2248 = vunpack.c.l.b16 %v261
      %v2249 = vunpack.c.h.b16 %v261
      %v2250 = vunpack.c.l.b16 %v262
      %v2251 = vunpack.c.h.b16 %v262
      %v2252 = vunpack.c.l.b16 %v263
      %v2253 = vunpack.c.h.b16 %v263
      %v2254 = vunpack.c.l.b16 %v264
      %v2255 = vunpack.c.h.b16 %v264
      %v2256 = vunpack.c.l.b16 %v265
      %v2257 = vunpack.c.h.b16 %v265
      %v2258 = vunpack.c.l.b16 %v266
      %v2259 = vunpack.c.h.b16 %v266
      %v2260 = vunpack.c.l.b16 %v267
      %v2261 = vunpack.c.h.b16 %v267
      %v2262 = vunpack.c.l.b16 %v268
      %v2263 = vunpack.c.h.b16 %v268
      %v2264 = vunpack.c.l.b16 %v269
      %v2265 = vunpack.c.h.b16 %v269
      %v2266 = vunpack.c.l.b16 %v270
      %v2267 = vunpack.c.h.b16 %v270
      %v2268 = vunpack.c.l.b16 %v271
      %v2269 = vunpack.c.h.b16 %v271
      %v2270 = vunpack.c.l.b16 %v272
      %v2271 = vunpack.c.h.b16 %v272
      %v2272 = vunpack.c.l.b16 %v273
      %v2273 = vunpack.c.h.b16 %v273
      %v2274 = vunpack.c.l.b16 %v274
      %v2275 = vunpack.c.h.b16 %v274
      %v2276 = vunpack.c.l.b16 %v275
      %v2277 = vunpack.c.h.b16 %v275
      %v2278 = vunpack.c.l.b16 %v276
      %v2279 = vunpack.c.h.b16 %v276
      %v2280 = vunpack.c.l.b16 %v277
      %v2281 = vunpack.c.h.b16 %v277
      %v2282 = vunpack.c.l.b16 %v278
      %v2283 = vunpack.c.h.b16 %v278
      %v2284 = vunpack.c.l.b16 %v279
      %v2285 = vunpack.c.h.b16 %v279
      %v2286 = vunpack.c.l.b16 %v280
      %v2287 = vunpack.c.h.b16 %v280
      %v2288 = vunpack.c.l.b16 %v281
      %v2289 = vunpack.c.h.b16 %v281
      %v2290 = vunpack.c.l.b16 %v282
      %v2291 = vunpack.c.h.b16 %v282
      %v2292 = vunpack.c.l.b16 %v283
      %v2293 = vunpack.c.h.b16 %v283
      %v2294 = vunpack.c.l.b16 %v284
      %v2295 = vunpack.c.h.b16 %v284
      %v2296 = vunpack.c.l.b16 %v285
      %v2297 = vunpack.c.h.b16 %v285
      %v2298 = vunpack.c.l.b16 %v286
      %v2299 = vunpack.c.h.b16 %v286
      %v2300 = vunpack.c.l.b16 %v287
      %v2301 = vunpack.c.h.b16 %v287
      %v2302 = vunpack.c.l.b16 %v288
      %v2303 = vunpack.c.h.b16 %v288
      %v2304 = vunpack.c.l.b16 %v289
      %v2305 = vunpack.c.h.b16 %v289
      %v2306 = vunpack.c.l.b16 %v290
      %v2307 = vunpack.c.h.b16 %v290
      %v2308 = vunpack.c.l.b16 %v291
      %v2309 = vunpack.c.h.b16 %v291
      %v2310 = vunpack.c.l.b16 %v292
      %v2311 = vunpack.c.h.b16 %v292
      %v2312 = vunpack.c.l.b16 %v293
      %v2313 = vunpack.c.h.b16 %v293
      %v2314 = vunpack.c.l.b16 %v294
      %v2315 = vunpack.c.h.b16 %v294
      %v2316 = vunpack.c.l.b16 %v295
      %v2317 = vunpack.c.h.b16 %v295
      %v2318 = vunpack.c.l.b16 %v296
      %v2319 = vunpack.c.h.b16 %v296
      %v2320 = vunpack.c.l.b16 %v297
      %v2321 = vunpack.c.h.b16 %v297
      %v2322 = vunpack.c.l.b16 %v298
      %v2323 = vunpack.c.h.b16 %v298
      %v2324 = vunpack.c.l.b16 %v299
      %v2325 = vunpack.c.h.b16 %v299
      %v2326 = vunpack.c.l.b16 %v300
      %v2327 = vunpack.c.h.b16 %v300
      %v2328 = vunpack.c.l.b16 %v301
      %v2329 = vunpack.c.h.b16 %v301
      %v2330 = vunpack.c.l.b16 %v302
      %v2331 = vunpack.c.h.b16 %v302
      %v2332 = vunpack.c.l.b16 %v303
      %v2333 = vunpack.c.h.b16 %v303
      %v2334 = vunpack.c.l.b16 %v304
      %v2335 = vunpack.c.h.b16 %v304
      %v2336 = vunpack.c.l.b16 %v305
      %v2337 = vunpack.c.h.b16 %v305
      %v2338 = vunpack.c.l.b16 %v306
      %v2339 = vunpack.c.h.b16 %v306
      %v2340 = vunpack.c.l.b16 %v307
      %v2341 = vunpack.c.h.b16 %v307
      %v2342 = vunpack.c.l.b16 %v308
      %v2343 = vunpack.c.h.b16 %v308
      %v2344 = vunpack.c.l.b16 %v309
      %v2345 = vunpack.c.h.b16 %v309
      %v2346 = vunpack.c.l.b16 %v310
      %v2347 = vunpack.c.h.b16 %v310
      %v2348 = vunpack.c.l.b16 %v311
      %v2349 = vunpack.c.h.b16 %v311
      %v2350 = vunpack.c.l.b16 %v312
      %v2351 = vunpack.c.h.b16 %v312
      %v2352 = vunpack.c.l.b16 %v313
      %v2353 = vunpack.c.h.b16 %v313
      %v2354 = vunpack.c.l.b16 %v314
      %v2355 = vunpack.c.h.b16 %v314
      %v2356 = vunpack.c.l.b16 %v315
      %v2357 = vunpack.c.h.b16 %v315
      %v2358 = vunpack.c.l.b16 %v316
      %v2359 = vunpack.c.h.b16 %v316
      %v2360 = vunpack.c.l.b16 %v317
      %v2361 = vunpack.c.h.b16 %v317
      %v2362 = vunpack.c.l.b16 %v318
      %v2363 = vunpack.c.h.b16 %v318
      %v2364 = vunpack.c.l.b16 %v319
      %v2365 = vunpack.c.h.b16 %v319
      %v2366 = vunpack.c.l.b16 %v320
      %v2367 = vunpack.c.h.b16 %v320
      %v2368 = vunpack.c.l.b16 %v321
      %v2369 = vunpack.c.h.b16 %v321
      %v2370 = vunpack.c.l.b16 %v322
      %v2371 = vunpack.c.h.b16 %v322
      %v2372 = vunpack.c.l.b16 %v323
      %v2373 = vunpack.c.h.b16 %v323
      %v2374 = vunpack.c.l.b16 %v324
      %v2375 = vunpack.c.h.b16 %v324
      %v2376 = vunpack.c.l.b16 %v325
      %v2377 = vunpack.c.h.b16 %v325
      %v2378 = vunpack.c.l.b16 %v326
      %v2379 = vunpack.c.h.b16 %v326
      %v2380 = vunpack.c.l.b16 %v327
      %v2381 = vunpack.c.h.b16 %v327
      %v2382 = vunpack.c.l.b16 %v328
      %v2383 = vunpack.c.h.b16 %v328
      %v2384 = vunpack.c.l.b16 %v329
      %v2385 = vunpack.c.h.b16 %v329
      %v2386 = vunpack.c.l.b16 %v330
      %v2387 = vunpack.c.h.b16 %v330
      %v2388 = vunpack.c.l.b16 %v331
      %v2389 = vunpack.c.h.b16 %v331
      %v2390 = vunpack.c.l.b16 %v332
      %v2391 = vunpack.c.h.b16 %v332
      %v2392 = vunpack.c.l.b16 %v333
      %v2393 = vunpack.c.h.b16 %v333
      %v2394 = vunpack.c.l.b16 %v334
      %v2395 = vunpack.c.h.b16 %v334
      %v2396 = vunpack.c.l.b16 %v335
      %v2397 = vunpack.c.h.b16 %v335
      %v2398 = vunpack.c.l.b16 %v336
      %v2399 = vunpack.c.h.b16 %v336
      %v2400 = vunpack.c.l.b16 %v337
      %v2401 = vunpack.c.h.b16 %v337
      %v2402 = vunpack.c.l.b16 %v338
      %v2403 = vunpack.c.h.b16 %v338
      %v2404 = vunpack.c.l.b16 %v339
      %v2405 = vunpack.c.h.b16 %v339
      %v2406 = vunpack.c.l.b16 %v340
      %v2407 = vunpack.c.h.b16 %v340
      %v2408 = vunpack.c.l.b16 %v341
      %v2409 = vunpack.c.h.b16 %v341
      %v2410 = vunpack.c.l.b16 %v342
      %v2411 = vunpack.c.h.b16 %v342
      %v2412 = vunpack.c.l.b16 %v343
      %v2413 = vunpack.c.h.b16 %v343
      %v2414 = vunpack.c.l.b16 %v344
      %v2415 = vunpack.c.h.b16 %v344
      %v2416 = vunpack.c.l.b16 %v345
      %v2417 = vunpack.c.h.b16 %v345
      %v2418 = vunpack.c.l.b16 %v346
      %v2419 = vunpack.c.h.b16 %v346
      %v2420 = vunpack.c.l.b16 %v347
      %v2421 = vunpack.c.h.b16 %v347
      %v2422 = vunpack.c.l.b16 %v348
      %v2423 = vunpack.c.h.b16 %v348
      %v2424 = vunpack.c.l.b16 %v349
      %v2425 = vunpack.c.h.b16 %v349
      %v2426 = vunpack.c.l.b16 %v350
      %v2427 = vunpack.c.h.b16 %v350
      %v2428 = vunpack.c.l.b16 %v351
      %v2429 = vunpack.c.h.b16 %v351
      %v2430 = vunpack.c.l.b16 %v352
      %v2431 = vunpack.c.h.b16 %v352
      %v2432 = vunpack.c.l.b16 %v353
      %v2433 = vunpack.c.h.b16 %v353
      %v2434 = vunpack.c.l.b16 %v354
      %v2435 = vunpack.c.h.b16 %v354
      %v2436 = vunpack.c.l.b16 %v355
      %v2437 = vunpack.c.h.b16 %v355
      %v2438 = vunpack.c.l.b16 %v356
      %v2439 = vunpack.c.h.b16 %v356
      %v2440 = vunpack.c.l.b16 %v357
      %v2441 = vunpack.c.h.b16 %v357
      %v2442 = vunpack.c.l.b16 %v358
      %v2443 = vunpack.c.h.b16 %v358
      %v2444 = vunpack.c.l.b16 %v359
      %v2445 = vunpack.c.h.b16 %v359
      %v2446 = vunpack.c.l.b16 %v360
      %v2447 = vunpack.c.h.b16 %v360
      %v2448 = vunpack.c.l.b16 %v361
      %v2449 = vunpack.c.h.b16 %v361
      %v2450 = vunpack.c.l.b16 %v362
      %v2451 = vunpack.c.h.b16 %v362
      %v2452 = vunpack.c.l.b16 %v363
      %v2453 = vunpack.c.h.b16 %v363
      %v2454 = vunpack.c.l.b16 %v364
      %v2455 = vunpack.c.h.b16 %v364
      %v2456 = vunpack.c.l.b16 %v365
      %v2457 = vunpack.c.h.b16 %v365
      %v2458 = vunpack.c.l.b16 %v366
      %v2459 = vunpack.c.h.b16 %v366
      %v2460 = vunpack.c.l.b16 %v367
      %v2461 = vunpack.c.h.b16 %v367
      %v2462 = vunpack.c.l.b16 %v368
      %v2463 = vunpack.c.h.b16 %v368
      %v2464 = vunpack.c.l.b16 %v369
      %v2465 = vunpack.c.h.b16 %v369
      %v2466 = vunpack.c.l.b16 %v370
      %v2467 = vunpack.c.h.b16 %v370
      %v2468 = vunpack.c.l.b16 %v371
      %v2469 = vunpack.c.h.b16 %v371
      %v2470 = vunpack.c.l.b16 %v372
      %v2471 = vunpack.c.h.b16 %v372
      %v2472 = vunpack.c.l.b16 %v373
      %v2473 = vunpack.c.h.b16 %v373
      %v2474 = vunpack.c.l.b16 %v374
      %v2475 = vunpack.c.h.b16 %v374
      %v2476 = vunpack.c.l.b16 %v375
      %v2477 = vunpack.c.h.b16 %v375
      %v2478 = vunpack.c.l.b16 %v376
      %v2479 = vunpack.c.h.b16 %v376
      %v2480 = vunpack.c.l.b16 %v377
      %v2481 = vunpack.c.h.b16 %v377
      %v2482 = vunpack.c.l.b16 %v378
      %v2483 = vunpack.c.h.b16 %v378
      %v2484 = vunpack.c.l.b16 %v379
      %v2485 = vunpack.c.h.b16 %v379
      %v2486 = vunpack.c.l.b16 %v380
      %v2487 = vunpack.c.h.b16 %v380
      %v2488 = vunpack.c.l.b16 %v381
      %v2489 = vunpack.c.h.b16 %v381
      %v2490 = vunpack.c.l.b16 %v382
      %v2491 = vunpack.c.h.b16 %v382
      %v2492 = vunpack.c.l.b16 %v383
      %v2493 = vunpack.c.h.b16 %v383
      %v2494 = vunpack.c.l.b16 %v384
      %v2495 = vunpack.c.h.b16 %v384
      %v2496 = vunpack.c.l.b16 %v385
      %v2497 = vunpack.c.h.b16 %v385
      %v2498 = vunpack.c.l.b16 %v386
      %v2499 = vunpack.c.h.b16 %v386
      %v2500 = vunpack.c.l.b16 %v387
      %v2501 = vunpack.c.h.b16 %v387
      %v2502 = vunpack.c.l.b16 %v388
      %v2503 = vunpack.c.h.b16 %v388
      %v2504 = vunpack.c.l.b16 %v389
      %v2505 = vunpack.c.h.b16 %v389
      %v2506 = vunpack.c.l.b16 %v390
      %v2507 = vunpack.c.h.b16 %v390
      %v2508 = vunpack.c.l.b16 %v391
      %v2509 = vunpack.c.h.b16 %v391
      %v2510 = vunpack.c.l.b16 %v392
      %v2511 = vunpack.c.h.b16 %v392
      %v2512 = vunpack.c.l.b16 %v393
      %v2513 = vunpack.c.h.b16 %v393
      %v2514 = vunpack.c.l.b16 %v394
      %v2515 = vunpack.c.h.b16 %v394
      %v2516 = vunpack.c.l.b16 %v395
      %v2517 = vunpack.c.h.b16 %v395
      %v2518 = vunpack.c.l.b16 %v396
      %v2519 = vunpack.c.h.b16 %v396
      %v2520 = vunpack.c.l.b16 %v397
      %v2521 = vunpack.c.h.b16 %v397
      %v2522 = vunpack.c.l.b16 %v398
      %v2523 = vunpack.c.h.b16 %v398
      %v2524 = vunpack.c.l.b16 %v399
      %v2525 = vunpack.c.h.b16 %v399
      %v2526 = vunpack.c.l.b16 %v400
      %v2527 = vunpack.c.h.b16 %v400
      %v2528 = vunpack.c.l.b16 %v401
      %v2529 = vunpack.c.h.b16 %v401
      %v2530 = vunpack.c.l.b16 %v402
      %v2531 = vunpack.c.h.b16 %v402
      %v2532 = vunpack.c.l.b16 %v403
      %v2533 = vunpack.c.h.b16 %v403
      %v2534 = vunpack.c.l.b16 %v404
      %v2535 = vunpack.c.h.b16 %v404
      %v2536 = vunpack.c.l.b16 %v405
      %v2537 = vunpack.c.h.b16 %v405
      %v2538 = vunpack.c.l.b16 %v406
      %v2539 = vunpack.c.h.b16 %v406
      %v2540 = vunpack.c.l.b16 %v407
      %v2541 = vunpack.c.h.b16 %v407
      %v2542 = vunpack.c.l.b16 %v408
      %v2543 = vunpack.c.h.b16 %v408
      %v2544 = vunpack.c.l.b16 %v409
      %v2545 = vunpack.c.h.b16 %v409
      %v2546 = vunpack.c.l.b16 %v410
      %v2547 = vunpack.c.h.b16 %v410
      %v2548 = vunpack.c.l.b16 %v411
      %v2549 = vunpack.c.h.b16 %v411
      %v2550 = vunpack.c.l.b16 %v412
      %v2551 = vunpack.c.h.b16 %v412
      %v2552 = vunpack.c.l.b16 %v413
      %v2553 = vunpack.c.h.b16 %v413
      %v2554 = vunpack.c.l.b16 %v414
      %v2555 = vunpack.c.h.b16 %v414
      %v2556 = vunpack.c.l.b16 %v415
      %v2557 = vunpack.c.h.b16 %v415
      %v2558 = vunpack.c.l.b16 %v416
      %v2559 = vunpack.c.h.b16 %v416
      %v2560 = vunpack.c.l.b16 %v417
      %v2561 = vunpack.c.h.b16 %v417
      %v2562 = vunpack.c.l.b16 %v418
      %v2563 = vunpack.c.h.b16 %v418
      %v2564 = vunpack.c.l.b16 %v419
      %v2565 = vunpack.c.h.b16 %v419
      %v2566 = vunpack.c.l.b16 %v420
      %v2567 = vunpack.c.h.b16 %v420
      %v2568 = vunpack.c.l.b16 %v421
      %v2569 = vunpack.c.h.b16 %v421
      %v2570 = vunpack.c.l.b16 %v422
      %v2571 = vunpack.c.h.b16 %v422
      %v2572 = vunpack.c.l.b16 %v423
      %v2573 = vunpack.c.h.b16 %v423
      %v2574 = vunpack.c.l.b16 %v424
      %v2575 = vunpack.c.h.b16 %v424
      %v2576 = vunpack.c.l.b16 %v425
      %v2577 = vunpack.c.h.b16 %v425
      %v2578 = vunpack.c.l.b16 %v426
      %v2579 = vunpack.c.h.b16 %v426
      %v2580 = vunpack.c.l.b16 %v427
      %v2581 = vunpack.c.h.b16 %v427
      %v2582 = vunpack.c.l.b16 %v428
      %v2583 = vunpack.c.h.b16 %v428
      %v2584 = vunpack.c.l.b16 %v429
      %v2585 = vunpack.c.h.b16 %v429
      %v2586 = vunpack.c.l.b16 %v430
      %v2587 = vunpack.c.h.b16 %v430
      %v2588 = vunpack.c.l.b16 %v431
      %v2589 = vunpack.c.h.b16 %v431
      %v2590 = vunpack.c.l.b16 %v432
      %v2591 = vunpack.c.h.b16 %v432
      %v2592 = vunpack.c.l.b16 %v433
      %v2593 = vunpack.c.h.b16 %v433
      %v2594 = vunpack.c.l.b16 %v434
      %v2595 = vunpack.c.h.b16 %v434
      %v2596 = vunpack.c.l.b16 %v435
      %v2597 = vunpack.c.h.b16 %v435
      %v2598 = vunpack.c.l.b16 %v436
      %v2599 = vunpack.c.h.b16 %v436
      %v2600 = vunpack.c.l.b16 %v437
      %v2601 = vunpack.c.h.b16 %v437
      %v2602 = vunpack.c.l.b16 %v438
      %v2603 = vunpack.c.h.b16 %v438
      %v2604 = vunpack.c.l.b16 %v439
      %v2605 = vunpack.c.h.b16 %v439
      %v2606 = vunpack.c.l.b16 %v440
      %v2607 = vunpack.c.h.b16 %v440
      %v2608 = vunpack.c.l.b16 %v441
      %v2609 = vunpack.c.h.b16 %v441
      %v2610 = vunpack.c.l.b16 %v442
      %v2611 = vunpack.c.h.b16 %v442
      %v2612 = vunpack.c.l.b16 %v443
      %v2613 = vunpack.c.h.b16 %v443
      %v2614 = vunpack.c.l.b16 %v444
      %v2615 = vunpack.c.h.b16 %v444
      %v2616 = vunpack.c.l.b16 %v445
      %v2617 = vunpack.c.h.b16 %v445
      %v2618 = vunpack.c.l.b16 %v446
      %v2619 = vunpack.c.h.b16 %v446
      %v2620 = vunpack.c.l.b16 %v447
      %v2621 = vunpack.c.h.b16 %v447
      %v2622 = vunpack.c.l.b16 %v448
      %v2623 = vunpack.c.h.b16 %v448
      %v2624 = vunpack.c.l.b16 %v449
      %v2625 = vunpack.c.h.b16 %v449
      %v2626 = vunpack.c.l.b16 %v450
      %v2627 = vunpack.c.h.b16 %v450
      %v2628 = vunpack.c.l.b16 %v451
      %v2629 = vunpack.c.h.b16 %v451
      %v2630 = vunpack.c.l.b16 %v452
      %v2631 = vunpack.c.h.b16 %v452
      %v2632 = vunpack.c.l.b16 %v453
      %v2633 = vunpack.c.h.b16 %v453
      %v2634 = vunpack.c.l.b16 %v454
      %v2635 = vunpack.c.h.b16 %v454
      %v2636 = vunpack.c.l.b16 %v455
      %v2637 = vunpack.c.h.b16 %v455
      %v2638 = vunpack.c.l.b16 %v456
      %v2639 = vunpack.c.h.b16 %v456
      %v2640 = vunpack.c.l.b16 %v457
      %v2641 = vunpack.c.h.b16 %v457
      %v2642 = vunpack.c.l.b16 %v458
      %v2643 = vunpack.c.h.b16 %v458
      %v2644 = vunpack.c.l.b16 %v459
      %v2645 = vunpack.c.h.b16 %v459
      %v2646 = vunpack.c.l.b16 %v460
      %v2647 = vunpack.c.h.b16 %v460
      %v2648 = vunpack.c.l.b16 %v461
      %v2649 = vunpack.c.h.b16 %v461
      %v2650 = vunpack.c.l.b16 %v462
      %v2651 = vunpack.c.h.b16 %v462
      %v2652 = vunpack.c.l.b16 %v463
      %v2653 = vunpack.c.h.b16 %v463
      %v2654 = vunpack.c.l.b16 %v464
      %v2655 = vunpack.c.h.b16 %v464
      %v2656 = vunpack.c.l.b16 %v465
      %v2657 = vunpack.c.h.b16 %v465
      %v2658 = vunpack.c.l.b16 %v466
      %v2659 = vunpack.c.h.b16 %v466
      %v2660 = vunpack.c.l.b16 %v467
      %v2661 = vunpack.c.h.b16 %v467
      %v2662 = vunpack.c.l.b16 %v468
      %v2663 = vunpack.c.h.b16 %v468
      %v2664 = vunpack.c.l.b16 %v469
      %v2665 = vunpack.c.h.b16 %v469
      %v2666 = vunpack.c.l.b16 %v470
      %v2667 = vunpack.c.h.b16 %v470
      %v2668 = vunpack.c.l.b16 %v471
      %v2669 = vunpack.c.h.b16 %v471
      %v2670 = vunpack.c.l.b16 %v472
      %v2671 = vunpack.c.h.b16 %v472
      %v2672 = vunpack.c.l.b16 %v473
      %v2673 = vunpack.c.h.b16 %v473
      %v2674 = vunpack.c.l.b16 %v474
      %v2675 = vunpack.c.h.b16 %v474
      %v2676 = vunpack.c.l.b16 %v475
      %v2677 = vunpack.c.h.b16 %v475
      %v2678 = vunpack.c.l.b16 %v476
      %v2679 = vunpack.c.h.b16 %v476
      %v2680 = vunpack.c.l.b16 %v477
      %v2681 = vunpack.c.h.b16 %v477
      %v2682 = vunpack.c.l.b16 %v478
      %v2683 = vunpack.c.h.b16 %v478
      %v2684 = vunpack.c.l.b16 %v479
      %v2685 = vunpack.c.h.b16 %v479
      %v2686 = vunpack.c.l.b16 %v480
      %v2687 = vunpack.c.h.b16 %v480
      %v2688 = vunpack.c.l.b16 %v481
      %v2689 = vunpack.c.h.b16 %v481
      %v2690 = vunpack.c.l.b16 %v482
      %v2691 = vunpack.c.h.b16 %v482
      %v2692 = vunpack.c.l.b16 %v483
      %v2693 = vunpack.c.h.b16 %v483
      %v2694 = vunpack.c.l.b16 %v484
      %v2695 = vunpack.c.h.b16 %v484
      %v2696 = vunpack.c.l.b16 %v485
      %v2697 = vunpack.c.h.b16 %v485
      %v2698 = vunpack.c.l.b16 %v486
      %v2699 = vunpack.c.h.b16 %v486
      %v2700 = vunpack.c.l.b16 %v487
      %v2701 = vunpack.c.h.b16 %v487
      %v2702 = vunpack.c.l.b16 %v488
      %v2703 = vunpack.c.h.b16 %v488
      %v2704 = vunpack.c.l.b16 %v489
      %v2705 = vunpack.c.h.b16 %v489
      %v2706 = vunpack.c.l.b16 %v490
      %v2707 = vunpack.c.h.b16 %v490
      %v2708 = vunpack.c.l.b16 %v491
      %v2709 = vunpack.c.h.b16 %v491
      %v2710 = vunpack.c.l.b16 %v492
      %v2711 = vunpack.c.h.b16 %v492
      %v2712 = vunpack.c.l.b16 %v493
      %v2713 = vunpack.c.h.b16 %v493
      %v2714 = vunpack.c.l.b16 %v494
      %v2715 = vunpack.c.h.b16 %v494
      %v2716 = vunpack.c.l.b16 %v495
      %v2717 = vunpack.c.h.b16 %v495
      %v2718 = vunpack.c.l.b16 %v496
      %v2719 = vunpack.c.h.b16 %v496
      %v2720 = vunpack.c.l.b16 %v497
      %v2721 = vunpack.c.h.b16 %v497
      %v2722 = vunpack.c.l.b16 %v498
      %v2723 = vunpack.c.h.b16 %v498
      %v2724 = vunpack.c.l.b16 %v499
      %v2725 = vunpack.c.h.b16 %v499
      %v2726 = vunpack.c.l.b16 %v500
      %v2727 = vunpack.c.h.b16 %v500
      %v2728 = vunpack.c.l.b16 %v501
      %v2729 = vunpack.c.h.b16 %v501
      %v2730 = vunpack.c.l.b16 %v502
      %v2731 = vunpack.c.h.b16 %v502
      %v2732 = vunpack.c.l.b16 %v503
      %v2733 = vunpack.c.h.b16 %v503
      %v2734 = vunpack.c.l.b16 %v504
      %v2735 = vunpack.c.h.b16 %v504
      %v2736 = vunpack.c.l.b16 %v505
      %v2737 = vunpack.c.h.b16 %v505
      %v2738 = vunpack.c.l.b16 %v506
      %v2739 = vunpack.c.h.b16 %v506
      %v2740 = vunpack.c.l.b16 %v507
      %v2741 = vunpack.c.h.b16 %v507
      %v2742 = vunpack.c.l.b16 %v508
      %v2743 = vunpack.c.h.b16 %v508
      %v2744 = vunpack.c.l.b16 %v509
      %v2745 = vunpack.c.h.b16 %v509
      %v2746 = vunpack.c.l.b16 %v510
      %v2747 = vunpack.c.h.b16 %v510
      %v2748 = vunpack.c.l.b16 %v511
      %v2749 = vunpack.c.h.b16 %v511
      %v2750 = vunpack.c.l.b16 %v512
      %v2751 = vunpack.c.h.b16 %v512
      %v2752 = vunpack.c.l.b16 %v513
      %v2753 = vunpack.c.h.b16 %v513
      %v2754 = vunpack.c.l.b16 %v514
      %v2755 = vunpack.c.h.b16 %v514
      %v2756 = vunpack.c.l.b16 %v515
      %v2757 = vunpack.c.h.b16 %v515
      %v2758 = vunpack.c.l.b16 %v516
      %v2759 = vunpack.c.h.b16 %v516
      %v2760 = vunpack.c.l.b16 %v517
      %v2761 = vunpack.c.h.b16 %v517
      %v2762 = vunpack.c.l.b16 %v518
      %v2763 = vunpack.c.h.b16 %v518
      %v2764 = vunpack.c.l.b16 %v519
      %v2765 = vunpack.c.h.b16 %v519
      %v2766 = vunpack.c.l.b16 %v520
      %v2767 = vunpack.c.h.b16 %v520
      %v2768 = vunpack.c.l.b16 %v521
      %v2769 = vunpack.c.h.b16 %v521
      %v2770 = vunpack.c.l.b16 %v522
      %v2771 = vunpack.c.h.b16 %v522
      %v2772 = vunpack.c.l.b16 %v523
      %v2773 = vunpack.c.h.b16 %v523
      %v2774 = vunpack.c.l.b16 %v524
      %v2775 = vunpack.c.h.b16 %v524
      %v2776 = vunpack.c.l.b16 %v525
      %v2777 = vunpack.c.h.b16 %v525
      %v2778 = vunpack.c.l.b16 %v526
      %v2779 = vunpack.c.h.b16 %v526
      %v2780 = vunpack.c.l.b16 %v527
      %v2781 = vunpack.c.h.b16 %v527
      %v2782 = vunpack.c.l.b16 %v528
      %v2783 = vunpack.c.h.b16 %v528
      %v2784 = vunpack.c.l.b16 %v529
      %v2785 = vunpack.c.h.b16 %v529
      %v2786 = vunpack.c.l.b16 %v530
      %v2787 = vunpack.c.h.b16 %v530
      %v2788 = vunpack.c.l.b16 %v531
      %v2789 = vunpack.c.h.b16 %v531
      %v2790 = vunpack.c.l.b16 %v532
      %v2791 = vunpack.c.h.b16 %v532
      %v2792 = vunpack.c.l.b16 %v533
      %v2793 = vunpack.c.h.b16 %v533
      %v2794 = vunpack.c.l.b16 %v534
      %v2795 = vunpack.c.h.b16 %v534
      %v2796 = vunpack.c.l.b16 %v535
      %v2797 = vunpack.c.h.b16 %v535
      %v2798 = vunpack.c.l.b16 %v536
      %v2799 = vunpack.c.h.b16 %v536
      %v2800 = vunpack.c.l.b16 %v537
      %v2801 = vunpack.c.h.b16 %v537
      %v2802 = vunpack.c.l.b16 %v538
      %v2803 = vunpack.c.h.b16 %v538
      %v2804 = vunpack.c.l.b16 %v539
      %v2805 = vunpack.c.h.b16 %v539
      %v2806 = vunpack.c.l.b16 %v540
      %v2807 = vunpack.c.h.b16 %v540
      %v2808 = vunpack.c.l.b16 %v541
      %v2809 = vunpack.c.h.b16 %v541
      %v2810 = vunpack.c.l.b16 %v542
      %v2811 = vunpack.c.h.b16 %v542
      %v2812 = vunpack.c.l.b16 %v543
      %v2813 = vunpack.c.h.b16 %v543
      %v2814 = vunpack.c.l.b16 %v544
      %v2815 = vunpack.c.h.b16 %v544
      %v2816 = vunpack.c.l.b16 %v545
      %v2817 = vunpack.c.h.b16 %v545
      %v2818 = vunpack.c.l.b16 %v546
      %v2819 = vunpack.c.h.b16 %v546
      %v2820 = vunpack.c.l.b16 %v547
      %v2821 = vunpack.c.h.b16 %v547
      %v2822 = vunpack.c.l.b16 %v548
      %v2823 = vunpack.c.h.b16 %v548
      %v2824 = vunpack.c.l.b16 %v549
      %v2825 = vunpack.c.h.b16 %v549
      %v2826 = vunpack.c.l.b16 %v550
      %v2827 = vunpack.c.h.b16 %v550
      %v2828 = vunpack.c.l.b16 %v551
      %v2829 = vunpack.c.h.b16 %v551
      %v2830 = vunpack.c.l.b16 %v552
      %v2831 = vunpack.c.h.b16 %v552
      %v2832 = vunpack.c.l.b16 %v553
      %v2833 = vunpack.c.h.b16 %v553
      %v2834 = vunpack.c.l.b16 %v554
      %v2835 = vunpack.c.h.b16 %v554
      %v2836 = vunpack.c.l.b16 %v555
      %v2837 = vunpack.c.h.b16 %v555
      %v2838 = vunpack.c.l.b16 %v556
      %v2839 = vunpack.c.h.b16 %v556
      %v2840 = vunpack.c.l.b16 %v557
      %v2841 = vunpack.c.h.b16 %v557
      %v2842 = vunpack.c.l.b16 %v558
      %v2843 = vunpack.c.h.b16 %v558
      %v2844 = vunpack.c.l.b16 %v559
      %v2845 = vunpack.c.h.b16 %v559
      %v2846 = vunpack.c.l.b16 %v560
      %v2847 = vunpack.c.h.b16 %v560
      %v2848 = vunpack.c.l.b16 %v561
      %v2849 = vunpack.c.h.b16 %v561
      %v2850 = vunpack.c.l.b16 %v562
      %v2851 = vunpack.c.h.b16 %v562
      %v2852 = vunpack.c.l.b16 %v563
      %v2853 = vunpack.c.h.b16 %v563
      %v2854 = vunpack.c.l.b16 %v564
      %v2855 = vunpack.c.h.b16 %v564
      %v2856 = vunpack.c.l.b16 %v565
      %v2857 = vunpack.c.h.b16 %v565
      %v2858 = vunpack.c.l.b16 %v566
      %v2859 = vunpack.c.h.b16 %v566
      %v2860 = vunpack.c.l.b16 %v567
      %v2861 = vunpack.c.h.b16 %v567
      %v2862 = vunpack.c.l.b16 %v568
      %v2863 = vunpack.c.h.b16 %v568
      %v2864 = vunpack.c.l.b16 %v569
      %v2865 = vunpack.c.h.b16 %v569
      %v2866 = vunpack.c.l.b16 %v570
      %v2867 = vunpack.c.h.b16 %v570
      %v2868 = vunpack.c.l.b16 %v571
      %v2869 = vunpack.c.h.b16 %v571
      %v2870 = vunpack.c.l.b16 %v572
      %v2871 = vunpack.c.h.b16 %v572
      %v2872 = vunpack.c.l.b16 %v573
      %v2873 = vunpack.c.h.b16 %v573
      %v2874 = vunpack.c.l.b16 %v574
      %v2875 = vunpack.c.h.b16 %v574
      %v2876 = vunpack.c.l.b16 %v575
      %v2877 = vunpack.c.h.b16 %v575
      %v2878 = vunpack.c.l.b16 %v576
      %v2879 = vunpack.c.h.b16 %v576
      %v2880 = vunpack.c.l.b16 %v577
      %v2881 = vunpack.c.h.b16 %v577
      %v2882 = vunpack.c.l.b16 %v578
      %v2883 = vunpack.c.h.b16 %v578
      %v2884 = vunpack.c.l.b16 %v579
      %v2885 = vunpack.c.h.b16 %v579
      %v2886 = vunpack.c.l.b16 %v580
      %v2887 = vunpack.c.h.b16 %v580
      %v2888 = vunpack.c.l.b16 %v581
      %v2889 = vunpack.c.h.b16 %v581
      %v2890 = vunpack.c.l.b16 %v582
      %v2891 = vunpack.c.h.b16 %v582
      %v2892 = vunpack.c.l.b16 %v583
      %v2893 = vunpack.c.h.b16 %v583
      %v2894 = vunpack.c.l.b16 %v584
      %v2895 = vunpack.c.h.b16 %v584
      %v2896 = vunpack.c.l.b16 %v585
      %v2897 = vunpack.c.h.b16 %v585
      %v2898 = vunpack.c.l.b16 %v586
      %v2899 = vunpack.c.h.b16 %v586
      %v2900 = vunpack.c.l.b16 %v587
      %v2901 = vunpack.c.h.b16 %v587
      %v2902 = vunpack.c.l.b16 %v588
      %v2903 = vunpack.c.h.b16 %v588
      %v2904 = vunpack.c.l.b16 %v589
      %v2905 = vunpack.c.h.b16 %v589
      %v2906 = vunpack.c.l.b16 %v590
      %v2907 = vunpack.c.h.b16 %v590
      %v2908 = vunpack.c.l.b16 %v591
      %v2909 = vunpack.c.h.b16 %v591
      %v2910 = vunpack.c.l.b16 %v592
      %v2911 = vunpack.c.h.b16 %v592
      %v2912 = vunpack.c.l.b16 %v593
      %v2913 = vunpack.c.h.b16 %v593
      %v2914 = vunpack.c.l.b16 %v594
      %v2915 = vunpack.c.h.b16 %v594
      %v2916 = vunpack.c.l.b16 %v595
      %v2917 = vunpack.c.h.b16 %v595
      %v2918 = vunpack.c.l.b16 %v596
      %v2919 = vunpack.c.h.b16 %v596
      %v2920 = vunpack.c.l.b16 %v597
      %v2921 = vunpack.c.h.b16 %v597
      %v2922 = vunpack.c.l.b16 %v598
      %v2923 = vunpack.c.h.b16 %v598
      %v2924 = vunpack.c.l.b16 %v599
      %v2925 = vunpack.c.h.b16 %v599
      %v2926 = vunpack.c.l.b16 %v600
      %v2927 = vunpack.c.h.b16 %v600
      %v2928 = vunpack.c.l.b16 %v601
      %v2929 = vunpack.c.h.b16 %v601
      %v2930 = vunpack.c.l.b16 %v602
      %v2931 = vunpack.c.h.b16 %v602
      %v2932 = vunpack.c.l.b16 %v603
      %v2933 = vunpack.c.h.b16 %v603
      %v2934 = vunpack.c.l.b16 %v604
      %v2935 = vunpack.c.h.b16 %v604
      %v2936 = vunpack.c.l.b16 %v605
      %v2937 = vunpack.c.h.b16 %v605
      %v2938 = vunpack.c.l.b16 %v606
      %v2939 = vunpack.c.h.b16 %v606
      %v2940 = vunpack.c.l.b16 %v607
      %v2941 = vunpack.c.h.b16 %v607
      %v2942 = vunpack.c.l.b16 %v608
      %v2943 = vunpack.c.h.b16 %v608
      %v2944 = vunpack.c.l.b16 %v609
      %v2945 = vunpack.c.h.b16 %v609
      %v2946 = vunpack.c.l.b16 %v610
      %v2947 = vunpack.c.h.b16 %v610
      %v2948 = vunpack.c.l.b16 %v611
      %v2949 = vunpack.c.h.b16 %v611
      %v2950 = vunpack.c.l.b16 %v612
      %v2951 = vunpack.c.h.b16 %v612
      %v2952 = vunpack.c.l.b16 %v613
      %v2953 = vunpack.c.h.b16 %v613
      %v2954 = vunpack.c.l.b16 %v614
      %v2955 = vunpack.c.h.b16 %v614
      %v2956 = vunpack.c.l.b16 %v615
      %v2957 = vunpack.c.h.b16 %v615
      %v2958 = vunpack.c.l.b16 %v616
      %v2959 = vunpack.c.h.b16 %v616
      %v2960 = vunpack.c.l.b16 %v617
      %v2961 = vunpack.c.h.b16 %v617
      %v2962 = vunpack.c.l.b16 %v618
      %v2963 = vunpack.c.h.b16 %v618
      %v2964 = vunpack.c.l.b16 %v619
      %v2965 = vunpack.c.h.b16 %v619
      %v2966 = vunpack.c.l.b16 %v620
      %v2967 = vunpack.c.h.b16 %v620
      %v2968 = vunpack.c.l.b16 %v621
      %v2969 = vunpack.c.h.b16 %v621
      %v2970 = vunpack.c.l.b16 %v622
      %v2971 = vunpack.c.h.b16 %v622
      %v2972 = vunpack.c.l.b16 %v623
      %v2973 = vunpack.c.h.b16 %v623
      %v2974 = vunpack.c.l.b16 %v624
      %v2975 = vunpack.c.h.b16 %v624
      %v2976 = vunpack.c.l.b16 %v625
      %v2977 = vunpack.c.h.b16 %v625
      %v2978 = vunpack.c.l.b16 %v626
      %v2979 = vunpack.c.h.b16 %v626
      %v2980 = vunpack.c.l.b16 %v627
      %v2981 = vunpack.c.h.b16 %v627
      %v2982 = vunpack.c.l.b16 %v628
      %v2983 = vunpack.c.h.b16 %v628
      %v2984 = vunpack.c.l.b16 %v629
      %v2985 = vunpack.c.h.b16 %v629
      %v2986 = vunpack.c.l.b16 %v630
      %v2987 = vunpack.c.h.b16 %v630
      %v2988 = vunpack.c.l.b16 %v631
      %v2989 = vunpack.c.h.b16 %v631
      %v2990 = vunpack.c.l.b16 %v632
      %v2991 = vunpack.c.h.b16 %v632
      %v2992 = vunpack.c.l.b16 %v633
      %v2993 = vunpack.c.h.b16 %v633
      %v2994 = vunpack.c.l.b16 %v634
      %v2995 = vunpack.c.h.b16 %v634
      %v2996 = vunpack.c.l.b16 %v635
      %v2997 = vunpack.c.h.b16 %v635
      %v2998 = vunpack.c.l.b16 %v636
      %v2999 = vunpack.c.h.b16 %v636
      %v3000 = vunpack.c.l.b16 %v637
      %v3001 = vunpack.c.h.b16 %v637
      %v3002 = vunpack.c.l.b16 %v638
      %v3003 = vunpack.c.h.b16 %v638
      %v3004 = vunpack.c.l.b16 %v639
      %v3005 = vunpack.c.h.b16 %v639
      %v3006 = vunpack.c.l.b16 %v640
      %v3007 = vunpack.c.h.b16 %v640
      %v3008 = vunpack.c.l.b16 %v641
      %v3009 = vunpack.c.h.b16 %v641
      %v3010 = vunpack.c.l.b16 %v642
      %v3011 = vunpack.c.h.b16 %v642
      %v3012 = vunpack.c.l.b16 %v643
      %v3013 = vunpack.c.h.b16 %v643
      %v3014 = vunpack.c.l.b16 %v644
      %v3015 = vunpack.c.h.b16 %v644
      %v3016 = vunpack.c.l.b16 %v645
      %v3017 = vunpack.c.h.b16 %v645
      %v3018 = vunpack.c.l.b16 %v646
      %v3019 = vunpack.c.h.b16 %v646
      %v3020 = vunpack.c.l.b16 %v647
      %v3021 = vunpack.c.h.b16 %v647
      %v3022 = vunpack.c.l.b16 %v648
      %v3023 = vunpack.c.h.b16 %v648
      %v3024 = vunpack.c.l.b16 %v649
      %v3025 = vunpack.c.h.b16 %v649
      %v3026 = vunpack.c.l.b16 %v650
      %v3027 = vunpack.c.h.b16 %v650
      %v3028 = vunpack.c.l.b16 %v651
      %v3029 = vunpack.c.h.b16 %v651
      %v3030 = vunpack.c.l.b16 %v652
      %v3031 = vunpack.c.h.b16 %v652
      %v3032 = vunpack.c.l.b16 %v653
      %v3033 = vunpack.c.h.b16 %v653
      %v3034 = vunpack.c.l.b16 %v654
      %v3035 = vunpack.c.h.b16 %v654
      %v3036 = vunpack.c.l.b16 %v655
      %v3037 = vunpack.c.h.b16 %v655
      %v3038 = vunpack.c.l.b16 %v656
      %v3039 = vunpack.c.h.b16 %v656
      %v3040 = vunpack.c.l.b16 %v657
      %v3041 = vunpack.c.h.b16 %v657
      %v3042 = vunpack.c.l.b16 %v658
      %v3043 = vunpack.c.h.b16 %v658
      %v3044 = vunpack.c.l.b16 %v659
      %v3045 = vunpack.c.h.b16 %v659
      %v3046 = vunpack.c.l.b16 %v660
      %v3047 = vunpack.c.h.b16 %v660
      %v3048 = vunpack.c.l.b16 %v661
      %v3049 = vunpack.c.h.b16 %v661
      %v3050 = vunpack.c.l.b16 %v662
      %v3051 = vunpack.c.h.b16 %v662
      %v3052 = vunpack.c.l.b16 %v663
      %v3053 = vunpack.c.h.b16 %v663
      %v3054 = vunpack.c.l.b16 %v664
      %v3055 = vunpack.c.h.b16 %v664
      %v3056 = vunpack.c.l.b16 %v665
      %v3057 = vunpack.c.h.b16 %v665
      %v3058 = vunpack.c.l.b16 %v666
      %v3059 = vunpack.c.h.b16 %v666
      %v3060 = vunpack.c.l.b16 %v667
      %v3061 = vunpack.c.h.b16 %v667
      %v3062 = vunpack.c.l.b16 %v668
      %v3063 = vunpack.c.h.b16 %v668
      %v3064 = vunpack.c.l.b16 %v669
      %v3065 = vunpack.c.h.b16 %v669
      %v3066 = vunpack.c.l.b16 %v670
      %v3067 = vunpack.c.h.b16 %v670
      %v3068 = vunpack.c.l.b16 %v671
      %v3069 = vunpack.c.h.b16 %v671
      %v3070 = vunpack.c.l.b16 %v672
      %v3071 = vunpack.c.h.b16 %v672
      %v3072 = vunpack.c.l.b16 %v673
      %v3073 = vunpack.c.h.b16 %v673
      %v3074 = vunpack.c.l.b16 %v674
      %v3075 = vunpack.c.h.b16 %v674
      %v3076 = vunpack.c.l.b16 %v675
      %v3077 = vunpack.c.h.b16 %v675
      %v3078 = vunpack.c.l.b16 %v676
      %v3079 = vunpack.c.h.b16 %v676
      %v3080 = vunpack.c.l.b16 %v677
      %v3081 = vunpack.c.h.b16 %v677
      %v3082 = vunpack.c.l.b16 %v678
      %v3083 = vunpack.c.h.b16 %v678
      %v3084 = vunpack.c.l.b16 %v679
      %v3085 = vunpack.c.h.b16 %v679
      %v3086 = vunpack.c.l.b16 %v680
      %v3087 = vunpack.c.h.b16 %v680
      %v3088 = vunpack.c.l.b16 %v681
      %v3089 = vunpack.c.h.b16 %v681
      %v3090 = vunpack.c.l.b16 %v682
      %v3091 = vunpack.c.h.b16 %v682
      %v3092 = vunpack.c.l.b16 %v683
      %v3093 = vunpack.c.h.b16 %v683
      %v3094 = vunpack.c.l.b16 %v684
      %v3095 = vunpack.c.h.b16 %v684
      %v3096 = vunpack.c.l.b16 %v685
      %v3097 = vunpack.c.h.b16 %v685
      %v3098 = vunpack.c.l.b16 %v686
      %v3099 = vunpack.c.h.b16 %v686
      %v3100 = vunpack.c.l.b16 %v687
      %v3101 = vunpack.c.h.b16 %v687
      %v3102 = vunpack.c.l.b16 %v688
      %v3103 = vunpack.c.h.b16 %v688
      %v3104 = vunpack.c.l.b16 %v689
      %v3105 = vunpack.c.h.b16 %v689
      %v3106 = vunpack.c.l.b16 %v690
      %v3107 = vunpack.c.h.b16 %v690
      %v3108 = vunpack.c.l.b16 %v691
      %v3109 = vunpack.c.h.b16 %v691
      %v3110 = vunpack.c.l.b16 %v692
      %v3111 = vunpack.c.h.b16 %v692
      %v3112 = vunpack.c.l.b16 %v693
      %v3113 = vunpack.c.h.b16 %v693
      %v3114 = vunpack.c.l.b16 %v694
      %v3115 = vunpack.c.h.b16 %v694
      %v3116 = vunpack.c.l.b16 %v695
      %v3117 = vunpack.c.h.b16 %v695
      %v3118 = vunpack.c.l.b16 %v696
      %v3119 = vunpack.c.h.b16 %v696
      %v3120 = vunpack.c.l.b16 %v697
      %v3121 = vunpack.c.h.b16 %v697
      %v3122 = vunpack.c.l.b16 %v698
      %v3123 = vunpack.c.h.b16 %v698
      %v3124 = vunpack.c.l.b16 %v699
      %v3125 = vunpack.c.h.b16 %v699
      %v3126 = vunpack.c.l.b16 %v700
      %v3127 = vunpack.c.h.b16 %v700
      %v3128 = vunpack.c.l.b16 %v701
      %v3129 = vunpack.c.h.b16 %v701
      %v3130 = vunpack.c.l.b16 %v702
      %v3131 = vunpack.c.h.b16 %v702
      %v3132 = vunpack.c.l.b16 %v703
      %v3133 = vunpack.c.h.b16 %v703
      %v3134 = vunpack.c.l.b16 %v704
      %v3135 = vunpack.c.h.b16 %v704
      %v3136 = vunpack.c.l.b16 %v705
      %v3137 = vunpack.c.h.b16 %v705
      %v3138 = vunpack.c.l.b16 %v706
      %v3139 = vunpack.c.h.b16 %v706
      %v3140 = vunpack.c.l.b16 %v707
      %v3141 = vunpack.c.h.b16 %v707
      %v3142 = vunpack.c.l.b16 %v708
      %v3143 = vunpack.c.h.b16 %v708
      %v3144 = vunpack.c.l.b16 %v709
      %v3145 = vunpack.c.h.b16 %v709
      %v3146 = vunpack.c.l.b16 %v710
      %v3147 = vunpack.c.h.b16 %v710
      %v3148 = vunpack.c.l.b16 %v711
      %v3149 = vunpack.c.h.b16 %v711
      %v3150 = vunpack.c.l.b16 %v712
      %v3151 = vunpack.c.h.b16 %v712
      %v3152 = vunpack.c.l.b16 %v713
      %v3153 = vunpack.c.h.b16 %v713
      %v3154 = vunpack.c.l.b16 %v714
      %v3155 = vunpack.c.h.b16 %v714
      %v3156 = vunpack.c.l.b16 %v715
      %v3157 = vunpack.c.h.b16 %v715
      %v3158 = vunpack.c.l.b16 %v716
      %v3159 = vunpack.c.h.b16 %v716
      %v3160 = vunpack.c.l.b16 %v717
      %v3161 = vunpack.c.h.b16 %v717
      %v3162 = vunpack.c.l.b16 %v718
      %v3163 = vunpack.c.h.b16 %v718
      %v3164 = vunpack.c.l.b16 %v719
      %v3165 = vunpack.c.h.b16 %v719
      %v3166 = vunpack.c.l.b16 %v720
      %v3167 = vunpack.c.h.b16 %v720
      %v3168 = vunpack.c.l.b16 %v721
      %v3169 = vunpack.c.h.b16 %v721
      %v3170 = vunpack.c.l.b16 %v722
      %v3171 = vunpack.c.h.b16 %v722
      %v3172 = vunpack.c.l.b16 %v723
      %v3173 = vunpack.c.h.b16 %v723
      %v3174 = vunpack.c.l.b16 %v724
      %v3175 = vunpack.c.h.b16 %v724
      %v3176 = vunpack.c.l.b16 %v725
      %v3177 = vunpack.c.h.b16 %v725
      %v3178 = vunpack.c.l.b16 %v726
      %v3179 = vunpack.c.h.b16 %v726
      %v3180 = vunpack.c.l.b16 %v727
      %v3181 = vunpack.c.h.b16 %v727
      %v3182 = vunpack.c.l.b16 %v728
      %v3183 = vunpack.c.h.b16 %v728
      %v3184 = vunpack.c.l.b16 %v729
      %v3185 = vunpack.c.h.b16 %v729
      %v3186 = vunpack.c.l.b16 %v730
      %v3187 = vunpack.c.h.b16 %v730
      %v3188 = vunpack.c.l.b16 %v731
      %v3189 = vunpack.c.h.b16 %v731
      %v3190 = vunpack.c.l.b16 %v732
      %v3191 = vunpack.c.h.b16 %v732
      %v3192 = vunpack.c.l.b16 %v733
      %v3193 = vunpack.c.h.b16 %v733
      %v3194 = vunpack.c.l.b16 %v734
      %v3195 = vunpack.c.h.b16 %v734
      %v3196 = vunpack.c.l.b16 %v735
      %v3197 = vunpack.c.h.b16 %v735
      %v3198 = vunpack.c.l.b16 %v736
      %v3199 = vunpack.c.h.b16 %v736
      %v3200 = vunpack.c.l.b16 %v737
      %v3201 = vunpack.c.h.b16 %v737
      %v3202 = vunpack.c.l.b16 %v738
      %v3203 = vunpack.c.h.b16 %v738
      %v3204 = vunpack.c.l.b16 %v739
      %v3205 = vunpack.c.h.b16 %v739
      %v3206 = vunpack.c.l.b16 %v740
      %v3207 = vunpack.c.h.b16 %v740
      %v3208 = vunpack.c.l.b16 %v741
      %v3209 = vunpack.c.h.b16 %v741
      %v3210 = vunpack.c.l.b16 %v742
      %v3211 = vunpack.c.h.b16 %v742
      %v3212 = vunpack.c.l.b16 %v743
      %v3213 = vunpack.c.h.b16 %v743
      %v3214 = vunpack.c.l.b16 %v744
      %v3215 = vunpack.c.h.b16 %v744
      %v3216 = vunpack.c.l.b16 %v745
      %v3217 = vunpack.c.h.b16 %v745
      %v3218 = vunpack.c.l.b16 %v746
      %v3219 = vunpack.c.h.b16 %v746
      %v3220 = vunpack.c.l.b16 %v747
      %v3221 = vunpack.c.h.b16 %v747
      %v3222 = vunpack.c.l.b16 %v748
      %v3223 = vunpack.c.h.b16 %v748
      %v3224 = vunpack.c.l.b16 %v749
      %v3225 = vunpack.c.h.b16 %v749
      %v3226 = vunpack.c.l.b16 %v750
      %v3227 = vunpack.c.h.b16 %v750
      %v3228 = vunpack.c.l.b16 %v751
      %v3229 = vunpack.c.h.b16 %v751
      %v3230 = vunpack.c.l.b16 %v752
      %v3231 = vunpack.c.h.b16 %v752
      %v3232 = vunpack.c.l.b16 %v753
      %v3233 = vunpack.c.h.b16 %v753
      %v3234 = vunpack.c.l.b16 %v754
      %v3235 = vunpack.c.h.b16 %v754
      %v3236 = vunpack.c.l.b16 %v755
      %v3237 = vunpack.c.h.b16 %v755
      %v3238 = vunpack.c.l.b16 %v756
      %v3239 = vunpack.c.h.b16 %v756
      %v3240 = vunpack.c.l.b16 %v757
      %v3241 = vunpack.c.h.b16 %v757
      %v3242 = vunpack.c.l.b16 %v758
      %v3243 = vunpack.c.h.b16 %v758
      %v3244 = vunpack.c.l.b16 %v759
      %v3245 = vunpack.c.h.b16 %v759
      %v3246 = vunpack.c.l.b16 %v760
      %v3247 = vunpack.c.h.b16 %v760
      %v3248 = vunpack.c.l.b16 %v761
      %v3249 = vunpack.c.h.b16 %v761
      %v3250 = vunpack.c.l.b16 %v762
      %v3251 = vunpack.c.h.b16 %v762
      %v3252 = vunpack.c.l.b16 %v763
      %v3253 = vunpack.c.h.b16 %v763
      %v3254 = vunpack.c.l.b16 %v764
      %v3255 = vunpack.c.h.b16 %v764
      %v3256 = vunpack.c.l.b16 %v765
      %v3257 = vunpack.c.h.b16 %v765
      %v3258 = vunpack.c.l.b16 %v766
      %v3259 = vunpack.c.h.b16 %v766
      %v3260 = vunpack.c.l.b16 %v767
      %v3261 = vunpack.c.h.b16 %v767
      %v3262 = vunpack.c.l.b16 %v768
      %v3263 = vunpack.c.h.b16 %v768
      %v3264 = vunpack.c.l.b16 %v769
      %v3265 = vunpack.c.h.b16 %v769
      %v3266 = vunpack.c.l.b16 %v770
      %v3267 = vunpack.c.h.b16 %v770
      %v3268 = vunpack.c.l.b16 %v771
      %v3269 = vunpack.c.h.b16 %v771
      %v3270 = vunpack.c.l.b16 %v772
      %v3271 = vunpack.c.h.b16 %v772
      %v3272 = vunpack.c.l.b16 %v773
      %v3273 = vunpack.c.h.b16 %v773
      %v3274 = vunpack.c.l.b16 %v774
      %v3275 = vunpack.c.h.b16 %v774
      %v3276 = vunpack.c.l.b16 %v775
      %v3277 = vunpack.c.h.b16 %v775
      %v3278 = vunpack.c.l.b16 %v776
      %v3279 = vunpack.c.h.b16 %v776
      %v3280 = vunpack.c.l.b16 %v777
      %v3281 = vunpack.c.h.b16 %v777
      %v3282 = vunpack.c.l.b16 %v778
      %v3283 = vunpack.c.h.b16 %v778
      %v3284 = vunpack.c.l.b16 %v779
      %v3285 = vunpack.c.h.b16 %v779
      %v3286 = vunpack.c.l.b16 %v780
      %v3287 = vunpack.c.h.b16 %v780
      %v3288 = vunpack.c.l.b16 %v781
      %v3289 = vunpack.c.h.b16 %v781
      %v3290 = vunpack.c.l.b16 %v782
      %v3291 = vunpack.c.h.b16 %v782
      %v3292 = vunpack.c.l.b16 %v783
      %v3293 = vunpack.c.h.b16 %v783
      %v3294 = vunpack.c.l.b16 %v784
      %v3295 = vunpack.c.h.b16 %v784
      %v3296 = vunpack.c.l.b16 %v785
      %v3297 = vunpack.c.h.b16 %v785
      %v3298 = vunpack.c.l.b16 %v786
      %v3299 = vunpack.c.h.b16 %v786
      %v3300 = vunpack.c.l.b16 %v787
      %v3301 = vunpack.c.h.b16 %v787
      %v3302 = vunpack.c.l.b16 %v788
      %v3303 = vunpack.c.h.b16 %v788
      %v3304 = vunpack.c.l.b16 %v789
      %v3305 = vunpack.c.h.b16 %v789
      %v3306 = vunpack.c.l.b16 %v790
      %v3307 = vunpack.c.h.b16 %v790
      %v3308 = vunpack.c.l.b16 %v791
      %v3309 = vunpack.c.h.b16 %v791
      %v3310 = vunpack.c.l.b16 %v792
      %v3311 = vunpack.c.h.b16 %v792
      %v3312 = vunpack.c.l.b16 %v793
      %v3313 = vunpack.c.h.b16 %v793
      %v3314 = vunpack.c.l.b16 %v794
      %v3315 = vunpack.c.h.b16 %v794
      %v3316 = vunpack.c.l.b16 %v795
      %v3317 = vunpack.c.h.b16 %v795
      %v3318 = vunpack.c.l.b16 %v796
      %v3319 = vunpack.c.h.b16 %v796
      %v3320 = vunpack.c.l.b16 %v797
      %v3321 = vunpack.c.h.b16 %v797
      %v3322 = vunpack.c.l.b16 %v798
      %v3323 = vunpack.c.h.b16 %v798
      %v3324 = vunpack.c.l.b16 %v799
      %v3325 = vunpack.c.h.b16 %v799
      %v3326 = vunpack.c.l.b16 %v800
      %v3327 = vunpack.c.h.b16 %v800
      %v3328 = vunpack.c.l.b16 %v801
      %v3329 = vunpack.c.h.b16 %v801
      %v3330 = vunpack.c.l.b16 %v802
      %v3331 = vunpack.c.h.b16 %v802
      %v3332 = vunpack.c.l.b16 %v803
      %v3333 = vunpack.c.h.b16 %v803
      %v3334 = vunpack.c.l.b16 %v804
      %v3335 = vunpack.c.h.b16 %v804
      %v3336 = vunpack.c.l.b16 %v805
      %v3337 = vunpack.c.h.b16 %v805
      %v3338 = vunpack.c.l.b16 %v806
      %v3339 = vunpack.c.h.b16 %v806
      %v3340 = vunpack.c.l.b16 %v807
      %v3341 = vunpack.c.h.b16 %v807
      %v3342 = vunpack.c.l.b16 %v808
      %v3343 = vunpack.c.h.b16 %v808
      %v3344 = vunpack.c.l.b16 %v809
      %v3345 = vunpack.c.h.b16 %v809
      %v3346 = vunpack.c.l.b16 %v810
      %v3347 = vunpack.c.h.b16 %v810
      %v3348 = vunpack.c.l.b16 %v811
      %v3349 = vunpack.c.h.b16 %v811
      %v3350 = vunpack.c.l.b16 %v812
      %v3351 = vunpack.c.h.b16 %v812
      %v3352 = vunpack.c.l.b16 %v813
      %v3353 = vunpack.c.h.b16 %v813
      %v3354 = vunpack.c.l.b16 %v814
      %v3355 = vunpack.c.h.b16 %v814
      %v3356 = vunpack.c.l.b16 %v815
      %v3357 = vunpack.c.h.b16 %v815
      %v3358 = vunpack.c.l.b16 %v816
      %v3359 = vunpack.c.h.b16 %v816
      %v3360 = vunpack.c.l.b16 %v817
      %v3361 = vunpack.c.h.b16 %v817
      %v3362 = vunpack.c.l.b16 %v818
      %v3363 = vunpack.c.h.b16 %v818
      %v3364 = vunpack.c.l.b16 %v819
      %v3365 = vunpack.c.h.b16 %v819
      %v3366 = vunpack.c.l.b16 %v820
      %v3367 = vunpack.c.h.b16 %v820
      %v3368 = vunpack.c.l.b16 %v821
      %v3369 = vunpack.c.h.b16 %v821
      %v3370 = vunpack.c.l.b16 %v822
      %v3371 = vunpack.c.h.b16 %v822
      %v3372 = vunpack.c.l.b16 %v823
      %v3373 = vunpack.c.h.b16 %v823
      %v3374 = vunpack.c.l.b16 %v824
      %v3375 = vunpack.c.h.b16 %v824
      %v3376 = vunpack.c.l.b16 %v825
      %v3377 = vunpack.c.h.b16 %v825
      %v3378 = vunpack.c.l.b16 %v826
      %v3379 = vunpack.c.h.b16 %v826
      %v3380 = vunpack.c.l.b16 %v827
      %v3381 = vunpack.c.h.b16 %v827
      %v3382 = vunpack.c.l.b16 %v828
      %v3383 = vunpack.c.h.b16 %v828
      %v3384 = vunpack.c.l.b16 %v829
      %v3385 = vunpack.c.h.b16 %v829
      %v3386 = vunpack.c.l.b16 %v830
      %v3387 = vunpack.c.h.b16 %v830
      %v3388 = vunpack.c.l.b16 %v831
      %v3389 = vunpack.c.h.b16 %v831
      %v3390 = vunpack.c.l.b16 %v832
      %v3391 = vunpack.c.h.b16 %v832
      %v3392 = vunpack.c.l.b16 %v833
      %v3393 = vunpack.c.h.b16 %v833
      %v3394 = vunpack.c.l.b16 %v834
      %v3395 = vunpack.c.h.b16 %v834
      %v3396 = vunpack.c.l.b16 %v835
      %v3397 = vunpack.c.h.b16 %v835
      %v3398 = vunpack.c.l.b16 %v836
      %v3399 = vunpack.c.h.b16 %v836
      %v3400 = vunpack.c.l.b16 %v837
      %v3401 = vunpack.c.h.b16 %v837
      %v3402 = vunpack.c.l.b16 %v838
      %v3403 = vunpack.c.h.b16 %v838
      %v3404 = vunpack.c.l.b16 %v839
      %v3405 = vunpack.c.h.b16 %v839
      %v3406 = vunpack.c.l.b16 %v840
      %v3407 = vunpack.c.h.b16 %v840
      %v3408 = vunpack.c.l.b16 %v841
      %v3409 = vunpack.c.h.b16 %v841
      %v3410 = vunpack.c.l.b16 %v842
      %v3411 = vunpack.c.h.b16 %v842
      %v3412 = vunpack.c.l.b16 %v843
      %v3413 = vunpack.c.h.b16 %v843
      %v3414 = vunpack.c.l.b16 %v844
      %v3415 = vunpack.c.h.b16 %v844
      %v3416 = vunpack.c.l.b16 %v845
      %v3417 = vunpack.c.h.b16 %v845
      %v3418 = vunpack.c.l.b16 %v846
      %v3419 = vunpack.c.h.b16 %v846
      %v3420 = vunpack.c.l.b16 %v847
      %v3421 = vunpack.c.h.b16 %v847
      %v3422 = vunpack.c.l.b16 %v848
      %v3423 = vunpack.c.h.b16 %v848
      %v3424 = vunpack.c.l.b16 %v849
      %v3425 = vunpack.c.h.b16 %v849
      %v3426 = vunpack.c.l.b16 %v850
      %v3427 = vunpack.c.h.b16 %v850
      %v3428 = vunpack.c.l.b16 %v851
      %v3429 = vunpack.c.h.b16 %v851
      %v3430 = vunpack.c.l.b16 %v852
      %v3431 = vunpack.c.h.b16 %v852
      %v3432 = vunpack.c.l.b16 %v853
      %v3433 = vunpack.c.h.b16 %v853
      %v3434 = vunpack.c.l.b16 %v854
      %v3435 = vunpack.c.h.b16 %v854
      %v3436 = vunpack.c.l.b16 %v855
      %v3437 = vunpack.c.h.b16 %v855
      %v3438 = vunpack.c.l.b16 %v856
      %v3439 = vunpack.c.h.b16 %v856
      %v3440 = vunpack.c.l.b16 %v857
      %v3441 = vunpack.c.h.b16 %v857
      %v3442 = vunpack.c.l.b16 %v858
      %v3443 = vunpack.c.h.b16 %v858
      %v3444 = vunpack.c.l.b16 %v859
      %v3445 = vunpack.c.h.b16 %v859
      %v3446 = vunpack.c.l.b16 %v860
      %v3447 = vunpack.c.h.b16 %v860
      %v3448 = vunpack.c.l.b16 %v861
      %v3449 = vunpack.c.h.b16 %v861
      %v3450 = vunpack.c.l.b16 %v862
      %v3451 = vunpack.c.h.b16 %v862
      %v3452 = vunpack.c.l.b16 %v863
      %v3453 = vunpack.c.h.b16 %v863
      %v3454 = vunpack.c.l.b16 %v864
      %v3455 = vunpack.c.h.b16 %v864
      %v3456 = vunpack.c.l.b16 %v865
      %v3457 = vunpack.c.h.b16 %v865
      %v3458 = vunpack.c.l.b16 %v866
      %v3459 = vunpack.c.h.b16 %v866
      %v3460 = vunpack.c.l.b16 %v867
      %v3461 = vunpack.c.h.b16 %v867
      %v3462 = vunpack.c.l.b16 %v868
      %v3463 = vunpack.c.h.b16 %v868
      %v3464 = vunpack.c.l.b16 %v869
      %v3465 = vunpack.c.h.b16 %v869
      %v3466 = vunpack.c.l.b16 %v870
      %v3467 = vunpack.c.h.b16 %v870
      %v3468 = vunpack.c.l.b16 %v871
      %v3469 = vunpack.c.h.b16 %v871
      %v3470 = vunpack.c.l.b16 %v872
      %v3471 = vunpack.c.h.b16 %v872
      %v3472 = vunpack.c.l.b16 %v873
      %v3473 = vunpack.c.h.b16 %v873
      %v3474 = vunpack.c.l.b16 %v874
      %v3475 = vunpack.c.h.b16 %v874
      %v3476 = vunpack.c.l.b16 %v875
      %v3477 = vunpack.c.h.b16 %v875
      %v3478 = vunpack.c.l.b16 %v876
      %v3479 = vunpack.c.h.b16 %v876
      %v3480 = vunpack.c.l.b16 %v877
      %v3481 = vunpack.c.h.b16 %v877
      %v3482 = vunpack.c.l.b16 %v878
      %v3483 = vunpack.c.h.b16 %v878
      %v3484 = vunpack.c.l.b16 %v879
      %v3485 = vunpack.c.h.b16 %v879
      %v3486 = vunpack.c.l.b16 %v880
      %v3487 = vunpack.c.h.b16 %v880
      %v3488 = vunpack.c.l.b16 %v881
      %v3489 = vunpack.c.h.b16 %v881
      %v3490 = vunpack.c.l.b16 %v882
      %v3491 = vunpack.c.h.b16 %v882
      %v3492 = vunpack.c.l.b16 %v883
      %v3493 = vunpack.c.h.b16 %v883
      %v3494 = vunpack.c.l.b16 %v884
      %v3495 = vunpack.c.h.b16 %v884
      %v3496 = vunpack.c.l.b16 %v885
      %v3497 = vunpack.c.h.b16 %v885
      %v3498 = vunpack.c.l.b16 %v886
      %v3499 = vunpack.c.h.b16 %v886
      %v3500 = vunpack.c.l.b16 %v887
      %v3501 = vunpack.c.h.b16 %v887
      %v3502 = vunpack.c.l.b16 %v888
      %v3503 = vunpack.c.h.b16 %v888
      %v3504 = vunpack.c.l.b16 %v889
      %v3505 = vunpack.c.h.b16 %v889
      %v3506 = vunpack.c.l.b16 %v890
      %v3507 = vunpack.c.h.b16 %v890
      %v3508 = vunpack.c.l.b16 %v891
      %v3509 = vunpack.c.h.b16 %v891
      %v3510 = vunpack.c.l.b16 %v892
      %v3511 = vunpack.c.h.b16 %v892
      %v3512 = vunpack.c.l.b16 %v893
      %v3513 = vunpack.c.h.b16 %v893
      %v3514 = vunpack.c.l.b16 %v894
      %v3515 = vunpack.c.h.b16 %v894
      %v3516 = vunpack.c.l.b16 %v895
      %v3517 = vunpack.c.h.b16 %v895
      %v3518 = vunpack.c.l.b16 %v896
      %v3519 = vunpack.c.h.b16 %v896
      %v3520 = vunpack.c.l.b16 %v897
      %v3521 = vunpack.c.h.b16 %v897
      %v3522 = vunpack.c.l.b16 %v898
      %v3523 = vunpack.c.h.b16 %v898
      %v3524 = vunpack.c.l.b16 %v899
      %v3525 = vunpack.c.h.b16 %v899
      %v3526 = vunpack.c.l.b16 %v900
      %v3527 = vunpack.c.h.b16 %v900
      %v3528 = vunpack.c.l.b16 %v901
      %v3529 = vunpack.c.h.b16 %v901
      %v3530 = vunpack.c.l.b16 %v902
      %v3531 = vunpack.c.h.b16 %v902
      %v3532 = vunpack.c.l.b16 %v903
      %v3533 = vunpack.c.h.b16 %v903
      %v3534 = vunpack.c.l.b16 %v904
      %v3535 = vunpack.c.h.b16 %v904
      %v3536 = vunpack.c.l.b16 %v905
      %v3537 = vunpack.c.h.b16 %v905
      %v3538 = vunpack.c.l.b16 %v906
      %v3539 = vunpack.c.h.b16 %v906
      %v3540 = vunpack.c.l.b16 %v907
      %v3541 = vunpack.c.h.b16 %v907
      %v3542 = vunpack.c.l.b16 %v908
      %v3543 = vunpack.c.h.b16 %v908
      %v3544 = vunpack.c.l.b16 %v909
      %v3545 = vunpack.c.h.b16 %v909
      %v3546 = vunpack.c.l.b16 %v910
      %v3547 = vunpack.c.h.b16 %v910
      %v3548 = vunpack.c.l.b16 %v911
      %v3549 = vunpack.c.h.b16 %v911
      %v3550 = vunpack.c.l.b16 %v912
      %v3551 = vunpack.c.h.b16 %v912
      %v3552 = vunpack.c.l.b16 %v913
      %v3553 = vunpack.c.h.b16 %v913
      %v3554 = vunpack.c.l.b16 %v914
      %v3555 = vunpack.c.h.b16 %v914
      %v3556 = vunpack.c.l.b16 %v915
      %v3557 = vunpack.c.h.b16 %v915
      %v3558 = vunpack.c.l.b16 %v916
      %v3559 = vunpack.c.h.b16 %v916
      %v3560 = vunpack.c.l.b16 %v917
      %v3561 = vunpack.c.h.b16 %v917
      %v3562 = vunpack.c.l.b16 %v918
      %v3563 = vunpack.c.h.b16 %v918
      %v3564 = vunpack.c.l.b16 %v919
      %v3565 = vunpack.c.h.b16 %v919
      %v3566 = vunpack.c.l.b16 %v920
      %v3567 = vunpack.c.h.b16 %v920
      %v3568 = vunpack.c.l.b16 %v921
      %v3569 = vunpack.c.h.b16 %v921
      %v3570 = vunpack.c.l.b16 %v922
      %v3571 = vunpack.c.h.b16 %v922
      %v3572 = vunpack.c.l.b16 %v923
      %v3573 = vunpack.c.h.b16 %v923
      %v3574 = vunpack.c.l.b16 %v924
      %v3575 = vunpack.c.h.b16 %v924
      %v3576 = vunpack.c.l.b16 %v925
      %v3577 = vunpack.c.h.b16 %v925
      %v3578 = vunpack.c.l.b16 %v926
      %v3579 = vunpack.c.h.b16 %v926
      %v3580 = vunpack.c.l.b16 %v927
      %v3581 = vunpack.c.h.b16 %v927
      %v3582 = vunpack.c.l.b16 %v928
      %v3583 = vunpack.c.h.b16 %v928
      %v3584 = vunpack.c.l.b16 %v929
      %v3585 = vunpack.c.h.b16 %v929
      %v3586 = vunpack.c.l.b16 %v930
      %v3587 = vunpack.c.h.b16 %v930
      %v3588 = vunpack.c.l.b16 %v931
      %v3589 = vunpack.c.h.b16 %v931
      %v3590 = vunpack.c.l.b16 %v932
      %v3591 = vunpack.c.h.b16 %v932
      %v3592 = vunpack.c.l.b16 %v933
      %v3593 = vunpack.c.h.b16 %v933
      %v3594 = vunpack.c.l.b16 %v934
      %v3595 = vunpack.c.h.b16 %v934
      %v3596 = vunpack.c.l.b16 %v935
      %v3597 = vunpack.c.h.b16 %v935
      %v3598 = vunpack.c.l.b16 %v936
      %v3599 = vunpack.c.h.b16 %v936
      %v3600 = vunpack.c.l.b16 %v937
      %v3601 = vunpack.c.h.b16 %v937
      %v3602 = vunpack.c.l.b16 %v938
      %v3603 = vunpack.c.h.b16 %v938
      %v3604 = vunpack.c.l.b16 %v939
      %v3605 = vunpack.c.h.b16 %v939
      %v3606 = vunpack.c.l.b16 %v940
      %v3607 = vunpack.c.h.b16 %v940
      %v3608 = vunpack.c.l.b16 %v941
      %v3609 = vunpack.c.h.b16 %v941
      %v3610 = vunpack.c.l.b16 %v942
      %v3611 = vunpack.c.h.b16 %v942
      %v3612 = vunpack.c.l.b16 %v943
      %v3613 = vunpack.c.h.b16 %v943
      %v3614 = vunpack.c.l.b16 %v944
      %v3615 = vunpack.c.h.b16 %v944
      %v3616 = vunpack.c.l.b16 %v945
      %v3617 = vunpack.c.h.b16 %v945
      %v3618 = vunpack.c.l.b16 %v946
      %v3619 = vunpack.c.h.b16 %v946
      %v3620 = vunpack.c.l.b16 %v947
      %v3621 = vunpack.c.h.b16 %v947
      %v3622 = vunpack.c.l.b16 %v948
      %v3623 = vunpack.c.h.b16 %v948
      %v3624 = vunpack.c.l.b16 %v949
      %v3625 = vunpack.c.h.b16 %v949
      %v3626 = vunpack.c.l.b16 %v950
      %v3627 = vunpack.c.h.b16 %v950
      %v3628 = vunpack.c.l.b16 %v951
      %v3629 = vunpack.c.h.b16 %v951
      %v3630 = vunpack.c.l.b16 %v952
      %v3631 = vunpack.c.h.b16 %v952
      %v3632 = vunpack.c.l.b16 %v953
      %v3633 = vunpack.c.h.b16 %v953
      %v3634 = vunpack.c.l.b16 %v954
      %v3635 = vunpack.c.h.b16 %v954
      %v3636 = vunpack.c.l.b16 %v955
      %v3637 = vunpack.c.h.b16 %v955
      %v3638 = vunpack.c.l.b16 %v956
      %v3639 = vunpack.c.h.b16 %v956
      %v3640 = vunpack.c.l.b16 %v957
      %v3641 = vunpack.c.h.b16 %v957
      %v3642 = vunpack.c.l.b16 %v958
      %v3643 = vunpack.c.h.b16 %v958
      %v3644 = vunpack.c.l.b16 %v959
      %v3645 = vunpack.c.h.b16 %v959
      %v3646 = vunpack.c.l.b16 %v960
      %v3647 = vunpack.c.h.b16 %v960
      %v3648 = vunpack.c.l.b16 %v961
      %v3649 = vunpack.c.h.b16 %v961
      %v3650 = vunpack.c.l.b16 %v962
      %v3651 = vunpack.c.h.b16 %v962
      %v3652 = vunpack.c.l.b16 %v963
      %v3653 = vunpack.c.h.b16 %v963
      %v3654 = vunpack.c.l.b16 %v964
      %v3655 = vunpack.c.h.b16 %v964
      %v3656 = vunpack.c.l.b16 %v965
      %v3657 = vunpack.c.h.b16 %v965
      %v3658 = vunpack.c.l.b16 %v966
      %v3659 = vunpack.c.h.b16 %v966
      %v3660 = vunpack.c.l.b16 %v967
      %v3661 = vunpack.c.h.b16 %v967
      %v3662 = vunpack.c.l.b16 %v968
      %v3663 = vunpack.c.h.b16 %v968
      %v3664 = vunpack.c.l.b16 %v969
      %v3665 = vunpack.c.h.b16 %v969
      %v3666 = vunpack.c.l.b16 %v970
      %v3667 = vunpack.c.h.b16 %v970
      %v3668 = vunpack.c.l.b16 %v971
      %v3669 = vunpack.c.h.b16 %v971
      %v3670 = vunpack.c.l.b16 %v972
      %v3671 = vunpack.c.h.b16 %v972
      %v3672 = vunpack.c.l.b16 %v973
      %v3673 = vunpack.c.h.b16 %v973
      %v3674 = vunpack.c.l.b16 %v974
      %v3675 = vunpack.c.h.b16 %v974
      %v3676 = vunpack.c.l.b16 %v975
      %v3677 = vunpack.c.h.b16 %v975
      %v3678 = vunpack.c.l.b16 %v976
      %v3679 = vunpack.c.h.b16 %v976
      %v3680 = vunpack.c.l.b16 %v977
      %v3681 = vunpack.c.h.b16 %v977
      %v3682 = vunpack.c.l.b16 %v978
      %v3683 = vunpack.c.h.b16 %v978
      %v3684 = vunpack.c.l.b16 %v979
      %v3685 = vunpack.c.h.b16 %v979
      %v3686 = vunpack.c.l.b16 %v980
      %v3687 = vunpack.c.h.b16 %v980
      %v3688 = vunpack.c.l.b16 %v981
      %v3689 = vunpack.c.h.b16 %v981
      %v3690 = vunpack.c.l.b16 %v982
      %v3691 = vunpack.c.h.b16 %v982
      %v3692 = vunpack.c.l.b16 %v983
      %v3693 = vunpack.c.h.b16 %v983
      %v3694 = vunpack.c.l.b16 %v984
      %v3695 = vunpack.c.h.b16 %v984
      %v3696 = vunpack.c.l.b16 %v985
      %v3697 = vunpack.c.h.b16 %v985
      %v3698 = vunpack.c.l.b16 %v986
      %v3699 = vunpack.c.h.b16 %v986
      %v3700 = vunpack.c.l.b16 %v987
      %v3701 = vunpack.c.h.b16 %v987
      %v3702 = vunpack.c.l.b16 %v988
      %v3703 = vunpack.c.h.b16 %v988
      %v3704 = vunpack.c.l.b16 %v989
      %v3705 = vunpack.c.h.b16 %v989
      %v3706 = vunpack.c.l.b16 %v990
      %v3707 = vunpack.c.h.b16 %v990
      %v3708 = vunpack.c.l.b16 %v991
      %v3709 = vunpack.c.h.b16 %v991
      %v3710 = vunpack.c.l.b16 %v992
      %v3711 = vunpack.c.h.b16 %v992
      %v3712 = vunpack.c.l.b16 %v993
      %v3713 = vunpack.c.h.b16 %v993
      %v3714 = vunpack.c.l.b16 %v994
      %v3715 = vunpack.c.h.b16 %v994
      %v3716 = vunpack.c.l.b16 %v995
      %v3717 = vunpack.c.h.b16 %v995
      %v3718 = vunpack.c.l.b16 %v996
      %v3719 = vunpack.c.h.b16 %v996
      %v3720 = vunpack.c.l.b16 %v997
      %v3721 = vunpack.c.h.b16 %v997
      %v3722 = vunpack.c.l.b16 %v998
      %v3723 = vunpack.c.h.b16 %v998
      %v3724 = vunpack.c.l.b16 %v999
      %v3725 = vunpack.c.h.b16 %v999
      %v3726 = vunpack.c.l.b16 %v1000
      %v3727 = vunpack.c.h.b16 %v1000
      %v3728 = vunpack.c.l.b16 %v1001
      %v3729 = vunpack.c.h.b16 %v1001
      %v3730 = vunpack.c.l.b16 %v1002
      %v3731 = vunpack.c.h.b16 %v1002
      %v3732 = vunpack.c.l.b16 %v1003
      %v3733 = vunpack.c.h.b16 %v1003
      %v3734 = vunpack.c.l.b16 %v1004
      %v3735 = vunpack.c.h.b16 %v1004
      %v3736 = vunpack.c.l.b16 %v1005
      %v3737 = vunpack.c.h.b16 %v1005
      %v3738 = vunpack.c.l.b16 %v1006
      %v3739 = vunpack.c.h.b16 %v1006
      %v3740 = vunpack.c.l.b16 %v1007
      %v3741 = vunpack.c.h.b16 %v1007
      %v3742 = vunpack.c.l.b16 %v1008
      %v3743 = vunpack.c.h.b16 %v1008
      %v3744 = vunpack.c.l.b16 %v1009
      %v3745 = vunpack.c.h.b16 %v1009
      %v3746 = vunpack.c.l.b16 %v1010
      %v3747 = vunpack.c.h.b16 %v1010
      %v3748 = vunpack.c.l.b16 %v1011
      %v3749 = vunpack.c.h.b16 %v1011
      %v3750 = vunpack.c.l.b16 %v1012
      %v3751 = vunpack.c.h.b16 %v1012
      %v3752 = vunpack.c.l.b16 %v1013
      %v3753 = vunpack.c.h.b16 %v1013
      %v3754 = vunpack.c.l.b16 %v1014
      %v3755 = vunpack.c.h.b16 %v1014
      %v3756 = vunpack.c.l.b16 %v1015
      %v3757 = vunpack.c.h.b16 %v1015
      %v3758 = vunpack.c.l.b16 %v1016
      %v3759 = vunpack.c.h.b16 %v1016
      %v3760 = vunpack.c.l.b16 %v1017
      %v3761 = vunpack.c.h.b16 %v1017
      %v3762 = vunpack.c.l.b16 %v1018
      %v3763 = vunpack.c.h.b16 %v1018
      %v3764 = vunpack.c.l.b16 %v1019
      %v3765 = vunpack.c.h.b16 %v1019
      %v3766 = vunpack.c.l.b16 %v1020
      %v3767 = vunpack.c.h.b16 %v1020
      %v3768 = vunpack.c.l.b16 %v1021
      %v3769 = vunpack.c.h.b16 %v1021
      %v3770 = vunpack.c.l.b16 %v1022
      %v3771 = vunpack.c.h.b16 %v1022
      %v3772 = vunpack.c.l.b16 %v1023
      %v3773 = vunpack.c.h.b16 %v1023
      %v3774 = vunpack.c.l.b16 %v1024
      %v3775 = vunpack.c.h.b16 %v1024
      %v3776 = vunpack.c.l.b16 %v1025
      %v3777 = vunpack.c.h.b16 %v1025
      %v3778 = vunpack.c.l.b16 %v1026
      %v3779 = vunpack.c.h.b16 %v1026
      %v3780 = vunpack.c.l.b16 %v1027
      %v3781 = vunpack.c.h.b16 %v1027
      %v3782 = vunpack.c.l.b16 %v1028
      %v3783 = vunpack.c.h.b16 %v1028
      %v3784 = vunpack.c.l.b16 %v1029
      %v3785 = vunpack.c.h.b16 %v1029
      %v3786 = vunpack.c.l.b16 %v1030
      %v3787 = vunpack.c.h.b16 %v1030
      %v3788 = vunpack.c.l.b16 %v1031
      %v3789 = vunpack.c.h.b16 %v1031
      %v3790 = vunpack.c.l.b16 %v1032
      %v3791 = vunpack.c.h.b16 %v1032
      %v3792 = vunpack.c.l.b16 %v1033
      %v3793 = vunpack.c.h.b16 %v1033
      %v3794 = vunpack.c.l.b16 %v1034
      %v3795 = vunpack.c.h.b16 %v1034
      %v3796 = vunpack.c.l.b16 %v1035
      %v3797 = vunpack.c.h.b16 %v1035
      %v3798 = vunpack.c.l.b16 %v1036
      %v3799 = vunpack.c.h.b16 %v1036
      %v3800 = vunpack.c.l.b16 %v1037
      %v3801 = vunpack.c.h.b16 %v1037
      %v3802 = vunpack.c.l.b16 %v1038
      %v3803 = vunpack.c.h.b16 %v1038
      %v3804 = vunpack.c.l.b16 %v1039
      %v3805 = vunpack.c.h.b16 %v1039
      %v3806 = vunpack.c.l.b16 %v1040
      %v3807 = vunpack.c.h.b16 %v1040
      %v3808 = vunpack.c.l.b16 %v1041
      %v3809 = vunpack.c.h.b16 %v1041
      %v3810 = vunpack.c.l.b16 %v1042
      %v3811 = vunpack.c.h.b16 %v1042
      %v3812 = vunpack.c.l.b16 %v1043
      %v3813 = vunpack.c.h.b16 %v1043
      %v3814 = vunpack.c.l.b16 %v1044
      %v3815 = vunpack.c.h.b16 %v1044
      %v3816 = vunpack.c.l.b16 %v1045
      %v3817 = vunpack.c.h.b16 %v1045
      %v3818 = vunpack.c.l.b16 %v1046
      %v3819 = vunpack.c.h.b16 %v1046
      %v3820 = vpack.c.b16 %v2222, %v2220
      %v3821 = vpack.c.b16 %v2223, %v2221
      %v3822 = vpack.c.b16 %v2226, %v2224
      %v3823 = vpack.c.b16 %v2227, %v2225
      %v3824 = vpack.c.b16 %v2230, %v2228
      %v3825 = vpack.c.b16 %v2231, %v2229
      %v3826 = vpack.c.b16 %v2234, %v2232
      %v3827 = vpack.c.b16 %v2235, %v2233
      %v3828 = vpack.c.b16 %v2238, %v2236
      %v3829 = vpack.c.b16 %v2239, %v2237
      %v3830 = vpack.c.b16 %v2242, %v2240
      %v3831 = vpack.c.b16 %v2243, %v2241
      %v3832 = vpack.c.b16 %v2246, %v2244
      %v3833 = vpack.c.b16 %v2247, %v2245
      %v3834 = vpack.c.b16 %v2250, %v2248
      %v3835 = vpack.c.b16 %v2251, %v2249
      %v3836 = vpack.c.b16 %v2254, %v2252
      %v3837 = vpack.c.b16 %v2255, %v2253
      %v3838 = vpack.c.b16 %v2258, %v2256
      %v3839 = vpack.c.b16 %v2259, %v2257
      %v3840 = vpack.c.b16 %v2262, %v2260
      %v3841 = vpack.c.b16 %v2263, %v2261
      %v3842 = vpack.c.b16 %v2266, %v2264
      %v3843 = vpack.c.b16 %v2267, %v2265
      %v3844 = vpack.c.b16 %v2270, %v2268
      %v3845 = vpack.c.b16 %v2271, %v2269
      %v3846 = vpack.c.b16 %v2274, %v2272
      %v3847 = vpack.c.b16 %v2275, %v2273
      %v3848 = vpack.c.b16 %v2278, %v2276
      %v3849 = vpack.c.b16 %v2279, %v2277
      %v3850 = vpack.c.b16 %v2282, %v2280
      %v3851 = vpack.c.b16 %v2283, %v2281
      %v3852 = vpack.c.b16 %v2286, %v2284
      %v3853 = vpack.c.b16 %v2287, %v2285
      %v3854 = vpack.c.b16 %v2290, %v2288
      %v3855 = vpack.c.b16 %v2291, %v2289
      %v3856 = vpack.c.b16 %v2294, %v2292
      %v3857 = vpack.c.b16 %v2295, %v2293
      %v3858 = vpack.c.b16 %v2298, %v2296
      %v3859 = vpack.c.b16 %v2299, %v2297
      %v3860 = vpack.c.b16 %v2302, %v2300
      %v3861 = vpack.c.b16 %v2303, %v2301
      %v3862 = vpack.c.b16 %v2306, %v2304
      %v3863 = vpack.c.b16 %v2307, %v2305
      %v3864 = vpack.c.b16 %v2310, %v2308
      %v3865 = vpack.c.b16 %v2311, %v2309
      %v3866 = vpack.c.b16 %v2314, %v2312
      %v3867 = vpack.c.b16 %v2315, %v2313
      %v3868 = vpack.c.b16 %v2318, %v2316
      %v3869 = vpack.c.b16 %v2319, %v2317
      %v3870 = vpack.c.b16 %v2322, %v2320
      %v3871 = vpack.c.b16 %v2323, %v2321
      %v3872 = vpack.c.b16 %v2326, %v2324
      %v3873 = vpack.c.b16 %v2327, %v2325
      %v3874 = vpack.c.b16 %v2330, %v2328
      %v3875 = vpack.c.b16 %v2331, %v2329
      %v3876 = vpack.c.b16 %v2334, %v2332
      %v3877 = vpack.c.b16 %v2335, %v2333
      %v3878 = vpack.c.b16 %v2338, %v2336
      %v3879 = vpack.c.b16 %v2339, %v2337
      %v3880 = vpack.c.b16 %v2342, %v2340
      %v3881 = vpack.c.b16 %v2343, %v2341
      %v3882 = vpack.c.b16 %v2346, %v2344
      %v3883 = vpack.c.b16 %v2347, %v2345
      %v3884 = vpack.c.b16 %v2350, %v2348
      %v3885 = vpack.c.b16 %v2351, %v2349
      %v3886 = vpack.c.b16 %v2354, %v2352
      %v3887 = vpack.c.b16 %v2355, %v2353
      %v3888 = vpack.c.b16 %v2358, %v2356
      %v3889 = vpack.c.b16 %v2359, %v2357
      %v3890 = vpack.c.b16 %v2362, %v2360
      %v3891 = vpack.c.b16 %v2363, %v2361
      %v3892 = vpack.c.b16 %v2366, %v2364
      %v3893 = vpack.c.b16 %v2367, %v2365
      %v3894 = vpack.c.b16 %v2370, %v2368
      %v3895 = vpack.c.b16 %v2371, %v2369
      %v3896 = vpack.c.b16 %v2374, %v2372
      %v3897 = vpack.c.b16 %v2375, %v2373
      %v3898 = vpack.c.b16 %v2378, %v2376
      %v3899 = vpack.c.b16 %v2379, %v2377
      %v3900 = vpack.c.b16 %v2382, %v2380
      %v3901 = vpack.c.b16 %v2383, %v2381
      %v3902 = vpack.c.b16 %v2386, %v2384
      %v3903 = vpack.c.b16 %v2387, %v2385
      %v3904 = vpack.c.b16 %v2390, %v2388
      %v3905 = vpack.c.b16 %v2391, %v2389
      %v3906 = vpack.c.b16 %v2394, %v2392
      %v3907 = vpack.c.b16 %v2395, %v2393
      %v3908 = vpack.c.b16 %v2398, %v2396
      %v3909 = vpack.c.b16 %v2399, %v2397
      %v3910 = vpack.c.b16 %v2402, %v2400
      %v3911 = vpack.c.b16 %v2403, %v2401
      %v3912 = vpack.c.b16 %v2406, %v2404
      %v3913 = vpack.c.b16 %v2407, %v2405
      %v3914 = vpack.c.b16 %v2410, %v2408
      %v3915 = vpack.c.b16 %v2411, %v2409
      %v3916 = vpack.c.b16 %v2414, %v2412
      %v3917 = vpack.c.b16 %v2415, %v2413
      %v3918 = vpack.c.b16 %v2418, %v2416
      %v3919 = vpack.c.b16 %v2419, %v2417
      %v3920 = vpack.c.b16 %v2422, %v2420
      %v3921 = vpack.c.b16 %v2423, %v2421
      %v3922 = vpack.c.b16 %v2426, %v2424
      %v3923 = vpack.c.b16 %v2427, %v2425
      %v3924 = vpack.c.b16 %v2430, %v2428
      %v3925 = vpack.c.b16 %v2431, %v2429
      %v3926 = vpack.c.b16 %v2434, %v2432
      %v3927 = vpack.c.b16 %v2435, %v2433
      %v3928 = vpack.c.b16 %v2438, %v2436
      %v3929 = vpack.c.b16 %v2439, %v2437
      %v3930 = vpack.c.b16 %v2442, %v2440
      %v3931 = vpack.c.b16 %v2443, %v2441
      %v3932 = vpack.c.b16 %v2446, %v2444
      %v3933 = vpack.c.b16 %v2447, %v2445
      %v3934 = vpack.c.b16 %v2450, %v2448
      %v3935 = vpack.c.b16 %v2451, %v2449
      %v3936 = vpack.c.b16 %v2454, %v2452
      %v3937 = vpack.c.b16 %v2455, %v2453
      %v3938 = vpack.c.b16 %v2458, %v2456
      %v3939 = vpack.c.b16 %v2459, %v2457
      %v3940 = vpack.c.b16 %v2462, %v2460
      %v3941 = vpack.c.b16 %v2463, %v2461
      %v3942 = vpack.c.b16 %v2466, %v2464
      %v3943 = vpack.c.b16 %v2467, %v2465
      %v3944 = vpack.c.b16 %v2470, %v2468
      %v3945 = vpack.c.b16 %v2471, %v2469
      %v3946 = vpack.c.b16 %v2474, %v2472
      %v3947 = vpack.c.b16 %v2475, %v2473
      %v3948 = vpack.c.b16 %v2478, %v2476
      %v3949 = vpack.c.b16 %v2479, %v2477
      %v3950 = vpack.c.b16 %v2482, %v2480
      %v3951 = vpack.c.b16 %v2483, %v2481
      %v3952 = vpack.c.b16 %v2486, %v2484
      %v3953 = vpack.c.b16 %v2487, %v2485
      %v3954 = vpack.c.b16 %v2490, %v2488
      %v3955 = vpack.c.b16 %v2491, %v2489
      %v3956 = vpack.c.b16 %v2494, %v2492
      %v3957 = vpack.c.b16 %v2495, %v2493
      %v3958 = vpack.c.b16 %v2498, %v2496
      %v3959 = vpack.c.b16 %v2499, %v2497
      %v3960 = vpack.c.b16 %v2502, %v2500
      %v3961 = vpack.c.b16 %v2503, %v2501
      %v3962 = vpack.c.b16 %v2506, %v2504
      %v3963 = vpack.c.b16 %v2507, %v2505
      %v3964 = vpack.c.b16 %v2510, %v2508
      %v3965 = vpack.c.b16 %v2511, %v2509
      %v3966 = vpack.c.b16 %v2514, %v2512
      %v3967 = vpack.c.b16 %v2515, %v2513
      %v3968 = vpack.c.b16 %v2518, %v2516
      %v3969 = vpack.c.b16 %v2519, %v2517
      %v3970 = vpack.c.b16 %v2522, %v2520
      %v3971 = vpack.c.b16 %v2523, %v2521
      %v3972 = vpack.c.b16 %v2526, %v2524
      %v3973 = vpack.c.b16 %v2527, %v2525
      %v3974 = vpack.c.b16 %v2530, %v2528
      %v3975 = vpack.c.b16 %v2531, %v2529
      %v3976 = vpack.c.b16 %v2534, %v2532
      %v3977 = vpack.c.b16 %v2535, %v2533
      %v3978 = vpack.c.b16 %v2538, %v2536
      %v3979 = vpack.c.b16 %v2539, %v2537
      %v3980 = vpack.c.b16 %v2542, %v2540
      %v3981 = vpack.c.b16 %v2543, %v2541
      %v3982 = vpack.c.b16 %v2546, %v2544
      %v3983 = vpack.c.b16 %v2547, %v2545
      %v3984 = vpack.c.b16 %v2550, %v2548
      %v3985 = vpack.c.b16 %v2551, %v2549
      %v3986 = vpack.c.b16 %v2554, %v2552
      %v3987 = vpack.c.b16 %v2555, %v2553
      %v3988 = vpack.c.b16 %v2558, %v2556
      %v3989 = vpack.c.b16 %v2559, %v2557
      %v3990 = vpack.c.b16 %v2562, %v2560
      %v3991 = vpack.c.b16 %v2563, %v2561
      %v3992 = vpack.c.b16 %v2566, %v2564
      %v3993 = vpack.c.b16 %v2567, %v2565
      %v3994 = vpack.c.b16 %v2570, %v2568
      %v3995 = vpack.c.b16 %v2571, %v2569
      %v3996 = vpack.c.b16 %v2574, %v2572
      %v3997 = vpack.c.b16 %v2575, %v2573
      %v3998 = vpack.c.b16 %v2578, %v2576
      %v3999 = vpack.c.b16 %v2579, %v2577
      %v4000 = vpack.c.b16 %v2582, %v2580
      %v4001 = vpack.c.b16 %v2583, %v2581
      %v4002 = vpack.c.b16 %v2586, %v2584
      %v4003 = vpack.c.b16 %v2587, %v2585
      %v4004 = vpack.c.b16 %v2590, %v2588
      %v4005 = vpack.c.b16 %v2591, %v2589
      %v4006 = vpack.c.b16 %v2594, %v2592
      %v4007 = vpack.c.b16 %v2595, %v2593
      %v4008 = vpack.c.b16 %v2598, %v2596
      %v4009 = vpack.c.b16 %v2599, %v2597
      %v4010 = vpack.c.b16 %v2602, %v2600
      %v4011 = vpack.c.b16 %v2603, %v2601
      %v4012 = vpack.c.b16 %v2606, %v2604
      %v4013 = vpack.c.b16 %v2607, %v2605
      %v4014 = vpack.c.b16 %v2610, %v2608
      %v4015 = vpack.c.b16 %v2611, %v2609
      %v4016 = vpack.c.b16 %v2614, %v2612
      %v4017 = vpack.c.b16 %v2615, %v2613
      %v4018 = vpack.c.b16 %v2618, %v2616
      %v4019 = vpack.c.b16 %v2619, %v2617
      %v4020 = vpack.c.b16 %v2622, %v2620
      %v4021 = vpack.c.b16 %v2623, %v2621
      %v4022 = vpack.c.b16 %v2626, %v2624
      %v4023 = vpack.c.b16 %v2627, %v2625
      %v4024 = vpack.c.b16 %v2630, %v2628
      %v4025 = vpack.c.b16 %v2631, %v2629
      %v4026 = vpack.c.b16 %v2634, %v2632
      %v4027 = vpack.c.b16 %v2635, %v2633
      %v4028 = vpack.c.b16 %v2638, %v2636
      %v4029 = vpack.c.b16 %v2639, %v2637
      %v4030 = vpack.c.b16 %v2642, %v2640
      %v4031 = vpack.c.b16 %v2643, %v2641
      %v4032 = vpack.c.b16 %v2646, %v2644
      %v4033 = vpack.c.b16 %v2647, %v2645
      %v4034 = vpack.c.b16 %v2650, %v2648
      %v4035 = vpack.c.b16 %v2651, %v2649
      %v4036 = vpack.c.b16 %v2654, %v2652
      %v4037 = vpack.c.b16 %v2655, %v2653
      %v4038 = vpack.c.b16 %v2658, %v2656
      %v4039 = vpack.c.b16 %v2659, %v2657
      %v4040 = vpack.c.b16 %v2662, %v2660
      %v4041 = vpack.c.b16 %v2663, %v2661
      %v4042 = vpack.c.b16 %v2666, %v2664
      %v4043 = vpack.c.b16 %v2667, %v2665
      %v4044 = vpack.c.b16 %v2670, %v2668
      %v4045 = vpack.c.b16 %v2671, %v2669
      %v4046 = vpack.c.b16 %v2674, %v2672
      %v4047 = vpack.c.b16 %v2675, %v2673
      %v4048 = vpack.c.b16 %v2678, %v2676
      %v4049 = vpack.c.b16 %v2679, %v2677
      %v4050 = vpack.c.b16 %v2682, %v2680
      %v4051 = vpack.c.b16 %v2683, %v2681
      %v4052 = vpack.c.b16 %v2686, %v2684
      %v4053 = vpack.c.b16 %v2687, %v2685
      %v4054 = vpack.c.b16 %v2690, %v2688
      %v4055 = vpack.c.b16 %v2691, %v2689
      %v4056 = vpack.c.b16 %v2694, %v2692
      %v4057 = vpack.c.b16 %v2695, %v2693
      %v4058 = vpack.c.b16 %v2698, %v2696
      %v4059 = vpack.c.b16 %v2699, %v2697
      %v4060 = vpack.c.b16 %v2702, %v2700
      %v4061 = vpack.c.b16 %v2703, %v2701
      %v4062 = vpack.c.b16 %v2706, %v2704
      %v4063 = vpack.c.b16 %v2707, %v2705
      %v4064 = vpack.c.b16 %v2710, %v2708
      %v4065 = vpack.c.b16 %v2711, %v2709
      %v4066 = vpack.c.b16 %v2714, %v2712
      %v4067 = vpack.c.b16 %v2715, %v2713
      %v4068 = vpack.c.b16 %v2718, %v2716
      %v4069 = vpack.c.b16 %v2719, %v2717
      %v4070 = vpack.c.b16 %v2722, %v2720
      %v4071 = vpack.c.b16 %v2723, %v2721
      %v4072 = vpack.c.b16 %v2726, %v2724
      %v4073 = vpack.c.b16 %v2727, %v2725
      %v4074 = vpack.c.b16 %v2730, %v2728
      %v4075 = vpack.c.b16 %v2731, %v2729
      %v4076 = vpack.c.b16 %v2734, %v2732
      %v4077 = vpack.c.b16 %v2735, %v2733
      %v4078 = vpack.c.b16 %v2738, %v2736
      %v4079 = vpack.c.b16 %v2739, %v2737
      %v4080 = vpack.c.b16 %v2742, %v2740
      %v4081 = vpack.c.b16 %v2743, %v2741
      %v4082 = vpack.c.b16 %v2746, %v2744
      %v4083 = vpack.c.b16 %v2747, %v2745
      %v4084 = vpack.c.b16 %v2750, %v2748
      %v4085 = vpack.c.b16 %v2751, %v2749
      %v4086 = vpack.c.b16 %v2754, %v2752
      %v4087 = vpack.c.b16 %v2755, %v2753
      %v4088 = vpack.c.b16 %v2758, %v2756
      %v4089 = vpack.c.b16 %v2759, %v2757
      %v4090 = vpack.c.b16 %v2762, %v2760
      %v4091 = vpack.c.b16 %v2763, %v2761
      %v4092 = vpack.c.b16 %v2766, %v2764
      %v4093 = vpack.c.b16 %v2767, %v2765
      %v4094 = vpack.c.b16 %v2770, %v2768
      %v4095 = vpack.c.b16 %v2771, %v2769
      %v4096 = vpack.c.b16 %v2774, %v2772
      %v4097 = vpack.c.b16 %v2775, %v2773
      %v4098 = vpack.c.b16 %v2778, %v2776
      %v4099 = vpack.c.b16 %v2779, %v2777
      %v4100 = vpack.c.b16 %v2782, %v2780
      %v4101 = vpack.c.b16 %v2783, %v2781
      %v4102 = vpack.c.b16 %v2786, %v2784
      %v4103 = vpack.c.b16 %v2787, %v2785
      %v4104 = vpack.c.b16 %v2790, %v2788
      %v4105 = vpack.c.b16 %v2791, %v2789
      %v4106 = vpack.c.b16 %v2794, %v2792
      %v4107 = vpack.c.b16 %v2795, %v2793
      %v4108 = vpack.c.b16 %v2798, %v2796
      %v4109 = vpack.c.b16 %v2799, %v2797
      %v4110 = vpack.c.b16 %v2802, %v2800
      %v4111 = vpack.c.b16 %v2803, %v2801
      %v4112 = vpack.c.b16 %v2806, %v2804
      %v4113 = vpack.c.b16 %v2807, %v2805
      %v4114 = vpack.c.b16 %v2810, %v2808
      %v4115 = vpack.c.b16 %v2811, %v2809
      %v4116 = vpack.c.b16 %v2814, %v2812
      %v4117 = vpack.c.b16 %v2815, %v2813
      %v4118 = vpack.c.b16 %v2818, %v2816
      %v4119 = vpack.c.b16 %v2819, %v2817
      %v4120 = vpack.c.b16 %v2822, %v2820
      %v4121 = vpack.c.b16 %v2823, %v2821
      %v4122 = vpack.c.b16 %v2826, %v2824
      %v4123 = vpack.c.b16 %v2827, %v2825
      %v4124 = vpack.c.b16 %v2830, %v2828
      %v4125 = vpack.c.b16 %v2831, %v2829
      %v4126 = vpack.c.b16 %v2834, %v2832
      %v4127 = vpack.c.b16 %v2835, %v2833
      %v4128 = vpack.c.b16 %v2838, %v2836
      %v4129 = vpack.c.b16 %v2839, %v2837
      %v4130 = vpack.c.b16 %v2842, %v2840
      %v4131 = vpack.c.b16 %v2843, %v2841
      %v4132 = vpack.c.b16 %v2846, %v2844
      %v4133 = vpack.c.b16 %v2847, %v2845
      %v4134 = vpack.c.b16 %v2850, %v2848
      %v4135 = vpack.c.b16 %v2851, %v2849
      %v4136 = vpack.c.b16 %v2854, %v2852
      %v4137 = vpack.c.b16 %v2855, %v2853
      %v4138 = vpack.c.b16 %v2858, %v2856
      %v4139 = vpack.c.b16 %v2859, %v2857
      %v4140 = vpack.c.b16 %v2862, %v2860
      %v4141 = vpack.c.b16 %v2863, %v2861
      %v4142 = vpack.c.b16 %v2866, %v2864
      %v4143 = vpack.c.b16 %v2867, %v2865
      %v4144 = vpack.c.b16 %v2870, %v2868
      %v4145 = vpack.c.b16 %v2871, %v2869
      %v4146 = vpack.c.b16 %v2874, %v2872
      %v4147 = vpack.c.b16 %v2875, %v2873
      %v4148 = vpack.c.b16 %v2878, %v2876
      %v4149 = vpack.c.b16 %v2879, %v2877
      %v4150 = vpack.c.b16 %v2882, %v2880
      %v4151 = vpack.c.b16 %v2883, %v2881
      %v4152 = vpack.c.b16 %v2886, %v2884
      %v4153 = vpack.c.b16 %v2887, %v2885
      %v4154 = vpack.c.b16 %v2890, %v2888
      %v4155 = vpack.c.b16 %v2891, %v2889
      %v4156 = vpack.c.b16 %v2894, %v2892
      %v4157 = vpack.c.b16 %v2895, %v2893
      %v4158 = vpack.c.b16 %v2898, %v2896
      %v4159 = vpack.c.b16 %v2899, %v2897
      %v4160 = vpack.c.b16 %v2902, %v2900
      %v4161 = vpack.c.b16 %v2903, %v2901
      %v4162 = vpack.c.b16 %v2906, %v2904
      %v4163 = vpack.c.b16 %v2907, %v2905
      %v4164 = vpack.c.b16 %v2910, %v2908
      %v4165 = vpack.c.b16 %v2911, %v2909
      %v4166 = vpack.c.b16 %v2914, %v2912
      %v4167 = vpack.c.b16 %v2915, %v2913
      %v4168 = vpack.c.b16 %v2918, %v2916
      %v4169 = vpack.c.b16 %v2919, %v2917
      %v4170 = vpack.c.b16 %v2922, %v2920
      %v4171 = vpack.c.b16 %v2923, %v2921
      %v4172 = vpack.c.b16 %v2926, %v2924
      %v4173 = vpack.c.b16 %v2927, %v2925
      %v4174 = vpack.c.b16 %v2930, %v2928
      %v4175 = vpack.c.b16 %v2931, %v2929
      %v4176 = vpack.c.b16 %v2934, %v2932
      %v4177 = vpack.c.b16 %v2935, %v2933
      %v4178 = vpack.c.b16 %v2938, %v2936
      %v4179 = vpack.c.b16 %v2939, %v2937
      %v4180 = vpack.c.b16 %v2942, %v2940
      %v4181 = vpack.c.b16 %v2943, %v2941
      %v4182 = vpack.c.b16 %v2946, %v2944
      %v4183 = vpack.c.b16 %v2947, %v2945
      %v4184 = vpack.c.b16 %v2950, %v2948
      %v4185 = vpack.c.b16 %v2951, %v2949
      %v4186 = vpack.c.b16 %v2954, %v2952
      %v4187 = vpack.c.b16 %v2955, %v2953
      %v4188 = vpack.c.b16 %v2958, %v2956
      %v4189 = vpack.c.b16 %v2959, %v2957
      %v4190 = vpack.c.b16 %v2962, %v2960
      %v4191 = vpack.c.b16 %v2963, %v2961
      %v4192 = vpack.c.b16 %v2966, %v2964
      %v4193 = vpack.c.b16 %v2967, %v2965
      %v4194 = vpack.c.b16 %v2970, %v2968
      %v4195 = vpack.c.b16 %v2971, %v2969
      %v4196 = vpack.c.b16 %v2974, %v2972
      %v4197 = vpack.c.b16 %v2975, %v2973
      %v4198 = vpack.c.b16 %v2978, %v2976
      %v4199 = vpack.c.b16 %v2979, %v2977
      %v4200 = vpack.c.b16 %v2982, %v2980
      %v4201 = vpack.c.b16 %v2983, %v2981
      %v4202 = vpack.c.b16 %v2986, %v2984
      %v4203 = vpack.c.b16 %v2987, %v2985
      %v4204 = vpack.c.b16 %v2990, %v2988
      %v4205 = vpack.c.b16 %v2991, %v2989
      %v4206 = vpack.c.b16 %v2994, %v2992
      %v4207 = vpack.c.b16 %v2995, %v2993
      %v4208 = vpack.c.b16 %v2998, %v2996
      %v4209 = vpack.c.b16 %v2999, %v2997
      %v4210 = vpack.c.b16 %v3002, %v3000
      %v4211 = vpack.c.b16 %v3003, %v3001
      %v4212 = vpack.c.b16 %v3006, %v3004
      %v4213 = vpack.c.b16 %v3007, %v3005
      %v4214 = vpack.c.b16 %v3010, %v3008
      %v4215 = vpack.c.b16 %v3011, %v3009
      %v4216 = vpack.c.b16 %v3014, %v3012
      %v4217 = vpack.c.b16 %v3015, %v3013
      %v4218 = vpack.c.b16 %v3018, %v3016
      %v4219 = vpack.c.b16 %v3019, %v3017
      %v4220 = vpack.c.b16 %v3022, %v3020
      %v4221 = vpack.c.b16 %v3023, %v3021
      %v4222 = vpack.c.b16 %v3026, %v3024
      %v4223 = vpack.c.b16 %v3027, %v3025
      %v4224 = vpack.c.b16 %v3030, %v3028
      %v4225 = vpack.c.b16 %v3031, %v3029
      %v4226 = vpack.c.b16 %v3034, %v3032
      %v4227 = vpack.c.b16 %v3035, %v3033
      %v4228 = vpack.c.b16 %v3038, %v3036
      %v4229 = vpack.c.b16 %v3039, %v3037
      %v4230 = vpack.c.b16 %v3042, %v3040
      %v4231 = vpack.c.b16 %v3043, %v3041
      %v4232 = vpack.c.b16 %v3046, %v3044
      %v4233 = vpack.c.b16 %v3047, %v3045
      %v4234 = vpack.c.b16 %v3050, %v3048
      %v4235 = vpack.c.b16 %v3051, %v3049
      %v4236 = vpack.c.b16 %v3054, %v3052
      %v4237 = vpack.c.b16 %v3055, %v3053
      %v4238 = vpack.c.b16 %v3058, %v3056
      %v4239 = vpack.c.b16 %v3059, %v3057
      %v4240 = vpack.c.b16 %v3062, %v3060
      %v4241 = vpack.c.b16 %v3063, %v3061
      %v4242 = vpack.c.b16 %v3066, %v3064
      %v4243 = vpack.c.b16 %v3067, %v3065
      %v4244 = vpack.c.b16 %v3070, %v3068
      %v4245 = vpack.c.b16 %v3071, %v3069
      %v4246 = vpack.c.b16 %v3074, %v3072
      %v4247 = vpack.c.b16 %v3075, %v3073
      %v4248 = vpack.c.b16 %v3078, %v3076
      %v4249 = vpack.c.b16 %v3079, %v3077
      %v4250 = vpack.c.b16 %v3082, %v3080
      %v4251 = vpack.c.b16 %v3083, %v3081
      %v4252 = vpack.c.b16 %v3086, %v3084
      %v4253 = vpack.c.b16 %v3087, %v3085
      %v4254 = vpack.c.b16 %v3090, %v3088
      %v4255 = vpack.c.b16 %v3091, %v3089
      %v4256 = vpack.c.b16 %v3094, %v3092
      %v4257 = vpack.c.b16 %v3095, %v3093
      %v4258 = vpack.c.b16 %v3098, %v3096
      %v4259 = vpack.c.b16 %v3099, %v3097
      %v4260 = vpack.c.b16 %v3102, %v3100
      %v4261 = vpack.c.b16 %v3103, %v3101
      %v4262 = vpack.c.b16 %v3106, %v3104
      %v4263 = vpack.c.b16 %v3107, %v3105
      %v4264 = vpack.c.b16 %v3110, %v3108
      %v4265 = vpack.c.b16 %v3111, %v3109
      %v4266 = vpack.c.b16 %v3114, %v3112
      %v4267 = vpack.c.b16 %v3115, %v3113
      %v4268 = vpack.c.b16 %v3118, %v3116
      %v4269 = vpack.c.b16 %v3119, %v3117
      %v4270 = vpack.c.b16 %v3122, %v3120
      %v4271 = vpack.c.b16 %v3123, %v3121
      %v4272 = vpack.c.b16 %v3126, %v3124
      %v4273 = vpack.c.b16 %v3127, %v3125
      %v4274 = vpack.c.b16 %v3130, %v3128
      %v4275 = vpack.c.b16 %v3131, %v3129
      %v4276 = vpack.c.b16 %v3134, %v3132
      %v4277 = vpack.c.b16 %v3135, %v3133
      %v4278 = vpack.c.b16 %v3138, %v3136
      %v4279 = vpack.c.b16 %v3139, %v3137
      %v4280 = vpack.c.b16 %v3142, %v3140
      %v4281 = vpack.c.b16 %v3143, %v3141
      %v4282 = vpack.c.b16 %v3146, %v3144
      %v4283 = vpack.c.b16 %v3147, %v3145
      %v4284 = vpack.c.b16 %v3150, %v3148
      %v4285 = vpack.c.b16 %v3151, %v3149
      %v4286 = vpack.c.b16 %v3154, %v3152
      %v4287 = vpack.c.b16 %v3155, %v3153
      %v4288 = vpack.c.b16 %v3158, %v3156
      %v4289 = vpack.c.b16 %v3159, %v3157
      %v4290 = vpack.c.b16 %v3162, %v3160
      %v4291 = vpack.c.b16 %v3163, %v3161
      %v4292 = vpack.c.b16 %v3166, %v3164
      %v4293 = vpack.c.b16 %v3167, %v3165
      %v4294 = vpack.c.b16 %v3170, %v3168
      %v4295 = vpack.c.b16 %v3171, %v3169
      %v4296 = vpack.c.b16 %v3174, %v3172
      %v4297 = vpack.c.b16 %v3175, %v3173
      %v4298 = vpack.c.b16 %v3178, %v3176
      %v4299 = vpack.c.b16 %v3179, %v3177
      %v4300 = vpack.c.b16 %v3182, %v3180
      %v4301 = vpack.c.b16 %v3183, %v3181
      %v4302 = vpack.c.b16 %v3186, %v3184
      %v4303 = vpack.c.b16 %v3187, %v3185
      %v4304 = vpack.c.b16 %v3190, %v3188
      %v4305 = vpack.c.b16 %v3191, %v3189
      %v4306 = vpack.c.b16 %v3194, %v3192
      %v4307 = vpack.c.b16 %v3195, %v3193
      %v4308 = vpack.c.b16 %v3198, %v3196
      %v4309 = vpack.c.b16 %v3199, %v3197
      %v4310 = vpack.c.b16 %v3202, %v3200
      %v4311 = vpack.c.b16 %v3203, %v3201
      %v4312 = vpack.c.b16 %v3206, %v3204
      %v4313 = vpack.c.b16 %v3207, %v3205
      %v4314 = vpack.c.b16 %v3210, %v3208
      %v4315 = vpack.c.b16 %v3211, %v3209
      %v4316 = vpack.c.b16 %v3214, %v3212
      %v4317 = vpack.c.b16 %v3215, %v3213
      %v4318 = vpack.c.b16 %v3218, %v3216
      %v4319 = vpack.c.b16 %v3219, %v3217
      %v4320 = vpack.c.b16 %v3222, %v3220
      %v4321 = vpack.c.b16 %v3223, %v3221
      %v4322 = vpack.c.b16 %v3226, %v3224
      %v4323 = vpack.c.b16 %v3227, %v3225
      %v4324 = vpack.c.b16 %v3230, %v3228
      %v4325 = vpack.c.b16 %v3231, %v3229
      %v4326 = vpack.c.b16 %v3234, %v3232
      %v4327 = vpack.c.b16 %v3235, %v3233
      %v4328 = vpack.c.b16 %v3238, %v3236
      %v4329 = vpack.c.b16 %v3239, %v3237
      %v4330 = vpack.c.b16 %v3242, %v3240
      %v4331 = vpack.c.b16 %v3243, %v3241
      %v4332 = vpack.c.b16 %v3246, %v3244
      %v4333 = vpack.c.b16 %v3247, %v3245
      %v4334 = vpack.c.b16 %v3250, %v3248
      %v4335 = vpack.c.b16 %v3251, %v3249
      %v4336 = vpack.c.b16 %v3254, %v3252
      %v4337 = vpack.c.b16 %v3255, %v3253
      %v4338 = vpack.c.b16 %v3258, %v3256
      %v4339 = vpack.c.b16 %v3259, %v3257
      %v4340 = vpack.c.b16 %v3262, %v3260
      %v4341 = vpack.c.b16 %v3263, %v3261
      %v4342 = vpack.c.b16 %v3266, %v3264
      %v4343 = vpack.c.b16 %v3267, %v3265
      %v4344 = vpack.c.b16 %v3270, %v3268
      %v4345 = vpack.c.b16 %v3271, %v3269
      %v4346 = vpack.c.b16 %v3274, %v3272
      %v4347 = vpack.c.b16 %v3275, %v3273
      %v4348 = vpack.c.b16 %v3278, %v3276
      %v4349 = vpack.c.b16 %v3279, %v3277
      %v4350 = vpack.c.b16 %v3282, %v3280
      %v4351 = vpack.c.b16 %v3283, %v3281
      %v4352 = vpack.c.b16 %v3286, %v3284
      %v4353 = vpack.c.b16 %v3287, %v3285
      %v4354 = vpack.c.b16 %v3290, %v3288
      %v4355 = vpack.c.b16 %v3291, %v3289
      %v4356 = vpack.c.b16 %v3294, %v3292
      %v4357 = vpack.c.b16 %v3295, %v3293
      %v4358 = vpack.c.b16 %v3298, %v3296
      %v4359 = vpack.c.b16 %v3299, %v3297
      %v4360 = vpack.c.b16 %v3302, %v3300
      %v4361 = vpack.c.b16 %v3303, %v3301
      %v4362 = vpack.c.b16 %v3306, %v3304
      %v4363 = vpack.c.b16 %v3307, %v3305
      %v4364 = vpack.c.b16 %v3310, %v3308
      %v4365 = vpack.c.b16 %v3311, %v3309
      %v4366 = vpack.c.b16 %v3314, %v3312
      %v4367 = vpack.c.b16 %v3315, %v3313
      %v4368 = vpack.c.b16 %v3318, %v3316
      %v4369 = vpack.c.b16 %v3319, %v3317
      %v4370 = vpack.c.b16 %v3322, %v3320
      %v4371 = vpack.c.b16 %v3323, %v3321
      %v4372 = vpack.c.b16 %v3326, %v3324
      %v4373 = vpack.c.b16 %v3327, %v3325
      %v4374 = vpack.c.b16 %v3330, %v3328
      %v4375 = vpack.c.b16 %v3331, %v3329
      %v4376 = vpack.c.b16 %v3334, %v3332
      %v4377 = vpack.c.b16 %v3335, %v3333
      %v4378 = vpack.c.b16 %v3338, %v3336
      %v4379 = vpack.c.b16 %v3339, %v3337
      %v4380 = vpack.c.b16 %v3342, %v3340
      %v4381 = vpack.c.b16 %v3343, %v3341
      %v4382 = vpack.c.b16 %v3346, %v3344
      %v4383 = vpack.c.b16 %v3347, %v3345
      %v4384 = vpack.c.b16 %v3350, %v3348
      %v4385 = vpack.c.b16 %v3351, %v3349
      %v4386 = vpack.c.b16 %v3354, %v3352
      %v4387 = vpack.c.b16 %v3355, %v3353
      %v4388 = vpack.c.b16 %v3358, %v3356
      %v4389 = vpack.c.b16 %v3359, %v3357
      %v4390 = vpack.c.b16 %v3362, %v3360
      %v4391 = vpack.c.b16 %v3363, %v3361
      %v4392 = vpack.c.b16 %v3366, %v3364
      %v4393 = vpack.c.b16 %v3367, %v3365
      %v4394 = vpack.c.b16 %v3370, %v3368
      %v4395 = vpack.c.b16 %v3371, %v3369
      %v4396 = vpack.c.b16 %v3374, %v3372
      %v4397 = vpack.c.b16 %v3375, %v3373
      %v4398 = vpack.c.b16 %v3378, %v3376
      %v4399 = vpack.c.b16 %v3379, %v3377
      %v4400 = vpack.c.b16 %v3382, %v3380
      %v4401 = vpack.c.b16 %v3383, %v3381
      %v4402 = vpack.c.b16 %v3386, %v3384
      %v4403 = vpack.c.b16 %v3387, %v3385
      %v4404 = vpack.c.b16 %v3390, %v3388
      %v4405 = vpack.c.b16 %v3391, %v3389
      %v4406 = vpack.c.b16 %v3394, %v3392
      %v4407 = vpack.c.b16 %v3395, %v3393
      %v4408 = vpack.c.b16 %v3398, %v3396
      %v4409 = vpack.c.b16 %v3399, %v3397
      %v4410 = vpack.c.b16 %v3402, %v3400
      %v4411 = vpack.c.b16 %v3403, %v3401
      %v4412 = vpack.c.b16 %v3406, %v3404
      %v4413 = vpack.c.b16 %v3407, %v3405
      %v4414 = vpack.c.b16 %v3410, %v3408
      %v4415 = vpack.c.b16 %v3411, %v3409
      %v4416 = vpack.c.b16 %v3414, %v3412
      %v4417 = vpack.c.b16 %v3415, %v3413
      %v4418 = vpack.c.b16 %v3418, %v3416
      %v4419 = vpack.c.b16 %v3419, %v3417
      %v4420 = vpack.c.b16 %v3422, %v3420
      %v4421 = vpack.c.b16 %v3423, %v3421
      %v4422 = vpack.c.b16 %v3426, %v3424
      %v4423 = vpack.c.b16 %v3427, %v3425
      %v4424 = vpack.c.b16 %v3430, %v3428
      %v4425 = vpack.c.b16 %v3431, %v3429
      %v4426 = vpack.c.b16 %v3434, %v3432
      %v4427 = vpack.c.b16 %v3435, %v3433
      %v4428 = vpack.c.b16 %v3438, %v3436
      %v4429 = vpack.c.b16 %v3439, %v3437
      %v4430 = vpack.c.b16 %v3442, %v3440
      %v4431 = vpack.c.b16 %v3443, %v3441
      %v4432 = vpack.c.b16 %v3446, %v3444
      %v4433 = vpack.c.b16 %v3447, %v3445
      %v4434 = vpack.c.b16 %v3450, %v3448
      %v4435 = vpack.c.b16 %v3451, %v3449
      %v4436 = vpack.c.b16 %v3454, %v3452
      %v4437 = vpack.c.b16 %v3455, %v3453
      %v4438 = vpack.c.b16 %v3458, %v3456
      %v4439 = vpack.c.b16 %v3459, %v3457
      %v4440 = vpack.c.b16 %v3462, %v3460
      %v4441 = vpack.c.b16 %v3463, %v3461
      %v4442 = vpack.c.b16 %v3466, %v3464
      %v4443 = vpack.c.b16 %v3467, %v3465
      %v4444 = vpack.c.b16 %v3470, %v3468
      %v4445 = vpack.c.b16 %v3471, %v3469
      %v4446 = vpack.c.b16 %v3474, %v3472
      %v4447 = vpack.c.b16 %v3475, %v3473
      %v4448 = vpack.c.b16 %v3478, %v3476
      %v4449 = vpack.c.b16 %v3479, %v3477
      %v4450 = vpack.c.b16 %v3482, %v3480
      %v4451 = vpack.c.b16 %v3483, %v3481
      %v4452 = vpack.c.b16 %v3486, %v3484
      %v4453 = vpack.c.b16 %v3487, %v3485
      %v4454 = vpack.c.b16 %v3490, %v3488
      %v4455 = vpack.c.b16 %v3491, %v3489
      %v4456 = vpack.c.b16 %v3494, %v3492
      %v4457 = vpack.c.b16 %v3495, %v3493
      %v4458 = vpack.c.b16 %v3498, %v3496
      %v4459 = vpack.c.b16 %v3499, %v3497
      %v4460 = vpack.c.b16 %v3502, %v3500
      %v4461 = vpack.c.b16 %v3503, %v3501
      %v4462 = vpack.c.b16 %v3506, %v3504
      %v4463 = vpack.c.b16 %v3507, %v3505
      %v4464 = vpack.c.b16 %v3510, %v3508
      %v4465 = vpack.c.b16 %v3511, %v3509
      %v4466 = vpack.c.b16 %v3514, %v3512
      %v4467 = vpack.c.b16 %v3515, %v3513
      %v4468 = vpack.c.b16 %v3518, %v3516
      %v4469 = vpack.c.b16 %v3519, %v3517
      %v4470 = vpack.c.b16 %v3522, %v3520
      %v4471 = vpack.c.b16 %v3523, %v3521
      %v4472 = vpack.c.b16 %v3526, %v3524
      %v4473 = vpack.c.b16 %v3527, %v3525
      %v4474 = vpack.c.b16 %v3530, %v3528
      %v4475 = vpack.c.b16 %v3531, %v3529
      %v4476 = vpack.c.b16 %v3534, %v3532
      %v4477 = vpack.c.b16 %v3535, %v3533
      %v4478 = vpack.c.b16 %v3538, %v3536
      %v4479 = vpack.c.b16 %v3539, %v3537
      %v4480 = vpack.c.b16 %v3542, %v3540
      %v4481 = vpack.c.b16 %v3543, %v3541
      %v4482 = vpack.c.b16 %v3546, %v3544
      %v4483 = vpack.c.b16 %v3547, %v3545
      %v4484 = vpack.c.b16 %v3550, %v3548
      %v4485 = vpack.c.b16 %v3551, %v3549
      %v4486 = vpack.c.b16 %v3554, %v3552
      %v4487 = vpack.c.b16 %v3555, %v3553
      %v4488 = vpack.c.b16 %v3558, %v3556
      %v4489 = vpack.c.b16 %v3559, %v3557
      %v4490 = vpack.c.b16 %v3562, %v3560
      %v4491 = vpack.c.b16 %v3563, %v3561
      %v4492 = vpack.c.b16 %v3566, %v3564
      %v4493 = vpack.c.b16 %v3567, %v3565
      %v4494 = vpack.c.b16 %v3570, %v3568
      %v4495 = vpack.c.b16 %v3571, %v3569
      %v4496 = vpack.c.b16 %v3574, %v3572
      %v4497 = vpack.c.b16 %v3575, %v3573
      %v4498 = vpack.c.b16 %v3578, %v3576
      %v4499 = vpack.c.b16 %v3579, %v3577
      %v4500 = vpack.c.b16 %v3582, %v3580
      %v4501 = vpack.c.b16 %v3583, %v3581
      %v4502 = vpack.c.b16 %v3586, %v3584
      %v4503 = vpack.c.b16 %v3587, %v3585
      %v4504 = vpack.c.b16 %v3590, %v3588
      %v4505 = vpack.c.b16 %v3591, %v3589
      %v4506 = vpack.c.b16 %v3594, %v3592
      %v4507 = vpack.c.b16 %v3595, %v3593
      %v4508 = vpack.c.b16 %v3598, %v3596
      %v4509 = vpack.c.b16 %v3599, %v3597
      %v4510 = vpack.c.b16 %v3602, %v3600
      %v4511 = vpack.c.b16 %v3603, %v3601
      %v4512 = vpack.c.b16 %v3606, %v3604
      %v4513 = vpack.c.b16 %v3607, %v3605
      %v4514 = vpack.c.b16 %v3610, %v3608
      %v4515 = vpack.c.b16 %v3611, %v3609
      %v4516 = vpack.c.b16 %v3614, %v3612
      %v4517 = vpack.c.b16 %v3615, %v3613
      %v4518 = vpack.c.b16 %v3618, %v3616
      %v4519 = vpack.c.b16 %v3619, %v3617
      %v4520 = vpack.c.b16 %v3622, %v3620
      %v4521 = vpack.c.b16 %v3623, %v3621
      %v4522 = vpack.c.b16 %v3626, %v3624
      %v4523 = vpack.c.b16 %v3627, %v3625
      %v4524 = vpack.c.b16 %v3630, %v3628
      %v4525 = vpack.c.b16 %v3631, %v3629
      %v4526 = vpack.c.b16 %v3634, %v3632
      %v4527 = vpack.c.b16 %v3635, %v3633
      %v4528 = vpack.c.b16 %v3638, %v3636
      %v4529 = vpack.c.b16 %v3639, %v3637
      %v4530 = vpack.c.b16 %v3642, %v3640
      %v4531 = vpack.c.b16 %v3643, %v3641
      %v4532 = vpack.c.b16 %v3646, %v3644
      %v4533 = vpack.c.b16 %v3647, %v3645
      %v4534 = vpack.c.b16 %v3650, %v3648
      %v4535 = vpack.c.b16 %v3651, %v3649
      %v4536 = vpack.c.b16 %v3654, %v3652
      %v4537 = vpack.c.b16 %v3655, %v3653
      %v4538 = vpack.c.b16 %v3658, %v3656
      %v4539 = vpack.c.b16 %v3659, %v3657
      %v4540 = vpack.c.b16 %v3662, %v3660
      %v4541 = vpack.c.b16 %v3663, %v3661
      %v4542 = vpack.c.b16 %v3666, %v3664
      %v4543 = vpack.c.b16 %v3667, %v3665
      %v4544 = vpack.c.b16 %v3670, %v3668
      %v4545 = vpack.c.b16 %v3671, %v3669
      %v4546 = vpack.c.b16 %v3674, %v3672
      %v4547 = vpack.c.b16 %v3675, %v3673
      %v4548 = vpack.c.b16 %v3678, %v3676
      %v4549 = vpack.c.b16 %v3679, %v3677
      %v4550 = vpack.c.b16 %v3682, %v3680
      %v4551 = vpack.c.b16 %v3683, %v3681
      %v4552 = vpack.c.b16 %v3686, %v3684
      %v4553 = vpack.c.b16 %v3687, %v3685
      %v4554 = vpack.c.b16 %v3690, %v3688
      %v4555 = vpack.c.b16 %v3691, %v3689
      %v4556 = vpack.c.b16 %v3694, %v3692
      %v4557 = vpack.c.b16 %v3695, %v3693
      %v4558 = vpack.c.b16 %v3698, %v3696
      %v4559 = vpack.c.b16 %v3699, %v3697
      %v4560 = vpack.c.b16 %v3702, %v3700
      %v4561 = vpack.c.b16 %v3703, %v3701
      %v4562 = vpack.c.b16 %v3706, %v3704
      %v4563 = vpack.c.b16 %v3707, %v3705
      %v4564 = vpack.c.b16 %v3710, %v3708
      %v4565 = vpack.c.b16 %v3711, %v3709
      %v4566 = vpack.c.b16 %v3714, %v3712
      %v4567 = vpack.c.b16 %v3715, %v3713
      %v4568 = vpack.c.b16 %v3718, %v3716
      %v4569 = vpack.c.b16 %v3719, %v3717
      %v4570 = vpack.c.b16 %v3722, %v3720
      %v4571 = vpack.c.b16 %v3723, %v3721
      %v4572 = vpack.c.b16 %v3726, %v3724
      %v4573 = vpack.c.b16 %v3727, %v3725
      %v4574 = vpack.c.b16 %v3730, %v3728
      %v4575 = vpack.c.b16 %v3731, %v3729
      %v4576 = vpack.c.b16 %v3734, %v3732
      %v4577 = vpack.c.b16 %v3735, %v3733
      %v4578 = vpack.c.b16 %v3738, %v3736
      %v4579 = vpack.c.b16 %v3739, %v3737
      %v4580 = vpack.c.b16 %v3742, %v3740
      %v4581 = vpack.c.b16 %v3743, %v3741
      %v4582 = vpack.c.b16 %v3746, %v3744
      %v4583 = vpack.c.b16 %v3747, %v3745
      %v4584 = vpack.c.b16 %v3750, %v3748
      %v4585 = vpack.c.b16 %v3751, %v3749
      %v4586 = vpack.c.b16 %v3754, %v3752
      %v4587 = vpack.c.b16 %v3755, %v3753
      %v4588 = vpack.c.b16 %v3758, %v3756
      %v4589 = vpack.c.b16 %v3759, %v3757
      %v4590 = vpack.c.b16 %v3762, %v3760
      %v4591 = vpack.c.b16 %v3763, %v3761
      %v4592 = vpack.c.b16 %v3766, %v3764
      %v4593 = vpack.c.b16 %v3767, %v3765
      %v4594 = vpack.c.b16 %v3770, %v3768
      %v4595 = vpack.c.b16 %v3771, %v3769
      %v4596 = vpack.c.b16 %v3774, %v3772
      %v4597 = vpack.c.b16 %v3775, %v3773
      %v4598 = vpack.c.b16 %v3778, %v3776
      %v4599 = vpack.c.b16 %v3779, %v3777
      %v4600 = vpack.c.b16 %v3782, %v3780
      %v4601 = vpack.c.b16 %v3783, %v3781
      %v4602 = vpack.c.b16 %v3786, %v3784
      %v4603 = vpack.c.b16 %v3787, %v3785
      %v4604 = vpack.c.b16 %v3790, %v3788
      %v4605 = vpack.c.b16 %v3791, %v3789
      %v4606 = vpack.c.b16 %v3794, %v3792
      %v4607 = vpack.c.b16 %v3795, %v3793
      %v4608 = vpack.c.b16 %v3798, %v3796
      %v4609 = vpack.c.b16 %v3799, %v3797
      %v4610 = vpack.c.b16 %v3802, %v3800
      %v4611 = vpack.c.b16 %v3803, %v3801
      %v4612 = vpack.c.b16 %v3806, %v3804
      %v4613 = vpack.c.b16 %v3807, %v3805
      %v4614 = vpack.c.b16 %v3810, %v3808
      %v4615 = vpack.c.b16 %v3811, %v3809
      %v4616 = vpack.c.b16 %v3814, %v3812
      %v4617 = vpack.c.b16 %v3815, %v3813
      %v4618 = vpack.c.b16 %v3818, %v3816
      %v4619 = vpack.c.b16 %v3819, %v3817
      %5420 = vmatprep.subr.bf16.mxu0 %v3821
      %5421 = vmatpush1.bf16.msra.mxu0 %v3820
      %5422 = vmatprep.subr.bf16.mxu0 %v3823
      %5423 = vmatpush1.bf16.msra.mxu0 %v3822
      %5424 = vmatprep.subr.bf16.mxu0 %v3825
      %5425 = vmatpush1.bf16.msra.mxu0 %v3824
      %5426 = vmatprep.subr.bf16.mxu0 %v3827
      %5427 = vmatpush1.bf16.msra.mxu0 %v3826
      %5428 = vmatprep.subr.bf16.mxu0 %v3829
      %5429 = vmatpush1.bf16.msra.mxu0 %v3828
      %5430 = vmatprep.subr.bf16.mxu0 %v3831
      %5431 = vmatpush1.bf16.msra.mxu0 %v3830
      %5432 = vmatprep.subr.bf16.mxu0 %v3833
      %5433 = vmatpush1.bf16.msra.mxu0 %v3832
      %5434 = vmatprep.subr.bf16.mxu0 %v3835
      %5435 = vmatpush1.bf16.msra.mxu0 %v3834
      %5436 = vmatprep.subr.bf16.mxu0 %v3837
      %5437 = vmatpush1.bf16.msra.mxu0 %v3836
      %5438 = vmatprep.subr.bf16.mxu0 %v3839
      %5439 = vmatpush1.bf16.msra.mxu0 %v3838
      %5440 = vmatprep.subr.bf16.mxu0 %v3841
      %5441 = vmatpush1.bf16.msra.mxu0 %v3840
      %5442 = vmatprep.subr.bf16.mxu0 %v3843
      %5443 = vmatpush1.bf16.msra.mxu0 %v3842
      %5444 = vmatprep.subr.bf16.mxu0 %v3845
      %5445 = vmatpush1.bf16.msra.mxu0 %v3844
      %5446 = vmatprep.subr.bf16.mxu0 %v3847
      %5447 = vmatpush1.bf16.msra.mxu0 %v3846
      %5448 = vmatprep.subr.bf16.mxu0 %v3849
      %5449 = vmatpush1.bf16.msra.mxu0 %v3848
      %5450 = vmatprep.subr.bf16.mxu0 %v3851
      %5451 = vmatpush1.bf16.msra.mxu0 %v3850
      %5452 = vmatprep.mubr.bf16.mxu0 %v1091
      %5453 = vmatmul.mubr.bf16.gmra.mrb[0].mxu0 %v1077
      %v5454 = vpop.f32.mrb[0].mxu0
      %v5455 = vadd.f32 0.0, %v5454
      %v5456 = vpop.f32.mrb[0].mxu0
      %v5457 = vadd.f32 0.0, %v5456
      %v5458 = vpop.f32.mrb[0].mxu0
      %v5459 = vpop.f32.mrb[0].mxu0
      %5460 = vdwg.mxu0
      %5461 = vmatprep.subr.bf16.mxu0 %v3853
      %5462 = vmatpush1.bf16.msra.mxu0 %v3852
      %5463 = vmatprep.subr.bf16.mxu0 %v3855
      %5464 = vmatpush1.bf16.msra.mxu0 %v3854
      %5465 = vmatprep.subr.bf16.mxu0 %v3857
      %5466 = vmatpush1.bf16.msra.mxu0 %v3856
      %5467 = vmatprep.subr.bf16.mxu0 %v3859
      %5468 = vmatpush1.bf16.msra.mxu0 %v3858
      %5469 = vmatprep.subr.bf16.mxu0 %v3861
      %5470 = vmatpush1.bf16.msra.mxu0 %v3860
      %5471 = vmatprep.subr.bf16.mxu0 %v3863
      %5472 = vmatpush1.bf16.msra.mxu0 %v3862
      %5473 = vmatprep.subr.bf16.mxu0 %v3865
      %5474 = vmatpush1.bf16.msra.mxu0 %v3864
      %5475 = vmatprep.subr.bf16.mxu0 %v3867
      %5476 = vmatpush1.bf16.msra.mxu0 %v3866
      %5477 = vmatprep.subr.bf16.mxu0 %v3869
      %5478 = vmatpush1.bf16.msra.mxu0 %v3868
      %5479 = vmatprep.subr.bf16.mxu0 %v3871
      %5480 = vmatpush1.bf16.msra.mxu0 %v3870
      %5481 = vmatprep.subr.bf16.mxu0 %v3873
      %5482 = vmatpush1.bf16.msra.mxu0 %v3872
      %5483 = vmatprep.subr.bf16.mxu0 %v3875
      %5484 = vmatpush1.bf16.msra.mxu0 %v3874
      %5485 = vmatprep.subr.bf16.mxu0 %v3877
      %5486 = vmatpush1.bf16.msra.mxu0 %v3876
      %5487 = vmatprep.subr.bf16.mxu0 %v3879
      %5488 = vmatpush1.bf16.msra.mxu0 %v3878
      %5489 = vmatprep.subr.bf16.mxu0 %v3881
      %5490 = vmatpush1.bf16.msra.mxu0 %v3880
      %5491 = vmatprep.subr.bf16.mxu0 %v3883
      %5492 = vmatpush1.bf16.msra.mxu0 %v3882
      %5493 = vmatprep.mubr.bf16.mxu0 %v1101
      %5494 = vmatmul.mubr.bf16.gmra.mrb[0].mxu0 %v1099
      %v5495 = vpop.f32.mrb[0].mxu0
      %v5496 = vadd.f32 %v5455, %v5495
      %v5497 = vpop.f32.mrb[0].mxu0
      %v5498 = vadd.f32 %v5457, %v5497
      %v5499 = vpop.f32.mrb[0].mxu0
      %v5500 = vpop.f32.mrb[0].mxu0
      %5501 = vdwg.mxu0
      %5502 = vmatprep.subr.bf16.mxu0 %v3885
      %5503 = vmatpush1.bf16.msra.mxu0 %v3884
      %5504 = vmatprep.subr.bf16.mxu0 %v3887
      %5505 = vmatpush1.bf16.msra.mxu0 %v3886
      %5506 = vmatprep.subr.bf16.mxu0 %v3889
      %5507 = vmatpush1.bf16.msra.mxu0 %v3888
      %5508 = vmatprep.subr.bf16.mxu0 %v3891
      %5509 = vmatpush1.bf16.msra.mxu0 %v3890
      %5510 = vmatprep.subr.bf16.mxu0 %v3893
      %5511 = vmatpush1.bf16.msra.mxu0 %v3892
      %5512 = vmatprep.subr.bf16.mxu0 %v3895
      %5513 = vmatpush1.bf16.msra.mxu0 %v3894
      %5514 = vmatprep.subr.bf16.mxu0 %v3897
      %5515 = vmatpush1.bf16.msra.mxu0 %v3896
      %5516 = vmatprep.subr.bf16.mxu0 %v3899
      %5517 = vmatpush1.bf16.msra.mxu0 %v3898
      %5518 = vmatprep.subr.bf16.mxu0 %v3901
      %5519 = vmatpush1.bf16.msra.mxu0 %v3900
      %5520 = vmatprep.subr.bf16.mxu0 %v3903
      %5521 = vmatpush1.bf16.msra.mxu0 %v3902
      %5522 = vmatprep.subr.bf16.mxu0 %v3905
      %5523 = vmatpush1.bf16.msra.mxu0 %v3904
      %5524 = vmatprep.subr.bf16.mxu0 %v3907
      %5525 = vmatpush1.bf16.msra.mxu0 %v3906
      %5526 = vmatprep.subr.bf16.mxu0 %v3909
      %5527 = vmatpush1.bf16.msra.mxu0 %v3908
      %5528 = vmatprep.subr.bf16.mxu0 %v3911
      %5529 = vmatpush1.bf16.msra.mxu0 %v3910
      %5530 = vmatprep.subr.bf16.mxu0 %v3913
      %5531 = vmatpush1.bf16.msra.mxu0 %v3912
      %5532 = vmatprep.subr.bf16.mxu0 %v3915
      %5533 = vmatpush1.bf16.msra.mxu0 %v3914
      %5534 = vmatprep.mubr.bf16.mxu0 %v1098
      %5535 = vmatmul.mubr.bf16.gmra.mrb[0].mxu0 %v1084
      %v5536 = vpop.f32.mrb[0].mxu0
      %v5537 = vadd.f32 %v5496, %v5536
      %v5538 = vpop.f32.mrb[0].mxu0
      %v5539 = vadd.f32 %v5498, %v5538
      %v5540 = vpop.f32.mrb[0].mxu0
      %v5541 = vpop.f32.mrb[0].mxu0
      %5542 = vdwg.mxu0
      %5543 = vmatprep.subr.bf16.mxu0 %v3917
      %5544 = vmatpush1.bf16.msra.mxu0 %v3916
      %5545 = vmatprep.subr.bf16.mxu0 %v3919
      %5546 = vmatpush1.bf16.msra.mxu0 %v3918
      %5547 = vmatprep.subr.bf16.mxu0 %v3921
      %5548 = vmatpush1.bf16.msra.mxu0 %v3920
      %5549 = vmatprep.subr.bf16.mxu0 %v3923
      %5550 = vmatpush1.bf16.msra.mxu0 %v3922
      %5551 = vmatprep.subr.bf16.mxu0 %v3925
      %5552 = vmatpush1.bf16.msra.mxu0 %v3924
      %5553 = vmatprep.subr.bf16.mxu0 %v3927
      %5554 = vmatpush1.bf16.msra.mxu0 %v3926
      %5555 = vmatprep.subr.bf16.mxu0 %v3929
      %5556 = vmatpush1.bf16.msra.mxu0 %v3928
      %5557 = vmatprep.subr.bf16.mxu0 %v3931
      %5558 = vmatpush1.bf16.msra.mxu0 %v3930
      %5559 = vmatprep.subr.bf16.mxu0 %v3933
      %5560 = vmatpush1.bf16.msra.mxu0 %v3932
      %5561 = vmatprep.subr.bf16.mxu0 %v3935
      %5562 = vmatpush1.bf16.msra.mxu0 %v3934
      %5563 = vmatprep.subr.bf16.mxu0 %v3937
      %5564 = vmatpush1.bf16.msra.mxu0 %v3936
      %5565 = vmatprep.subr.bf16.mxu0 %v3939
      %5566 = vmatpush1.bf16.msra.mxu0 %v3938
      %5567 = vmatprep.subr.bf16.mxu0 %v3941
      %5568 = vmatpush1.bf16.msra.mxu0 %v3940
      %5569 = vmatprep.subr.bf16.mxu0 %v3943
      %5570 = vmatpush1.bf16.msra.mxu0 %v3942
      %5571 = vmatprep.subr.bf16.mxu0 %v3945
      %5572 = vmatpush1.bf16.msra.mxu0 %v3944
      %5573 = vmatprep.subr.bf16.mxu0 %v3947
      %5574 = vmatpush1.bf16.msra.mxu0 %v3946
      %5575 = vmatprep.mubr.bf16.mxu0 %v1102
      %5576 = vmatmul.mubr.bf16.gmra.mrb[0].mxu0 %v1100
      %v5577 = vpop.f32.mrb[0].mxu0
      %v5578 = vadd.f32 %v5537, %v5577
      %v5579 = vpop.f32.mrb[0].mxu0
      %v5580 = vadd.f32 %v5539, %v5579
      %v5581 = vpop.f32.mrb[0].mxu0
      %v5582 = vpop.f32.mrb[0].mxu0
      %5583 = vdwg.mxu0
      %5584 = vmatprep.subr.bf16.mxu0 %v3949
      %5585 = vmatpush1.bf16.msra.mxu0 %v3948
      %5586 = vmatprep.subr.bf16.mxu0 %v3951
      %5587 = vmatpush1.bf16.msra.mxu0 %v3950
      %5588 = vmatprep.subr.bf16.mxu0 %v3953
      %5589 = vmatpush1.bf16.msra.mxu0 %v3952
      %5590 = vmatprep.subr.bf16.mxu0 %v3955
      %5591 = vmatpush1.bf16.msra.mxu0 %v3954
      %5592 = vmatprep.subr.bf16.mxu0 %v3957
      %5593 = vmatpush1.bf16.msra.mxu0 %v3956
      %5594 = vmatprep.subr.bf16.mxu0 %v3959
      %5595 = vmatpush1.bf16.msra.mxu0 %v3958
      %5596 = vmatprep.subr.bf16.mxu0 %v3961
      %5597 = vmatpush1.bf16.msra.mxu0 %v3960
      %5598 = vmatprep.subr.bf16.mxu0 %v3963
      %5599 = vmatpush1.bf16.msra.mxu0 %v3962
      %5600 = vmatprep.subr.bf16.mxu0 %v3965
      %5601 = vmatpush1.bf16.msra.mxu0 %v3964
      %5602 = vmatprep.subr.bf16.mxu0 %v3967
      %5603 = vmatpush1.bf16.msra.mxu0 %v3966
      %5604 = vmatprep.subr.bf16.mxu0 %v3969
      %5605 = vmatpush1.bf16.msra.mxu0 %v3968
      %5606 = vmatprep.subr.bf16.mxu0 %v3971
      %5607 = vmatpush1.bf16.msra.mxu0 %v3970
      %5608 = vmatprep.subr.bf16.mxu0 %v3973
      %5609 = vmatpush1.bf16.msra.mxu0 %v3972
      %5610 = vmatprep.subr.bf16.mxu0 %v3975
      %5611 = vmatpush1.bf16.msra.mxu0 %v3974
      %5612 = vmatprep.subr.bf16.mxu0 %v3977
      %5613 = vmatpush1.bf16.msra.mxu0 %v3976
      %5614 = vmatprep.subr.bf16.mxu0 %v3979
      %5615 = vmatpush1.bf16.msra.mxu0 %v3978
      %5616 = vmatprep.mubr.bf16.mxu0 %v1140
      %5617 = vmatmul.mubr.bf16.gmra.mrb[0].mxu0 %v1126
      %v5618 = vpop.f32.mrb[0].mxu0
      %v5619 = vadd.f32 %v5578, %v5618
      %v5620 = vpop.f32.mrb[0].mxu0
      %v5621 = vadd.f32 %v5580, %v5620
      %v5622 = vpop.f32.mrb[0].mxu0
      %v5623 = vpop.f32.mrb[0].mxu0
      %5624 = vdwg.mxu0
      %5625 = vmatprep.subr.bf16.mxu0 %v3981
      %5626 = vmatpush1.bf16.msra.mxu0 %v3980
      %5627 = vmatprep.subr.bf16.mxu0 %v3983
      %5628 = vmatpush1.bf16.msra.mxu0 %v3982
      %5629 = vmatprep.subr.bf16.mxu0 %v3985
      %5630 = vmatpush1.bf16.msra.mxu0 %v3984
      %5631 = vmatprep.subr.bf16.mxu0 %v3987
      %5632 = vmatpush1.bf16.msra.mxu0 %v3986
      %5633 = vmatprep.subr.bf16.mxu0 %v3989
      %5634 = vmatpush1.bf16.msra.mxu0 %v3988
      %5635 = vmatprep.subr.bf16.mxu0 %v3991
      %5636 = vmatpush1.bf16.msra.mxu0 %v3990
      %5637 = vmatprep.subr.bf16.mxu0 %v3993
      %5638 = vmatpush1.bf16.msra.mxu0 %v3992
      %5639 = vmatprep.subr.bf16.mxu0 %v3995
      %5640 = vmatpush1.bf16.msra.mxu0 %v3994
      %5641 = vmatprep.subr.bf16.mxu0 %v3997
      %5642 = vmatpush1.bf16.msra.mxu0 %v3996
      %5643 = vmatprep.subr.bf16.mxu0 %v3999
      %5644 = vmatpush1.bf16.msra.mxu0 %v3998
      %5645 = vmatprep.subr.bf16.mxu0 %v4001
      %5646 = vmatpush1.bf16.msra.mxu0 %v4000
      %5647 = vmatprep.subr.bf16.mxu0 %v4003
      %5648 = vmatpush1.bf16.msra.mxu0 %v4002
      %5649 = vmatprep.subr.bf16.mxu0 %v4005
      %5650 = vmatpush1.bf16.msra.mxu0 %v4004
      %5651 = vmatprep.subr.bf16.mxu0 %v4007
      %5652 = vmatpush1.bf16.msra.mxu0 %v4006
      %5653 = vmatprep.subr.bf16.mxu0 %v4009
      %5654 = vmatpush1.bf16.msra.mxu0 %v4008
      %5655 = vmatprep.subr.bf16.mxu0 %v4011
      %5656 = vmatpush1.bf16.msra.mxu0 %v4010
      %5657 = vmatprep.mubr.bf16.mxu0 %v1150
      %5658 = vmatmul.mubr.bf16.gmra.mrb[0].mxu0 %v1148
      %v5659 = vpop.f32.mrb[0].mxu0
      %v5660 = vadd.f32 %v5619, %v5659
      %v5661 = vpop.f32.mrb[0].mxu0
      %v5662 = vadd.f32 %v5621, %v5661
      %v5663 = vpop.f32.mrb[0].mxu0
      %v5664 = vpop.f32.mrb[0].mxu0
      %5665 = vdwg.mxu0
      %5666 = vmatprep.subr.bf16.mxu0 %v4013
      %5667 = vmatpush1.bf16.msra.mxu0 %v4012
      %5668 = vmatprep.subr.bf16.mxu0 %v4015
      %5669 = vmatpush1.bf16.msra.mxu0 %v4014
      %5670 = vmatprep.subr.bf16.mxu0 %v4017
      %5671 = vmatpush1.bf16.msra.mxu0 %v4016
      %5672 = vmatprep.subr.bf16.mxu0 %v4019
      %5673 = vmatpush1.bf16.msra.mxu0 %v4018
      %5674 = vmatprep.subr.bf16.mxu0 %v4021
      %5675 = vmatpush1.bf16.msra.mxu0 %v4020
      %5676 = vmatprep.subr.bf16.mxu0 %v4023
      %5677 = vmatpush1.bf16.msra.mxu0 %v4022
      %5678 = vmatprep.subr.bf16.mxu0 %v4025
      %5679 = vmatpush1.bf16.msra.mxu0 %v4024
      %5680 = vmatprep.subr.bf16.mxu0 %v4027
      %5681 = vmatpush1.bf16.msra.mxu0 %v4026
      %5682 = vmatprep.subr.bf16.mxu0 %v4029
      %5683 = vmatpush1.bf16.msra.mxu0 %v4028
      %5684 = vmatprep.subr.bf16.mxu0 %v4031
      %5685 = vmatpush1.bf16.msra.mxu0 %v4030
      %5686 = vmatprep.subr.bf16.mxu0 %v4033
      %5687 = vmatpush1.bf16.msra.mxu0 %v4032
      %5688 = vmatprep.subr.bf16.mxu0 %v4035
      %5689 = vmatpush1.bf16.msra.mxu0 %v4034
      %5690 = vmatprep.subr.bf16.mxu0 %v4037
      %5691 = vmatpush1.bf16.msra.mxu0 %v4036
      %5692 = vmatprep.subr.bf16.mxu0 %v4039
      %5693 = vmatpush1.bf16.msra.mxu0 %v4038
      %5694 = vmatprep.subr.bf16.mxu0 %v4041
      %5695 = vmatpush1.bf16.msra.mxu0 %v4040
      %5696 = vmatprep.subr.bf16.mxu0 %v4043
      %5697 = vmatpush1.bf16.msra.mxu0 %v4042
      %5698 = vmatprep.mubr.bf16.mxu0 %v1147
      %5699 = vmatmul.mubr.bf16.gmra.mrb[0].mxu0 %v1133
      %v5700 = vpop.f32.mrb[0].mxu0
      %v5701 = vadd.f32 %v5660, %v5700
      %v5702 = vpop.f32.mrb[0].mxu0
      %v5703 = vadd.f32 %v5662, %v5702
      %v5704 = vpop.f32.mrb[0].mxu0
      %v5705 = vpop.f32.mrb[0].mxu0
      %5706 = vdwg.mxu0
      %5707 = vmatprep.subr.bf16.mxu0 %v4045
      %5708 = vmatpush1.bf16.msra.mxu0 %v4044
      %5709 = vmatprep.subr.bf16.mxu0 %v4047
      %5710 = vmatpush1.bf16.msra.mxu0 %v4046
      %5711 = vmatprep.subr.bf16.mxu0 %v4049
      %5712 = vmatpush1.bf16.msra.mxu0 %v4048
      %5713 = vmatprep.subr.bf16.mxu0 %v4051
      %5714 = vmatpush1.bf16.msra.mxu0 %v4050
      %5715 = vmatprep.subr.bf16.mxu0 %v4053
      %5716 = vmatpush1.bf16.msra.mxu0 %v4052
      %5717 = vmatprep.subr.bf16.mxu0 %v4055
      %5718 = vmatpush1.bf16.msra.mxu0 %v4054
      %5719 = vmatprep.subr.bf16.mxu0 %v4057
      %5720 = vmatpush1.bf16.msra.mxu0 %v4056
      %5721 = vmatprep.subr.bf16.mxu0 %v4059
      %5722 = vmatpush1.bf16.msra.mxu0 %v4058
      %5723 = vmatprep.subr.bf16.mxu0 %v4061
      %5724 = vmatpush1.bf16.msra.mxu0 %v4060
      %5725 = vmatprep.subr.bf16.mxu0 %v4063
      %5726 = vmatpush1.bf16.msra.mxu0 %v4062
      %5727 = vmatprep.subr.bf16.mxu0 %v4065
      %5728 = vmatpush1.bf16.msra.mxu0 %v4064
      %5729 = vmatprep.subr.bf16.mxu0 %v4067
      %5730 = vmatpush1.bf16.msra.mxu0 %v4066
      %5731 = vmatprep.subr.bf16.mxu0 %v4069
      %5732 = vmatpush1.bf16.msra.mxu0 %v4068
      %5733 = vmatprep.subr.bf16.mxu0 %v4071
      %5734 = vmatpush1.bf16.msra.mxu0 %v4070
      %5735 = vmatprep.subr.bf16.mxu0 %v4073
      %5736 = vmatpush1.bf16.msra.mxu0 %v4072
      %5737 = vmatprep.subr.bf16.mxu0 %v4075
      %5738 = vmatpush1.bf16.msra.mxu0 %v4074
      %5739 = vmatprep.mubr.bf16.mxu0 %v1151
      %5740 = vmatmul.mubr.bf16.gmra.mrb[0].mxu0 %v1149
      %v5741 = vpop.f32.mrb[0].mxu0
      %v5742 = vadd.f32 %v5701, %v5741
      %v5743 = vpop.f32.mrb[0].mxu0
      %v5744 = vadd.f32 %v5703, %v5743
      %v5745 = vpop.f32.mrb[0].mxu0
      %v5746 = vpop.f32.mrb[0].mxu0
      %5747 = vdwg.mxu0
      %5748 = vmatprep.subr.bf16.mxu0 %v4077
      %5749 = vmatpush1.bf16.msra.mxu0 %v4076
      %5750 = vmatprep.subr.bf16.mxu0 %v4079
      %5751 = vmatpush1.bf16.msra.mxu0 %v4078
      %5752 = vmatprep.subr.bf16.mxu0 %v4081
      %5753 = vmatpush1.bf16.msra.mxu0 %v4080
      %5754 = vmatprep.subr.bf16.mxu0 %v4083
      %5755 = vmatpush1.bf16.msra.mxu0 %v4082
      %5756 = vmatprep.subr.bf16.mxu0 %v4085
      %5757 = vmatpush1.bf16.msra.mxu0 %v4084
      %5758 = vmatprep.subr.bf16.mxu0 %v4087
      %5759 = vmatpush1.bf16.msra.mxu0 %v4086
      %5760 = vmatprep.subr.bf16.mxu0 %v4089
      %5761 = vmatpush1.bf16.msra.mxu0 %v4088
      %5762 = vmatprep.subr.bf16.mxu0 %v4091
      %5763 = vmatpush1.bf16.msra.mxu0 %v4090
      %5764 = vmatprep.subr.bf16.mxu0 %v4093
      %5765 = vmatpush1.bf16.msra.mxu0 %v4092
      %5766 = vmatprep.subr.bf16.mxu0 %v4095
      %5767 = vmatpush1.bf16.msra.mxu0 %v4094
      %5768 = vmatprep.subr.bf16.mxu0 %v4097
      %5769 = vmatpush1.bf16.msra.mxu0 %v4096
      %5770 = vmatprep.subr.bf16.mxu0 %v4099
      %5771 = vmatpush1.bf16.msra.mxu0 %v4098
      %5772 = vmatprep.subr.bf16.mxu0 %v4101
      %5773 = vmatpush1.bf16.msra.mxu0 %v4100
      %5774 = vmatprep.subr.bf16.mxu0 %v4103
      %5775 = vmatpush1.bf16.msra.mxu0 %v4102
      %5776 = vmatprep.subr.bf16.mxu0 %v4105
      %5777 = vmatpush1.bf16.msra.mxu0 %v4104
      %5778 = vmatprep.subr.bf16.mxu0 %v4107
      %5779 = vmatpush1.bf16.msra.mxu0 %v4106
      %5780 = vmatprep.mubr.bf16.mxu0 %v1189
      %5781 = vmatmul.mubr.bf16.gmra.mrb[0].mxu0 %v1175
      %v5782 = vpop.f32.mrb[0].mxu0
      %v5783 = vadd.f32 %v5742, %v5782
      %v5784 = vpop.f32.mrb[0].mxu0
      %v5785 = vadd.f32 %v5744, %v5784
      %v5786 = vpop.f32.mrb[0].mxu0
      %v5787 = vpop.f32.mrb[0].mxu0
      %5788 = vdwg.mxu0
      %5789 = vmatprep.subr.bf16.mxu0 %v4109
      %5790 = vmatpush1.bf16.msra.mxu0 %v4108
      %5791 = vmatprep.subr.bf16.mxu0 %v4111
      %5792 = vmatpush1.bf16.msra.mxu0 %v4110
      %5793 = vmatprep.subr.bf16.mxu0 %v4113
      %5794 = vmatpush1.bf16.msra.mxu0 %v4112
      %5795 = vmatprep.subr.bf16.mxu0 %v4115
      %5796 = vmatpush1.bf16.msra.mxu0 %v4114
      %5797 = vmatprep.subr.bf16.mxu0 %v4117
      %5798 = vmatpush1.bf16.msra.mxu0 %v4116
      %5799 = vmatprep.subr.bf16.mxu0 %v4119
      %5800 = vmatpush1.bf16.msra.mxu0 %v4118
      %5801 = vmatprep.subr.bf16.mxu0 %v4121
      %5802 = vmatpush1.bf16.msra.mxu0 %v4120
      %5803 = vmatprep.subr.bf16.mxu0 %v4123
      %5804 = vmatpush1.bf16.msra.mxu0 %v4122
      %5805 = vmatprep.subr.bf16.mxu0 %v4125
      %5806 = vmatpush1.bf16.msra.mxu0 %v4124
      %5807 = vmatprep.subr.bf16.mxu0 %v4127
      %5808 = vmatpush1.bf16.msra.mxu0 %v4126
      %5809 = vmatprep.subr.bf16.mxu0 %v4129
      %5810 = vmatpush1.bf16.msra.mxu0 %v4128
      %5811 = vmatprep.subr.bf16.mxu0 %v4131
      %5812 = vmatpush1.bf16.msra.mxu0 %v4130
      %5813 = vmatprep.subr.bf16.mxu0 %v4133
      %5814 = vmatpush1.bf16.msra.mxu0 %v4132
      %5815 = vmatprep.subr.bf16.mxu0 %v4135
      %5816 = vmatpush1.bf16.msra.mxu0 %v4134
      %5817 = vmatprep.subr.bf16.mxu0 %v4137
      %5818 = vmatpush1.bf16.msra.mxu0 %v4136
      %5819 = vmatprep.subr.bf16.mxu0 %v4139
      %5820 = vmatpush1.bf16.msra.mxu0 %v4138
      %5821 = vmatprep.mubr.bf16.mxu0 %v1199
      %5822 = vmatmul.mubr.bf16.gmra.mrb[0].mxu0 %v1197
      %v5823 = vpop.f32.mrb[0].mxu0
      %v5824 = vadd.f32 %v5783, %v5823
      %v5825 = vpop.f32.mrb[0].mxu0
      %v5826 = vadd.f32 %v5785, %v5825
      %v5827 = vpop.f32.mrb[0].mxu0
      %v5828 = vpop.f32.mrb[0].mxu0
      %5829 = vdwg.mxu0
      %5830 = vmatprep.subr.bf16.mxu0 %v4141
      %5831 = vmatpush1.bf16.msra.mxu0 %v4140
      %5832 = vmatprep.subr.bf16.mxu0 %v4143
      %5833 = vmatpush1.bf16.msra.mxu0 %v4142
      %5834 = vmatprep.subr.bf16.mxu0 %v4145
      %5835 = vmatpush1.bf16.msra.mxu0 %v4144
      %5836 = vmatprep.subr.bf16.mxu0 %v4147
      %5837 = vmatpush1.bf16.msra.mxu0 %v4146
      %5838 = vmatprep.subr.bf16.mxu0 %v4149
      %5839 = vmatpush1.bf16.msra.mxu0 %v4148
      %5840 = vmatprep.subr.bf16.mxu0 %v4151
      %5841 = vmatpush1.bf16.msra.mxu0 %v4150
      %5842 = vmatprep.subr.bf16.mxu0 %v4153
      %5843 = vmatpush1.bf16.msra.mxu0 %v4152
      %5844 = vmatprep.subr.bf16.mxu0 %v4155
      %5845 = vmatpush1.bf16.msra.mxu0 %v4154
      %5846 = vmatprep.subr.bf16.mxu0 %v4157
      %5847 = vmatpush1.bf16.msra.mxu0 %v4156
      %5848 = vmatprep.subr.bf16.mxu0 %v4159
      %5849 = vmatpush1.bf16.msra.mxu0 %v4158
      %5850 = vmatprep.subr.bf16.mxu0 %v4161
      %5851 = vmatpush1.bf16.msra.mxu0 %v4160
      %5852 = vmatprep.subr.bf16.mxu0 %v4163
      %5853 = vmatpush1.bf16.msra.mxu0 %v4162
      %5854 = vmatprep.subr.bf16.mxu0 %v4165
      %5855 = vmatpush1.bf16.msra.mxu0 %v4164
      %5856 = vmatprep.subr.bf16.mxu0 %v4167
      %5857 = vmatpush1.bf16.msra.mxu0 %v4166
      %5858 = vmatprep.subr.bf16.mxu0 %v4169
      %5859 = vmatpush1.bf16.msra.mxu0 %v4168
      %5860 = vmatprep.subr.bf16.mxu0 %v4171
      %5861 = vmatpush1.bf16.msra.mxu0 %v4170
      %5862 = vmatprep.mubr.bf16.mxu0 %v1196
      %5863 = vmatmul.mubr.bf16.gmra.mrb[0].mxu0 %v1182
      %v5864 = vpop.f32.mrb[0].mxu0
      %v5865 = vadd.f32 %v5824, %v5864
      %v5866 = vpop.f32.mrb[0].mxu0
      %v5867 = vadd.f32 %v5826, %v5866
      %v5868 = vpop.f32.mrb[0].mxu0
      %v5869 = vpop.f32.mrb[0].mxu0
      %5870 = vdwg.mxu0
      %5871 = vmatprep.subr.bf16.mxu0 %v4173
      %5872 = vmatpush1.bf16.msra.mxu0 %v4172
      %5873 = vmatprep.subr.bf16.mxu0 %v4175
      %5874 = vmatpush1.bf16.msra.mxu0 %v4174
      %5875 = vmatprep.subr.bf16.mxu0 %v4177
      %5876 = vmatpush1.bf16.msra.mxu0 %v4176
      %5877 = vmatprep.subr.bf16.mxu0 %v4179
      %5878 = vmatpush1.bf16.msra.mxu0 %v4178
      %5879 = vmatprep.subr.bf16.mxu0 %v4181
      %5880 = vmatpush1.bf16.msra.mxu0 %v4180
      %5881 = vmatprep.subr.bf16.mxu0 %v4183
      %5882 = vmatpush1.bf16.msra.mxu0 %v4182
      %5883 = vmatprep.subr.bf16.mxu0 %v4185
      %5884 = vmatpush1.bf16.msra.mxu0 %v4184
      %5885 = vmatprep.subr.bf16.mxu0 %v4187
      %5886 = vmatpush1.bf16.msra.mxu0 %v4186
      %5887 = vmatprep.subr.bf16.mxu0 %v4189
      %5888 = vmatpush1.bf16.msra.mxu0 %v4188
      %5889 = vmatprep.subr.bf16.mxu0 %v4191
      %5890 = vmatpush1.bf16.msra.mxu0 %v4190
      %5891 = vmatprep.subr.bf16.mxu0 %v4193
      %5892 = vmatpush1.bf16.msra.mxu0 %v4192
      %5893 = vmatprep.subr.bf16.mxu0 %v4195
      %5894 = vmatpush1.bf16.msra.mxu0 %v4194
      %5895 = vmatprep.subr.bf16.mxu0 %v4197
      %5896 = vmatpush1.bf16.msra.mxu0 %v4196
      %5897 = vmatprep.subr.bf16.mxu0 %v4199
      %5898 = vmatpush1.bf16.msra.mxu0 %v4198
      %5899 = vmatprep.subr.bf16.mxu0 %v4201
      %5900 = vmatpush1.bf16.msra.mxu0 %v4200
      %5901 = vmatprep.subr.bf16.mxu0 %v4203
      %5902 = vmatpush1.bf16.msra.mxu0 %v4202
      %5903 = vmatprep.mubr.bf16.mxu0 %v1200
      %5904 = vmatmul.mubr.bf16.gmra.mrb[0].mxu0 %v1198
      %v5905 = vpop.f32.mrb[0].mxu0
      %v5906 = vadd.f32 %v5865, %v5905
      %v5907 = vpop.f32.mrb[0].mxu0
      %v5908 = vadd.f32 %v5867, %v5907
      %v5909 = vpop.f32.mrb[0].mxu0
      %v5910 = vpop.f32.mrb[0].mxu0
      %5911 = vdwg.mxu0
      %5912 = vmatprep.subr.bf16.mxu0 %v4205
      %5913 = vmatpush1.bf16.msra.mxu0 %v4204
      %5914 = vmatprep.subr.bf16.mxu0 %v4207
      %5915 = vmatpush1.bf16.msra.mxu0 %v4206
      %5916 = vmatprep.subr.bf16.mxu0 %v4209
      %5917 = vmatpush1.bf16.msra.mxu0 %v4208
      %5918 = vmatprep.subr.bf16.mxu0 %v4211
      %5919 = vmatpush1.bf16.msra.mxu0 %v4210
      %5920 = vmatprep.subr.bf16.mxu0 %v4213
      %5921 = vmatpush1.bf16.msra.mxu0 %v4212
      %5922 = vmatprep.subr.bf16.mxu0 %v4215
      %5923 = vmatpush1.bf16.msra.mxu0 %v4214
      %5924 = vmatprep.subr.bf16.mxu0 %v4217
      %5925 = vmatpush1.bf16.msra.mxu0 %v4216
      %5926 = vmatprep.subr.bf16.mxu0 %v4219
      %5927 = vmatpush1.bf16.msra.mxu0 %v4218
      %5928 = vmatprep.subr.bf16.mxu0 %v4221
      %5929 = vmatpush1.bf16.msra.mxu0 %v4220
      %5930 = vmatprep.subr.bf16.mxu0 %v4223
      %5931 = vmatpush1.bf16.msra.mxu0 %v4222
      %5932 = vmatprep.subr.bf16.mxu0 %v4225
      %5933 = vmatpush1.bf16.msra.mxu0 %v4224
      %5934 = vmatprep.subr.bf16.mxu0 %v4227
      %5935 = vmatpush1.bf16.msra.mxu0 %v4226
      %5936 = vmatprep.subr.bf16.mxu0 %v4229
      %5937 = vmatpush1.bf16.msra.mxu0 %v4228
      %5938 = vmatprep.subr.bf16.mxu0 %v4231
      %5939 = vmatpush1.bf16.msra.mxu0 %v4230
      %5940 = vmatprep.subr.bf16.mxu0 %v4233
      %5941 = vmatpush1.bf16.msra.mxu0 %v4232
      %5942 = vmatprep.subr.bf16.mxu0 %v4235
      %5943 = vmatpush1.bf16.msra.mxu0 %v4234
      %5944 = vmatprep.mubr.bf16.mxu0 %v1238
      %5945 = vmatmul.mubr.bf16.gmra.mrb[0].mxu0 %v1224
      %v5946 = vpop.f32.mrb[0].mxu0
      %v5947 = vadd.f32 %v5906, %v5946
      %v5948 = vpop.f32.mrb[0].mxu0
      %v5949 = vadd.f32 %v5908, %v5948
      %v5950 = vpop.f32.mrb[0].mxu0
      %v5951 = vpop.f32.mrb[0].mxu0
      %5952 = vdwg.mxu0
      %5953 = vmatprep.subr.bf16.mxu0 %v4237
      %5954 = vmatpush1.bf16.msra.mxu0 %v4236
      %5955 = vmatprep.subr.bf16.mxu0 %v4239
      %5956 = vmatpush1.bf16.msra.mxu0 %v4238
      %5957 = vmatprep.subr.bf16.mxu0 %v4241
      %5958 = vmatpush1.bf16.msra.mxu0 %v4240
      %5959 = vmatprep.subr.bf16.mxu0 %v4243
      %5960 = vmatpush1.bf16.msra.mxu0 %v4242
      %5961 = vmatprep.subr.bf16.mxu0 %v4245
      %5962 = vmatpush1.bf16.msra.mxu0 %v4244
      %5963 = vmatprep.subr.bf16.mxu0 %v4247
      %5964 = vmatpush1.bf16.msra.mxu0 %v4246
      %5965 = vmatprep.subr.bf16.mxu0 %v4249
      %5966 = vmatpush1.bf16.msra.mxu0 %v4248
      %5967 = vmatprep.subr.bf16.mxu0 %v4251
      %5968 = vmatpush1.bf16.msra.mxu0 %v4250
      %5969 = vmatprep.subr.bf16.mxu0 %v4253
      %5970 = vmatpush1.bf16.msra.mxu0 %v4252
      %5971 = vmatprep.subr.bf16.mxu0 %v4255
      %5972 = vmatpush1.bf16.msra.mxu0 %v4254
      %5973 = vmatprep.subr.bf16.mxu0 %v4257
      %5974 = vmatpush1.bf16.msra.mxu0 %v4256
      %5975 = vmatprep.subr.bf16.mxu0 %v4259
      %5976 = vmatpush1.bf16.msra.mxu0 %v4258
      %5977 = vmatprep.subr.bf16.mxu0 %v4261
      %5978 = vmatpush1.bf16.msra.mxu0 %v4260
      %5979 = vmatprep.subr.bf16.mxu0 %v4263
      %5980 = vmatpush1.bf16.msra.mxu0 %v4262
      %5981 = vmatprep.subr.bf16.mxu0 %v4265
      %5982 = vmatpush1.bf16.msra.mxu0 %v4264
      %5983 = vmatprep.subr.bf16.mxu0 %v4267
      %5984 = vmatpush1.bf16.msra.mxu0 %v4266
      %5985 = vmatprep.mubr.bf16.mxu0 %v1248
      %5986 = vmatmul.mubr.bf16.gmra.mrb[0].mxu0 %v1246
      %v5987 = vpop.f32.mrb[0].mxu0
      %v5988 = vadd.f32 %v5947, %v5987
      %v5989 = vpop.f32.mrb[0].mxu0
      %v5990 = vadd.f32 %v5949, %v5989
      %v5991 = vpop.f32.mrb[0].mxu0
      %v5992 = vpop.f32.mrb[0].mxu0
      %5993 = vdwg.mxu0
      %5994 = vmatprep.subr.bf16.mxu0 %v4269
      %5995 = vmatpush1.bf16.msra.mxu0 %v4268
      %5996 = vmatprep.subr.bf16.mxu0 %v4271
      %5997 = vmatpush1.bf16.msra.mxu0 %v4270
      %5998 = vmatprep.subr.bf16.mxu0 %v4273
      %5999 = vmatpush1.bf16.msra.mxu0 %v4272
      %6000 = vmatprep.subr.bf16.mxu0 %v4275
      %6001 = vmatpush1.bf16.msra.mxu0 %v4274
      %6002 = vmatprep.subr.bf16.mxu0 %v4277
      %6003 = vmatpush1.bf16.msra.mxu0 %v4276
      %6004 = vmatprep.subr.bf16.mxu0 %v4279
      %6005 = vmatpush1.bf16.msra.mxu0 %v4278
      %6006 = vmatprep.subr.bf16.mxu0 %v4281
      %6007 = vmatpush1.bf16.msra.mxu0 %v4280
      %6008 = vmatprep.subr.bf16.mxu0 %v4283
      %6009 = vmatpush1.bf16.msra.mxu0 %v4282
      %6010 = vmatprep.subr.bf16.mxu0 %v4285
      %6011 = vmatpush1.bf16.msra.mxu0 %v4284
      %6012 = vmatprep.subr.bf16.mxu0 %v4287
      %6013 = vmatpush1.bf16.msra.mxu0 %v4286
      %6014 = vmatprep.subr.bf16.mxu0 %v4289
      %6015 = vmatpush1.bf16.msra.mxu0 %v4288
      %6016 = vmatprep.subr.bf16.mxu0 %v4291
      %6017 = vmatpush1.bf16.msra.mxu0 %v4290
      %6018 = vmatprep.subr.bf16.mxu0 %v4293
      %6019 = vmatpush1.bf16.msra.mxu0 %v4292
      %6020 = vmatprep.subr.bf16.mxu0 %v4295
      %6021 = vmatpush1.bf16.msra.mxu0 %v4294
      %6022 = vmatprep.subr.bf16.mxu0 %v4297
      %6023 = vmatpush1.bf16.msra.mxu0 %v4296
      %6024 = vmatprep.subr.bf16.mxu0 %v4299
      %6025 = vmatpush1.bf16.msra.mxu0 %v4298
      %6026 = vmatprep.mubr.bf16.mxu0 %v1245
      %6027 = vmatmul.mubr.bf16.gmra.mrb[0].mxu0 %v1231
      %v6028 = vpop.f32.mrb[0].mxu0
      %v6029 = vadd.f32 %v5988, %v6028
      %v6030 = vpop.f32.mrb[0].mxu0
      %v6031 = vadd.f32 %v5990, %v6030
      %v6032 = vpop.f32.mrb[0].mxu0
      %v6033 = vpop.f32.mrb[0].mxu0
      %6034 = vdwg.mxu0
      %6035 = vmatprep.subr.bf16.mxu0 %v4301
      %6036 = vmatpush1.bf16.msra.mxu0 %v4300
      %6037 = vmatprep.subr.bf16.mxu0 %v4303
      %6038 = vmatpush1.bf16.msra.mxu0 %v4302
      %6039 = vmatprep.subr.bf16.mxu0 %v4305
      %6040 = vmatpush1.bf16.msra.mxu0 %v4304
      %6041 = vmatprep.subr.bf16.mxu0 %v4307
      %6042 = vmatpush1.bf16.msra.mxu0 %v4306
      %6043 = vmatprep.subr.bf16.mxu0 %v4309
      %6044 = vmatpush1.bf16.msra.mxu0 %v4308
      %6045 = vmatprep.subr.bf16.mxu0 %v4311
      %6046 = vmatpush1.bf16.msra.mxu0 %v4310
      %6047 = vmatprep.subr.bf16.mxu0 %v4313
      %6048 = vmatpush1.bf16.msra.mxu0 %v4312
      %6049 = vmatprep.subr.bf16.mxu0 %v4315
      %6050 = vmatpush1.bf16.msra.mxu0 %v4314
      %6051 = vmatprep.subr.bf16.mxu0 %v4317
      %6052 = vmatpush1.bf16.msra.mxu0 %v4316
      %6053 = vmatprep.subr.bf16.mxu0 %v4319
      %6054 = vmatpush1.bf16.msra.mxu0 %v4318
      %6055 = vmatprep.subr.bf16.mxu0 %v4321
      %6056 = vmatpush1.bf16.msra.mxu0 %v4320
      %6057 = vmatprep.subr.bf16.mxu0 %v4323
      %6058 = vmatpush1.bf16.msra.mxu0 %v4322
      %6059 = vmatprep.subr.bf16.mxu0 %v4325
      %6060 = vmatpush1.bf16.msra.mxu0 %v4324
      %6061 = vmatprep.subr.bf16.mxu0 %v4327
      %6062 = vmatpush1.bf16.msra.mxu0 %v4326
      %6063 = vmatprep.subr.bf16.mxu0 %v4329
      %6064 = vmatpush1.bf16.msra.mxu0 %v4328
      %6065 = vmatprep.subr.bf16.mxu0 %v4331
      %6066 = vmatpush1.bf16.msra.mxu0 %v4330
      %6067 = vmatprep.mubr.bf16.mxu0 %v1249
      %6068 = vmatmul.mubr.bf16.gmra.mrb[0].mxu0 %v1247
      %v6069 = vpop.f32.mrb[0].mxu0
      %v6070 = vadd.f32 %v6029, %v6069
      %v6071 = vpop.f32.mrb[0].mxu0
      %v6072 = vadd.f32 %v6031, %v6071
      %v6073 = vpop.f32.mrb[0].mxu0
      %v6074 = vpop.f32.mrb[0].mxu0
      %6075 = vdwg.mxu0
      %6076 = vmatprep.subr.bf16.mxu0 %v4333
      %6077 = vmatpush1.bf16.msra.mxu0 %v4332
      %6078 = vmatprep.subr.bf16.mxu0 %v4335
      %6079 = vmatpush1.bf16.msra.mxu0 %v4334
      %6080 = vmatprep.subr.bf16.mxu0 %v4337
      %6081 = vmatpush1.bf16.msra.mxu0 %v4336
      %6082 = vmatprep.subr.bf16.mxu0 %v4339
      %6083 = vmatpush1.bf16.msra.mxu0 %v4338
      %6084 = vmatprep.subr.bf16.mxu0 %v4341
      %6085 = vmatpush1.bf16.msra.mxu0 %v4340
      %6086 = vmatprep.subr.bf16.mxu0 %v4343
      %6087 = vmatpush1.bf16.msra.mxu0 %v4342
      %6088 = vmatprep.subr.bf16.mxu0 %v4345
      %6089 = vmatpush1.bf16.msra.mxu0 %v4344
      %6090 = vmatprep.subr.bf16.mxu0 %v4347
      %6091 = vmatpush1.bf16.msra.mxu0 %v4346
      %6092 = vmatprep.subr.bf16.mxu0 %v4349
      %6093 = vmatpush1.bf16.msra.mxu0 %v4348
      %6094 = vmatprep.subr.bf16.mxu0 %v4351
      %6095 = vmatpush1.bf16.msra.mxu0 %v4350
      %6096 = vmatprep.subr.bf16.mxu0 %v4353
      %6097 = vmatpush1.bf16.msra.mxu0 %v4352
      %6098 = vmatprep.subr.bf16.mxu0 %v4355
      %6099 = vmatpush1.bf16.msra.mxu0 %v4354
      %6100 = vmatprep.subr.bf16.mxu0 %v4357
      %6101 = vmatpush1.bf16.msra.mxu0 %v4356
      %6102 = vmatprep.subr.bf16.mxu0 %v4359
      %6103 = vmatpush1.bf16.msra.mxu0 %v4358
      %6104 = vmatprep.subr.bf16.mxu0 %v4361
      %6105 = vmatpush1.bf16.msra.mxu0 %v4360
      %6106 = vmatprep.subr.bf16.mxu0 %v4363
      %6107 = vmatpush1.bf16.msra.mxu0 %v4362
      %6108 = vmatprep.mubr.bf16.mxu0 %v1287
      %6109 = vmatmul.mubr.bf16.gmra.mrb[0].mxu0 %v1273
      %v6110 = vpop.f32.mrb[0].mxu0
      %v6111 = vadd.f32 %v6070, %v6110
      %v6112 = vpop.f32.mrb[0].mxu0
      %v6113 = vadd.f32 %v6072, %v6112
      %v6114 = vpop.f32.mrb[0].mxu0
      %v6115 = vpop.f32.mrb[0].mxu0
      %6116 = vdwg.mxu0
      %6117 = vmatprep.subr.bf16.mxu0 %v4365
      %6118 = vmatpush1.bf16.msra.mxu0 %v4364
      %6119 = vmatprep.subr.bf16.mxu0 %v4367
      %6120 = vmatpush1.bf16.msra.mxu0 %v4366
      %6121 = vmatprep.subr.bf16.mxu0 %v4369
      %6122 = vmatpush1.bf16.msra.mxu0 %v4368
      %6123 = vmatprep.subr.bf16.mxu0 %v4371
      %6124 = vmatpush1.bf16.msra.mxu0 %v4370
      %6125 = vmatprep.subr.bf16.mxu0 %v4373
      %6126 = vmatpush1.bf16.msra.mxu0 %v4372
      %6127 = vmatprep.subr.bf16.mxu0 %v4375
      %6128 = vmatpush1.bf16.msra.mxu0 %v4374
      %6129 = vmatprep.subr.bf16.mxu0 %v4377
      %6130 = vmatpush1.bf16.msra.mxu0 %v4376
      %6131 = vmatprep.subr.bf16.mxu0 %v4379
      %6132 = vmatpush1.bf16.msra.mxu0 %v4378
      %6133 = vmatprep.subr.bf16.mxu0 %v4381
      %6134 = vmatpush1.bf16.msra.mxu0 %v4380
      %6135 = vmatprep.subr.bf16.mxu0 %v4383
      %6136 = vmatpush1.bf16.msra.mxu0 %v4382
      %6137 = vmatprep.subr.bf16.mxu0 %v4385
      %6138 = vmatpush1.bf16.msra.mxu0 %v4384
      %6139 = vmatprep.subr.bf16.mxu0 %v4387
      %6140 = vmatpush1.bf16.msra.mxu0 %v4386
      %6141 = vmatprep.subr.bf16.mxu0 %v4389
      %6142 = vmatpush1.bf16.msra.mxu0 %v4388
      %6143 = vmatprep.subr.bf16.mxu0 %v4391
      %6144 = vmatpush1.bf16.msra.mxu0 %v4390
      %6145 = vmatprep.subr.bf16.mxu0 %v4393
      %6146 = vmatpush1.bf16.msra.mxu0 %v4392
      %6147 = vmatprep.subr.bf16.mxu0 %v4395
      %6148 = vmatpush1.bf16.msra.mxu0 %v4394
      %6149 = vmatprep.mubr.bf16.mxu0 %v1297
      %6150 = vmatmul.mubr.bf16.gmra.mrb[0].mxu0 %v1295
      %v6151 = vpop.f32.mrb[0].mxu0
      %v6152 = vadd.f32 %v6111, %v6151
      %v6153 = vpop.f32.mrb[0].mxu0
      %v6154 = vadd.f32 %v6113, %v6153
      %v6155 = vpop.f32.mrb[0].mxu0
      %v6156 = vpop.f32.mrb[0].mxu0
      %6157 = vdwg.mxu0
      %6158 = vmatprep.subr.bf16.mxu0 %v4397
      %6159 = vmatpush1.bf16.msra.mxu0 %v4396
      %6160 = vmatprep.subr.bf16.mxu0 %v4399
      %6161 = vmatpush1.bf16.msra.mxu0 %v4398
      %6162 = vmatprep.subr.bf16.mxu0 %v4401
      %6163 = vmatpush1.bf16.msra.mxu0 %v4400
      %6164 = vmatprep.subr.bf16.mxu0 %v4403
      %6165 = vmatpush1.bf16.msra.mxu0 %v4402
      %6166 = vmatprep.subr.bf16.mxu0 %v4405
      %6167 = vmatpush1.bf16.msra.mxu0 %v4404
      %6168 = vmatprep.subr.bf16.mxu0 %v4407
      %6169 = vmatpush1.bf16.msra.mxu0 %v4406
      %6170 = vmatprep.subr.bf16.mxu0 %v4409
      %6171 = vmatpush1.bf16.msra.mxu0 %v4408
      %6172 = vmatprep.subr.bf16.mxu0 %v4411
      %6173 = vmatpush1.bf16.msra.mxu0 %v4410
      %6174 = vmatprep.subr.bf16.mxu0 %v4413
      %6175 = vmatpush1.bf16.msra.mxu0 %v4412
      %6176 = vmatprep.subr.bf16.mxu0 %v4415
      %6177 = vmatpush1.bf16.msra.mxu0 %v4414
      %6178 = vmatprep.subr.bf16.mxu0 %v4417
      %6179 = vmatpush1.bf16.msra.mxu0 %v4416
      %6180 = vmatprep.subr.bf16.mxu0 %v4419
      %6181 = vmatpush1.bf16.msra.mxu0 %v4418
      %6182 = vmatprep.subr.bf16.mxu0 %v4421
      %6183 = vmatpush1.bf16.msra.mxu0 %v4420
      %6184 = vmatprep.subr.bf16.mxu0 %v4423
      %6185 = vmatpush1.bf16.msra.mxu0 %v4422
      %6186 = vmatprep.subr.bf16.mxu0 %v4425
      %6187 = vmatpush1.bf16.msra.mxu0 %v4424
      %6188 = vmatprep.subr.bf16.mxu0 %v4427
      %6189 = vmatpush1.bf16.msra.mxu0 %v4426
      %6190 = vmatprep.mubr.bf16.mxu0 %v1294
      %6191 = vmatmul.mubr.bf16.gmra.mrb[0].mxu0 %v1280
      %v6192 = vpop.f32.mrb[0].mxu0
      %v6193 = vadd.f32 %v6152, %v6192
      %v6194 = vpop.f32.mrb[0].mxu0
      %v6195 = vadd.f32 %v6154, %v6194
      %v6196 = vpop.f32.mrb[0].mxu0
      %v6197 = vpop.f32.mrb[0].mxu0
      %6198 = vdwg.mxu0
      %6199 = vmatprep.subr.bf16.mxu0 %v4429
      %6200 = vmatpush1.bf16.msra.mxu0 %v4428
      %6201 = vmatprep.subr.bf16.mxu0 %v4431
      %6202 = vmatpush1.bf16.msra.mxu0 %v4430
      %6203 = vmatprep.subr.bf16.mxu0 %v4433
      %6204 = vmatpush1.bf16.msra.mxu0 %v4432
      %6205 = vmatprep.subr.bf16.mxu0 %v4435
      %6206 = vmatpush1.bf16.msra.mxu0 %v4434
      %6207 = vmatprep.subr.bf16.mxu0 %v4437
      %6208 = vmatpush1.bf16.msra.mxu0 %v4436
      %6209 = vmatprep.subr.bf16.mxu0 %v4439
      %6210 = vmatpush1.bf16.msra.mxu0 %v4438
      %6211 = vmatprep.subr.bf16.mxu0 %v4441
      %6212 = vmatpush1.bf16.msra.mxu0 %v4440
      %6213 = vmatprep.subr.bf16.mxu0 %v4443
      %6214 = vmatpush1.bf16.msra.mxu0 %v4442
      %6215 = vmatprep.subr.bf16.mxu0 %v4445
      %6216 = vmatpush1.bf16.msra.mxu0 %v4444
      %6217 = vmatprep.subr.bf16.mxu0 %v4447
      %6218 = vmatpush1.bf16.msra.mxu0 %v4446
      %6219 = vmatprep.subr.bf16.mxu0 %v4449
      %6220 = vmatpush1.bf16.msra.mxu0 %v4448
      %6221 = vmatprep.subr.bf16.mxu0 %v4451
      %6222 = vmatpush1.bf16.msra.mxu0 %v4450
      %6223 = vmatprep.subr.bf16.mxu0 %v4453
      %6224 = vmatpush1.bf16.msra.mxu0 %v4452
      %6225 = vmatprep.subr.bf16.mxu0 %v4455
      %6226 = vmatpush1.bf16.msra.mxu0 %v4454
      %6227 = vmatprep.subr.bf16.mxu0 %v4457
      %6228 = vmatpush1.bf16.msra.mxu0 %v4456
      %6229 = vmatprep.subr.bf16.mxu0 %v4459
      %6230 = vmatpush1.bf16.msra.mxu0 %v4458
      %6231 = vmatprep.mubr.bf16.mxu0 %v1298
      %6232 = vmatmul.mubr.bf16.gmra.mrb[0].mxu0 %v1296
      %v6233 = vpop.f32.mrb[0].mxu0
      %v6234 = vadd.f32 %v6193, %v6233
      %v6235 = vpop.f32.mrb[0].mxu0
      %v6236 = vadd.f32 %v6195, %v6235
      %v6237 = vpop.f32.mrb[0].mxu0
      %v6238 = vpop.f32.mrb[0].mxu0
      %6239 = vdwg.mxu0
      %6240 = vmatprep.subr.bf16.mxu0 %v4461
      %6241 = vmatpush1.bf16.msra.mxu0 %v4460
      %6242 = vmatprep.subr.bf16.mxu0 %v4463
      %6243 = vmatpush1.bf16.msra.mxu0 %v4462
      %6244 = vmatprep.subr.bf16.mxu0 %v4465
      %6245 = vmatpush1.bf16.msra.mxu0 %v4464
      %6246 = vmatprep.subr.bf16.mxu0 %v4467
      %6247 = vmatpush1.bf16.msra.mxu0 %v4466
      %6248 = vmatprep.subr.bf16.mxu0 %v4469
      %6249 = vmatpush1.bf16.msra.mxu0 %v4468
      %6250 = vmatprep.subr.bf16.mxu0 %v4471
      %6251 = vmatpush1.bf16.msra.mxu0 %v4470
      %6252 = vmatprep.subr.bf16.mxu0 %v4473
      %6253 = vmatpush1.bf16.msra.mxu0 %v4472
      %6254 = vmatprep.subr.bf16.mxu0 %v4475
      %6255 = vmatpush1.bf16.msra.mxu0 %v4474
      %6256 = vmatprep.subr.bf16.mxu0 %v4477
      %6257 = vmatpush1.bf16.msra.mxu0 %v4476
      %6258 = vmatprep.subr.bf16.mxu0 %v4479
      %6259 = vmatpush1.bf16.msra.mxu0 %v4478
      %6260 = vmatprep.subr.bf16.mxu0 %v4481
      %6261 = vmatpush1.bf16.msra.mxu0 %v4480
      %6262 = vmatprep.subr.bf16.mxu0 %v4483
      %6263 = vmatpush1.bf16.msra.mxu0 %v4482
      %6264 = vmatprep.subr.bf16.mxu0 %v4485
      %6265 = vmatpush1.bf16.msra.mxu0 %v4484
      %6266 = vmatprep.subr.bf16.mxu0 %v4487
      %6267 = vmatpush1.bf16.msra.mxu0 %v4486
      %6268 = vmatprep.subr.bf16.mxu0 %v4489
      %6269 = vmatpush1.bf16.msra.mxu0 %v4488
      %6270 = vmatprep.subr.bf16.mxu0 %v4491
      %6271 = vmatpush1.bf16.msra.mxu0 %v4490
      %6272 = vmatprep.mubr.bf16.mxu0 %v1336
      %6273 = vmatmul.mubr.bf16.gmra.mrb[0].mxu0 %v1322
      %v6274 = vpop.f32.mrb[0].mxu0
      %v6275 = vadd.f32 %v6234, %v6274
      %v6276 = vpop.f32.mrb[0].mxu0
      %v6277 = vadd.f32 %v6236, %v6276
      %v6278 = vpop.f32.mrb[0].mxu0
      %v6279 = vpop.f32.mrb[0].mxu0
      %6280 = vdwg.mxu0
      %6281 = vmatprep.subr.bf16.mxu0 %v4493
      %6282 = vmatpush1.bf16.msra.mxu0 %v4492
      %6283 = vmatprep.subr.bf16.mxu0 %v4495
      %6284 = vmatpush1.bf16.msra.mxu0 %v4494
      %6285 = vmatprep.subr.bf16.mxu0 %v4497
      %6286 = vmatpush1.bf16.msra.mxu0 %v4496
      %6287 = vmatprep.subr.bf16.mxu0 %v4499
      %6288 = vmatpush1.bf16.msra.mxu0 %v4498
      %6289 = vmatprep.subr.bf16.mxu0 %v4501
      %6290 = vmatpush1.bf16.msra.mxu0 %v4500
      %6291 = vmatprep.subr.bf16.mxu0 %v4503
      %6292 = vmatpush1.bf16.msra.mxu0 %v4502
      %6293 = vmatprep.subr.bf16.mxu0 %v4505
      %6294 = vmatpush1.bf16.msra.mxu0 %v4504
      %6295 = vmatprep.subr.bf16.mxu0 %v4507
      %6296 = vmatpush1.bf16.msra.mxu0 %v4506
      %6297 = vmatprep.subr.bf16.mxu0 %v4509
      %6298 = vmatpush1.bf16.msra.mxu0 %v4508
      %6299 = vmatprep.subr.bf16.mxu0 %v4511
      %6300 = vmatpush1.bf16.msra.mxu0 %v4510
      %6301 = vmatprep.subr.bf16.mxu0 %v4513
      %6302 = vmatpush1.bf16.msra.mxu0 %v4512
      %6303 = vmatprep.subr.bf16.mxu0 %v4515
      %6304 = vmatpush1.bf16.msra.mxu0 %v4514
      %6305 = vmatprep.subr.bf16.mxu0 %v4517
      %6306 = vmatpush1.bf16.msra.mxu0 %v4516
      %6307 = vmatprep.subr.bf16.mxu0 %v4519
      %6308 = vmatpush1.bf16.msra.mxu0 %v4518
      %6309 = vmatprep.subr.bf16.mxu0 %v4521
      %6310 = vmatpush1.bf16.msra.mxu0 %v4520
      %6311 = vmatprep.subr.bf16.mxu0 %v4523
      %6312 = vmatpush1.bf16.msra.mxu0 %v4522
      %6313 = vmatprep.mubr.bf16.mxu0 %v1346
      %6314 = vmatmul.mubr.bf16.gmra.mrb[0].mxu0 %v1344
      %v6315 = vpop.f32.mrb[0].mxu0
      %v6316 = vadd.f32 %v6275, %v6315
      %v6317 = vpop.f32.mrb[0].mxu0
      %v6318 = vadd.f32 %v6277, %v6317
      %v6319 = vpop.f32.mrb[0].mxu0
      %v6320 = vpop.f32.mrb[0].mxu0
      %6321 = vdwg.mxu0
      %6322 = vmatprep.subr.bf16.mxu0 %v4525
      %6323 = vmatpush1.bf16.msra.mxu0 %v4524
      %6324 = vmatprep.subr.bf16.mxu0 %v4527
      %6325 = vmatpush1.bf16.msra.mxu0 %v4526
      %6326 = vmatprep.subr.bf16.mxu0 %v4529
      %6327 = vmatpush1.bf16.msra.mxu0 %v4528
      %6328 = vmatprep.subr.bf16.mxu0 %v4531
      %6329 = vmatpush1.bf16.msra.mxu0 %v4530
      %6330 = vmatprep.subr.bf16.mxu0 %v4533
      %6331 = vmatpush1.bf16.msra.mxu0 %v4532
      %6332 = vmatprep.subr.bf16.mxu0 %v4535
      %6333 = vmatpush1.bf16.msra.mxu0 %v4534
      %6334 = vmatprep.subr.bf16.mxu0 %v4537
      %6335 = vmatpush1.bf16.msra.mxu0 %v4536
      %6336 = vmatprep.subr.bf16.mxu0 %v4539
      %6337 = vmatpush1.bf16.msra.mxu0 %v4538
      %6338 = vmatprep.subr.bf16.mxu0 %v4541
      %6339 = vmatpush1.bf16.msra.mxu0 %v4540
      %6340 = vmatprep.subr.bf16.mxu0 %v4543
      %6341 = vmatpush1.bf16.msra.mxu0 %v4542
      %6342 = vmatprep.subr.bf16.mxu0 %v4545
      %6343 = vmatpush1.bf16.msra.mxu0 %v4544
      %6344 = vmatprep.subr.bf16.mxu0 %v4547
      %6345 = vmatpush1.bf16.msra.mxu0 %v4546
      %6346 = vmatprep.subr.bf16.mxu0 %v4549
      %6347 = vmatpush1.bf16.msra.mxu0 %v4548
      %6348 = vmatprep.subr.bf16.mxu0 %v4551
      %6349 = vmatpush1.bf16.msra.mxu0 %v4550
      %6350 = vmatprep.subr.bf16.mxu0 %v4553
      %6351 = vmatpush1.bf16.msra.mxu0 %v4552
      %6352 = vmatprep.subr.bf16.mxu0 %v4555
      %6353 = vmatpush1.bf16.msra.mxu0 %v4554
      %6354 = vmatprep.mubr.bf16.mxu0 %v1343
      %6355 = vmatmul.mubr.bf16.gmra.mrb[0].mxu0 %v1329
      %v6356 = vpop.f32.mrb[0].mxu0
      %v6357 = vadd.f32 %v6316, %v6356
      %v6358 = vpop.f32.mrb[0].mxu0
      %v6359 = vadd.f32 %v6318, %v6358
      %v6360 = vpop.f32.mrb[0].mxu0
      %v6361 = vpop.f32.mrb[0].mxu0
      %6362 = vdwg.mxu0
      %6363 = vmatprep.subr.bf16.mxu0 %v4557
      %6364 = vmatpush1.bf16.msra.mxu0 %v4556
      %6365 = vmatprep.subr.bf16.mxu0 %v4559
      %6366 = vmatpush1.bf16.msra.mxu0 %v4558
      %6367 = vmatprep.subr.bf16.mxu0 %v4561
      %6368 = vmatpush1.bf16.msra.mxu0 %v4560
      %6369 = vmatprep.subr.bf16.mxu0 %v4563
      %6370 = vmatpush1.bf16.msra.mxu0 %v4562
      %6371 = vmatprep.subr.bf16.mxu0 %v4565
      %6372 = vmatpush1.bf16.msra.mxu0 %v4564
      %6373 = vmatprep.subr.bf16.mxu0 %v4567
      %6374 = vmatpush1.bf16.msra.mxu0 %v4566
      %6375 = vmatprep.subr.bf16.mxu0 %v4569
      %6376 = vmatpush1.bf16.msra.mxu0 %v4568
      %6377 = vmatprep.subr.bf16.mxu0 %v4571
      %6378 = vmatpush1.bf16.msra.mxu0 %v4570
      %6379 = vmatprep.subr.bf16.mxu0 %v4573
      %6380 = vmatpush1.bf16.msra.mxu0 %v4572
      %6381 = vmatprep.subr.bf16.mxu0 %v4575
      %6382 = vmatpush1.bf16.msra.mxu0 %v4574
      %6383 = vmatprep.subr.bf16.mxu0 %v4577
      %6384 = vmatpush1.bf16.msra.mxu0 %v4576
      %6385 = vmatprep.subr.bf16.mxu0 %v4579
      %6386 = vmatpush1.bf16.msra.mxu0 %v4578
      %6387 = vmatprep.subr.bf16.mxu0 %v4581
      %6388 = vmatpush1.bf16.msra.mxu0 %v4580
      %6389 = vmatprep.subr.bf16.mxu0 %v4583
      %6390 = vmatpush1.bf16.msra.mxu0 %v4582
      %6391 = vmatprep.subr.bf16.mxu0 %v4585
      %6392 = vmatpush1.bf16.msra.mxu0 %v4584
      %6393 = vmatprep.subr.bf16.mxu0 %v4587
      %6394 = vmatpush1.bf16.msra.mxu0 %v4586
      %6395 = vmatprep.mubr.bf16.mxu0 %v1347
      %6396 = vmatmul.mubr.bf16.gmra.mrb[0].mxu0 %v1345
      %v6397 = vpop.f32.mrb[0].mxu0
      %v6398 = vadd.f32 %v6357, %v6397
      %v6399 = vpop.f32.mrb[0].mxu0
      %v6400 = vadd.f32 %v6359, %v6399
      %v6401 = vpop.f32.mrb[0].mxu0
      %v6402 = vpop.f32.mrb[0].mxu0
      %6403 = vdwg.mxu0
      %6404 = vmatprep.subr.bf16.mxu0 %v4589
      %6405 = vmatpush1.bf16.msra.mxu0 %v4588
      %6406 = vmatprep.subr.bf16.mxu0 %v4591
      %6407 = vmatpush1.bf16.msra.mxu0 %v4590
      %6408 = vmatprep.subr.bf16.mxu0 %v4593
      %6409 = vmatpush1.bf16.msra.mxu0 %v4592
      %6410 = vmatprep.subr.bf16.mxu0 %v4595
      %6411 = vmatpush1.bf16.msra.mxu0 %v4594
      %6412 = vmatprep.subr.bf16.mxu0 %v4597
      %6413 = vmatpush1.bf16.msra.mxu0 %v4596
      %6414 = vmatprep.subr.bf16.mxu0 %v4599
      %6415 = vmatpush1.bf16.msra.mxu0 %v4598
      %6416 = vmatprep.subr.bf16.mxu0 %v4601
      %6417 = vmatpush1.bf16.msra.mxu0 %v4600
      %6418 = vmatprep.subr.bf16.mxu0 %v4603
      %6419 = vmatpush1.bf16.msra.mxu0 %v4602
      %6420 = vmatprep.subr.bf16.mxu0 %v4605
      %6421 = vmatpush1.bf16.msra.mxu0 %v4604
      %6422 = vmatprep.subr.bf16.mxu0 %v4607
      %6423 = vmatpush1.bf16.msra.mxu0 %v4606
      %6424 = vmatprep.subr.bf16.mxu0 %v4609
      %6425 = vmatpush1.bf16.msra.mxu0 %v4608
      %6426 = vmatprep.subr.bf16.mxu0 %v4611
      %6427 = vmatpush1.bf16.msra.mxu0 %v4610
      %6428 = vmatprep.subr.bf16.mxu0 %v4613
      %6429 = vmatpush1.bf16.msra.mxu0 %v4612
      %6430 = vmatprep.subr.bf16.mxu0 %v4615
      %6431 = vmatpush1.bf16.msra.mxu0 %v4614
      %6432 = vmatprep.subr.bf16.mxu0 %v4617
      %6433 = vmatpush1.bf16.msra.mxu0 %v4616
      %6434 = vmatprep.subr.bf16.mxu0 %v4619
      %6435 = vmatpush1.bf16.msra.mxu0 %v4618
      %6436 = vmatprep.mubr.bf16.mxu0 %v1369
      %6437 = vmatmul.mubr.bf16.gmra.mrb[0].mxu0 %v1362
      %v6438 = vpop.f32.mrb[0].mxu0
      %v6439 = vadd.f32 %v6398, %v6438
      %v6440 = vpop.f32.mrb[0].mxu0
      %v6441 = vadd.f32 %v6400, %v6440
      %v6442 = vpop.f32.mrb[0].mxu0
      %v6443 = vpop.f32.mrb[0].mxu0
      %6444 = vdwg.mxu0
      %v6447 = vcombine.low %v6439, %v6441
      %v6449 = vunpack.c.l.s4 1983009808
      %v6450 = vunpack.c.0.s8 %v6449
      %v6451 = vlaneseq
      %v6452 = vshrl.u32 %v6451, 7
      %v6453 = vsub.s32 %v6450, %v6452
      %v6454 = vrot.slane %v6447, %v6453
      %v6456 = vadd.f32 %v239, %v6454
      %6457 = vst [vmem:[#allocation2] sm:$0xf] %v6456
      %p6458 = scmp.eq.s32.totalorder %s16, 1
      // Predicated region
      $region45: #{state_encoder_forward.7} parent=39 // pred_check
        %p6459 = pneg %p6458
      $region46: #{state_encoder_forward.7} parent=39 // pred_check_branch
        %6461 = sbr.rel (%p6459) target = $region48
      $region47: #{state_encoder_forward.7} parent=39 // pred_region
        %v6462 = vld [vmem:[#allocation2] sm:$0xf]
        %v6463 = vld [vmem:[%s2] sm:$0x3]
        %v6465 = vlaneseq
        %v6466 = vshrl.u32 %v6465, 7
        %v6467 = vsub.s32 0, %v6466
        %v6468 = vrot.slane %v6463, %v6467
        %v6469 = vlaneseq
        %v6470 = vshrl.u32 %v6469, 7
        %v6471 = vsub.s32 1, %v6470
        %v6472 = vrot.slane %v6463, %v6471
        %v6473 = vcombine.low %v6468, %v6472
        %v6475 = vunpack.c.l.s4 1983009808
        %v6476 = vunpack.c.0.s8 %v6475
        %v6477 = vlaneseq
        %v6478 = vshrl.u32 %v6477, 7
        %v6479 = vsub.s32 %v6476, %v6478
        %v6480 = vrot.slane %v6473, %v6479
        %v6482 = vadd.f32 %v6462, %v6480
        %v6483 = vmax.f32 %v6482, 0.0
        %v6484 = vld [vmem:[%s3] sm:$0xff]
        %v6485 = vld [vmem:[%s3 + $0x8] sm:$0xff]
        %v6486 = vld [vmem:[%s3 + $0x10] sm:$0xff]
        %v6487 = vld [vmem:[%s3 + $0x18] sm:$0xff]
        %v6488 = vld [vmem:[%s3 + $0x20] sm:$0xff]
        %v6489 = vld [vmem:[%s3 + $0x28] sm:$0xff]
        %v6490 = vld [vmem:[%s3 + $0x30] sm:$0xff]
        %v6491 = vld [vmem:[%s3 + $0x38] sm:$0xff]
        %v6492 = vld [vmem:[%s3 + $0x40] sm:$0xff]
        %v6493 = vld [vmem:[%s3 + $0x48] sm:$0xff]
        %v6494 = vld [vmem:[%s3 + $0x50] sm:$0xff]
        %v6495 = vld [vmem:[%s3 + $0x58] sm:$0xff]
        %v6496 = vld [vmem:[%s3 + $0x60] sm:$0xff]
        %v6497 = vld [vmem:[%s3 + $0x68] sm:$0xff]
        %v6498 = vld [vmem:[%s3 + $0x70] sm:$0xff]
        %v6499 = vld [vmem:[%s3 + $0x78] sm:$0xff]
        %v6500 = vld [vmem:[%s3 + $0x80] sm:$0xff]
        %v6501 = vld [vmem:[%s3 + $0x88] sm:$0xff]
        %v6502 = vld [vmem:[%s3 + $0x90] sm:$0xff]
        %v6503 = vld [vmem:[%s3 + $0x98] sm:$0xff]
        %v6504 = vld [vmem:[%s3 + $0xa0] sm:$0xff]
        %v6505 = vld [vmem:[%s3 + $0xa8] sm:$0xff]
        %v6506 = vld [vmem:[%s3 + $0xb0] sm:$0xff]
        %v6507 = vld [vmem:[%s3 + $0xb8] sm:$0xff]
        %v6508 = vld [vmem:[%s3 + $0xc0] sm:$0xff]
        %v6509 = vld [vmem:[%s3 + $0xc8] sm:$0xff]
        %v6510 = vld [vmem:[%s3 + $0xd0] sm:$0xff]
        %v6511 = vld [vmem:[%s3 + $0xd8] sm:$0xff]
        %v6512 = vld [vmem:[%s3 + $0xe0] sm:$0xff]
        %v6513 = vld [vmem:[%s3 + $0xe8] sm:$0xff]
        %v6514 = vld [vmem:[%s3 + $0xf0] sm:$0xff]
        %v6515 = vld [vmem:[%s3 + $0xf8] sm:$0xff]
        %v6516 = vld [vmem:[%s4] sm:$0x1]
        %v6518 = vlaneseq
        %v6519 = vshrl.u32 %v6518, 7
        %v6520 = vsub.s32 0, %v6519
        %v6521 = vrot.slane %v6516, %v6520
        %v6525 = vunpack.c.l.s4 1983009808
        %v6526 = vunpack.c.0.s8 %v6525
        %v6527 = vlaneseq
        %v6528 = vshrl.u32 %v6527, 7
        %v6529 = vsub.s32 %v6526, %v6528
        %v6530 = vrot.slane %v6483, %v6529
        %v6531 = vcombine.high %v6530, %v6530
        %6534 = vmatprep.subr.mxu0 0.0
        %6535 = vmatpush1.msra.mxu0 %v6484
        %6536 = vmatprep.subr.mxu0 0.0
        %6537 = vmatpush1.msra.mxu0 %v6485
        %6538 = vmatprep.subr.mxu0 0.0
        %6539 = vmatpush1.msra.mxu0 %v6486
        %6540 = vmatprep.subr.mxu0 0.0
        %6541 = vmatpush1.msra.mxu0 %v6487
        %6542 = vmatprep.subr.mxu0 0.0
        %6543 = vmatpush1.msra.mxu0 %v6488
        %6544 = vmatprep.subr.mxu0 0.0
        %6545 = vmatpush1.msra.mxu0 %v6489
        %6546 = vmatprep.subr.mxu0 0.0
        %6547 = vmatpush1.msra.mxu0 %v6490
        %6548 = vmatprep.subr.mxu0 0.0
        %6549 = vmatpush1.msra.mxu0 %v6491
        %6550 = vmatprep.subr.mxu0 0.0
        %6551 = vmatpush1.msra.mxu0 %v6492
        %6552 = vmatprep.subr.mxu0 0.0
        %6553 = vmatpush1.msra.mxu0 %v6493
        %6554 = vmatprep.subr.mxu0 0.0
        %6555 = vmatpush1.msra.mxu0 %v6494
        %6556 = vmatprep.subr.mxu0 0.0
        %6557 = vmatpush1.msra.mxu0 %v6495
        %6558 = vmatprep.subr.mxu0 0.0
        %6559 = vmatpush1.msra.mxu0 %v6496
        %6560 = vmatprep.subr.mxu0 0.0
        %6561 = vmatpush1.msra.mxu0 %v6497
        %6562 = vmatprep.subr.mxu0 0.0
        %6563 = vmatpush1.msra.mxu0 %v6498
        %6564 = vmatprep.subr.mxu0 0.0
        %6565 = vmatpush1.msra.mxu0 %v6499
        %6566 = vmatprep.subr.mxu0 0.0
        %6567 = vmatpush1.msra.mxu0 %v6500
        %6568 = vmatprep.subr.mxu0 0.0
        %6569 = vmatpush1.msra.mxu0 %v6501
        %6570 = vmatprep.subr.mxu0 0.0
        %6571 = vmatpush1.msra.mxu0 %v6502
        %6572 = vmatprep.subr.mxu0 0.0
        %6573 = vmatpush1.msra.mxu0 %v6503
        %6574 = vmatprep.subr.mxu0 0.0
        %6575 = vmatpush1.msra.mxu0 %v6504
        %6576 = vmatprep.subr.mxu0 0.0
        %6577 = vmatpush1.msra.mxu0 %v6505
        %6578 = vmatprep.subr.mxu0 0.0
        %6579 = vmatpush1.msra.mxu0 %v6506
        %6580 = vmatprep.subr.mxu0 0.0
        %6581 = vmatpush1.msra.mxu0 %v6507
        %6582 = vmatprep.subr.mxu0 0.0
        %6583 = vmatpush1.msra.mxu0 %v6508
        %6584 = vmatprep.subr.mxu0 0.0
        %6585 = vmatpush1.msra.mxu0 %v6509
        %6586 = vmatprep.subr.mxu0 0.0
        %6587 = vmatpush1.msra.mxu0 %v6510
        %6588 = vmatprep.subr.mxu0 0.0
        %6589 = vmatpush1.msra.mxu0 %v6511
        %6590 = vmatprep.subr.mxu0 0.0
        %6591 = vmatpush1.msra.mxu0 %v6512
        %6592 = vmatprep.subr.mxu0 0.0
        %6593 = vmatpush1.msra.mxu0 %v6513
        %6594 = vmatprep.subr.mxu0 0.0
        %6595 = vmatpush1.msra.mxu0 %v6514
        %6596 = vmatprep.subr.mxu0 0.0
        %6597 = vmatpush1.msra.mxu0 %v6515
        %6598 = vmatprep.mubr.f32.mxu0 %v6531
        %6599 = vmatmul.mubr.f32.gmra.mrb[0].mxu0 %v6530
        %v6600 = vpop.f32.mrb[0].mxu0
        %v6601 = vadd.f32 %v6521, %v6600
        %v6602 = vpop.f32.mrb[0].mxu0
        %6603 = vdwg.mxu0
        %vm6604 = vcmask 123904
        %6605 = vst.msk [vmem:[%s5] sm:$0x3] %vm6604, %v6601
      $region48: #{state_encoder_forward.7} parent=39 // pred_fallthru
        _
      // Predicated region
      $region49: #{state_encoder_forward.7} parent=39 // pred_check
        %p6606 = pneg %p144
      $region50: #{state_encoder_forward.7} parent=39 // pred_check_branch
        %6608 = sbr.rel (%p6606) target = $region52
      $region51: #{state_encoder_forward.7} parent=39 // pred_region
        _
      $region52: #{state_encoder_forward.7} parent=39 // pred_fallthru
        _
      // Predicated region
      $region53: #{state_encoder_forward.7} parent=39 // pred_check
        %p6609 = pneg %p144
      $region54: #{state_encoder_forward.7} parent=39 // pred_check_branch
        %6611 = sbr.rel (%p6609) target = $region56
      $region55: #{state_encoder_forward.7} parent=39 // pred_region
        _
      $region56: #{state_encoder_forward.7} parent=39 // pred_fallthru
        _
    $region40: #{state_encoder_forward.7} parent=5 // pred_fallthru
      _
    %p6612 = scmp.le.s32.totalorder 2, %s11
    // Predicated region
    $region57: #{state_encoder_forward.7} parent=5 // pred_check
      %p6613 = pneg %p6612
    $region58: #{state_encoder_forward.7} parent=5 // pred_check_branch
      %6615 = sbr.rel (%p6613) target = $region60
    $region59: #{state_encoder_forward.7} parent=5 // pred_region
      %s6616 = ssub.s32 %s11, 2
    $region60: #{state_encoder_forward.7} parent=5 // pred_fallthru
      _
  $region6: #{state_encoder_forward.7} parent=0 // loop_footer
    %s15 = sadd.s32 1, %s11
  $region7: #{state_encoder_forward.7} parent=0 // loop_footer_branch
    %10 = sbr.rel target = $region3
  $region8: #{state_encoder_forward.7} parent=0 // loop_exit
    _

</llo_original>
